<compile_context>
chip_gen: v7x
topology: tpu7x:2x2x1
jax: 0.10.0
libtpu: 0.0.40
codegen_flags: <defaults>
</compile_context>

<pallas_src>
import jax
import jax.numpy as jnp
from jax.experimental import pallas as pl
from jax.experimental.pallas import tpu as pltpu

L_IN = 178                 # input length implied by fc1 (16 * 41 = 656)
K = 5                      # conv kernel size
C1, C2 = 6, 16             # conv channel counts
LC1 = L_IN - K + 1         # 174 (conv1 length)
L1 = LC1 // 2              # 87  (after pool)
LC2 = L1 - K + 1           # 83  (conv2 length)
L2 = LC2 // 2              # 41  (after pool; last conv2 position dropped)
H_FC = 128
N_CLS = 5

L_PAD = 192                # input positions padded 178 -> 192 (bf16 row tiles)
L1_STRIDE = 96             # per-channel row stride of pooled1 (87 -> 96)
L2_STRIDE = 48             # per-channel row stride of pooled2 (41 -> 48)
K1 = C1 * L1_STRIDE        # 576 rows of pooled1 / K of the conv2 matmuls
K2 = C2 * L2_STRIDE        # 768 rows of pooled2 / K of the fc1 matmul
OUT_P = 8                  # logits rows padded 5 -> 8 (full sublane tile)


def _conv_pool_matrix(w, parity, out_len, out_stride, in_stride, n_cols):
    """Dense Toeplitz matrix W with
         (W @ src)[co*out_stride + j] =
             sum_{ci,k} w[co,ci,k] * src[ci*in_stride + 2*j + parity + k]
       for j < out_len; every other row is zero (pool-pad rows)."""
    c_out, c_in, ksz = w.shape
    co = jnp.arange(c_out)[:, None, None, None]
    ci = jnp.arange(c_in)[None, :, None, None]
    jj = jnp.arange(out_len)[None, None, :, None]
    kk = jnp.arange(ksz)[None, None, None, :]
    shape = (c_out, c_in, out_len, ksz)
    rows = jnp.broadcast_to(co * out_stride + jj, shape).reshape(-1)
    cols = jnp.broadcast_to(ci * in_stride + 2 * jj + parity + kk,
                            shape).reshape(-1)
    vals = jnp.broadcast_to(w[:, :, None, :], shape).reshape(-1)
    mat = jnp.zeros((c_out * out_stride, n_cols), jnp.float32)
    return mat.at[rows, cols].set(vals)


def _bias_col(b, out_len, out_stride):
    """(C*out_stride, 1) bias column with zeros in the pool-pad rows."""
    col = jnp.zeros((b.shape[0], out_stride), jnp.float32)
    col = col.at[:, :out_len].set(b[:, None])
    return col.reshape(-1, 1)


def _mycnn_kernel(x_ref, w1e_ref, w1o_ref, b1_ref,
                  w2e_ref, w2o_ref, b2_ref,
                  wfc1_ref, bfc1_ref, wfc2_ref, bfc2_ref,
                  out_ref, p1_ref, p2_ref):
    # ---- conv1(k5) + ReLU + MaxPool1d(2): two Toeplitz matmuls on the MXU ---
    x = x_ref[...]                                             # (L_PAD, BN) bf16
    c1e = jnp.dot(w1e_ref[...], x, preferred_element_type=jnp.float32)
    c1o = jnp.dot(w1o_ref[...], x, preferred_element_type=jnp.float32)
    # relu(max(even, odd) + b) == maxpool(relu(conv + b)) (relu monotone).
    p1_ref[...] = jnp.maximum(jnp.maximum(c1e, c1o) + b1_ref[...],
                              0.0).astype(jnp.bfloat16)        # (576, BN)

    # ---- conv2(k5) + ReLU + MaxPool1d(2): two Toeplitz matmuls on the MXU ---
    p1 = p1_ref[...]
    c2e = jnp.dot(w2e_ref[...], p1, preferred_element_type=jnp.float32)
    c2o = jnp.dot(w2o_ref[...], p1, preferred_element_type=jnp.float32)
    p2_ref[...] = jnp.maximum(jnp.maximum(c2e, c2o) + b2_ref[...],
                              0.0).astype(jnp.bfloat16)        # (768, BN)

    # ---- fc1: one fused K=768 bf16 MXU matmul + ReLU -------------------------
    h = jnp.dot(wfc1_ref[...], p2_ref[...],
                preferred_element_type=jnp.float32)            # (128, BN) f32
    h = jnp.maximum(h + bfc1_ref[...], 0.0)

    # ---- fc2 (tiny, kept f32), padded to 8 lane-dense output rows ------------
    out_ref[...] = (jnp.dot(wfc2_ref[...], h,
                            preferred_element_type=jnp.float32)
                    + bfc2_ref[...])                           # (8, BN)


def mycnn_forward(params, x, block_n=512):
    n = x.shape[0]
    assert x.shape[1:] == (1, L_IN)

    # Clamp the batch block for tiny batches; keep it a multiple of 128.
    # (v7x note: pick batch / block_n so n_blocks >= 2 to feed both TCs.)
    block_n = max(128, min(block_n, -(-n // 128) * 128))
    n_blocks = -(-n // block_n)
    n_pad = n_blocks * block_n

    # Input: (N,1,178) -> batch-minor (L_PAD, n_pad) bf16, positions on rows.
    x2d = x.reshape(n, L_IN).astype(jnp.float32)
    xp = jnp.pad(x2d, ((0, n_pad - n), (0, L_PAD - L_IN)))
    x_cols = xp.T.astype(jnp.bfloat16)                          # (192, n_pad)

    w1 = params["w1"].astype(jnp.float32)                       # (6, 1, 5)
    b1 = params["b1"].astype(jnp.float32)                       # (6,)
    w2 = params["w2"].astype(jnp.float32)                       # (16, 6, 5)
    b2 = params["b2"].astype(jnp.float32)                       # (16,)

    # conv1+pool Toeplitz: (576, 192), even / odd pooling parity.
    w1e = _conv_pool_matrix(w1, 0, L1, L1_STRIDE, 0, L_PAD).astype(jnp.bfloat16)
    w1o = _conv_pool_matrix(w1, 1, L1, L1_STRIDE, 0, L_PAD).astype(jnp.bfloat16)
    b1c = _bias_col(b1, L1, L1_STRIDE)                          # (576, 1)

    # conv2+pool Toeplitz: (768, 576).
    w2e = _conv_pool_matrix(w2, 0, L2, L2_STRIDE, L1_STRIDE, K1).astype(jnp.bfloat16)
    w2o = _conv_pool_matrix(w2, 1, L2, L2_STRIDE, L1_STRIDE, K1).astype(jnp.bfloat16)
    b2c = _bias_col(b2, L2, L2_STRIDE)                          # (768, 1)

    # fc1 weight: (656,128) row = c2*41 + j  ->  (128, 768) with zero pad cols.
    wfc1 = params["wfc1"].astype(jnp.float32).reshape(C2, L2, H_FC)
    wfc1 = jnp.pad(wfc1, ((0, 0), (0, L2_STRIDE - L2), (0, 0)))
    wfc1_t = wfc1.transpose(2, 0, 1).reshape(H_FC, K2).astype(jnp.bfloat16)
    bfc1 = params["bfc1"].reshape(H_FC, 1).astype(jnp.float32)  # (128, 1)

    # fc2 weight: (128,5) -> (8,128), zero rows for the padded classes.
    wfc2_t = jnp.pad(params["wfc2"].astype(jnp.float32).T,
                     ((0, OUT_P - N_CLS), (0, 0)))              # (8, 128)
    bfc2 = jnp.pad(params["bfc2"].astype(jnp.float32),
                   (0, OUT_P - N_CLS)).reshape(OUT_P, 1)        # (8, 1)

    const = lambda i: (0, 0)
    flops = 2 * n_pad * (2 * K1 * L_PAD + 2 * K2 * K1 + H_FC * K2 + OUT_P * H_FC)
    bytes_acc = (2 * L_PAD * n_pad + 4 * OUT_P * n_pad
                 + 2 * (2 * K1 * L_PAD + 2 * K2 * K1 + H_FC * K2)
                 + 4 * (K1 + K2 + H_FC + OUT_P * H_FC + OUT_P))

    out = pl.pallas_call(
        _mycnn_kernel,
        out_shape=jax.ShapeDtypeStruct((OUT_P, n_pad), jnp.float32),
        grid=(n_blocks,),
        in_specs=[
            pl.BlockSpec((L_PAD, block_n), lambda i: (0, i)),   # x (batch-minor)
            pl.BlockSpec((K1, L_PAD), const),                   # w1e
            pl.BlockSpec((K1, L_PAD), const),                   # w1o
            pl.BlockSpec((K1, 1), const),                       # b1 column
            pl.BlockSpec((K2, K1), const),                      # w2e
            pl.BlockSpec((K2, K1), const),                      # w2o
            pl.BlockSpec((K2, 1), const),                       # b2 column
            pl.BlockSpec((H_FC, K2), const),                    # wfc1_t
            pl.BlockSpec((H_FC, 1), const),                     # bfc1
            pl.BlockSpec((OUT_P, H_FC), const),                 # wfc2_t
            pl.BlockSpec((OUT_P, 1), const),                    # bfc2
        ],
        out_specs=pl.BlockSpec((OUT_P, block_n), lambda i: (0, i)),
        scratch_shapes=[
            pltpu.VMEM((K1, block_n), jnp.bfloat16),            # pooled1 (bf16)
            pltpu.VMEM((K2, block_n), jnp.bfloat16),            # pooled2 (bf16)
        ],
        compiler_params=pltpu.CompilerParams(
            dimension_semantics=("parallel",),
            vmem_limit_bytes=32 * 1024 * 1024,
        ),
        cost_estimate=pl.CostEstimate(flops=flops, transcendentals=0,
                                      bytes_accessed=bytes_acc),
    )(x_cols, w1e, w1o, b1c, w2e, w2o, b2c, wfc1_t, bfc1, wfc2_t, bfc2)

    return out[:N_CLS, :n].T                                    # (N, 5)


def init_params(key):
    ks = jax.random.split(key, 8)

    def u(k, shape, fan_in):
        bound = 1.0 / (fan_in ** 0.5)
        return jax.random.uniform(k, shape, jnp.float32, -bound, bound)

    return {
        "w1":   u(ks[0], (C1, 1, K), 1 * K),
        "b1":   u(ks[1], (C1,), 1 * K),
        "w2":   u(ks[2], (C2, C1, K), C1 * K),
        "b2":   u(ks[3], (C2,), C1 * K),
        # Stored as (in_features, out_features); row index = channel*41 + pos,
        # consistent with torch's view(-1, 16*41) flatten order.
        "wfc1": u(ks[4], (C2 * L2, H_FC), C2 * L2),
        "bfc1": u(ks[5], (H_FC,), C2 * L2),
        "wfc2": u(ks[6], (H_FC, N_CLS), H_FC),
        "bfc2": u(ks[7], (N_CLS,), H_FC),
    }


def reference_forward(params, x):
    """Pure-jnp reference of the PyTorch forward (dropout = identity)."""
    n = x.shape[0]
    xs = x.reshape(n, L_IN).astype(jnp.float32)
    w1 = params["w1"].reshape(C1, K)
    c1 = sum(w1[:, k][None, :, None] * xs[:, None, k:k + LC1] for k in range(K))
    c1 = jnp.maximum(c1 + params["b1"][None, :, None], 0.0)
    p1 = c1[:, :, : 2 * L1].reshape(n, C1, L1, 2).max(-1)
    w2 = params["w2"]
    c2 = jnp.zeros((n, C2, LC2), jnp.float32)
    for ci in range(C1):
        for k in range(K):
            c2 = c2 + w2[:, ci, k][None, :, None] * p1[:, None, ci, k:k + LC2]
    c2 = jnp.maximum(c2 + params["b2"][None, :, None], 0.0)
    p2 = c2[:, :, : 2 * L2].reshape(n, C2, L2, 2).max(-1)
    flat = p2.reshape(n, C2 * L2)
    h = jnp.maximum(flat @ params["wfc1"] + params["bfc1"], 0.0)
    return h @ params["wfc2"] + params["bfc2"]


if __name__ == "__main__":
    key = jax.random.PRNGKey(0)
    pkey, xkey = jax.random.split(key)
    params = init_params(pkey)
    x = jax.random.normal(xkey, (2, 1, L_IN), jnp.float32)   # batch=2, NCL layout

    out = jax.jit(mycnn_forward)(params, x)
    jax.block_until_ready(out)
    assert out.shape == (2, N_CLS)

    ref = reference_forward(params, x)
    assert jnp.allclose(out, ref, rtol=2e-2, atol=2e-2), (out, ref)

    print("KERNEL_OK")
</pallas_src>

<mosaic_0001>
module attributes {stable_mosaic.version = 11 : i64} {
  func.func @_mycnn_kernel(%arg0: i32, %arg1: memref<192x128xbf16, #tpu.memory_space<vmem>>, %arg2: memref<576x192xbf16, #tpu.memory_space<vmem>>, %arg3: memref<576x192xbf16, #tpu.memory_space<vmem>>, %arg4: memref<576x1xf32, #tpu.memory_space<vmem>>, %arg5: memref<768x576xbf16, #tpu.memory_space<vmem>>, %arg6: memref<768x576xbf16, #tpu.memory_space<vmem>>, %arg7: memref<768x1xf32, #tpu.memory_space<vmem>>, %arg8: memref<128x768xbf16, #tpu.memory_space<vmem>>, %arg9: memref<128x1xf32, #tpu.memory_space<vmem>>, %arg10: memref<8x128xf32, #tpu.memory_space<vmem>>, %arg11: memref<8x1xf32, #tpu.memory_space<vmem>>, %arg12: memref<8x128xf32, #tpu.memory_space<vmem>>, %arg13: memref<576x128xbf16, #tpu.memory_space<vmem>>, %arg14: memref<768x128xbf16, #tpu.memory_space<vmem>>) attributes {dimension_semantics = [#tpu.dimension_semantics<parallel>], iteration_bounds = array<i64: 1>, scalar_prefetch = 0 : i64, scratch_operands = 2 : i64, tpu.core_type = #tpu.core_type<tc>, window_params = [{transform_indices = @transform_0, window_bounds = array<i64: 192, 128>}, {pipeline_mode = #tpu.pipeline_mode<synchronous>, transform_indices = @transform_1, window_bounds = array<i64: 576, 192>}, {pipeline_mode = #tpu.pipeline_mode<synchronous>, transform_indices = @transform_2, window_bounds = array<i64: 576, 192>}, {pipeline_mode = #tpu.pipeline_mode<synchronous>, transform_indices = @transform_3, window_bounds = array<i64: 576, 1>}, {pipeline_mode = #tpu.pipeline_mode<synchronous>, transform_indices = @transform_4, window_bounds = array<i64: 768, 576>}, {pipeline_mode = #tpu.pipeline_mode<synchronous>, transform_indices = @transform_5, window_bounds = array<i64: 768, 576>}, {pipeline_mode = #tpu.pipeline_mode<synchronous>, transform_indices = @transform_6, window_bounds = array<i64: 768, 1>}, {pipeline_mode = #tpu.pipeline_mode<synchronous>, transform_indices = @transform_7, window_bounds = array<i64: 128, 768>}, {pipeline_mode = #tpu.pipeline_mode<synchronous>, transform_indices = @transform_8, window_bounds = array<i64: 128, 1>}, {pipeline_mode = #tpu.pipeline_mode<synchronous>, transform_indices = @transform_9, window_bounds = array<i64: 8, 128>}, {pipeline_mode = #tpu.pipeline_mode<synchronous>, transform_indices = @transform_10, window_bounds = array<i64: 8, 1>}, {transform_indices = @transform_11, window_bounds = array<i64: 8, 128>}]} {
    %c0 = arith.constant 0 : index
    %c0_0 = arith.constant 0 : index
    %0 = vector.load %arg1[%c0, %c0_0] : memref<192x128xbf16, #tpu.memory_space<vmem>>, vector<192x128xbf16>
    %c0_1 = arith.constant 0 : index
    %c0_2 = arith.constant 0 : index
    %1 = vector.load %arg2[%c0_1, %c0_2] : memref<576x192xbf16, #tpu.memory_space<vmem>>, vector<576x192xbf16>
    %cst = arith.constant dense<0.000000e+00> : vector<576x128xf32>
    %2 = tpu.matmul %1, %0, %cst {dimension_numbers = #tpu.dot_dimension_numbers<[1], [0], [0], [1], [0, 0, 1, 1], [], []>} : vector<576x192xbf16>, vector<192x128xbf16>, vector<576x128xf32> -> vector<576x128xf32>
    %c0_3 = arith.constant 0 : index
    %c0_4 = arith.constant 0 : index
    %3 = vector.load %arg3[%c0_3, %c0_4] : memref<576x192xbf16, #tpu.memory_space<vmem>>, vector<576x192xbf16>
    %cst_5 = arith.constant dense<0.000000e+00> : vector<576x128xf32>
    %4 = tpu.matmul %3, %0, %cst_5 {dimension_numbers = #tpu.dot_dimension_numbers<[1], [0], [0], [1], [0, 0, 1, 1], [], []>} : vector<576x192xbf16>, vector<192x128xbf16>, vector<576x128xf32> -> vector<576x128xf32>
    %5 = arith.maximumf %2, %4 : vector<576x128xf32>
    %c0_6 = arith.constant 0 : index
    %c0_7 = arith.constant 0 : index
    %6 = vector.load %arg4[%c0_6, %c0_7] : memref<576x1xf32, #tpu.memory_space<vmem>>, vector<576x1xf32>
    %7 = vector.broadcast %6 : vector<576x1xf32> to vector<576x128xf32>
    %8 = arith.addf %5, %7 : vector<576x128xf32>
    %cst_8 = arith.constant 0.000000e+00 : f32
    %9 = vector.broadcast %cst_8 : f32 to vector<576x128xf32>
    %10 = arith.maximumf %8, %9 : vector<576x128xf32>
    %11 = arith.truncf %10 : vector<576x128xf32> to vector<576x128xbf16>
    %c0_9 = arith.constant 0 : index
    %c0_10 = arith.constant 0 : index
    %12 = vector.load %arg13[%c0_9, %c0_10] : memref<576x128xbf16, #tpu.memory_space<vmem>>, vector<576x128xbf16>
    tpu.vector_store %arg13[%c0_9, %c0_10], %11 {strides = array<i32>} : memref<576x128xbf16, #tpu.memory_space<vmem>>, vector<576x128xbf16>,
    %c0_11 = arith.constant 0 : index
    %c0_12 = arith.constant 0 : index
    %13 = vector.load %arg13[%c0_11, %c0_12] : memref<576x128xbf16, #tpu.memory_space<vmem>>, vector<576x128xbf16>
    %c0_13 = arith.constant 0 : index
    %c0_14 = arith.constant 0 : index
    %14 = vector.load %arg5[%c0_13, %c0_14] : memref<768x576xbf16, #tpu.memory_space<vmem>>, vector<768x576xbf16>
    %cst_15 = arith.constant dense<0.000000e+00> : vector<768x128xf32>
    %15 = tpu.matmul %14, %13, %cst_15 {dimension_numbers = #tpu.dot_dimension_numbers<[1], [0], [0], [1], [0, 0, 1, 1], [], []>} : vector<768x576xbf16>, vector<576x128xbf16>, vector<768x128xf32> -> vector<768x128xf32>
    %c0_16 = arith.constant 0 : index
    %c0_17 = arith.constant 0 : index
    %16 = vector.load %arg6[%c0_16, %c0_17] : memref<768x576xbf16, #tpu.memory_space<vmem>>, vector<768x576xbf16>
    %cst_18 = arith.constant dense<0.000000e+00> : vector<768x128xf32>
    %17 = tpu.matmul %16, %13, %cst_18 {dimension_numbers = #tpu.dot_dimension_numbers<[1], [0], [0], [1], [0, 0, 1, 1], [], []>} : vector<768x576xbf16>, vector<576x128xbf16>, vector<768x128xf32> -> vector<768x128xf32>
    %18 = arith.maximumf %15, %17 : vector<768x128xf32>
    %c0_19 = arith.constant 0 : index
    %c0_20 = arith.constant 0 : index
    %19 = vector.load %arg7[%c0_19, %c0_20] : memref<768x1xf32, #tpu.memory_space<vmem>>, vector<768x1xf32>
    %20 = vector.broadcast %19 : vector<768x1xf32> to vector<768x128xf32>
    %21 = arith.addf %18, %20 : vector<768x128xf32>
    %cst_21 = arith.constant 0.000000e+00 : f32
    %22 = vector.broadcast %cst_21 : f32 to vector<768x128xf32>
    %23 = arith.maximumf %21, %22 : vector<768x128xf32>
    %24 = arith.truncf %23 : vector<768x128xf32> to vector<768x128xbf16>
    %c0_22 = arith.constant 0 : index
    %c0_23 = arith.constant 0 : index
    %25 = vector.load %arg14[%c0_22, %c0_23] : memref<768x128xbf16, #tpu.memory_space<vmem>>, vector<768x128xbf16>
    tpu.vector_store %arg14[%c0_22, %c0_23], %24 {strides = array<i32>} : memref<768x128xbf16, #tpu.memory_space<vmem>>, vector<768x128xbf16>,
    %c0_24 = arith.constant 0 : index
    %c0_25 = arith.constant 0 : index
    %26 = vector.load %arg8[%c0_24, %c0_25] : memref<128x768xbf16, #tpu.memory_space<vmem>>, vector<128x768xbf16>
    %c0_26 = arith.constant 0 : index
    %c0_27 = arith.constant 0 : index
    %27 = vector.load %arg14[%c0_26, %c0_27] : memref<768x128xbf16, #tpu.memory_space<vmem>>, vector<768x128xbf16>
    %cst_28 = arith.constant dense<0.000000e+00> : vector<128x128xf32>
    %28 = tpu.matmul %26, %27, %cst_28 {dimension_numbers = #tpu.dot_dimension_numbers<[1], [0], [0], [1], [0, 0, 1, 1], [], []>} : vector<128x768xbf16>, vector<768x128xbf16>, vector<128x128xf32> -> vector<128x128xf32>
    %c0_29 = arith.constant 0 : index
    %c0_30 = arith.constant 0 : index
    %29 = vector.load %arg9[%c0_29, %c0_30] : memref<128x1xf32, #tpu.memory_space<vmem>>, vector<128x1xf32>
    %30 = vector.broadcast %29 : vector<128x1xf32> to vector<128x128xf32>
    %31 = arith.addf %28, %30 : vector<128x128xf32>
    %cst_31 = arith.constant 0.000000e+00 : f32
    %32 = vector.broadcast %cst_31 : f32 to vector<128x128xf32>
    %33 = arith.maximumf %31, %32 : vector<128x128xf32>
    %c0_32 = arith.constant 0 : index
    %c0_33 = arith.constant 0 : index
    %34 = vector.load %arg10[%c0_32, %c0_33] : memref<8x128xf32, #tpu.memory_space<vmem>>, vector<8x128xf32>
    %cst_34 = arith.constant dense<0.000000e+00> : vector<8x128xf32>
    %35 = tpu.matmul %34, %33, %cst_34 {dimension_numbers = #tpu.dot_dimension_numbers<[1], [0], [0], [1], [0, 0, 1, 1], [], []>} : vector<8x128xf32>, vector<128x128xf32>, vector<8x128xf32> -> vector<8x128xf32>
    %c0_35 = arith.constant 0 : index
    %c0_36 = arith.constant 0 : index
    %36 = vector.load %arg11[%c0_35, %c0_36] : memref<8x1xf32, #tpu.memory_space<vmem>>, vector<8x1xf32>
    %37 = vector.broadcast %36 : vector<8x1xf32> to vector<8x128xf32>
    %38 = arith.addf %35, %37 : vector<8x128xf32>
    %c0_37 = arith.constant 0 : index
    %c0_38 = arith.constant 0 : index
    %39 = vector.load %arg12[%c0_37, %c0_38] : memref<8x128xf32, #tpu.memory_space<vmem>>, vector<8x128xf32>
    tpu.vector_store %arg12[%c0_37, %c0_38], %38 {strides = array<i32>} : memref<8x128xf32, #tpu.memory_space<vmem>>, vector<8x128xf32>,
    return
  }
  func.func @transform_0(%arg0: i32) -> (i32, i32) {
    %c0_i32 = arith.constant 0 : i32
    %c0_i32_0 = arith.constant 0 : i32
    return %c0_i32, %arg0 : i32, i32
  }
  func.func @transform_1(%arg0: i32) -> (i32, i32) {
    %c0_i32 = arith.constant 0 : i32
    %c0_i32_0 = arith.constant 0 : i32
    %c0_i32_1 = arith.constant 0 : i32
    return %c0_i32, %c0_i32_0 : i32, i32
  }
  func.func @transform_2(%arg0: i32) -> (i32, i32) {
    %c0_i32 = arith.constant 0 : i32
    %c0_i32_0 = arith.constant 0 : i32
    %c0_i32_1 = arith.constant 0 : i32
    return %c0_i32, %c0_i32_0 : i32, i32
  }
  func.func @transform_3(%arg0: i32) -> (i32, i32) {
    %c0_i32 = arith.constant 0 : i32
    %c0_i32_0 = arith.constant 0 : i32
    %c0_i32_1 = arith.constant 0 : i32
    return %c0_i32, %c0_i32_0 : i32, i32
  }
  func.func @transform_4(%arg0: i32) -> (i32, i32) {
    %c0_i32 = arith.constant 0 : i32
    %c0_i32_0 = arith.constant 0 : i32
    %c0_i32_1 = arith.constant 0 : i32
    return %c0_i32, %c0_i32_0 : i32, i32
  }
  func.func @transform_5(%arg0: i32) -> (i32, i32) {
    %c0_i32 = arith.constant 0 : i32
    %c0_i32_0 = arith.constant 0 : i32
    %c0_i32_1 = arith.constant 0 : i32
    return %c0_i32, %c0_i32_0 : i32, i32
  }
  func.func @transform_6(%arg0: i32) -> (i32, i32) {
    %c0_i32 = arith.constant 0 : i32
    %c0_i32_0 = arith.constant 0 : i32
    %c0_i32_1 = arith.constant 0 : i32
    return %c0_i32, %c0_i32_0 : i32, i32
  }
  func.func @transform_7(%arg0: i32) -> (i32, i32) {
    %c0_i32 = arith.constant 0 : i32
    %c0_i32_0 = arith.constant 0 : i32
    %c0_i32_1 = arith.constant 0 : i32
    return %c0_i32, %c0_i32_0 : i32, i32
  }
  func.func @transform_8(%arg0: i32) -> (i32, i32) {
    %c0_i32 = arith.constant 0 : i32
    %c0_i32_0 = arith.constant 0 : i32
    %c0_i32_1 = arith.constant 0 : i32
    return %c0_i32, %c0_i32_0 : i32, i32
  }
  func.func @transform_9(%arg0: i32) -> (i32, i32) {
    %c0_i32 = arith.constant 0 : i32
    %c0_i32_0 = arith.constant 0 : i32
    %c0_i32_1 = arith.constant 0 : i32
    return %c0_i32, %c0_i32_0 : i32, i32
  }
  func.func @transform_10(%arg0: i32) -> (i32, i32) {
    %c0_i32 = arith.constant 0 : i32
    %c0_i32_0 = arith.constant 0 : i32
    %c0_i32_1 = arith.constant 0 : i32
    return %c0_i32, %c0_i32_0 : i32, i32
  }
  func.func @transform_11(%arg0: i32) -> (i32, i32) {
    %c0_i32 = arith.constant 0 : i32
    %c0_i32_0 = arith.constant 0 : i32
    return %c0_i32, %arg0 : i32, i32
  }
}

</mosaic_0001>

<llo_original>
// kernel: mycnn_forward.1
$region0: #{mycnn_forward.1}
  #allocation0 [shape = 'u32[]', space=smem, size = 0x4, offset = 0x4, fixed_abs, tag = 'smem constant byte address 0x4 - core index']
  #allocation1 [shape = 'u32[144,128]{1,0:T(1,128)}', space=vmem, size = 0x12000, scoped, tag = 'internal scratch']
  #allocation2 [shape = 'bf16[576,128]{1,0:T(16,128)(2,1)}', space=vmem, size = 0x24000, scoped, tag = 'scratch operand']
  #allocation3 [shape = 'bf16[768,128]{1,0:T(16,128)(2,1)}', space=vmem, size = 0x30000, scoped, tag = 'scratch operand']
  %s0 = inlined_call_operand.vmem [shape: bf16[192,128], index: 0, kind: input, shape index: {}]
  %s1 = inlined_call_operand.vmem [shape: bf16[576,192], index: 1, kind: input, shape index: {}]
  %s2 = inlined_call_operand.vmem [shape: bf16[576,192], index: 2, kind: input, shape index: {}]
  %s3 = inlined_call_operand.vmem [shape: f32[576,1], index: 3, kind: input, shape index: {}]
  %s4 = inlined_call_operand.vmem [shape: bf16[768,576], index: 4, kind: input, shape index: {}]
  %s5 = inlined_call_operand.vmem [shape: bf16[768,576], index: 5, kind: input, shape index: {}]
  %s6 = inlined_call_operand.vmem [shape: f32[768,1], index: 6, kind: input, shape index: {}]
  %s7 = inlined_call_operand.vmem [shape: bf16[128,768], index: 7, kind: input, shape index: {}]
  %s8 = inlined_call_operand.vmem [shape: f32[128,1], index: 8, kind: input, shape index: {}]
  %s9 = inlined_call_operand.vmem [shape: f32[8,128], index: 9, kind: input, shape index: {}]
  %s10 = inlined_call_operand.vmem [shape: f32[8,1], index: 10, kind: input, shape index: {}]
  %s11 = inlined_call_operand.vmem [shape: f32[8,128], index: 11, kind: output, shape index: {}]
  %s12 = sld [smem:[#allocation0]]
  $region54: #{mycnn_forward.1} parent=0
    _
  %s14 = ssub.s32 1, %s12
  %s15 = scalar_select 0, %s14, %s12
  // Predicated region
  $region2: #{mycnn_forward.1} parent=0 // pred_check
    _
  $region3: #{mycnn_forward.1} parent=0 // pred_check_branch
    %17 = sbr.rel (0) target = $region5
  $region4: #{mycnn_forward.1} parent=0 // pred_region
    _
  $region5: #{mycnn_forward.1} parent=0 // pred_fallthru
    _
  // Predicated region
  $region6: #{mycnn_forward.1} parent=0 // pred_check
    _
  $region7: #{mycnn_forward.1} parent=0 // pred_check_branch
    %19 = sbr.rel (0) target = $region9
  $region8: #{mycnn_forward.1} parent=0 // pred_region
    _
  $region9: #{mycnn_forward.1} parent=0 // pred_fallthru
    _
  // Predicated region
  $region10: #{mycnn_forward.1} parent=0 // pred_check
    _
  $region11: #{mycnn_forward.1} parent=0 // pred_check_branch
    %21 = sbr.rel (0) target = $region13
  $region12: #{mycnn_forward.1} parent=0 // pred_region
    _
  $region13: #{mycnn_forward.1} parent=0 // pred_fallthru
    _
  // Predicated region
  $region14: #{mycnn_forward.1} parent=0 // pred_check
    _
  $region15: #{mycnn_forward.1} parent=0 // pred_check_branch
    %23 = sbr.rel (0) target = $region17
  $region16: #{mycnn_forward.1} parent=0 // pred_region
    _
  $region17: #{mycnn_forward.1} parent=0 // pred_fallthru
    _
  // Predicated region
  $region18: #{mycnn_forward.1} parent=0 // pred_check
    _
  $region19: #{mycnn_forward.1} parent=0 // pred_check_branch
    %25 = sbr.rel (0) target = $region21
  $region20: #{mycnn_forward.1} parent=0 // pred_region
    _
  $region21: #{mycnn_forward.1} parent=0 // pred_fallthru
    _
  // Predicated region
  $region22: #{mycnn_forward.1} parent=0 // pred_check
    _
  $region23: #{mycnn_forward.1} parent=0 // pred_check_branch
    %27 = sbr.rel (0) target = $region25
  $region24: #{mycnn_forward.1} parent=0 // pred_region
    _
  $region25: #{mycnn_forward.1} parent=0 // pred_fallthru
    _
  // Predicated region
  $region26: #{mycnn_forward.1} parent=0 // pred_check
    _
  $region27: #{mycnn_forward.1} parent=0 // pred_check_branch
    %29 = sbr.rel (0) target = $region29
  $region28: #{mycnn_forward.1} parent=0 // pred_region
    _
  $region29: #{mycnn_forward.1} parent=0 // pred_fallthru
    _
  // Predicated region
  $region30: #{mycnn_forward.1} parent=0 // pred_check
    _
  $region31: #{mycnn_forward.1} parent=0 // pred_check_branch
    %31 = sbr.rel (0) target = $region33
  $region32: #{mycnn_forward.1} parent=0 // pred_region
    _
  $region33: #{mycnn_forward.1} parent=0 // pred_fallthru
    _
  // Predicated region
  $region34: #{mycnn_forward.1} parent=0 // pred_check
    _
  $region35: #{mycnn_forward.1} parent=0 // pred_check_branch
    %33 = sbr.rel (0) target = $region37
  $region36: #{mycnn_forward.1} parent=0 // pred_region
    _
  $region37: #{mycnn_forward.1} parent=0 // pred_fallthru
    _
  // Predicated region
  $region38: #{mycnn_forward.1} parent=0 // pred_check
    _
  $region39: #{mycnn_forward.1} parent=0 // pred_check_branch
    %35 = sbr.rel (0) target = $region41
  $region40: #{mycnn_forward.1} parent=0 // pred_region
    _
  $region41: #{mycnn_forward.1} parent=0 // pred_fallthru
    _
  // Predicated region
  $region42: #{mycnn_forward.1} parent=0 // pred_check
    _
  $region43: #{mycnn_forward.1} parent=0 // pred_check_branch
    %37 = sbr.rel (0) target = $region45
  $region44: #{mycnn_forward.1} parent=0 // pred_region
    _
  $region45: #{mycnn_forward.1} parent=0 // pred_fallthru
    _
  %v39 = vld [vmem:[%s0] sm:$0xf]
  %v40 = vld [vmem:[%s0 + $0x4] sm:$0xf]
  %v41 = vld [vmem:[%s0 + $0x8] sm:$0xf]
  %v42 = vld [vmem:[%s0 + $0xc] sm:$0xf]
  %v43 = vld [vmem:[%s0 + $0x10] sm:$0xf]
  %v44 = vld [vmem:[%s0 + $0x14] sm:$0xf]
  %v45 = vld [vmem:[%s0 + $0x18] sm:$0xf]
  %v46 = vld [vmem:[%s0 + $0x1c] sm:$0xf]
  %v47 = vld [vmem:[%s0 + $0x20] sm:$0xf]
  %v48 = vld [vmem:[%s0 + $0x24] sm:$0xf]
  %v49 = vld [vmem:[%s0 + $0x28] sm:$0xf]
  %v50 = vld [vmem:[%s0 + $0x2c] sm:$0xf]
  %v51 = vld [vmem:[%s0 + $0x30] sm:$0xf]
  %v52 = vld [vmem:[%s0 + $0x34] sm:$0xf]
  %v53 = vld [vmem:[%s0 + $0x38] sm:$0xf]
  %v54 = vld [vmem:[%s0 + $0x3c] sm:$0xf]
  %v55 = vld [vmem:[%s0 + $0x40] sm:$0xf]
  %v56 = vld [vmem:[%s0 + $0x44] sm:$0xf]
  %v57 = vld [vmem:[%s0 + $0x48] sm:$0xf]
  %v58 = vld [vmem:[%s0 + $0x4c] sm:$0xf]
  %v59 = vld [vmem:[%s0 + $0x50] sm:$0xf]
  %v60 = vld [vmem:[%s0 + $0x54] sm:$0xf]
  %v61 = vld [vmem:[%s0 + $0x58] sm:$0xf]
  %v62 = vld [vmem:[%s0 + $0x5c] sm:$0xf]
  %v63 = vld [vmem:[%s1] sm:$0xff]
  %v64 = vld [vmem:[%s1 + $0x8] sm:$0xff]
  %v65 = vld [vmem:[%s1 + $0x10] sm:$0xff]
  %v66 = vld [vmem:[%s1 + $0x18] sm:$0xff]
  %v67 = vld [vmem:[%s1 + $0x20] sm:$0xff]
  %v68 = vld [vmem:[%s1 + $0x28] sm:$0xff]
  %v69 = vld [vmem:[%s1 + $0x30] sm:$0xff]
  %v70 = vld [vmem:[%s1 + $0x38] sm:$0xff]
  %v71 = vld [vmem:[%s1 + $0x40] sm:$0xff]
  %v72 = vld [vmem:[%s1 + $0x48] sm:$0xff]
  %v73 = vld [vmem:[%s1 + $0x50] sm:$0xff]
  %v74 = vld [vmem:[%s1 + $0x58] sm:$0xff]
  %v75 = vld [vmem:[%s1 + $0x60] sm:$0xff]
  %v76 = vld [vmem:[%s1 + $0x68] sm:$0xff]
  %v77 = vld [vmem:[%s1 + $0x70] sm:$0xff]
  %v78 = vld [vmem:[%s1 + $0x78] sm:$0xff]
  %v79 = vld [vmem:[%s1 + $0x80] sm:$0xff]
  %v80 = vld [vmem:[%s1 + $0x88] sm:$0xff]
  %v81 = vld [vmem:[%s1 + $0x90] sm:$0xff]
  %v82 = vld [vmem:[%s1 + $0x98] sm:$0xff]
  %v83 = vld [vmem:[%s1 + $0xa0] sm:$0xff]
  %v84 = vld [vmem:[%s1 + $0xa8] sm:$0xff]
  %v85 = vld [vmem:[%s1 + $0xb0] sm:$0xff]
  %v86 = vld [vmem:[%s1 + $0xb8] sm:$0xff]
  %v87 = vld [vmem:[%s1 + $0xc0] sm:$0xff]
  %v88 = vld [vmem:[%s1 + $0xc8] sm:$0xff]
  %v89 = vld [vmem:[%s1 + $0xd0] sm:$0xff]
  %v90 = vld [vmem:[%s1 + $0xd8] sm:$0xff]
  %v91 = vld [vmem:[%s1 + $0xe0] sm:$0xff]
  %v92 = vld [vmem:[%s1 + $0xe8] sm:$0xff]
  %v93 = vld [vmem:[%s1 + $0xf0] sm:$0xff]
  %v94 = vld [vmem:[%s1 + $0xf8] sm:$0xff]
  %v95 = vld [vmem:[%s1 + $0x100] sm:$0xff]
  %v96 = vld [vmem:[%s1 + $0x108] sm:$0xff]
  %v97 = vld [vmem:[%s1 + $0x110] sm:$0xff]
  %v98 = vld [vmem:[%s1 + $0x118] sm:$0xff]
  %v99 = vld [vmem:[%s1 + $0x120] sm:$0xff]
  %v100 = vld [vmem:[%s1 + $0x128] sm:$0xff]
  %v101 = vld [vmem:[%s1 + $0x130] sm:$0xff]
  %v102 = vld [vmem:[%s1 + $0x138] sm:$0xff]
  %v103 = vld [vmem:[%s1 + $0x140] sm:$0xff]
  %v104 = vld [vmem:[%s1 + $0x148] sm:$0xff]
  %v105 = vld [vmem:[%s1 + $0x150] sm:$0xff]
  %v106 = vld [vmem:[%s1 + $0x158] sm:$0xff]
  %v107 = vld [vmem:[%s1 + $0x160] sm:$0xff]
  %v108 = vld [vmem:[%s1 + $0x168] sm:$0xff]
  %v109 = vld [vmem:[%s1 + $0x170] sm:$0xff]
  %v110 = vld [vmem:[%s1 + $0x178] sm:$0xff]
  %v111 = vld [vmem:[%s1 + $0x180] sm:$0xff]
  %v112 = vld [vmem:[%s1 + $0x188] sm:$0xff]
  %v113 = vld [vmem:[%s1 + $0x190] sm:$0xff]
  %v114 = vld [vmem:[%s1 + $0x198] sm:$0xff]
  %v115 = vld [vmem:[%s1 + $0x1a0] sm:$0xff]
  %v116 = vld [vmem:[%s1 + $0x1a8] sm:$0xff]
  %v117 = vld [vmem:[%s1 + $0x1b0] sm:$0xff]
  %v118 = vld [vmem:[%s1 + $0x1b8] sm:$0xff]
  %v119 = vld [vmem:[%s1 + $0x1c0] sm:$0xff]
  %v120 = vld [vmem:[%s1 + $0x1c8] sm:$0xff]
  %v121 = vld [vmem:[%s1 + $0x1d0] sm:$0xff]
  %v122 = vld [vmem:[%s1 + $0x1d8] sm:$0xff]
  %v123 = vld [vmem:[%s1 + $0x1e0] sm:$0xff]
  %v124 = vld [vmem:[%s1 + $0x1e8] sm:$0xff]
  %v125 = vld [vmem:[%s1 + $0x1f0] sm:$0xff]
  %v126 = vld [vmem:[%s1 + $0x1f8] sm:$0xff]
  %v127 = vld [vmem:[%s1 + $0x200] sm:$0xff]
  %v128 = vld [vmem:[%s1 + $0x208] sm:$0xff]
  %v129 = vld [vmem:[%s1 + $0x210] sm:$0xff]
  %v130 = vld [vmem:[%s1 + $0x218] sm:$0xff]
  %v131 = vld [vmem:[%s1 + $0x220] sm:$0xff]
  %v132 = vld [vmem:[%s1 + $0x228] sm:$0xff]
  %v133 = vld [vmem:[%s1 + $0x230] sm:$0xff]
  %v134 = vld [vmem:[%s1 + $0x238] sm:$0xff]
  %v207 = vunpack.c.l.b16 %v63
  %v208 = vunpack.c.h.b16 %v63
  %v209 = vunpack.c.l.b16 %v64
  %v210 = vunpack.c.h.b16 %v64
  %v211 = vunpack.c.l.b16 %v65
  %v212 = vunpack.c.h.b16 %v65
  %v213 = vunpack.c.l.b16 %v66
  %v214 = vunpack.c.h.b16 %v66
  %v215 = vunpack.c.l.b16 %v67
  %v216 = vunpack.c.h.b16 %v67
  %v217 = vunpack.c.l.b16 %v68
  %v218 = vunpack.c.h.b16 %v68
  %v219 = vunpack.c.l.b16 %v69
  %v220 = vunpack.c.h.b16 %v69
  %v221 = vunpack.c.l.b16 %v70
  %v222 = vunpack.c.h.b16 %v70
  %v223 = vunpack.c.l.b16 %v71
  %v224 = vunpack.c.h.b16 %v71
  %v225 = vunpack.c.l.b16 %v72
  %v226 = vunpack.c.h.b16 %v72
  %v227 = vunpack.c.l.b16 %v73
  %v228 = vunpack.c.h.b16 %v73
  %v229 = vunpack.c.l.b16 %v74
  %v230 = vunpack.c.h.b16 %v74
  %v231 = vunpack.c.l.b16 %v75
  %v232 = vunpack.c.h.b16 %v75
  %v233 = vunpack.c.l.b16 %v76
  %v234 = vunpack.c.h.b16 %v76
  %v235 = vunpack.c.l.b16 %v77
  %v236 = vunpack.c.h.b16 %v77
  %v237 = vunpack.c.l.b16 %v78
  %v238 = vunpack.c.h.b16 %v78
  %v239 = vunpack.c.l.b16 %v79
  %v240 = vunpack.c.h.b16 %v79
  %v241 = vunpack.c.l.b16 %v80
  %v242 = vunpack.c.h.b16 %v80
  %v243 = vunpack.c.l.b16 %v81
  %v244 = vunpack.c.h.b16 %v81
  %v245 = vunpack.c.l.b16 %v82
  %v246 = vunpack.c.h.b16 %v82
  %v247 = vunpack.c.l.b16 %v83
  %v248 = vunpack.c.h.b16 %v83
  %v249 = vunpack.c.l.b16 %v84
  %v250 = vunpack.c.h.b16 %v84
  %v251 = vunpack.c.l.b16 %v85
  %v252 = vunpack.c.h.b16 %v85
  %v253 = vunpack.c.l.b16 %v86
  %v254 = vunpack.c.h.b16 %v86
  %v255 = vunpack.c.l.b16 %v87
  %v256 = vunpack.c.h.b16 %v87
  %v257 = vunpack.c.l.b16 %v88
  %v258 = vunpack.c.h.b16 %v88
  %v259 = vunpack.c.l.b16 %v89
  %v260 = vunpack.c.h.b16 %v89
  %v261 = vunpack.c.l.b16 %v90
  %v262 = vunpack.c.h.b16 %v90
  %v263 = vunpack.c.l.b16 %v91
  %v264 = vunpack.c.h.b16 %v91
  %v265 = vunpack.c.l.b16 %v92
  %v266 = vunpack.c.h.b16 %v92
  %v267 = vunpack.c.l.b16 %v93
  %v268 = vunpack.c.h.b16 %v93
  %v269 = vunpack.c.l.b16 %v94
  %v270 = vunpack.c.h.b16 %v94
  %v271 = vunpack.c.l.b16 %v95
  %v272 = vunpack.c.h.b16 %v95
  %v273 = vunpack.c.l.b16 %v96
  %v274 = vunpack.c.h.b16 %v96
  %v275 = vunpack.c.l.b16 %v97
  %v276 = vunpack.c.h.b16 %v97
  %v277 = vunpack.c.l.b16 %v98
  %v278 = vunpack.c.h.b16 %v98
  %v279 = vunpack.c.l.b16 %v99
  %v280 = vunpack.c.h.b16 %v99
  %v281 = vunpack.c.l.b16 %v100
  %v282 = vunpack.c.h.b16 %v100
  %v283 = vunpack.c.l.b16 %v101
  %v284 = vunpack.c.h.b16 %v101
  %v285 = vunpack.c.l.b16 %v102
  %v286 = vunpack.c.h.b16 %v102
  %v287 = vunpack.c.l.b16 %v103
  %v288 = vunpack.c.h.b16 %v103
  %v289 = vunpack.c.l.b16 %v104
  %v290 = vunpack.c.h.b16 %v104
  %v291 = vunpack.c.l.b16 %v105
  %v292 = vunpack.c.h.b16 %v105
  %v293 = vunpack.c.l.b16 %v106
  %v294 = vunpack.c.h.b16 %v106
  %v295 = vunpack.c.l.b16 %v107
  %v296 = vunpack.c.h.b16 %v107
  %v297 = vunpack.c.l.b16 %v108
  %v298 = vunpack.c.h.b16 %v108
  %v299 = vunpack.c.l.b16 %v109
  %v300 = vunpack.c.h.b16 %v109
  %v301 = vunpack.c.l.b16 %v110
  %v302 = vunpack.c.h.b16 %v110
  %v303 = vunpack.c.l.b16 %v111
  %v304 = vunpack.c.h.b16 %v111
  %v305 = vunpack.c.l.b16 %v112
  %v306 = vunpack.c.h.b16 %v112
  %v307 = vunpack.c.l.b16 %v113
  %v308 = vunpack.c.h.b16 %v113
  %v309 = vunpack.c.l.b16 %v114
  %v310 = vunpack.c.h.b16 %v114
  %v311 = vunpack.c.l.b16 %v115
  %v312 = vunpack.c.h.b16 %v115
  %v313 = vunpack.c.l.b16 %v116
  %v314 = vunpack.c.h.b16 %v116
  %v315 = vunpack.c.l.b16 %v117
  %v316 = vunpack.c.h.b16 %v117
  %v317 = vunpack.c.l.b16 %v118
  %v318 = vunpack.c.h.b16 %v118
  %v319 = vunpack.c.l.b16 %v119
  %v320 = vunpack.c.h.b16 %v119
  %v321 = vunpack.c.l.b16 %v120
  %v322 = vunpack.c.h.b16 %v120
  %v323 = vunpack.c.l.b16 %v121
  %v324 = vunpack.c.h.b16 %v121
  %v325 = vunpack.c.l.b16 %v122
  %v326 = vunpack.c.h.b16 %v122
  %v327 = vunpack.c.l.b16 %v123
  %v328 = vunpack.c.h.b16 %v123
  %v329 = vunpack.c.l.b16 %v124
  %v330 = vunpack.c.h.b16 %v124
  %v331 = vunpack.c.l.b16 %v125
  %v332 = vunpack.c.h.b16 %v125
  %v333 = vunpack.c.l.b16 %v126
  %v334 = vunpack.c.h.b16 %v126
  %v335 = vunpack.c.l.b16 %v127
  %v336 = vunpack.c.h.b16 %v127
  %v337 = vunpack.c.l.b16 %v128
  %v338 = vunpack.c.h.b16 %v128
  %v339 = vunpack.c.l.b16 %v129
  %v340 = vunpack.c.h.b16 %v129
  %v341 = vunpack.c.l.b16 %v130
  %v342 = vunpack.c.h.b16 %v130
  %v343 = vunpack.c.l.b16 %v131
  %v344 = vunpack.c.h.b16 %v131
  %v345 = vunpack.c.l.b16 %v132
  %v346 = vunpack.c.h.b16 %v132
  %v347 = vunpack.c.l.b16 %v133
  %v348 = vunpack.c.h.b16 %v133
  %v349 = vunpack.c.l.b16 %v134
  %v350 = vunpack.c.h.b16 %v134
  %v351 = vpack.c.b16 %v209, %v207
  %v352 = vpack.c.b16 %v210, %v208
  %v353 = vpack.c.b16 %v213, %v211
  %v354 = vpack.c.b16 %v214, %v212
  %v355 = vpack.c.b16 %v217, %v215
  %v356 = vpack.c.b16 %v218, %v216
  %v357 = vpack.c.b16 %v221, %v219
  %v358 = vpack.c.b16 %v222, %v220
  %v359 = vpack.c.b16 %v225, %v223
  %v360 = vpack.c.b16 %v226, %v224
  %v361 = vpack.c.b16 %v229, %v227
  %v362 = vpack.c.b16 %v230, %v228
  %v363 = vpack.c.b16 %v233, %v231
  %v364 = vpack.c.b16 %v234, %v232
  %v365 = vpack.c.b16 %v237, %v235
  %v366 = vpack.c.b16 %v238, %v236
  %v367 = vpack.c.b16 %v241, %v239
  %v368 = vpack.c.b16 %v242, %v240
  %v369 = vpack.c.b16 %v245, %v243
  %v370 = vpack.c.b16 %v246, %v244
  %v371 = vpack.c.b16 %v249, %v247
  %v372 = vpack.c.b16 %v250, %v248
  %v373 = vpack.c.b16 %v253, %v251
  %v374 = vpack.c.b16 %v254, %v252
  %v375 = vpack.c.b16 %v257, %v255
  %v376 = vpack.c.b16 %v258, %v256
  %v377 = vpack.c.b16 %v261, %v259
  %v378 = vpack.c.b16 %v262, %v260
  %v379 = vpack.c.b16 %v265, %v263
  %v380 = vpack.c.b16 %v266, %v264
  %v381 = vpack.c.b16 %v269, %v267
  %v382 = vpack.c.b16 %v270, %v268
  %v383 = vpack.c.b16 %v273, %v271
  %v384 = vpack.c.b16 %v274, %v272
  %v385 = vpack.c.b16 %v277, %v275
  %v386 = vpack.c.b16 %v278, %v276
  %v387 = vpack.c.b16 %v281, %v279
  %v388 = vpack.c.b16 %v282, %v280
  %v389 = vpack.c.b16 %v285, %v283
  %v390 = vpack.c.b16 %v286, %v284
  %v391 = vpack.c.b16 %v289, %v287
  %v392 = vpack.c.b16 %v290, %v288
  %v393 = vpack.c.b16 %v293, %v291
  %v394 = vpack.c.b16 %v294, %v292
  %v395 = vpack.c.b16 %v297, %v295
  %v396 = vpack.c.b16 %v298, %v296
  %v397 = vpack.c.b16 %v301, %v299
  %v398 = vpack.c.b16 %v302, %v300
  %v399 = vpack.c.b16 %v305, %v303
  %v400 = vpack.c.b16 %v306, %v304
  %v401 = vpack.c.b16 %v309, %v307
  %v402 = vpack.c.b16 %v310, %v308
  %v403 = vpack.c.b16 %v313, %v311
  %v404 = vpack.c.b16 %v314, %v312
  %v405 = vpack.c.b16 %v317, %v315
  %v406 = vpack.c.b16 %v318, %v316
  %v407 = vpack.c.b16 %v321, %v319
  %v408 = vpack.c.b16 %v322, %v320
  %v409 = vpack.c.b16 %v325, %v323
  %v410 = vpack.c.b16 %v326, %v324
  %v411 = vpack.c.b16 %v329, %v327
  %v412 = vpack.c.b16 %v330, %v328
  %v413 = vpack.c.b16 %v333, %v331
  %v414 = vpack.c.b16 %v334, %v332
  %v415 = vpack.c.b16 %v337, %v335
  %v416 = vpack.c.b16 %v338, %v336
  %v417 = vpack.c.b16 %v341, %v339
  %v418 = vpack.c.b16 %v342, %v340
  %v419 = vpack.c.b16 %v345, %v343
  %v420 = vpack.c.b16 %v346, %v344
  %v421 = vpack.c.b16 %v349, %v347
  %v422 = vpack.c.b16 %v350, %v348
  %v483 = vunpack.c.l.b16 %v39
  %v484 = vunpack.c.l.b16 %v40
  %v485 = vunpack.c.l.b16 %v41
  %v486 = vunpack.c.l.b16 %v42
  %v487 = vunpack.c.l.b16 %v43
  %v488 = vunpack.c.l.b16 %v44
  %v489 = vunpack.c.l.b16 %v45
  %v490 = vunpack.c.l.b16 %v46
  %v491 = vunpack.c.l.b16 %v47
  %v492 = vunpack.c.l.b16 %v48
  %v493 = vunpack.c.l.b16 %v49
  %v494 = vunpack.c.l.b16 %v50
  %v495 = vunpack.c.l.b16 %v51
  %v496 = vunpack.c.l.b16 %v52
  %v497 = vunpack.c.l.b16 %v53
  %v498 = vunpack.c.l.b16 %v54
  %v499 = vunpack.c.l.b16 %v55
  %v500 = vunpack.c.l.b16 %v56
  %v501 = vunpack.c.l.b16 %v57
  %v502 = vunpack.c.l.b16 %v58
  %v503 = vunpack.c.l.b16 %v59
  %v504 = vunpack.c.l.b16 %v60
  %v505 = vunpack.c.l.b16 %v61
  %v506 = vunpack.c.l.b16 %v62
  %v507 = vpack.c.b16 %v484, %v483
  %v508 = vpack.c.b16 %v486, %v485
  %v509 = vpack.c.b16 %v488, %v487
  %v510 = vpack.c.b16 %v490, %v489
  %v511 = vpack.c.b16 %v492, %v491
  %v512 = vpack.c.b16 %v494, %v493
  %v513 = vpack.c.b16 %v496, %v495
  %v514 = vpack.c.b16 %v498, %v497
  %v515 = vpack.c.b16 %v500, %v499
  %v516 = vpack.c.b16 %v502, %v501
  %v517 = vpack.c.b16 %v504, %v503
  %v518 = vpack.c.b16 %v506, %v505
  %vm531 = vcmask 523264
  %v533 = vsel %vm531, %v352, 0
  %v536 = vsel %vm531, %v354, 0
  %v539 = vsel %vm531, %v356, 0
  %v542 = vsel %vm531, %v358, 0
  %v545 = vsel %vm531, %v360, 0
  %v548 = vsel %vm531, %v362, 0
  %v551 = vsel %vm531, %v364, 0
  %v554 = vsel %vm531, %v366, 0
  %v557 = vsel %vm531, %v368, 0
  %v560 = vsel %vm531, %v370, 0
  %v563 = vsel %vm531, %v372, 0
  %v566 = vsel %vm531, %v374, 0
  %v569 = vsel %vm531, %v376, 0
  %v572 = vsel %vm531, %v378, 0
  %v575 = vsel %vm531, %v380, 0
  %v578 = vsel %vm531, %v382, 0
  %v581 = vsel %vm531, %v384, 0
  %v584 = vsel %vm531, %v386, 0
  %v587 = vsel %vm531, %v388, 0
  %v590 = vsel %vm531, %v390, 0
  %v593 = vsel %vm531, %v392, 0
  %v596 = vsel %vm531, %v394, 0
  %v599 = vsel %vm531, %v396, 0
  %v602 = vsel %vm531, %v398, 0
  %v605 = vsel %vm531, %v400, 0
  %v608 = vsel %vm531, %v402, 0
  %v611 = vsel %vm531, %v404, 0
  %v614 = vsel %vm531, %v406, 0
  %v617 = vsel %vm531, %v408, 0
  %v620 = vsel %vm531, %v410, 0
  %v623 = vsel %vm531, %v412, 0
  %v626 = vsel %vm531, %v414, 0
  %v629 = vsel %vm531, %v416, 0
  %v632 = vsel %vm531, %v418, 0
  %v635 = vsel %vm531, %v420, 0
  %v638 = vsel %vm531, %v422, 0
  %640 = vmatprep.subr.bf16.mxu0 0
  %641 = vmatpush1.bf16.msra.mxu0 %v507
  %642 = vmatprep.subr.bf16.mxu0 0
  %643 = vmatpush1.bf16.msra.mxu0 %v508
  %644 = vmatprep.subr.bf16.mxu0 0
  %645 = vmatpush1.bf16.msra.mxu0 %v509
  %646 = vmatprep.subr.bf16.mxu0 0
  %647 = vmatpush1.bf16.msra.mxu0 %v510
  %648 = vmatprep.subr.bf16.mxu0 0
  %649 = vmatpush1.bf16.msra.mxu0 %v511
  %650 = vmatprep.subr.bf16.mxu0 0
  %651 = vmatpush1.bf16.msra.mxu0 %v512
  %652 = vmatprep.subr.bf16.mxu0 0
  %653 = vmatpush1.bf16.msra.mxu0 %v513
  %654 = vmatprep.subr.bf16.mxu0 0
  %655 = vmatpush1.bf16.msra.mxu0 %v514
  %656 = vmatprep.subr.bf16.mxu0 0
  %657 = vmatpush1.bf16.msra.mxu0 %v515
  %658 = vmatprep.subr.bf16.mxu0 0
  %659 = vmatpush1.bf16.msra.mxu0 %v516
  %660 = vmatprep.subr.bf16.mxu0 0
  %661 = vmatpush1.bf16.msra.mxu0 %v517
  %662 = vmatprep.subr.bf16.mxu0 0
  %663 = vmatpush1.bf16.msra.mxu0 %v518
  %664 = vmatprep.subr.bf16.mxu0 0
  %665 = vmatpush1.bf16.msra.mxu0 0
  %666 = vmatprep.subr.bf16.mxu0 0
  %667 = vmatpush1.bf16.msra.mxu0 0
  %668 = vmatprep.subr.bf16.mxu0 0
  %669 = vmatpush1.bf16.msra.mxu0 0
  %670 = vmatprep.subr.bf16.mxu0 0
  %671 = vmatpush1.bf16.msra.mxu0 0
  %672 = vmatprep.mubr.bf16.mxu0 %v533
  %673 = vmatmul.mubr.bf16.gmra.mrb[0].mxu0 %v351
  %v674 = vpop.f32.mrb[0].mxu0
  %v675 = vadd.f32 0.0, %v674
  %v676 = vpop.f32.mrb[0].mxu0
  %v677 = vpop.f32.mrb[0].mxu0
  %v678 = vadd.f32 0.0, %v677
  %v679 = vpop.f32.mrb[0].mxu0
  %680 = vmatprep.mubr.bf16.mxu0 %v536
  %681 = vmatmul.mubr.bf16.gmra.mrb[0].mxu0 %v353
  %v682 = vpop.f32.mrb[0].mxu0
  %v683 = vadd.f32 0.0, %v682
  %v684 = vpop.f32.mrb[0].mxu0
  %v685 = vpop.f32.mrb[0].mxu0
  %v686 = vadd.f32 0.0, %v685
  %v687 = vpop.f32.mrb[0].mxu0
  %688 = vmatprep.mubr.bf16.mxu0 %v539
  %689 = vmatmul.mubr.bf16.gmra.mrb[0].mxu0 %v355
  %v690 = vpop.f32.mrb[0].mxu0
  %v691 = vadd.f32 0.0, %v690
  %v692 = vpop.f32.mrb[0].mxu0
  %v693 = vpop.f32.mrb[0].mxu0
  %v694 = vadd.f32 0.0, %v693
  %v695 = vpop.f32.mrb[0].mxu0
  %696 = vmatprep.mubr.bf16.mxu0 %v542
  %697 = vmatmul.mubr.bf16.gmra.mrb[0].mxu0 %v357
  %v698 = vpop.f32.mrb[0].mxu0
  %v699 = vadd.f32 0.0, %v698
  %v700 = vpop.f32.mrb[0].mxu0
  %v701 = vpop.f32.mrb[0].mxu0
  %v702 = vadd.f32 0.0, %v701
  %v703 = vpop.f32.mrb[0].mxu0
  %704 = vmatprep.mubr.bf16.mxu0 %v545
  %705 = vmatmul.mubr.bf16.gmra.mrb[0].mxu0 %v359
  %v706 = vpop.f32.mrb[0].mxu0
  %v707 = vadd.f32 0.0, %v706
  %v708 = vpop.f32.mrb[0].mxu0
  %v709 = vpop.f32.mrb[0].mxu0
  %v710 = vadd.f32 0.0, %v709
  %v711 = vpop.f32.mrb[0].mxu0
  %712 = vmatprep.mubr.bf16.mxu0 %v548
  %713 = vmatmul.mubr.bf16.gmra.mrb[0].mxu0 %v361
  %v714 = vpop.f32.mrb[0].mxu0
  %v715 = vadd.f32 0.0, %v714
  %v716 = vpop.f32.mrb[0].mxu0
  %v717 = vpop.f32.mrb[0].mxu0
  %v718 = vadd.f32 0.0, %v717
  %v719 = vpop.f32.mrb[0].mxu0
  %720 = vmatprep.mubr.bf16.mxu0 %v551
  %721 = vmatmul.mubr.bf16.gmra.mrb[0].mxu0 %v363
  %v722 = vpop.f32.mrb[0].mxu0
  %v723 = vadd.f32 0.0, %v722
  %v724 = vpop.f32.mrb[0].mxu0
  %v725 = vpop.f32.mrb[0].mxu0
  %v726 = vadd.f32 0.0, %v725
  %v727 = vpop.f32.mrb[0].mxu0
  %728 = vmatprep.mubr.bf16.mxu0 %v554
  %729 = vmatmul.mubr.bf16.gmra.mrb[0].mxu0 %v365
  %v730 = vpop.f32.mrb[0].mxu0
  %v731 = vadd.f32 0.0, %v730
  %v732 = vpop.f32.mrb[0].mxu0
  %v733 = vpop.f32.mrb[0].mxu0
  %v734 = vadd.f32 0.0, %v733
  %v735 = vpop.f32.mrb[0].mxu0
  %736 = vmatprep.mubr.bf16.mxu0 %v557
  %737 = vmatmul.mubr.bf16.gmra.mrb[0].mxu0 %v367
  %v738 = vpop.f32.mrb[0].mxu0
  %v739 = vadd.f32 0.0, %v738
  %v740 = vpop.f32.mrb[0].mxu0
  %v741 = vpop.f32.mrb[0].mxu0
  %v742 = vadd.f32 0.0, %v741
  %v743 = vpop.f32.mrb[0].mxu0
  %744 = vmatprep.mubr.bf16.mxu0 %v560
  %745 = vmatmul.mubr.bf16.gmra.mrb[0].mxu0 %v369
  %v746 = vpop.f32.mrb[0].mxu0
  %v747 = vadd.f32 0.0, %v746
  %v748 = vpop.f32.mrb[0].mxu0
  %v749 = vpop.f32.mrb[0].mxu0
  %v750 = vadd.f32 0.0, %v749
  %v751 = vpop.f32.mrb[0].mxu0
  %752 = vmatprep.mubr.bf16.mxu0 %v563
  %753 = vmatmul.mubr.bf16.gmra.mrb[0].mxu0 %v371
  %v754 = vpop.f32.mrb[0].mxu0
  %v755 = vadd.f32 0.0, %v754
  %v756 = vpop.f32.mrb[0].mxu0
  %v757 = vpop.f32.mrb[0].mxu0
  %v758 = vadd.f32 0.0, %v757
  %v759 = vpop.f32.mrb[0].mxu0
  %760 = vmatprep.mubr.bf16.mxu0 %v566
  %761 = vmatmul.mubr.bf16.gmra.mrb[0].mxu0 %v373
  %v762 = vpop.f32.mrb[0].mxu0
  %v763 = vadd.f32 0.0, %v762
  %v764 = vpop.f32.mrb[0].mxu0
  %v765 = vpop.f32.mrb[0].mxu0
  %v766 = vadd.f32 0.0, %v765
  %v767 = vpop.f32.mrb[0].mxu0
  %768 = vmatprep.mubr.bf16.mxu0 %v569
  %769 = vmatmul.mubr.bf16.gmra.mrb[0].mxu0 %v375
  %v770 = vpop.f32.mrb[0].mxu0
  %v771 = vadd.f32 0.0, %v770
  %v772 = vpop.f32.mrb[0].mxu0
  %v773 = vpop.f32.mrb[0].mxu0
  %v774 = vadd.f32 0.0, %v773
  %v775 = vpop.f32.mrb[0].mxu0
  %776 = vmatprep.mubr.bf16.mxu0 %v572
  %777 = vmatmul.mubr.bf16.gmra.mrb[0].mxu0 %v377
  %v778 = vpop.f32.mrb[0].mxu0
  %v779 = vadd.f32 0.0, %v778
  %v780 = vpop.f32.mrb[0].mxu0
  %v781 = vpop.f32.mrb[0].mxu0
  %v782 = vadd.f32 0.0, %v781
  %v783 = vpop.f32.mrb[0].mxu0
  %784 = vmatprep.mubr.bf16.mxu0 %v575
  %785 = vmatmul.mubr.bf16.gmra.mrb[0].mxu0 %v379
  %v786 = vpop.f32.mrb[0].mxu0
  %v787 = vadd.f32 0.0, %v786
  %v788 = vpop.f32.mrb[0].mxu0
  %v789 = vpop.f32.mrb[0].mxu0
  %v790 = vadd.f32 0.0, %v789
  %v791 = vpop.f32.mrb[0].mxu0
  %792 = vmatprep.mubr.bf16.mxu0 %v578
  %793 = vmatmul.mubr.bf16.gmra.mrb[0].mxu0 %v381
  %v794 = vpop.f32.mrb[0].mxu0
  %v795 = vadd.f32 0.0, %v794
  %v796 = vpop.f32.mrb[0].mxu0
  %v797 = vpop.f32.mrb[0].mxu0
  %v798 = vadd.f32 0.0, %v797
  %v799 = vpop.f32.mrb[0].mxu0
  %800 = vmatprep.mubr.bf16.mxu0 %v581
  %801 = vmatmul.mubr.bf16.gmra.mrb[0].mxu0 %v383
  %v802 = vpop.f32.mrb[0].mxu0
  %v803 = vadd.f32 0.0, %v802
  %v804 = vpop.f32.mrb[0].mxu0
  %v805 = vpop.f32.mrb[0].mxu0
  %v806 = vadd.f32 0.0, %v805
  %v807 = vpop.f32.mrb[0].mxu0
  %808 = vmatprep.mubr.bf16.mxu0 %v584
  %809 = vmatmul.mubr.bf16.gmra.mrb[0].mxu0 %v385
  %v810 = vpop.f32.mrb[0].mxu0
  %v811 = vadd.f32 0.0, %v810
  %v812 = vpop.f32.mrb[0].mxu0
  %v813 = vpop.f32.mrb[0].mxu0
  %v814 = vadd.f32 0.0, %v813
  %v815 = vpop.f32.mrb[0].mxu0
  %816 = vmatprep.mubr.bf16.mxu0 %v587
  %817 = vmatmul.mubr.bf16.gmra.mrb[0].mxu0 %v387
  %v818 = vpop.f32.mrb[0].mxu0
  %v819 = vadd.f32 0.0, %v818
  %v820 = vpop.f32.mrb[0].mxu0
  %v821 = vpop.f32.mrb[0].mxu0
  %v822 = vadd.f32 0.0, %v821
  %v823 = vpop.f32.mrb[0].mxu0
  %824 = vmatprep.mubr.bf16.mxu0 %v590
  %825 = vmatmul.mubr.bf16.gmra.mrb[0].mxu0 %v389
  %v826 = vpop.f32.mrb[0].mxu0
  %v827 = vadd.f32 0.0, %v826
  %v828 = vpop.f32.mrb[0].mxu0
  %v829 = vpop.f32.mrb[0].mxu0
  %v830 = vadd.f32 0.0, %v829
  %v831 = vpop.f32.mrb[0].mxu0
  %832 = vmatprep.mubr.bf16.mxu0 %v593
  %833 = vmatmul.mubr.bf16.gmra.mrb[0].mxu0 %v391
  %v834 = vpop.f32.mrb[0].mxu0
  %v835 = vadd.f32 0.0, %v834
  %v836 = vpop.f32.mrb[0].mxu0
  %v837 = vpop.f32.mrb[0].mxu0
  %v838 = vadd.f32 0.0, %v837
  %v839 = vpop.f32.mrb[0].mxu0
  %840 = vmatprep.mubr.bf16.mxu0 %v596
  %841 = vmatmul.mubr.bf16.gmra.mrb[0].mxu0 %v393
  %v842 = vpop.f32.mrb[0].mxu0
  %v843 = vadd.f32 0.0, %v842
  %v844 = vpop.f32.mrb[0].mxu0
  %v845 = vpop.f32.mrb[0].mxu0
  %v846 = vadd.f32 0.0, %v845
  %v847 = vpop.f32.mrb[0].mxu0
  %848 = vmatprep.mubr.bf16.mxu0 %v599
  %849 = vmatmul.mubr.bf16.gmra.mrb[0].mxu0 %v395
  %v850 = vpop.f32.mrb[0].mxu0
  %v851 = vadd.f32 0.0, %v850
  %v852 = vpop.f32.mrb[0].mxu0
  %v853 = vpop.f32.mrb[0].mxu0
  %v854 = vadd.f32 0.0, %v853
  %v855 = vpop.f32.mrb[0].mxu0
  %856 = vmatprep.mubr.bf16.mxu0 %v602
  %857 = vmatmul.mubr.bf16.gmra.mrb[0].mxu0 %v397
  %v858 = vpop.f32.mrb[0].mxu0
  %v859 = vadd.f32 0.0, %v858
  %v860 = vpop.f32.mrb[0].mxu0
  %v861 = vpop.f32.mrb[0].mxu0
  %v862 = vadd.f32 0.0, %v861
  %v863 = vpop.f32.mrb[0].mxu0
  %864 = vmatprep.mubr.bf16.mxu0 %v605
  %865 = vmatmul.mubr.bf16.gmra.mrb[0].mxu0 %v399
  %v866 = vpop.f32.mrb[0].mxu0
  %v867 = vadd.f32 0.0, %v866
  %v868 = vpop.f32.mrb[0].mxu0
  %v869 = vpop.f32.mrb[0].mxu0
  %v870 = vadd.f32 0.0, %v869
  %v871 = vpop.f32.mrb[0].mxu0
  %872 = vmatprep.mubr.bf16.mxu0 %v608
  %873 = vmatmul.mubr.bf16.gmra.mrb[0].mxu0 %v401
  %v874 = vpop.f32.mrb[0].mxu0
  %v875 = vadd.f32 0.0, %v874
  %v876 = vpop.f32.mrb[0].mxu0
  %v877 = vpop.f32.mrb[0].mxu0
  %v878 = vadd.f32 0.0, %v877
  %v879 = vpop.f32.mrb[0].mxu0
  %880 = vmatprep.mubr.bf16.mxu0 %v611
  %881 = vmatmul.mubr.bf16.gmra.mrb[0].mxu0 %v403
  %v882 = vpop.f32.mrb[0].mxu0
  %v883 = vadd.f32 0.0, %v882
  %v884 = vpop.f32.mrb[0].mxu0
  %v885 = vpop.f32.mrb[0].mxu0
  %v886 = vadd.f32 0.0, %v885
  %v887 = vpop.f32.mrb[0].mxu0
  %888 = vmatprep.mubr.bf16.mxu0 %v614
  %889 = vmatmul.mubr.bf16.gmra.mrb[0].mxu0 %v405
  %v890 = vpop.f32.mrb[0].mxu0
  %v891 = vadd.f32 0.0, %v890
  %v892 = vpop.f32.mrb[0].mxu0
  %v893 = vpop.f32.mrb[0].mxu0
  %v894 = vadd.f32 0.0, %v893
  %v895 = vpop.f32.mrb[0].mxu0
  %896 = vmatprep.mubr.bf16.mxu0 %v617
  %897 = vmatmul.mubr.bf16.gmra.mrb[0].mxu0 %v407
  %v898 = vpop.f32.mrb[0].mxu0
  %v899 = vadd.f32 0.0, %v898
  %v900 = vpop.f32.mrb[0].mxu0
  %v901 = vpop.f32.mrb[0].mxu0
  %v902 = vadd.f32 0.0, %v901
  %v903 = vpop.f32.mrb[0].mxu0
  %904 = vmatprep.mubr.bf16.mxu0 %v620
  %905 = vmatmul.mubr.bf16.gmra.mrb[0].mxu0 %v409
  %v906 = vpop.f32.mrb[0].mxu0
  %v907 = vadd.f32 0.0, %v906
  %v908 = vpop.f32.mrb[0].mxu0
  %v909 = vpop.f32.mrb[0].mxu0
  %v910 = vadd.f32 0.0, %v909
  %v911 = vpop.f32.mrb[0].mxu0
  %912 = vmatprep.mubr.bf16.mxu0 %v623
  %913 = vmatmul.mubr.bf16.gmra.mrb[0].mxu0 %v411
  %v914 = vpop.f32.mrb[0].mxu0
  %v915 = vadd.f32 0.0, %v914
  %v916 = vpop.f32.mrb[0].mxu0
  %v917 = vpop.f32.mrb[0].mxu0
  %v918 = vadd.f32 0.0, %v917
  %v919 = vpop.f32.mrb[0].mxu0
  %920 = vmatprep.mubr.bf16.mxu0 %v626
  %921 = vmatmul.mubr.bf16.gmra.mrb[0].mxu0 %v413
  %v922 = vpop.f32.mrb[0].mxu0
  %v923 = vadd.f32 0.0, %v922
  %v924 = vpop.f32.mrb[0].mxu0
  %v925 = vpop.f32.mrb[0].mxu0
  %v926 = vadd.f32 0.0, %v925
  %v927 = vpop.f32.mrb[0].mxu0
  %928 = vmatprep.mubr.bf16.mxu0 %v629
  %929 = vmatmul.mubr.bf16.gmra.mrb[0].mxu0 %v415
  %v930 = vpop.f32.mrb[0].mxu0
  %v931 = vadd.f32 0.0, %v930
  %v932 = vpop.f32.mrb[0].mxu0
  %v933 = vpop.f32.mrb[0].mxu0
  %v934 = vadd.f32 0.0, %v933
  %v935 = vpop.f32.mrb[0].mxu0
  %936 = vmatprep.mubr.bf16.mxu0 %v632
  %937 = vmatmul.mubr.bf16.gmra.mrb[0].mxu0 %v417
  %v938 = vpop.f32.mrb[0].mxu0
  %v939 = vadd.f32 0.0, %v938
  %v940 = vpop.f32.mrb[0].mxu0
  %v941 = vpop.f32.mrb[0].mxu0
  %v942 = vadd.f32 0.0, %v941
  %v943 = vpop.f32.mrb[0].mxu0
  %944 = vmatprep.mubr.bf16.mxu0 %v635
  %945 = vmatmul.mubr.bf16.gmra.mrb[0].mxu0 %v419
  %v946 = vpop.f32.mrb[0].mxu0
  %v947 = vadd.f32 0.0, %v946
  %v948 = vpop.f32.mrb[0].mxu0
  %v949 = vpop.f32.mrb[0].mxu0
  %v950 = vadd.f32 0.0, %v949
  %v951 = vpop.f32.mrb[0].mxu0
  %952 = vmatprep.mubr.bf16.mxu0 %v638
  %953 = vmatmul.mubr.bf16.gmra.mrb[0].mxu0 %v421
  %v954 = vpop.f32.mrb[0].mxu0
  %v955 = vadd.f32 0.0, %v954
  %v956 = vpop.f32.mrb[0].mxu0
  %v957 = vpop.f32.mrb[0].mxu0
  %v958 = vadd.f32 0.0, %v957
  %v959 = vpop.f32.mrb[0].mxu0
  %960 = vdwg.mxu0
  %v961 = vld [vmem:[%s2] sm:$0xff]
  %v962 = vld [vmem:[%s2 + $0x8] sm:$0xff]
  %v963 = vld [vmem:[%s2 + $0x10] sm:$0xff]
  %v964 = vld [vmem:[%s2 + $0x18] sm:$0xff]
  %v965 = vld [vmem:[%s2 + $0x20] sm:$0xff]
  %v966 = vld [vmem:[%s2 + $0x28] sm:$0xff]
  %v967 = vld [vmem:[%s2 + $0x30] sm:$0xff]
  %v968 = vld [vmem:[%s2 + $0x38] sm:$0xff]
  %v969 = vld [vmem:[%s2 + $0x40] sm:$0xff]
  %v970 = vld [vmem:[%s2 + $0x48] sm:$0xff]
  %v971 = vld [vmem:[%s2 + $0x50] sm:$0xff]
  %v972 = vld [vmem:[%s2 + $0x58] sm:$0xff]
  %v973 = vld [vmem:[%s2 + $0x60] sm:$0xff]
  %v974 = vld [vmem:[%s2 + $0x68] sm:$0xff]
  %v975 = vld [vmem:[%s2 + $0x70] sm:$0xff]
  %v976 = vld [vmem:[%s2 + $0x78] sm:$0xff]
  %v977 = vld [vmem:[%s2 + $0x80] sm:$0xff]
  %v978 = vld [vmem:[%s2 + $0x88] sm:$0xff]
  %v979 = vld [vmem:[%s2 + $0x90] sm:$0xff]
  %v980 = vld [vmem:[%s2 + $0x98] sm:$0xff]
  %v981 = vld [vmem:[%s2 + $0xa0] sm:$0xff]
  %v982 = vld [vmem:[%s2 + $0xa8] sm:$0xff]
  %v983 = vld [vmem:[%s2 + $0xb0] sm:$0xff]
  %v984 = vld [vmem:[%s2 + $0xb8] sm:$0xff]
  %v985 = vld [vmem:[%s2 + $0xc0] sm:$0xff]
  %v986 = vld [vmem:[%s2 + $0xc8] sm:$0xff]
  %v987 = vld [vmem:[%s2 + $0xd0] sm:$0xff]
  %v988 = vld [vmem:[%s2 + $0xd8] sm:$0xff]
  %v989 = vld [vmem:[%s2 + $0xe0] sm:$0xff]
  %v990 = vld [vmem:[%s2 + $0xe8] sm:$0xff]
  %v991 = vld [vmem:[%s2 + $0xf0] sm:$0xff]
  %v992 = vld [vmem:[%s2 + $0xf8] sm:$0xff]
  %v993 = vld [vmem:[%s2 + $0x100] sm:$0xff]
  %v994 = vld [vmem:[%s2 + $0x108] sm:$0xff]
  %v995 = vld [vmem:[%s2 + $0x110] sm:$0xff]
  %v996 = vld [vmem:[%s2 + $0x118] sm:$0xff]
  %v997 = vld [vmem:[%s2 + $0x120] sm:$0xff]
  %v998 = vld [vmem:[%s2 + $0x128] sm:$0xff]
  %v999 = vld [vmem:[%s2 + $0x130] sm:$0xff]
  %v1000 = vld [vmem:[%s2 + $0x138] sm:$0xff]
  %v1001 = vld [vmem:[%s2 + $0x140] sm:$0xff]
  %v1002 = vld [vmem:[%s2 + $0x148] sm:$0xff]
  %v1003 = vld [vmem:[%s2 + $0x150] sm:$0xff]
  %v1004 = vld [vmem:[%s2 + $0x158] sm:$0xff]
  %v1005 = vld [vmem:[%s2 + $0x160] sm:$0xff]
  %v1006 = vld [vmem:[%s2 + $0x168] sm:$0xff]
  %v1007 = vld [vmem:[%s2 + $0x170] sm:$0xff]
  %v1008 = vld [vmem:[%s2 + $0x178] sm:$0xff]
  %v1009 = vld [vmem:[%s2 + $0x180] sm:$0xff]
  %v1010 = vld [vmem:[%s2 + $0x188] sm:$0xff]
  %v1011 = vld [vmem:[%s2 + $0x190] sm:$0xff]
  %v1012 = vld [vmem:[%s2 + $0x198] sm:$0xff]
  %v1013 = vld [vmem:[%s2 + $0x1a0] sm:$0xff]
  %v1014 = vld [vmem:[%s2 + $0x1a8] sm:$0xff]
  %v1015 = vld [vmem:[%s2 + $0x1b0] sm:$0xff]
  %v1016 = vld [vmem:[%s2 + $0x1b8] sm:$0xff]
  %v1017 = vld [vmem:[%s2 + $0x1c0] sm:$0xff]
  %v1018 = vld [vmem:[%s2 + $0x1c8] sm:$0xff]
  %v1019 = vld [vmem:[%s2 + $0x1d0] sm:$0xff]
  %v1020 = vld [vmem:[%s2 + $0x1d8] sm:$0xff]
  %v1021 = vld [vmem:[%s2 + $0x1e0] sm:$0xff]
  %v1022 = vld [vmem:[%s2 + $0x1e8] sm:$0xff]
  %v1023 = vld [vmem:[%s2 + $0x1f0] sm:$0xff]
  %v1024 = vld [vmem:[%s2 + $0x1f8] sm:$0xff]
  %v1025 = vld [vmem:[%s2 + $0x200] sm:$0xff]
  %v1026 = vld [vmem:[%s2 + $0x208] sm:$0xff]
  %v1027 = vld [vmem:[%s2 + $0x210] sm:$0xff]
  %v1028 = vld [vmem:[%s2 + $0x218] sm:$0xff]
  %v1029 = vld [vmem:[%s2 + $0x220] sm:$0xff]
  %v1030 = vld [vmem:[%s2 + $0x228] sm:$0xff]
  %v1031 = vld [vmem:[%s2 + $0x230] sm:$0xff]
  %v1032 = vld [vmem:[%s2 + $0x238] sm:$0xff]
  %v1105 = vunpack.c.l.b16 %v961
  %v1106 = vunpack.c.h.b16 %v961
  %v1107 = vunpack.c.l.b16 %v962
  %v1108 = vunpack.c.h.b16 %v962
  %v1109 = vunpack.c.l.b16 %v963
  %v1110 = vunpack.c.h.b16 %v963
  %v1111 = vunpack.c.l.b16 %v964
  %v1112 = vunpack.c.h.b16 %v964
  %v1113 = vunpack.c.l.b16 %v965
  %v1114 = vunpack.c.h.b16 %v965
  %v1115 = vunpack.c.l.b16 %v966
  %v1116 = vunpack.c.h.b16 %v966
  %v1117 = vunpack.c.l.b16 %v967
  %v1118 = vunpack.c.h.b16 %v967
  %v1119 = vunpack.c.l.b16 %v968
  %v1120 = vunpack.c.h.b16 %v968
  %v1121 = vunpack.c.l.b16 %v969
  %v1122 = vunpack.c.h.b16 %v969
  %v1123 = vunpack.c.l.b16 %v970
  %v1124 = vunpack.c.h.b16 %v970
  %v1125 = vunpack.c.l.b16 %v971
  %v1126 = vunpack.c.h.b16 %v971
  %v1127 = vunpack.c.l.b16 %v972
  %v1128 = vunpack.c.h.b16 %v972
  %v1129 = vunpack.c.l.b16 %v973
  %v1130 = vunpack.c.h.b16 %v973
  %v1131 = vunpack.c.l.b16 %v974
  %v1132 = vunpack.c.h.b16 %v974
  %v1133 = vunpack.c.l.b16 %v975
  %v1134 = vunpack.c.h.b16 %v975
  %v1135 = vunpack.c.l.b16 %v976
  %v1136 = vunpack.c.h.b16 %v976
  %v1137 = vunpack.c.l.b16 %v977
  %v1138 = vunpack.c.h.b16 %v977
  %v1139 = vunpack.c.l.b16 %v978
  %v1140 = vunpack.c.h.b16 %v978
  %v1141 = vunpack.c.l.b16 %v979
  %v1142 = vunpack.c.h.b16 %v979
  %v1143 = vunpack.c.l.b16 %v980
  %v1144 = vunpack.c.h.b16 %v980
  %v1145 = vunpack.c.l.b16 %v981
  %v1146 = vunpack.c.h.b16 %v981
  %v1147 = vunpack.c.l.b16 %v982
  %v1148 = vunpack.c.h.b16 %v982
  %v1149 = vunpack.c.l.b16 %v983
  %v1150 = vunpack.c.h.b16 %v983
  %v1151 = vunpack.c.l.b16 %v984
  %v1152 = vunpack.c.h.b16 %v984
  %v1153 = vunpack.c.l.b16 %v985
  %v1154 = vunpack.c.h.b16 %v985
  %v1155 = vunpack.c.l.b16 %v986
  %v1156 = vunpack.c.h.b16 %v986
  %v1157 = vunpack.c.l.b16 %v987
  %v1158 = vunpack.c.h.b16 %v987
  %v1159 = vunpack.c.l.b16 %v988
  %v1160 = vunpack.c.h.b16 %v988
  %v1161 = vunpack.c.l.b16 %v989
  %v1162 = vunpack.c.h.b16 %v989
  %v1163 = vunpack.c.l.b16 %v990
  %v1164 = vunpack.c.h.b16 %v990
  %v1165 = vunpack.c.l.b16 %v991
  %v1166 = vunpack.c.h.b16 %v991
  %v1167 = vunpack.c.l.b16 %v992
  %v1168 = vunpack.c.h.b16 %v992
  %v1169 = vunpack.c.l.b16 %v993
  %v1170 = vunpack.c.h.b16 %v993
  %v1171 = vunpack.c.l.b16 %v994
  %v1172 = vunpack.c.h.b16 %v994
  %v1173 = vunpack.c.l.b16 %v995
  %v1174 = vunpack.c.h.b16 %v995
  %v1175 = vunpack.c.l.b16 %v996
  %v1176 = vunpack.c.h.b16 %v996
  %v1177 = vunpack.c.l.b16 %v997
  %v1178 = vunpack.c.h.b16 %v997
  %v1179 = vunpack.c.l.b16 %v998
  %v1180 = vunpack.c.h.b16 %v998
  %v1181 = vunpack.c.l.b16 %v999
  %v1182 = vunpack.c.h.b16 %v999
  %v1183 = vunpack.c.l.b16 %v1000
  %v1184 = vunpack.c.h.b16 %v1000
  %v1185 = vunpack.c.l.b16 %v1001
  %v1186 = vunpack.c.h.b16 %v1001
  %v1187 = vunpack.c.l.b16 %v1002
  %v1188 = vunpack.c.h.b16 %v1002
  %v1189 = vunpack.c.l.b16 %v1003
  %v1190 = vunpack.c.h.b16 %v1003
  %v1191 = vunpack.c.l.b16 %v1004
  %v1192 = vunpack.c.h.b16 %v1004
  %v1193 = vunpack.c.l.b16 %v1005
  %v1194 = vunpack.c.h.b16 %v1005
  %v1195 = vunpack.c.l.b16 %v1006
  %v1196 = vunpack.c.h.b16 %v1006
  %v1197 = vunpack.c.l.b16 %v1007
  %v1198 = vunpack.c.h.b16 %v1007
  %v1199 = vunpack.c.l.b16 %v1008
  %v1200 = vunpack.c.h.b16 %v1008
  %v1201 = vunpack.c.l.b16 %v1009
  %v1202 = vunpack.c.h.b16 %v1009
  %v1203 = vunpack.c.l.b16 %v1010
  %v1204 = vunpack.c.h.b16 %v1010
  %v1205 = vunpack.c.l.b16 %v1011
  %v1206 = vunpack.c.h.b16 %v1011
  %v1207 = vunpack.c.l.b16 %v1012
  %v1208 = vunpack.c.h.b16 %v1012
  %v1209 = vunpack.c.l.b16 %v1013
  %v1210 = vunpack.c.h.b16 %v1013
  %v1211 = vunpack.c.l.b16 %v1014
  %v1212 = vunpack.c.h.b16 %v1014
  %v1213 = vunpack.c.l.b16 %v1015
  %v1214 = vunpack.c.h.b16 %v1015
  %v1215 = vunpack.c.l.b16 %v1016
  %v1216 = vunpack.c.h.b16 %v1016
  %v1217 = vunpack.c.l.b16 %v1017
  %v1218 = vunpack.c.h.b16 %v1017
  %v1219 = vunpack.c.l.b16 %v1018
  %v1220 = vunpack.c.h.b16 %v1018
  %v1221 = vunpack.c.l.b16 %v1019
  %v1222 = vunpack.c.h.b16 %v1019
  %v1223 = vunpack.c.l.b16 %v1020
  %v1224 = vunpack.c.h.b16 %v1020
  %v1225 = vunpack.c.l.b16 %v1021
  %v1226 = vunpack.c.h.b16 %v1021
  %v1227 = vunpack.c.l.b16 %v1022
  %v1228 = vunpack.c.h.b16 %v1022
  %v1229 = vunpack.c.l.b16 %v1023
  %v1230 = vunpack.c.h.b16 %v1023
  %v1231 = vunpack.c.l.b16 %v1024
  %v1232 = vunpack.c.h.b16 %v1024
  %v1233 = vunpack.c.l.b16 %v1025
  %v1234 = vunpack.c.h.b16 %v1025
  %v1235 = vunpack.c.l.b16 %v1026
  %v1236 = vunpack.c.h.b16 %v1026
  %v1237 = vunpack.c.l.b16 %v1027
  %v1238 = vunpack.c.h.b16 %v1027
  %v1239 = vunpack.c.l.b16 %v1028
  %v1240 = vunpack.c.h.b16 %v1028
  %v1241 = vunpack.c.l.b16 %v1029
  %v1242 = vunpack.c.h.b16 %v1029
  %v1243 = vunpack.c.l.b16 %v1030
  %v1244 = vunpack.c.h.b16 %v1030
  %v1245 = vunpack.c.l.b16 %v1031
  %v1246 = vunpack.c.h.b16 %v1031
  %v1247 = vunpack.c.l.b16 %v1032
  %v1248 = vunpack.c.h.b16 %v1032
  %v1249 = vpack.c.b16 %v1107, %v1105
  %v1250 = vpack.c.b16 %v1108, %v1106
  %v1251 = vpack.c.b16 %v1111, %v1109
  %v1252 = vpack.c.b16 %v1112, %v1110
  %v1253 = vpack.c.b16 %v1115, %v1113
  %v1254 = vpack.c.b16 %v1116, %v1114
  %v1255 = vpack.c.b16 %v1119, %v1117
  %v1256 = vpack.c.b16 %v1120, %v1118
  %v1257 = vpack.c.b16 %v1123, %v1121
  %v1258 = vpack.c.b16 %v1124, %v1122
  %v1259 = vpack.c.b16 %v1127, %v1125
  %v1260 = vpack.c.b16 %v1128, %v1126
  %v1261 = vpack.c.b16 %v1131, %v1129
  %v1262 = vpack.c.b16 %v1132, %v1130
  %v1263 = vpack.c.b16 %v1135, %v1133
  %v1264 = vpack.c.b16 %v1136, %v1134
  %v1265 = vpack.c.b16 %v1139, %v1137
  %v1266 = vpack.c.b16 %v1140, %v1138
  %v1267 = vpack.c.b16 %v1143, %v1141
  %v1268 = vpack.c.b16 %v1144, %v1142
  %v1269 = vpack.c.b16 %v1147, %v1145
  %v1270 = vpack.c.b16 %v1148, %v1146
  %v1271 = vpack.c.b16 %v1151, %v1149
  %v1272 = vpack.c.b16 %v1152, %v1150
  %v1273 = vpack.c.b16 %v1155, %v1153
  %v1274 = vpack.c.b16 %v1156, %v1154
  %v1275 = vpack.c.b16 %v1159, %v1157
  %v1276 = vpack.c.b16 %v1160, %v1158
  %v1277 = vpack.c.b16 %v1163, %v1161
  %v1278 = vpack.c.b16 %v1164, %v1162
  %v1279 = vpack.c.b16 %v1167, %v1165
  %v1280 = vpack.c.b16 %v1168, %v1166
  %v1281 = vpack.c.b16 %v1171, %v1169
  %v1282 = vpack.c.b16 %v1172, %v1170
  %v1283 = vpack.c.b16 %v1175, %v1173
  %v1284 = vpack.c.b16 %v1176, %v1174
  %v1285 = vpack.c.b16 %v1179, %v1177
  %v1286 = vpack.c.b16 %v1180, %v1178
  %v1287 = vpack.c.b16 %v1183, %v1181
  %v1288 = vpack.c.b16 %v1184, %v1182
  %v1289 = vpack.c.b16 %v1187, %v1185
  %v1290 = vpack.c.b16 %v1188, %v1186
  %v1291 = vpack.c.b16 %v1191, %v1189
  %v1292 = vpack.c.b16 %v1192, %v1190
  %v1293 = vpack.c.b16 %v1195, %v1193
  %v1294 = vpack.c.b16 %v1196, %v1194
  %v1295 = vpack.c.b16 %v1199, %v1197
  %v1296 = vpack.c.b16 %v1200, %v1198
  %v1297 = vpack.c.b16 %v1203, %v1201
  %v1298 = vpack.c.b16 %v1204, %v1202
  %v1299 = vpack.c.b16 %v1207, %v1205
  %v1300 = vpack.c.b16 %v1208, %v1206
  %v1301 = vpack.c.b16 %v1211, %v1209
  %v1302 = vpack.c.b16 %v1212, %v1210
  %v1303 = vpack.c.b16 %v1215, %v1213
  %v1304 = vpack.c.b16 %v1216, %v1214
  %v1305 = vpack.c.b16 %v1219, %v1217
  %v1306 = vpack.c.b16 %v1220, %v1218
  %v1307 = vpack.c.b16 %v1223, %v1221
  %v1308 = vpack.c.b16 %v1224, %v1222
  %v1309 = vpack.c.b16 %v1227, %v1225
  %v1310 = vpack.c.b16 %v1228, %v1226
  %v1311 = vpack.c.b16 %v1231, %v1229
  %v1312 = vpack.c.b16 %v1232, %v1230
  %v1313 = vpack.c.b16 %v1235, %v1233
  %v1314 = vpack.c.b16 %v1236, %v1234
  %v1315 = vpack.c.b16 %v1239, %v1237
  %v1316 = vpack.c.b16 %v1240, %v1238
  %v1317 = vpack.c.b16 %v1243, %v1241
  %v1318 = vpack.c.b16 %v1244, %v1242
  %v1319 = vpack.c.b16 %v1247, %v1245
  %v1320 = vpack.c.b16 %v1248, %v1246
  %v1358 = vsel %vm531, %v1250, 0
  %v1361 = vsel %vm531, %v1252, 0
  %v1364 = vsel %vm531, %v1254, 0
  %v1367 = vsel %vm531, %v1256, 0
  %v1370 = vsel %vm531, %v1258, 0
  %v1373 = vsel %vm531, %v1260, 0
  %v1376 = vsel %vm531, %v1262, 0
  %v1379 = vsel %vm531, %v1264, 0
  %v1382 = vsel %vm531, %v1266, 0
  %v1385 = vsel %vm531, %v1268, 0
  %v1388 = vsel %vm531, %v1270, 0
  %v1391 = vsel %vm531, %v1272, 0
  %v1394 = vsel %vm531, %v1274, 0
  %v1397 = vsel %vm531, %v1276, 0
  %v1400 = vsel %vm531, %v1278, 0
  %v1403 = vsel %vm531, %v1280, 0
  %v1406 = vsel %vm531, %v1282, 0
  %v1409 = vsel %vm531, %v1284, 0
  %v1412 = vsel %vm531, %v1286, 0
  %v1415 = vsel %vm531, %v1288, 0
  %v1418 = vsel %vm531, %v1290, 0
  %v1421 = vsel %vm531, %v1292, 0
  %v1424 = vsel %vm531, %v1294, 0
  %v1427 = vsel %vm531, %v1296, 0
  %v1430 = vsel %vm531, %v1298, 0
  %v1433 = vsel %vm531, %v1300, 0
  %v1436 = vsel %vm531, %v1302, 0
  %v1439 = vsel %vm531, %v1304, 0
  %v1442 = vsel %vm531, %v1306, 0
  %v1445 = vsel %vm531, %v1308, 0
  %v1448 = vsel %vm531, %v1310, 0
  %v1451 = vsel %vm531, %v1312, 0
  %v1454 = vsel %vm531, %v1314, 0
  %v1457 = vsel %vm531, %v1316, 0
  %v1460 = vsel %vm531, %v1318, 0
  %v1463 = vsel %vm531, %v1320, 0
  %1465 = vmatprep.subr.bf16.mxu0 0
  %1466 = vmatpush1.bf16.msra.mxu0 %v507
  %1467 = vmatprep.subr.bf16.mxu0 0
  %1468 = vmatpush1.bf16.msra.mxu0 %v508
  %1469 = vmatprep.subr.bf16.mxu0 0
  %1470 = vmatpush1.bf16.msra.mxu0 %v509
  %1471 = vmatprep.subr.bf16.mxu0 0
  %1472 = vmatpush1.bf16.msra.mxu0 %v510
  %1473 = vmatprep.subr.bf16.mxu0 0
  %1474 = vmatpush1.bf16.msra.mxu0 %v511
  %1475 = vmatprep.subr.bf16.mxu0 0
  %1476 = vmatpush1.bf16.msra.mxu0 %v512
  %1477 = vmatprep.subr.bf16.mxu0 0
  %1478 = vmatpush1.bf16.msra.mxu0 %v513
  %1479 = vmatprep.subr.bf16.mxu0 0
  %1480 = vmatpush1.bf16.msra.mxu0 %v514
  %1481 = vmatprep.subr.bf16.mxu0 0
  %1482 = vmatpush1.bf16.msra.mxu0 %v515
  %1483 = vmatprep.subr.bf16.mxu0 0
  %1484 = vmatpush1.bf16.msra.mxu0 %v516
  %1485 = vmatprep.subr.bf16.mxu0 0
  %1486 = vmatpush1.bf16.msra.mxu0 %v517
  %1487 = vmatprep.subr.bf16.mxu0 0
  %1488 = vmatpush1.bf16.msra.mxu0 %v518
  %1489 = vmatprep.subr.bf16.mxu0 0
  %1490 = vmatpush1.bf16.msra.mxu0 0
  %1491 = vmatprep.subr.bf16.mxu0 0
  %1492 = vmatpush1.bf16.msra.mxu0 0
  %1493 = vmatprep.subr.bf16.mxu0 0
  %1494 = vmatpush1.bf16.msra.mxu0 0
  %1495 = vmatprep.subr.bf16.mxu0 0
  %1496 = vmatpush1.bf16.msra.mxu0 0
  %1497 = vmatprep.mubr.bf16.mxu0 %v1358
  %1498 = vmatmul.mubr.bf16.gmra.mrb[0].mxu0 %v1249
  %v1499 = vpop.f32.mrb[0].mxu0
  %v1500 = vadd.f32 0.0, %v1499
  %v1501 = vpop.f32.mrb[0].mxu0
  %v1502 = vpop.f32.mrb[0].mxu0
  %v1503 = vadd.f32 0.0, %v1502
  %v1504 = vpop.f32.mrb[0].mxu0
  %1505 = vmatprep.mubr.bf16.mxu0 %v1361
  %1506 = vmatmul.mubr.bf16.gmra.mrb[0].mxu0 %v1251
  %v1507 = vpop.f32.mrb[0].mxu0
  %v1508 = vadd.f32 0.0, %v1507
  %v1509 = vpop.f32.mrb[0].mxu0
  %v1510 = vpop.f32.mrb[0].mxu0
  %v1511 = vadd.f32 0.0, %v1510
  %v1512 = vpop.f32.mrb[0].mxu0
  %1513 = vmatprep.mubr.bf16.mxu0 %v1364
  %1514 = vmatmul.mubr.bf16.gmra.mrb[0].mxu0 %v1253
  %v1515 = vpop.f32.mrb[0].mxu0
  %v1516 = vadd.f32 0.0, %v1515
  %v1517 = vpop.f32.mrb[0].mxu0
  %v1518 = vpop.f32.mrb[0].mxu0
  %v1519 = vadd.f32 0.0, %v1518
  %v1520 = vpop.f32.mrb[0].mxu0
  %1521 = vmatprep.mubr.bf16.mxu0 %v1367
  %1522 = vmatmul.mubr.bf16.gmra.mrb[0].mxu0 %v1255
  %v1523 = vpop.f32.mrb[0].mxu0
  %v1524 = vadd.f32 0.0, %v1523
  %v1525 = vpop.f32.mrb[0].mxu0
  %v1526 = vpop.f32.mrb[0].mxu0
  %v1527 = vadd.f32 0.0, %v1526
  %v1528 = vpop.f32.mrb[0].mxu0
  %1529 = vmatprep.mubr.bf16.mxu0 %v1370
  %1530 = vmatmul.mubr.bf16.gmra.mrb[0].mxu0 %v1257
  %v1531 = vpop.f32.mrb[0].mxu0
  %v1532 = vadd.f32 0.0, %v1531
  %v1533 = vpop.f32.mrb[0].mxu0
  %v1534 = vpop.f32.mrb[0].mxu0
  %v1535 = vadd.f32 0.0, %v1534
  %v1536 = vpop.f32.mrb[0].mxu0
  %1537 = vmatprep.mubr.bf16.mxu0 %v1373
  %1538 = vmatmul.mubr.bf16.gmra.mrb[0].mxu0 %v1259
  %v1539 = vpop.f32.mrb[0].mxu0
  %v1540 = vadd.f32 0.0, %v1539
  %v1541 = vpop.f32.mrb[0].mxu0
  %v1542 = vpop.f32.mrb[0].mxu0
  %v1543 = vadd.f32 0.0, %v1542
  %v1544 = vpop.f32.mrb[0].mxu0
  %1545 = vmatprep.mubr.bf16.mxu0 %v1376
  %1546 = vmatmul.mubr.bf16.gmra.mrb[0].mxu0 %v1261
  %v1547 = vpop.f32.mrb[0].mxu0
  %v1548 = vadd.f32 0.0, %v1547
  %v1549 = vpop.f32.mrb[0].mxu0
  %v1550 = vpop.f32.mrb[0].mxu0
  %v1551 = vadd.f32 0.0, %v1550
  %v1552 = vpop.f32.mrb[0].mxu0
  %1553 = vmatprep.mubr.bf16.mxu0 %v1379
  %1554 = vmatmul.mubr.bf16.gmra.mrb[0].mxu0 %v1263
  %v1555 = vpop.f32.mrb[0].mxu0
  %v1556 = vadd.f32 0.0, %v1555
  %v1557 = vpop.f32.mrb[0].mxu0
  %v1558 = vpop.f32.mrb[0].mxu0
  %v1559 = vadd.f32 0.0, %v1558
  %v1560 = vpop.f32.mrb[0].mxu0
  %1561 = vmatprep.mubr.bf16.mxu0 %v1382
  %1562 = vmatmul.mubr.bf16.gmra.mrb[0].mxu0 %v1265
  %v1563 = vpop.f32.mrb[0].mxu0
  %v1564 = vadd.f32 0.0, %v1563
  %v1565 = vpop.f32.mrb[0].mxu0
  %v1566 = vpop.f32.mrb[0].mxu0
  %v1567 = vadd.f32 0.0, %v1566
  %v1568 = vpop.f32.mrb[0].mxu0
  %1569 = vmatprep.mubr.bf16.mxu0 %v1385
  %1570 = vmatmul.mubr.bf16.gmra.mrb[0].mxu0 %v1267
  %v1571 = vpop.f32.mrb[0].mxu0
  %v1572 = vadd.f32 0.0, %v1571
  %v1573 = vpop.f32.mrb[0].mxu0
  %v1574 = vpop.f32.mrb[0].mxu0
  %v1575 = vadd.f32 0.0, %v1574
  %v1576 = vpop.f32.mrb[0].mxu0
  %1577 = vmatprep.mubr.bf16.mxu0 %v1388
  %1578 = vmatmul.mubr.bf16.gmra.mrb[0].mxu0 %v1269
  %v1579 = vpop.f32.mrb[0].mxu0
  %v1580 = vadd.f32 0.0, %v1579
  %v1581 = vpop.f32.mrb[0].mxu0
  %v1582 = vpop.f32.mrb[0].mxu0
  %v1583 = vadd.f32 0.0, %v1582
  %v1584 = vpop.f32.mrb[0].mxu0
  %1585 = vmatprep.mubr.bf16.mxu0 %v1391
  %1586 = vmatmul.mubr.bf16.gmra.mrb[0].mxu0 %v1271
  %v1587 = vpop.f32.mrb[0].mxu0
  %v1588 = vadd.f32 0.0, %v1587
  %v1589 = vpop.f32.mrb[0].mxu0
  %v1590 = vpop.f32.mrb[0].mxu0
  %v1591 = vadd.f32 0.0, %v1590
  %v1592 = vpop.f32.mrb[0].mxu0
  %1593 = vmatprep.mubr.bf16.mxu0 %v1394
  %1594 = vmatmul.mubr.bf16.gmra.mrb[0].mxu0 %v1273
  %v1595 = vpop.f32.mrb[0].mxu0
  %v1596 = vadd.f32 0.0, %v1595
  %v1597 = vpop.f32.mrb[0].mxu0
  %v1598 = vpop.f32.mrb[0].mxu0
  %v1599 = vadd.f32 0.0, %v1598
  %v1600 = vpop.f32.mrb[0].mxu0
  %1601 = vmatprep.mubr.bf16.mxu0 %v1397
  %1602 = vmatmul.mubr.bf16.gmra.mrb[0].mxu0 %v1275
  %v1603 = vpop.f32.mrb[0].mxu0
  %v1604 = vadd.f32 0.0, %v1603
  %v1605 = vpop.f32.mrb[0].mxu0
  %v1606 = vpop.f32.mrb[0].mxu0
  %v1607 = vadd.f32 0.0, %v1606
  %v1608 = vpop.f32.mrb[0].mxu0
  %1609 = vmatprep.mubr.bf16.mxu0 %v1400
  %1610 = vmatmul.mubr.bf16.gmra.mrb[0].mxu0 %v1277
  %v1611 = vpop.f32.mrb[0].mxu0
  %v1612 = vadd.f32 0.0, %v1611
  %v1613 = vpop.f32.mrb[0].mxu0
  %v1614 = vpop.f32.mrb[0].mxu0
  %v1615 = vadd.f32 0.0, %v1614
  %v1616 = vpop.f32.mrb[0].mxu0
  %1617 = vmatprep.mubr.bf16.mxu0 %v1403
  %1618 = vmatmul.mubr.bf16.gmra.mrb[0].mxu0 %v1279
  %v1619 = vpop.f32.mrb[0].mxu0
  %v1620 = vadd.f32 0.0, %v1619
  %v1621 = vpop.f32.mrb[0].mxu0
  %v1622 = vpop.f32.mrb[0].mxu0
  %v1623 = vadd.f32 0.0, %v1622
  %v1624 = vpop.f32.mrb[0].mxu0
  %1625 = vmatprep.mubr.bf16.mxu0 %v1406
  %1626 = vmatmul.mubr.bf16.gmra.mrb[0].mxu0 %v1281
  %v1627 = vpop.f32.mrb[0].mxu0
  %v1628 = vadd.f32 0.0, %v1627
  %v1629 = vpop.f32.mrb[0].mxu0
  %v1630 = vpop.f32.mrb[0].mxu0
  %v1631 = vadd.f32 0.0, %v1630
  %v1632 = vpop.f32.mrb[0].mxu0
  %1633 = vmatprep.mubr.bf16.mxu0 %v1409
  %1634 = vmatmul.mubr.bf16.gmra.mrb[0].mxu0 %v1283
  %v1635 = vpop.f32.mrb[0].mxu0
  %v1636 = vadd.f32 0.0, %v1635
  %v1637 = vpop.f32.mrb[0].mxu0
  %v1638 = vpop.f32.mrb[0].mxu0
  %v1639 = vadd.f32 0.0, %v1638
  %v1640 = vpop.f32.mrb[0].mxu0
  %1641 = vmatprep.mubr.bf16.mxu0 %v1412
  %1642 = vmatmul.mubr.bf16.gmra.mrb[0].mxu0 %v1285
  %v1643 = vpop.f32.mrb[0].mxu0
  %v1644 = vadd.f32 0.0, %v1643
  %v1645 = vpop.f32.mrb[0].mxu0
  %v1646 = vpop.f32.mrb[0].mxu0
  %v1647 = vadd.f32 0.0, %v1646
  %v1648 = vpop.f32.mrb[0].mxu0
  %1649 = vmatprep.mubr.bf16.mxu0 %v1415
  %1650 = vmatmul.mubr.bf16.gmra.mrb[0].mxu0 %v1287
  %v1651 = vpop.f32.mrb[0].mxu0
  %v1652 = vadd.f32 0.0, %v1651
  %v1653 = vpop.f32.mrb[0].mxu0
  %v1654 = vpop.f32.mrb[0].mxu0
  %v1655 = vadd.f32 0.0, %v1654
  %v1656 = vpop.f32.mrb[0].mxu0
  %1657 = vmatprep.mubr.bf16.mxu0 %v1418
  %1658 = vmatmul.mubr.bf16.gmra.mrb[0].mxu0 %v1289
  %v1659 = vpop.f32.mrb[0].mxu0
  %v1660 = vadd.f32 0.0, %v1659
  %v1661 = vpop.f32.mrb[0].mxu0
  %v1662 = vpop.f32.mrb[0].mxu0
  %v1663 = vadd.f32 0.0, %v1662
  %v1664 = vpop.f32.mrb[0].mxu0
  %1665 = vmatprep.mubr.bf16.mxu0 %v1421
  %1666 = vmatmul.mubr.bf16.gmra.mrb[0].mxu0 %v1291
  %v1667 = vpop.f32.mrb[0].mxu0
  %v1668 = vadd.f32 0.0, %v1667
  %v1669 = vpop.f32.mrb[0].mxu0
  %v1670 = vpop.f32.mrb[0].mxu0
  %v1671 = vadd.f32 0.0, %v1670
  %v1672 = vpop.f32.mrb[0].mxu0
  %1673 = vmatprep.mubr.bf16.mxu0 %v1424
  %1674 = vmatmul.mubr.bf16.gmra.mrb[0].mxu0 %v1293
  %v1675 = vpop.f32.mrb[0].mxu0
  %v1676 = vadd.f32 0.0, %v1675
  %v1677 = vpop.f32.mrb[0].mxu0
  %v1678 = vpop.f32.mrb[0].mxu0
  %v1679 = vadd.f32 0.0, %v1678
  %v1680 = vpop.f32.mrb[0].mxu0
  %1681 = vmatprep.mubr.bf16.mxu0 %v1427
  %1682 = vmatmul.mubr.bf16.gmra.mrb[0].mxu0 %v1295
  %v1683 = vpop.f32.mrb[0].mxu0
  %v1684 = vadd.f32 0.0, %v1683
  %v1685 = vpop.f32.mrb[0].mxu0
  %v1686 = vpop.f32.mrb[0].mxu0
  %v1687 = vadd.f32 0.0, %v1686
  %v1688 = vpop.f32.mrb[0].mxu0
  %1689 = vmatprep.mubr.bf16.mxu0 %v1430
  %1690 = vmatmul.mubr.bf16.gmra.mrb[0].mxu0 %v1297
  %v1691 = vpop.f32.mrb[0].mxu0
  %v1692 = vadd.f32 0.0, %v1691
  %v1693 = vpop.f32.mrb[0].mxu0
  %v1694 = vpop.f32.mrb[0].mxu0
  %v1695 = vadd.f32 0.0, %v1694
  %v1696 = vpop.f32.mrb[0].mxu0
  %1697 = vmatprep.mubr.bf16.mxu0 %v1433
  %1698 = vmatmul.mubr.bf16.gmra.mrb[0].mxu0 %v1299
  %v1699 = vpop.f32.mrb[0].mxu0
  %v1700 = vadd.f32 0.0, %v1699
  %v1701 = vpop.f32.mrb[0].mxu0
  %v1702 = vpop.f32.mrb[0].mxu0
  %v1703 = vadd.f32 0.0, %v1702
  %v1704 = vpop.f32.mrb[0].mxu0
  %1705 = vmatprep.mubr.bf16.mxu0 %v1436
  %1706 = vmatmul.mubr.bf16.gmra.mrb[0].mxu0 %v1301
  %v1707 = vpop.f32.mrb[0].mxu0
  %v1708 = vadd.f32 0.0, %v1707
  %v1709 = vpop.f32.mrb[0].mxu0
  %v1710 = vpop.f32.mrb[0].mxu0
  %v1711 = vadd.f32 0.0, %v1710
  %v1712 = vpop.f32.mrb[0].mxu0
  %1713 = vmatprep.mubr.bf16.mxu0 %v1439
  %1714 = vmatmul.mubr.bf16.gmra.mrb[0].mxu0 %v1303
  %v1715 = vpop.f32.mrb[0].mxu0
  %v1716 = vadd.f32 0.0, %v1715
  %v1717 = vpop.f32.mrb[0].mxu0
  %v1718 = vpop.f32.mrb[0].mxu0
  %v1719 = vadd.f32 0.0, %v1718
  %v1720 = vpop.f32.mrb[0].mxu0
  %1721 = vmatprep.mubr.bf16.mxu0 %v1442
  %1722 = vmatmul.mubr.bf16.gmra.mrb[0].mxu0 %v1305
  %v1723 = vpop.f32.mrb[0].mxu0
  %v1724 = vadd.f32 0.0, %v1723
  %v1725 = vpop.f32.mrb[0].mxu0
  %v1726 = vpop.f32.mrb[0].mxu0
  %v1727 = vadd.f32 0.0, %v1726
  %v1728 = vpop.f32.mrb[0].mxu0
  %1729 = vmatprep.mubr.bf16.mxu0 %v1445
  %1730 = vmatmul.mubr.bf16.gmra.mrb[0].mxu0 %v1307
  %v1731 = vpop.f32.mrb[0].mxu0
  %v1732 = vadd.f32 0.0, %v1731
  %v1733 = vpop.f32.mrb[0].mxu0
  %v1734 = vpop.f32.mrb[0].mxu0
  %v1735 = vadd.f32 0.0, %v1734
  %v1736 = vpop.f32.mrb[0].mxu0
  %1737 = vmatprep.mubr.bf16.mxu0 %v1448
  %1738 = vmatmul.mubr.bf16.gmra.mrb[0].mxu0 %v1309
  %v1739 = vpop.f32.mrb[0].mxu0
  %v1740 = vadd.f32 0.0, %v1739
  %v1741 = vpop.f32.mrb[0].mxu0
  %v1742 = vpop.f32.mrb[0].mxu0
  %v1743 = vadd.f32 0.0, %v1742
  %v1744 = vpop.f32.mrb[0].mxu0
  %1745 = vmatprep.mubr.bf16.mxu0 %v1451
  %1746 = vmatmul.mubr.bf16.gmra.mrb[0].mxu0 %v1311
  %v1747 = vpop.f32.mrb[0].mxu0
  %v1748 = vadd.f32 0.0, %v1747
  %v1749 = vpop.f32.mrb[0].mxu0
  %v1750 = vpop.f32.mrb[0].mxu0
  %v1751 = vadd.f32 0.0, %v1750
  %v1752 = vpop.f32.mrb[0].mxu0
  %1753 = vmatprep.mubr.bf16.mxu0 %v1454
  %1754 = vmatmul.mubr.bf16.gmra.mrb[0].mxu0 %v1313
  %v1755 = vpop.f32.mrb[0].mxu0
  %v1756 = vadd.f32 0.0, %v1755
  %v1757 = vpop.f32.mrb[0].mxu0
  %v1758 = vpop.f32.mrb[0].mxu0
  %v1759 = vadd.f32 0.0, %v1758
  %v1760 = vpop.f32.mrb[0].mxu0
  %1761 = vmatprep.mubr.bf16.mxu0 %v1457
  %1762 = vmatmul.mubr.bf16.gmra.mrb[0].mxu0 %v1315
  %v1763 = vpop.f32.mrb[0].mxu0
  %v1764 = vadd.f32 0.0, %v1763
  %v1765 = vpop.f32.mrb[0].mxu0
  %v1766 = vpop.f32.mrb[0].mxu0
  %v1767 = vadd.f32 0.0, %v1766
  %v1768 = vpop.f32.mrb[0].mxu0
  %1769 = vmatprep.mubr.bf16.mxu0 %v1460
  %1770 = vmatmul.mubr.bf16.gmra.mrb[0].mxu0 %v1317
  %v1771 = vpop.f32.mrb[0].mxu0
  %v1772 = vadd.f32 0.0, %v1771
  %v1773 = vpop.f32.mrb[0].mxu0
  %v1774 = vpop.f32.mrb[0].mxu0
  %v1775 = vadd.f32 0.0, %v1774
  %v1776 = vpop.f32.mrb[0].mxu0
  %1777 = vmatprep.mubr.bf16.mxu0 %v1463
  %1778 = vmatmul.mubr.bf16.gmra.mrb[0].mxu0 %v1319
  %v1779 = vpop.f32.mrb[0].mxu0
  %v1780 = vadd.f32 0.0, %v1779
  %v1781 = vpop.f32.mrb[0].mxu0
  %v1782 = vpop.f32.mrb[0].mxu0
  %v1783 = vadd.f32 0.0, %v1782
  %v1784 = vpop.f32.mrb[0].mxu0
  %1785 = vdwg.mxu0
  %v1786 = vmax.f32 %v675, %v1500
  %v1787 = vmax.f32 %v678, %v1503
  %v1788 = vmax.f32 %v683, %v1508
  %v1789 = vmax.f32 %v686, %v1511
  %v1790 = vmax.f32 %v691, %v1516
  %v1791 = vmax.f32 %v694, %v1519
  %v1792 = vmax.f32 %v699, %v1524
  %v1793 = vmax.f32 %v702, %v1527
  %v1794 = vmax.f32 %v707, %v1532
  %v1795 = vmax.f32 %v710, %v1535
  %v1796 = vmax.f32 %v715, %v1540
  %v1797 = vmax.f32 %v718, %v1543
  %v1798 = vmax.f32 %v723, %v1548
  %v1799 = vmax.f32 %v726, %v1551
  %v1800 = vmax.f32 %v731, %v1556
  %v1801 = vmax.f32 %v734, %v1559
  %v1802 = vmax.f32 %v739, %v1564
  %v1803 = vmax.f32 %v742, %v1567
  %v1804 = vmax.f32 %v747, %v1572
  %v1805 = vmax.f32 %v750, %v1575
  %v1806 = vmax.f32 %v755, %v1580
  %v1807 = vmax.f32 %v758, %v1583
  %v1808 = vmax.f32 %v763, %v1588
  %v1809 = vmax.f32 %v766, %v1591
  %v1810 = vmax.f32 %v771, %v1596
  %v1811 = vmax.f32 %v774, %v1599
  %v1812 = vmax.f32 %v779, %v1604
  %v1813 = vmax.f32 %v782, %v1607
  %v1814 = vmax.f32 %v787, %v1612
  %v1815 = vmax.f32 %v790, %v1615
  %v1816 = vmax.f32 %v795, %v1620
  %v1817 = vmax.f32 %v798, %v1623
  %v1818 = vmax.f32 %v803, %v1628
  %v1819 = vmax.f32 %v806, %v1631
  %v1820 = vmax.f32 %v811, %v1636
  %v1821 = vmax.f32 %v814, %v1639
  %v1822 = vmax.f32 %v819, %v1644
  %v1823 = vmax.f32 %v822, %v1647
  %v1824 = vmax.f32 %v827, %v1652
  %v1825 = vmax.f32 %v830, %v1655
  %v1826 = vmax.f32 %v835, %v1660
  %v1827 = vmax.f32 %v838, %v1663
  %v1828 = vmax.f32 %v843, %v1668
  %v1829 = vmax.f32 %v846, %v1671
  %v1830 = vmax.f32 %v851, %v1676
  %v1831 = vmax.f32 %v854, %v1679
  %v1832 = vmax.f32 %v859, %v1684
  %v1833 = vmax.f32 %v862, %v1687
  %v1834 = vmax.f32 %v867, %v1692
  %v1835 = vmax.f32 %v870, %v1695
  %v1836 = vmax.f32 %v875, %v1700
  %v1837 = vmax.f32 %v878, %v1703
  %v1838 = vmax.f32 %v883, %v1708
  %v1839 = vmax.f32 %v886, %v1711
  %v1840 = vmax.f32 %v891, %v1716
  %v1841 = vmax.f32 %v894, %v1719
  %v1842 = vmax.f32 %v899, %v1724
  %v1843 = vmax.f32 %v902, %v1727
  %v1844 = vmax.f32 %v907, %v1732
  %v1845 = vmax.f32 %v910, %v1735
  %v1846 = vmax.f32 %v915, %v1740
  %v1847 = vmax.f32 %v918, %v1743
  %v1848 = vmax.f32 %v923, %v1748
  %v1849 = vmax.f32 %v926, %v1751
  %v1850 = vmax.f32 %v931, %v1756
  %v1851 = vmax.f32 %v934, %v1759
  %v1852 = vmax.f32 %v939, %v1764
  %v1853 = vmax.f32 %v942, %v1767
  %v1854 = vmax.f32 %v947, %v1772
  %v1855 = vmax.f32 %v950, %v1775
  %v1856 = vmax.f32 %v955, %v1780
  %v1857 = vmax.f32 %v958, %v1783
  %v1858 = vld [vmem:[%s3] sm:$0xff]
  %v1859 = vld [vmem:[%s3 + $0x8] sm:$0xff]
  %v1860 = vld [vmem:[%s3 + $0x10] sm:$0xff]
  %v1861 = vld [vmem:[%s3 + $0x18] sm:$0xff]
  %v1862 = vld [vmem:[%s3 + $0x20] sm:$0xff]
  %v1863 = vld [vmem:[%s3 + $0x28] sm:$0xff]
  %v1864 = vld [vmem:[%s3 + $0x30] sm:$0xff]
  %v1865 = vld [vmem:[%s3 + $0x38] sm:$0xff]
  %v1866 = vld [vmem:[%s3 + $0x40] sm:$0xff]
  %v1867 = vld [vmem:[%s3 + $0x48] sm:$0xff]
  %v1868 = vld [vmem:[%s3 + $0x50] sm:$0xff]
  %v1869 = vld [vmem:[%s3 + $0x58] sm:$0xff]
  %v1870 = vld [vmem:[%s3 + $0x60] sm:$0xff]
  %v1871 = vld [vmem:[%s3 + $0x68] sm:$0xff]
  %v1872 = vld [vmem:[%s3 + $0x70] sm:$0xff]
  %v1873 = vld [vmem:[%s3 + $0x78] sm:$0xff]
  %v1874 = vld [vmem:[%s3 + $0x80] sm:$0xff]
  %v1875 = vld [vmem:[%s3 + $0x88] sm:$0xff]
  %v1876 = vld [vmem:[%s3 + $0x90] sm:$0xff]
  %v1877 = vld [vmem:[%s3 + $0x98] sm:$0xff]
  %v1878 = vld [vmem:[%s3 + $0xa0] sm:$0xff]
  %v1879 = vld [vmem:[%s3 + $0xa8] sm:$0xff]
  %v1880 = vld [vmem:[%s3 + $0xb0] sm:$0xff]
  %v1881 = vld [vmem:[%s3 + $0xb8] sm:$0xff]
  %v1882 = vld [vmem:[%s3 + $0xc0] sm:$0xff]
  %v1883 = vld [vmem:[%s3 + $0xc8] sm:$0xff]
  %v1884 = vld [vmem:[%s3 + $0xd0] sm:$0xff]
  %v1885 = vld [vmem:[%s3 + $0xd8] sm:$0xff]
  %v1886 = vld [vmem:[%s3 + $0xe0] sm:$0xff]
  %v1887 = vld [vmem:[%s3 + $0xe8] sm:$0xff]
  %v1888 = vld [vmem:[%s3 + $0xf0] sm:$0xff]
  %v1889 = vld [vmem:[%s3 + $0xf8] sm:$0xff]
  %v1890 = vld [vmem:[%s3 + $0x100] sm:$0xff]
  %v1891 = vld [vmem:[%s3 + $0x108] sm:$0xff]
  %v1892 = vld [vmem:[%s3 + $0x110] sm:$0xff]
  %v1893 = vld [vmem:[%s3 + $0x118] sm:$0xff]
  %v1894 = vld [vmem:[%s3 + $0x120] sm:$0xff]
  %v1895 = vld [vmem:[%s3 + $0x128] sm:$0xff]
  %v1896 = vld [vmem:[%s3 + $0x130] sm:$0xff]
  %v1897 = vld [vmem:[%s3 + $0x138] sm:$0xff]
  %v1898 = vld [vmem:[%s3 + $0x140] sm:$0xff]
  %v1899 = vld [vmem:[%s3 + $0x148] sm:$0xff]
  %v1900 = vld [vmem:[%s3 + $0x150] sm:$0xff]
  %v1901 = vld [vmem:[%s3 + $0x158] sm:$0xff]
  %v1902 = vld [vmem:[%s3 + $0x160] sm:$0xff]
  %v1903 = vld [vmem:[%s3 + $0x168] sm:$0xff]
  %v1904 = vld [vmem:[%s3 + $0x170] sm:$0xff]
  %v1905 = vld [vmem:[%s3 + $0x178] sm:$0xff]
  %v1906 = vld [vmem:[%s3 + $0x180] sm:$0xff]
  %v1907 = vld [vmem:[%s3 + $0x188] sm:$0xff]
  %v1908 = vld [vmem:[%s3 + $0x190] sm:$0xff]
  %v1909 = vld [vmem:[%s3 + $0x198] sm:$0xff]
  %v1910 = vld [vmem:[%s3 + $0x1a0] sm:$0xff]
  %v1911 = vld [vmem:[%s3 + $0x1a8] sm:$0xff]
  %v1912 = vld [vmem:[%s3 + $0x1b0] sm:$0xff]
  %v1913 = vld [vmem:[%s3 + $0x1b8] sm:$0xff]
  %v1914 = vld [vmem:[%s3 + $0x1c0] sm:$0xff]
  %v1915 = vld [vmem:[%s3 + $0x1c8] sm:$0xff]
  %v1916 = vld [vmem:[%s3 + $0x1d0] sm:$0xff]
  %v1917 = vld [vmem:[%s3 + $0x1d8] sm:$0xff]
  %v1918 = vld [vmem:[%s3 + $0x1e0] sm:$0xff]
  %v1919 = vld [vmem:[%s3 + $0x1e8] sm:$0xff]
  %v1920 = vld [vmem:[%s3 + $0x1f0] sm:$0xff]
  %v1921 = vld [vmem:[%s3 + $0x1f8] sm:$0xff]
  %v1922 = vld [vmem:[%s3 + $0x200] sm:$0xff]
  %v1923 = vld [vmem:[%s3 + $0x208] sm:$0xff]
  %v1924 = vld [vmem:[%s3 + $0x210] sm:$0xff]
  %v1925 = vld [vmem:[%s3 + $0x218] sm:$0xff]
  %v1926 = vld [vmem:[%s3 + $0x220] sm:$0xff]
  %v1927 = vld [vmem:[%s3 + $0x228] sm:$0xff]
  %v1928 = vld [vmem:[%s3 + $0x230] sm:$0xff]
  %v1929 = vld [vmem:[%s3 + $0x238] sm:$0xff]
  %1931 = vset.pattern.permute.xlu0 0
  %1932 = vperm.xlu0 %1931, %v1858
  %v1933 = vpop.permute.xlu0 %1932
  %1936 = vset.pattern.permute.xlu0 0
  %1937 = vperm.xlu0 %1936, %v1859
  %v1938 = vpop.permute.xlu0 %1937
  %1941 = vset.pattern.permute.xlu0 0
  %1942 = vperm.xlu0 %1941, %v1860
  %v1943 = vpop.permute.xlu0 %1942
  %1946 = vset.pattern.permute.xlu0 0
  %1947 = vperm.xlu0 %1946, %v1861
  %v1948 = vpop.permute.xlu0 %1947
  %1951 = vset.pattern.permute.xlu0 0
  %1952 = vperm.xlu0 %1951, %v1862
  %v1953 = vpop.permute.xlu0 %1952
  %1956 = vset.pattern.permute.xlu0 0
  %1957 = vperm.xlu0 %1956, %v1863
  %v1958 = vpop.permute.xlu0 %1957
  %1961 = vset.pattern.permute.xlu0 0
  %1962 = vperm.xlu0 %1961, %v1864
  %v1963 = vpop.permute.xlu0 %1962
  %1966 = vset.pattern.permute.xlu0 0
  %1967 = vperm.xlu0 %1966, %v1865
  %v1968 = vpop.permute.xlu0 %1967
  %1971 = vset.pattern.permute.xlu0 0
  %1972 = vperm.xlu0 %1971, %v1866
  %v1973 = vpop.permute.xlu0 %1972
  %1976 = vset.pattern.permute.xlu0 0
  %1977 = vperm.xlu0 %1976, %v1867
  %v1978 = vpop.permute.xlu0 %1977
  %1981 = vset.pattern.permute.xlu0 0
  %1982 = vperm.xlu0 %1981, %v1868
  %v1983 = vpop.permute.xlu0 %1982
  %1986 = vset.pattern.permute.xlu0 0
  %1987 = vperm.xlu0 %1986, %v1869
  %v1988 = vpop.permute.xlu0 %1987
  %1991 = vset.pattern.permute.xlu0 0
  %1992 = vperm.xlu0 %1991, %v1870
  %v1993 = vpop.permute.xlu0 %1992
  %1996 = vset.pattern.permute.xlu0 0
  %1997 = vperm.xlu0 %1996, %v1871
  %v1998 = vpop.permute.xlu0 %1997
  %2001 = vset.pattern.permute.xlu0 0
  %2002 = vperm.xlu0 %2001, %v1872
  %v2003 = vpop.permute.xlu0 %2002
  %2006 = vset.pattern.permute.xlu0 0
  %2007 = vperm.xlu0 %2006, %v1873
  %v2008 = vpop.permute.xlu0 %2007
  %2011 = vset.pattern.permute.xlu0 0
  %2012 = vperm.xlu0 %2011, %v1874
  %v2013 = vpop.permute.xlu0 %2012
  %2016 = vset.pattern.permute.xlu0 0
  %2017 = vperm.xlu0 %2016, %v1875
  %v2018 = vpop.permute.xlu0 %2017
  %2021 = vset.pattern.permute.xlu0 0
  %2022 = vperm.xlu0 %2021, %v1876
  %v2023 = vpop.permute.xlu0 %2022
  %2026 = vset.pattern.permute.xlu0 0
  %2027 = vperm.xlu0 %2026, %v1877
  %v2028 = vpop.permute.xlu0 %2027
  %2031 = vset.pattern.permute.xlu0 0
  %2032 = vperm.xlu0 %2031, %v1878
  %v2033 = vpop.permute.xlu0 %2032
  %2036 = vset.pattern.permute.xlu0 0
  %2037 = vperm.xlu0 %2036, %v1879
  %v2038 = vpop.permute.xlu0 %2037
  %2041 = vset.pattern.permute.xlu0 0
  %2042 = vperm.xlu0 %2041, %v1880
  %v2043 = vpop.permute.xlu0 %2042
  %2046 = vset.pattern.permute.xlu0 0
  %2047 = vperm.xlu0 %2046, %v1881
  %v2048 = vpop.permute.xlu0 %2047
  %2051 = vset.pattern.permute.xlu0 0
  %2052 = vperm.xlu0 %2051, %v1882
  %v2053 = vpop.permute.xlu0 %2052
  %2056 = vset.pattern.permute.xlu0 0
  %2057 = vperm.xlu0 %2056, %v1883
  %v2058 = vpop.permute.xlu0 %2057
  %2061 = vset.pattern.permute.xlu0 0
  %2062 = vperm.xlu0 %2061, %v1884
  %v2063 = vpop.permute.xlu0 %2062
  %2066 = vset.pattern.permute.xlu0 0
  %2067 = vperm.xlu0 %2066, %v1885
  %v2068 = vpop.permute.xlu0 %2067
  %2071 = vset.pattern.permute.xlu0 0
  %2072 = vperm.xlu0 %2071, %v1886
  %v2073 = vpop.permute.xlu0 %2072
  %2076 = vset.pattern.permute.xlu0 0
  %2077 = vperm.xlu0 %2076, %v1887
  %v2078 = vpop.permute.xlu0 %2077
  %2081 = vset.pattern.permute.xlu0 0
  %2082 = vperm.xlu0 %2081, %v1888
  %v2083 = vpop.permute.xlu0 %2082
  %2086 = vset.pattern.permute.xlu0 0
  %2087 = vperm.xlu0 %2086, %v1889
  %v2088 = vpop.permute.xlu0 %2087
  %2091 = vset.pattern.permute.xlu0 0
  %2092 = vperm.xlu0 %2091, %v1890
  %v2093 = vpop.permute.xlu0 %2092
  %2096 = vset.pattern.permute.xlu0 0
  %2097 = vperm.xlu0 %2096, %v1891
  %v2098 = vpop.permute.xlu0 %2097
  %2101 = vset.pattern.permute.xlu0 0
  %2102 = vperm.xlu0 %2101, %v1892
  %v2103 = vpop.permute.xlu0 %2102
  %2106 = vset.pattern.permute.xlu0 0
  %2107 = vperm.xlu0 %2106, %v1893
  %v2108 = vpop.permute.xlu0 %2107
  %2111 = vset.pattern.permute.xlu0 0
  %2112 = vperm.xlu0 %2111, %v1894
  %v2113 = vpop.permute.xlu0 %2112
  %2116 = vset.pattern.permute.xlu0 0
  %2117 = vperm.xlu0 %2116, %v1895
  %v2118 = vpop.permute.xlu0 %2117
  %2121 = vset.pattern.permute.xlu0 0
  %2122 = vperm.xlu0 %2121, %v1896
  %v2123 = vpop.permute.xlu0 %2122
  %2126 = vset.pattern.permute.xlu0 0
  %2127 = vperm.xlu0 %2126, %v1897
  %v2128 = vpop.permute.xlu0 %2127
  %2131 = vset.pattern.permute.xlu0 0
  %2132 = vperm.xlu0 %2131, %v1898
  %v2133 = vpop.permute.xlu0 %2132
  %2136 = vset.pattern.permute.xlu0 0
  %2137 = vperm.xlu0 %2136, %v1899
  %v2138 = vpop.permute.xlu0 %2137
  %2141 = vset.pattern.permute.xlu0 0
  %2142 = vperm.xlu0 %2141, %v1900
  %v2143 = vpop.permute.xlu0 %2142
  %2146 = vset.pattern.permute.xlu0 0
  %2147 = vperm.xlu0 %2146, %v1901
  %v2148 = vpop.permute.xlu0 %2147
  %2151 = vset.pattern.permute.xlu0 0
  %2152 = vperm.xlu0 %2151, %v1902
  %v2153 = vpop.permute.xlu0 %2152
  %2156 = vset.pattern.permute.xlu0 0
  %2157 = vperm.xlu0 %2156, %v1903
  %v2158 = vpop.permute.xlu0 %2157
  %2161 = vset.pattern.permute.xlu0 0
  %2162 = vperm.xlu0 %2161, %v1904
  %v2163 = vpop.permute.xlu0 %2162
  %2166 = vset.pattern.permute.xlu0 0
  %2167 = vperm.xlu0 %2166, %v1905
  %v2168 = vpop.permute.xlu0 %2167
  %2171 = vset.pattern.permute.xlu0 0
  %2172 = vperm.xlu0 %2171, %v1906
  %v2173 = vpop.permute.xlu0 %2172
  %2176 = vset.pattern.permute.xlu0 0
  %2177 = vperm.xlu0 %2176, %v1907
  %v2178 = vpop.permute.xlu0 %2177
  %2181 = vset.pattern.permute.xlu0 0
  %2182 = vperm.xlu0 %2181, %v1908
  %v2183 = vpop.permute.xlu0 %2182
  %2186 = vset.pattern.permute.xlu0 0
  %2187 = vperm.xlu0 %2186, %v1909
  %v2188 = vpop.permute.xlu0 %2187
  %2191 = vset.pattern.permute.xlu0 0
  %2192 = vperm.xlu0 %2191, %v1910
  %v2193 = vpop.permute.xlu0 %2192
  %2196 = vset.pattern.permute.xlu0 0
  %2197 = vperm.xlu0 %2196, %v1911
  %v2198 = vpop.permute.xlu0 %2197
  %2201 = vset.pattern.permute.xlu0 0
  %2202 = vperm.xlu0 %2201, %v1912
  %v2203 = vpop.permute.xlu0 %2202
  %2206 = vset.pattern.permute.xlu0 0
  %2207 = vperm.xlu0 %2206, %v1913
  %v2208 = vpop.permute.xlu0 %2207
  %2211 = vset.pattern.permute.xlu0 0
  %2212 = vperm.xlu0 %2211, %v1914
  %v2213 = vpop.permute.xlu0 %2212
  %2216 = vset.pattern.permute.xlu0 0
  %2217 = vperm.xlu0 %2216, %v1915
  %v2218 = vpop.permute.xlu0 %2217
  %2221 = vset.pattern.permute.xlu0 0
  %2222 = vperm.xlu0 %2221, %v1916
  %v2223 = vpop.permute.xlu0 %2222
  %2226 = vset.pattern.permute.xlu0 0
  %2227 = vperm.xlu0 %2226, %v1917
  %v2228 = vpop.permute.xlu0 %2227
  %2231 = vset.pattern.permute.xlu0 0
  %2232 = vperm.xlu0 %2231, %v1918
  %v2233 = vpop.permute.xlu0 %2232
  %2236 = vset.pattern.permute.xlu0 0
  %2237 = vperm.xlu0 %2236, %v1919
  %v2238 = vpop.permute.xlu0 %2237
  %2241 = vset.pattern.permute.xlu0 0
  %2242 = vperm.xlu0 %2241, %v1920
  %v2243 = vpop.permute.xlu0 %2242
  %2246 = vset.pattern.permute.xlu0 0
  %2247 = vperm.xlu0 %2246, %v1921
  %v2248 = vpop.permute.xlu0 %2247
  %2251 = vset.pattern.permute.xlu0 0
  %2252 = vperm.xlu0 %2251, %v1922
  %v2253 = vpop.permute.xlu0 %2252
  %2256 = vset.pattern.permute.xlu0 0
  %2257 = vperm.xlu0 %2256, %v1923
  %v2258 = vpop.permute.xlu0 %2257
  %2261 = vset.pattern.permute.xlu0 0
  %2262 = vperm.xlu0 %2261, %v1924
  %v2263 = vpop.permute.xlu0 %2262
  %2266 = vset.pattern.permute.xlu0 0
  %2267 = vperm.xlu0 %2266, %v1925
  %v2268 = vpop.permute.xlu0 %2267
  %2271 = vset.pattern.permute.xlu0 0
  %2272 = vperm.xlu0 %2271, %v1926
  %v2273 = vpop.permute.xlu0 %2272
  %2276 = vset.pattern.permute.xlu0 0
  %2277 = vperm.xlu0 %2276, %v1927
  %v2278 = vpop.permute.xlu0 %2277
  %2281 = vset.pattern.permute.xlu0 0
  %2282 = vperm.xlu0 %2281, %v1928
  %v2283 = vpop.permute.xlu0 %2282
  %2286 = vset.pattern.permute.xlu0 0
  %2287 = vperm.xlu0 %2286, %v1929
  %v2288 = vpop.permute.xlu0 %2287
  %v2290 = vadd.f32 %v1786, %v1933
  %v2291 = vadd.f32 %v1787, %v1938
  %v2292 = vadd.f32 %v1788, %v1943
  %v2293 = vadd.f32 %v1789, %v1948
  %v2294 = vadd.f32 %v1790, %v1953
  %v2295 = vadd.f32 %v1791, %v1958
  %v2296 = vadd.f32 %v1792, %v1963
  %v2297 = vadd.f32 %v1793, %v1968
  %v2298 = vadd.f32 %v1794, %v1973
  %v2299 = vadd.f32 %v1795, %v1978
  %v2300 = vadd.f32 %v1796, %v1983
  %v2301 = vadd.f32 %v1797, %v1988
  %v2302 = vadd.f32 %v1798, %v1993
  %v2303 = vadd.f32 %v1799, %v1998
  %v2304 = vadd.f32 %v1800, %v2003
  %v2305 = vadd.f32 %v1801, %v2008
  %v2306 = vadd.f32 %v1802, %v2013
  %v2307 = vadd.f32 %v1803, %v2018
  %v2308 = vadd.f32 %v1804, %v2023
  %v2309 = vadd.f32 %v1805, %v2028
  %v2310 = vadd.f32 %v1806, %v2033
  %v2311 = vadd.f32 %v1807, %v2038
  %v2312 = vadd.f32 %v1808, %v2043
  %v2313 = vadd.f32 %v1809, %v2048
  %v2314 = vadd.f32 %v1810, %v2053
  %v2315 = vadd.f32 %v1811, %v2058
  %v2316 = vadd.f32 %v1812, %v2063
  %v2317 = vadd.f32 %v1813, %v2068
  %v2318 = vadd.f32 %v1814, %v2073
  %v2319 = vadd.f32 %v1815, %v2078
  %v2320 = vadd.f32 %v1816, %v2083
  %v2321 = vadd.f32 %v1817, %v2088
  %v2322 = vadd.f32 %v1818, %v2093
  %v2323 = vadd.f32 %v1819, %v2098
  %v2324 = vadd.f32 %v1820, %v2103
  %v2325 = vadd.f32 %v1821, %v2108
  %v2326 = vadd.f32 %v1822, %v2113
  %v2327 = vadd.f32 %v1823, %v2118
  %v2328 = vadd.f32 %v1824, %v2123
  %v2329 = vadd.f32 %v1825, %v2128
  %v2330 = vadd.f32 %v1826, %v2133
  %v2331 = vadd.f32 %v1827, %v2138
  %v2332 = vadd.f32 %v1828, %v2143
  %v2333 = vadd.f32 %v1829, %v2148
  %v2334 = vadd.f32 %v1830, %v2153
  %v2335 = vadd.f32 %v1831, %v2158
  %v2336 = vadd.f32 %v1832, %v2163
  %v2337 = vadd.f32 %v1833, %v2168
  %v2338 = vadd.f32 %v1834, %v2173
  %v2339 = vadd.f32 %v1835, %v2178
  %v2340 = vadd.f32 %v1836, %v2183
  %v2341 = vadd.f32 %v1837, %v2188
  %v2342 = vadd.f32 %v1838, %v2193
  %v2343 = vadd.f32 %v1839, %v2198
  %v2344 = vadd.f32 %v1840, %v2203
  %v2345 = vadd.f32 %v1841, %v2208
  %v2346 = vadd.f32 %v1842, %v2213
  %v2347 = vadd.f32 %v1843, %v2218
  %v2348 = vadd.f32 %v1844, %v2223
  %v2349 = vadd.f32 %v1845, %v2228
  %v2350 = vadd.f32 %v1846, %v2233
  %v2351 = vadd.f32 %v1847, %v2238
  %v2352 = vadd.f32 %v1848, %v2243
  %v2353 = vadd.f32 %v1849, %v2248
  %v2354 = vadd.f32 %v1850, %v2253
  %v2355 = vadd.f32 %v1851, %v2258
  %v2356 = vadd.f32 %v1852, %v2263
  %v2357 = vadd.f32 %v1853, %v2268
  %v2358 = vadd.f32 %v1854, %v2273
  %v2359 = vadd.f32 %v1855, %v2278
  %v2360 = vadd.f32 %v1856, %v2283
  %v2361 = vadd.f32 %v1857, %v2288
  %v2362 = vmax.f32 %v2290, 0.0
  %v2363 = vmax.f32 %v2291, 0.0
  %v2364 = vmax.f32 %v2292, 0.0
  %v2365 = vmax.f32 %v2293, 0.0
  %v2366 = vmax.f32 %v2294, 0.0
  %v2367 = vmax.f32 %v2295, 0.0
  %v2368 = vmax.f32 %v2296, 0.0
  %v2369 = vmax.f32 %v2297, 0.0
  %v2370 = vmax.f32 %v2298, 0.0
  %v2371 = vmax.f32 %v2299, 0.0
  %v2372 = vmax.f32 %v2300, 0.0
  %v2373 = vmax.f32 %v2301, 0.0
  %v2374 = vmax.f32 %v2302, 0.0
  %v2375 = vmax.f32 %v2303, 0.0
  %v2376 = vmax.f32 %v2304, 0.0
  %v2377 = vmax.f32 %v2305, 0.0
  %v2378 = vmax.f32 %v2306, 0.0
  %v2379 = vmax.f32 %v2307, 0.0
  %v2380 = vmax.f32 %v2308, 0.0
  %v2381 = vmax.f32 %v2309, 0.0
  %v2382 = vmax.f32 %v2310, 0.0
  %v2383 = vmax.f32 %v2311, 0.0
  %v2384 = vmax.f32 %v2312, 0.0
  %v2385 = vmax.f32 %v2313, 0.0
  %v2386 = vmax.f32 %v2314, 0.0
  %v2387 = vmax.f32 %v2315, 0.0
  %v2388 = vmax.f32 %v2316, 0.0
  %v2389 = vmax.f32 %v2317, 0.0
  %v2390 = vmax.f32 %v2318, 0.0
  %v2391 = vmax.f32 %v2319, 0.0
  %v2392 = vmax.f32 %v2320, 0.0
  %v2393 = vmax.f32 %v2321, 0.0
  %v2394 = vmax.f32 %v2322, 0.0
  %v2395 = vmax.f32 %v2323, 0.0
  %v2396 = vmax.f32 %v2324, 0.0
  %v2397 = vmax.f32 %v2325, 0.0
  %v2398 = vmax.f32 %v2326, 0.0
  %v2399 = vmax.f32 %v2327, 0.0
  %v2400 = vmax.f32 %v2328, 0.0
  %v2401 = vmax.f32 %v2329, 0.0
  %v2402 = vmax.f32 %v2330, 0.0
  %v2403 = vmax.f32 %v2331, 0.0
  %v2404 = vmax.f32 %v2332, 0.0
  %v2405 = vmax.f32 %v2333, 0.0
  %v2406 = vmax.f32 %v2334, 0.0
  %v2407 = vmax.f32 %v2335, 0.0
  %v2408 = vmax.f32 %v2336, 0.0
  %v2409 = vmax.f32 %v2337, 0.0
  %v2410 = vmax.f32 %v2338, 0.0
  %v2411 = vmax.f32 %v2339, 0.0
  %v2412 = vmax.f32 %v2340, 0.0
  %v2413 = vmax.f32 %v2341, 0.0
  %v2414 = vmax.f32 %v2342, 0.0
  %v2415 = vmax.f32 %v2343, 0.0
  %v2416 = vmax.f32 %v2344, 0.0
  %v2417 = vmax.f32 %v2345, 0.0
  %v2418 = vmax.f32 %v2346, 0.0
  %v2419 = vmax.f32 %v2347, 0.0
  %v2420 = vmax.f32 %v2348, 0.0
  %v2421 = vmax.f32 %v2349, 0.0
  %v2422 = vmax.f32 %v2350, 0.0
  %v2423 = vmax.f32 %v2351, 0.0
  %v2424 = vmax.f32 %v2352, 0.0
  %v2425 = vmax.f32 %v2353, 0.0
  %v2426 = vmax.f32 %v2354, 0.0
  %v2427 = vmax.f32 %v2355, 0.0
  %v2428 = vmax.f32 %v2356, 0.0
  %v2429 = vmax.f32 %v2357, 0.0
  %v2430 = vmax.f32 %v2358, 0.0
  %v2431 = vmax.f32 %v2359, 0.0
  %v2432 = vmax.f32 %v2360, 0.0
  %v2433 = vmax.f32 %v2361, 0.0
  %v2434 = vpack.c.bf16 %v2363, %v2362
  %v2435 = vpack.c.bf16 %v2365, %v2364
  %v2436 = vpack.c.bf16 %v2367, %v2366
  %v2437 = vpack.c.bf16 %v2369, %v2368
  %v2438 = vpack.c.bf16 %v2371, %v2370
  %v2439 = vpack.c.bf16 %v2373, %v2372
  %v2440 = vpack.c.bf16 %v2375, %v2374
  %v2441 = vpack.c.bf16 %v2377, %v2376
  %v2442 = vpack.c.bf16 %v2379, %v2378
  %v2443 = vpack.c.bf16 %v2381, %v2380
  %v2444 = vpack.c.bf16 %v2383, %v2382
  %v2445 = vpack.c.bf16 %v2385, %v2384
  %v2446 = vpack.c.bf16 %v2387, %v2386
  %v2447 = vpack.c.bf16 %v2389, %v2388
  %v2448 = vpack.c.bf16 %v2391, %v2390
  %v2449 = vpack.c.bf16 %v2393, %v2392
  %v2450 = vpack.c.bf16 %v2395, %v2394
  %v2451 = vpack.c.bf16 %v2397, %v2396
  %v2452 = vpack.c.bf16 %v2399, %v2398
  %v2453 = vpack.c.bf16 %v2401, %v2400
  %v2454 = vpack.c.bf16 %v2403, %v2402
  %v2455 = vpack.c.bf16 %v2405, %v2404
  %v2456 = vpack.c.bf16 %v2407, %v2406
  %v2457 = vpack.c.bf16 %v2409, %v2408
  %v2458 = vpack.c.bf16 %v2411, %v2410
  %v2459 = vpack.c.bf16 %v2413, %v2412
  %v2460 = vpack.c.bf16 %v2415, %v2414
  %v2461 = vpack.c.bf16 %v2417, %v2416
  %v2462 = vpack.c.bf16 %v2419, %v2418
  %v2463 = vpack.c.bf16 %v2421, %v2420
  %v2464 = vpack.c.bf16 %v2423, %v2422
  %v2465 = vpack.c.bf16 %v2425, %v2424
  %v2466 = vpack.c.bf16 %v2427, %v2426
  %v2467 = vpack.c.bf16 %v2429, %v2428
  %v2468 = vpack.c.bf16 %v2431, %v2430
  %v2469 = vpack.c.bf16 %v2433, %v2432
  %2470 = vst [vmem:[#allocation2] sm:$0xff] %v2434
  %2471 = vst [vmem:[#allocation2 + $0x8] sm:$0xff] %v2435
  %2472 = vst [vmem:[#allocation2 + $0x10] sm:$0xff] %v2436
  %2473 = vst [vmem:[#allocation2 + $0x18] sm:$0xff] %v2437
  %2474 = vst [vmem:[#allocation2 + $0x20] sm:$0xff] %v2438
  %2475 = vst [vmem:[#allocation2 + $0x28] sm:$0xff] %v2439
  %2476 = vst [vmem:[#allocation2 + $0x30] sm:$0xff] %v2440
  %2477 = vst [vmem:[#allocation2 + $0x38] sm:$0xff] %v2441
  %2478 = vst [vmem:[#allocation2 + $0x40] sm:$0xff] %v2442
  %2479 = vst [vmem:[#allocation2 + $0x48] sm:$0xff] %v2443
  %2480 = vst [vmem:[#allocation2 + $0x50] sm:$0xff] %v2444
  %2481 = vst [vmem:[#allocation2 + $0x58] sm:$0xff] %v2445
  %2482 = vst [vmem:[#allocation2 + $0x60] sm:$0xff] %v2446
  %2483 = vst [vmem:[#allocation2 + $0x68] sm:$0xff] %v2447
  %2484 = vst [vmem:[#allocation2 + $0x70] sm:$0xff] %v2448
  %2485 = vst [vmem:[#allocation2 + $0x78] sm:$0xff] %v2449
  %2486 = vst [vmem:[#allocation2 + $0x80] sm:$0xff] %v2450
  %2487 = vst [vmem:[#allocation2 + $0x88] sm:$0xff] %v2451
  %2488 = vst [vmem:[#allocation2 + $0x90] sm:$0xff] %v2452
  %2489 = vst [vmem:[#allocation2 + $0x98] sm:$0xff] %v2453
  %2490 = vst [vmem:[#allocation2 + $0xa0] sm:$0xff] %v2454
  %2491 = vst [vmem:[#allocation2 + $0xa8] sm:$0xff] %v2455
  %2492 = vst [vmem:[#allocation2 + $0xb0] sm:$0xff] %v2456
  %2493 = vst [vmem:[#allocation2 + $0xb8] sm:$0xff] %v2457
  %2494 = vst [vmem:[#allocation2 + $0xc0] sm:$0xff] %v2458
  %2495 = vst [vmem:[#allocation2 + $0xc8] sm:$0xff] %v2459
  %2496 = vst [vmem:[#allocation2 + $0xd0] sm:$0xff] %v2460
  %2497 = vst [vmem:[#allocation2 + $0xd8] sm:$0xff] %v2461
  %2498 = vst [vmem:[#allocation2 + $0xe0] sm:$0xff] %v2462
  %2499 = vst [vmem:[#allocation2 + $0xe8] sm:$0xff] %v2463
  %2500 = vst [vmem:[#allocation2 + $0xf0] sm:$0xff] %v2464
  %2501 = vst [vmem:[#allocation2 + $0xf8] sm:$0xff] %v2465
  %2502 = vst [vmem:[#allocation2 + $0x100] sm:$0xff] %v2466
  %2503 = vst [vmem:[#allocation2 + $0x108] sm:$0xff] %v2467
  %2504 = vst [vmem:[#allocation2 + $0x110] sm:$0xff] %v2468
  %2505 = vst [vmem:[#allocation2 + $0x118] sm:$0xff] %v2469
  %v2506 = vld [vmem:[#allocation2] sm:$0xff]
  %v2507 = vld [vmem:[#allocation2 + $0x8] sm:$0xff]
  %v2508 = vld [vmem:[#allocation2 + $0x10] sm:$0xff]
  %v2509 = vld [vmem:[#allocation2 + $0x18] sm:$0xff]
  %v2510 = vld [vmem:[#allocation2 + $0x20] sm:$0xff]
  %v2511 = vld [vmem:[#allocation2 + $0x28] sm:$0xff]
  %v2512 = vld [vmem:[#allocation2 + $0x30] sm:$0xff]
  %v2513 = vld [vmem:[#allocation2 + $0x38] sm:$0xff]
  %v2514 = vld [vmem:[#allocation2 + $0x40] sm:$0xff]
  %v2515 = vld [vmem:[#allocation2 + $0x48] sm:$0xff]
  %v2516 = vld [vmem:[#allocation2 + $0x50] sm:$0xff]
  %v2517 = vld [vmem:[#allocation2 + $0x58] sm:$0xff]
  %v2518 = vld [vmem:[#allocation2 + $0x60] sm:$0xff]
  %v2519 = vld [vmem:[#allocation2 + $0x68] sm:$0xff]
  %v2520 = vld [vmem:[#allocation2 + $0x70] sm:$0xff]
  %v2521 = vld [vmem:[#allocation2 + $0x78] sm:$0xff]
  %v2522 = vld [vmem:[#allocation2 + $0x80] sm:$0xff]
  %v2523 = vld [vmem:[#allocation2 + $0x88] sm:$0xff]
  %v2524 = vld [vmem:[#allocation2 + $0x90] sm:$0xff]
  %v2525 = vld [vmem:[#allocation2 + $0x98] sm:$0xff]
  %v2526 = vld [vmem:[#allocation2 + $0xa0] sm:$0xff]
  %v2527 = vld [vmem:[#allocation2 + $0xa8] sm:$0xff]
  %v2528 = vld [vmem:[#allocation2 + $0xb0] sm:$0xff]
  %v2529 = vld [vmem:[#allocation2 + $0xb8] sm:$0xff]
  %v2530 = vld [vmem:[#allocation2 + $0xc0] sm:$0xff]
  %v2531 = vld [vmem:[#allocation2 + $0xc8] sm:$0xff]
  %v2532 = vld [vmem:[#allocation2 + $0xd0] sm:$0xff]
  %v2533 = vld [vmem:[#allocation2 + $0xd8] sm:$0xff]
  %v2534 = vld [vmem:[#allocation2 + $0xe0] sm:$0xff]
  %v2535 = vld [vmem:[#allocation2 + $0xe8] sm:$0xff]
  %v2536 = vld [vmem:[#allocation2 + $0xf0] sm:$0xff]
  %v2537 = vld [vmem:[#allocation2 + $0xf8] sm:$0xff]
  %v2538 = vld [vmem:[#allocation2 + $0x100] sm:$0xff]
  %v2539 = vld [vmem:[#allocation2 + $0x108] sm:$0xff]
  %v2540 = vld [vmem:[#allocation2 + $0x110] sm:$0xff]
  %v2541 = vld [vmem:[#allocation2 + $0x118] sm:$0xff]
  %v2542 = vld [vmem:[%s4] sm:$0xff]
  %v2543 = vld [vmem:[%s4 + $0x8] sm:$0xff]
  %v2544 = vld [vmem:[%s4 + $0x10] sm:$0xf]
  %v2545 = vld [vmem:[%s4 + $0x14] sm:$0xff]
  %v2546 = vld [vmem:[%s4 + $0x1c] sm:$0xff]
  %v2547 = vld [vmem:[%s4 + $0x24] sm:$0xf]
  %v2548 = vld [vmem:[%s4 + $0x28] sm:$0xff]
  %v2549 = vld [vmem:[%s4 + $0x30] sm:$0xff]
  %v2550 = vld [vmem:[%s4 + $0x38] sm:$0xf]
  %v2551 = vld [vmem:[%s4 + $0x3c] sm:$0xff]
  %v2552 = vld [vmem:[%s4 + $0x44] sm:$0xff]
  %v2553 = vld [vmem:[%s4 + $0x4c] sm:$0xf]
  %v2554 = vld [vmem:[%s4 + $0x50] sm:$0xff]
  %v2555 = vld [vmem:[%s4 + $0x58] sm:$0xff]
  %v2556 = vld [vmem:[%s4 + $0x60] sm:$0xf]
  %v2557 = vld [vmem:[%s4 + $0x64] sm:$0xff]
  %v2558 = vld [vmem:[%s4 + $0x6c] sm:$0xff]
  %v2559 = vld [vmem:[%s4 + $0x74] sm:$0xf]
  %v2560 = vld [vmem:[%s4 + $0x78] sm:$0xff]
  %v2561 = vld [vmem:[%s4 + $0x80] sm:$0xff]
  %v2562 = vld [vmem:[%s4 + $0x88] sm:$0xf]
  %v2563 = vld [vmem:[%s4 + $0x8c] sm:$0xff]
  %v2564 = vld [vmem:[%s4 + $0x94] sm:$0xff]
  %v2565 = vld [vmem:[%s4 + $0x9c] sm:$0xf]
  %v2566 = vld [vmem:[%s4 + $0xa0] sm:$0xff]
  %v2567 = vld [vmem:[%s4 + $0xa8] sm:$0xff]
  %v2568 = vld [vmem:[%s4 + $0xb0] sm:$0xf]
  %v2569 = vld [vmem:[%s4 + $0xb4] sm:$0xff]
  %v2570 = vld [vmem:[%s4 + $0xbc] sm:$0xff]
  %v2571 = vld [vmem:[%s4 + $0xc4] sm:$0xf]
  %v2572 = vld [vmem:[%s4 + $0xc8] sm:$0xff]
  %v2573 = vld [vmem:[%s4 + $0xd0] sm:$0xff]
  %v2574 = vld [vmem:[%s4 + $0xd8] sm:$0xf]
  %v2575 = vld [vmem:[%s4 + $0xdc] sm:$0xff]
  %v2576 = vld [vmem:[%s4 + $0xe4] sm:$0xff]
  %v2577 = vld [vmem:[%s4 + $0xec] sm:$0xf]
  %v2578 = vld [vmem:[%s4 + $0xf0] sm:$0xff]
  %v2579 = vld [vmem:[%s4 + $0xf8] sm:$0xff]
  %v2580 = vld [vmem:[%s4 + $0x100] sm:$0xf]
  %v2581 = vld [vmem:[%s4 + $0x104] sm:$0xff]
  %v2582 = vld [vmem:[%s4 + $0x10c] sm:$0xff]
  %v2583 = vld [vmem:[%s4 + $0x114] sm:$0xf]
  %v2584 = vld [vmem:[%s4 + $0x118] sm:$0xff]
  %v2585 = vld [vmem:[%s4 + $0x120] sm:$0xff]
  %v2586 = vld [vmem:[%s4 + $0x128] sm:$0xf]
  %v2587 = vld [vmem:[%s4 + $0x12c] sm:$0xff]
  %v2588 = vld [vmem:[%s4 + $0x134] sm:$0xff]
  %v2589 = vld [vmem:[%s4 + $0x13c] sm:$0xf]
  %v2590 = vld [vmem:[%s4 + $0x140] sm:$0xff]
  %v2591 = vld [vmem:[%s4 + $0x148] sm:$0xff]
  %v2592 = vld [vmem:[%s4 + $0x150] sm:$0xf]
  %v2593 = vld [vmem:[%s4 + $0x154] sm:$0xff]
  %v2594 = vld [vmem:[%s4 + $0x15c] sm:$0xff]
  %v2595 = vld [vmem:[%s4 + $0x164] sm:$0xf]
  %v2596 = vld [vmem:[%s4 + $0x168] sm:$0xff]
  %v2597 = vld [vmem:[%s4 + $0x170] sm:$0xff]
  %v2598 = vld [vmem:[%s4 + $0x178] sm:$0xf]
  %v2599 = vld [vmem:[%s4 + $0x17c] sm:$0xff]
  %v2600 = vld [vmem:[%s4 + $0x184] sm:$0xff]
  %v2601 = vld [vmem:[%s4 + $0x18c] sm:$0xf]
  %v2602 = vld [vmem:[%s4 + $0x190] sm:$0xff]
  %v2603 = vld [vmem:[%s4 + $0x198] sm:$0xff]
  %v2604 = vld [vmem:[%s4 + $0x1a0] sm:$0xf]
  %v2605 = vld [vmem:[%s4 + $0x1a4] sm:$0xff]
  %v2606 = vld [vmem:[%s4 + $0x1ac] sm:$0xff]
  %v2607 = vld [vmem:[%s4 + $0x1b4] sm:$0xf]
  %v2608 = vld [vmem:[%s4 + $0x1b8] sm:$0xff]
  %v2609 = vld [vmem:[%s4 + $0x1c0] sm:$0xff]
  %v2610 = vld [vmem:[%s4 + $0x1c8] sm:$0xf]
  %v2611 = vld [vmem:[%s4 + $0x1cc] sm:$0xff]
  %v2612 = vld [vmem:[%s4 + $0x1d4] sm:$0xff]
  %v2613 = vld [vmem:[%s4 + $0x1dc] sm:$0xf]
  %v2614 = vld [vmem:[%s4 + $0x1e0] sm:$0xff]
  %v2615 = vld [vmem:[%s4 + $0x1e8] sm:$0xff]
  %v2616 = vld [vmem:[%s4 + $0x1f0] sm:$0xf]
  %v2617 = vld [vmem:[%s4 + $0x1f4] sm:$0xff]
  %v2618 = vld [vmem:[%s4 + $0x1fc] sm:$0xff]
  %v2619 = vld [vmem:[%s4 + $0x204] sm:$0xf]
  %v2620 = vld [vmem:[%s4 + $0x208] sm:$0xff]
  %v2621 = vld [vmem:[%s4 + $0x210] sm:$0xff]
  %v2622 = vld [vmem:[%s4 + $0x218] sm:$0xf]
  %v2623 = vld [vmem:[%s4 + $0x21c] sm:$0xff]
  %v2624 = vld [vmem:[%s4 + $0x224] sm:$0xff]
  %v2625 = vld [vmem:[%s4 + $0x22c] sm:$0xf]
  %v2626 = vld [vmem:[%s4 + $0x230] sm:$0xff]
  %v2627 = vld [vmem:[%s4 + $0x238] sm:$0xff]
  %v2628 = vld [vmem:[%s4 + $0x240] sm:$0xf]
  %v2629 = vld [vmem:[%s4 + $0x244] sm:$0xff]
  %v2630 = vld [vmem:[%s4 + $0x24c] sm:$0xff]
  %v2631 = vld [vmem:[%s4 + $0x254] sm:$0xf]
  %v2632 = vld [vmem:[%s4 + $0x258] sm:$0xff]
  %v2633 = vld [vmem:[%s4 + $0x260] sm:$0xff]
  %v2634 = vld [vmem:[%s4 + $0x268] sm:$0xf]
  %v2635 = vld [vmem:[%s4 + $0x26c] sm:$0xff]
  %v2636 = vld [vmem:[%s4 + $0x274] sm:$0xff]
  %v2637 = vld [vmem:[%s4 + $0x27c] sm:$0xf]
  %v2638 = vld [vmem:[%s4 + $0x280] sm:$0xff]
  %v2639 = vld [vmem:[%s4 + $0x288] sm:$0xff]
  %v2640 = vld [vmem:[%s4 + $0x290] sm:$0xf]
  %v2641 = vld [vmem:[%s4 + $0x294] sm:$0xff]
  %v2642 = vld [vmem:[%s4 + $0x29c] sm:$0xff]
  %v2643 = vld [vmem:[%s4 + $0x2a4] sm:$0xf]
  %v2644 = vld [vmem:[%s4 + $0x2a8] sm:$0xff]
  %v2645 = vld [vmem:[%s4 + $0x2b0] sm:$0xff]
  %v2646 = vld [vmem:[%s4 + $0x2b8] sm:$0xf]
  %v2647 = vld [vmem:[%s4 + $0x2bc] sm:$0xff]
  %v2648 = vld [vmem:[%s4 + $0x2c4] sm:$0xff]
  %v2649 = vld [vmem:[%s4 + $0x2cc] sm:$0xf]
  %v2650 = vld [vmem:[%s4 + $0x2d0] sm:$0xff]
  %v2651 = vld [vmem:[%s4 + $0x2d8] sm:$0xff]
  %v2652 = vld [vmem:[%s4 + $0x2e0] sm:$0xf]
  %v2653 = vld [vmem:[%s4 + $0x2e4] sm:$0xff]
  %v2654 = vld [vmem:[%s4 + $0x2ec] sm:$0xff]
  %v2655 = vld [vmem:[%s4 + $0x2f4] sm:$0xf]
  %v2656 = vld [vmem:[%s4 + $0x2f8] sm:$0xff]
  %v2657 = vld [vmem:[%s4 + $0x300] sm:$0xff]
  %v2658 = vld [vmem:[%s4 + $0x308] sm:$0xf]
  %v2659 = vld [vmem:[%s4 + $0x30c] sm:$0xff]
  %v2660 = vld [vmem:[%s4 + $0x314] sm:$0xff]
  %v2661 = vld [vmem:[%s4 + $0x31c] sm:$0xf]
  %v2662 = vld [vmem:[%s4 + $0x320] sm:$0xff]
  %v2663 = vld [vmem:[%s4 + $0x328] sm:$0xff]
  %v2664 = vld [vmem:[%s4 + $0x330] sm:$0xf]
  %v2665 = vld [vmem:[%s4 + $0x334] sm:$0xff]
  %v2666 = vld [vmem:[%s4 + $0x33c] sm:$0xff]
  %v2667 = vld [vmem:[%s4 + $0x344] sm:$0xf]
  %v2668 = vld [vmem:[%s4 + $0x348] sm:$0xff]
  %v2669 = vld [vmem:[%s4 + $0x350] sm:$0xff]
  %v2670 = vld [vmem:[%s4 + $0x358] sm:$0xf]
  %v2671 = vld [vmem:[%s4 + $0x35c] sm:$0xff]
  %v2672 = vld [vmem:[%s4 + $0x364] sm:$0xff]
  %v2673 = vld [vmem:[%s4 + $0x36c] sm:$0xf]
  %v2674 = vld [vmem:[%s4 + $0x370] sm:$0xff]
  %v2675 = vld [vmem:[%s4 + $0x378] sm:$0xff]
  %v2676 = vld [vmem:[%s4 + $0x380] sm:$0xf]
  %v2677 = vld [vmem:[%s4 + $0x384] sm:$0xff]
  %v2678 = vld [vmem:[%s4 + $0x38c] sm:$0xff]
  %v2679 = vld [vmem:[%s4 + $0x394] sm:$0xf]
  %v2680 = vld [vmem:[%s4 + $0x398] sm:$0xff]
  %v2681 = vld [vmem:[%s4 + $0x3a0] sm:$0xff]
  %v2682 = vld [vmem:[%s4 + $0x3a8] sm:$0xf]
  %v2683 = vld [vmem:[%s4 + $0x3ac] sm:$0xff]
  %v2684 = vld [vmem:[%s4 + $0x3b4] sm:$0xff]
  %v2685 = vld [vmem:[%s4 + $0x3bc] sm:$0xf]
  %v2686 = vld [vmem:[%s4 + $0x3c0] sm:$0xff]
  %v2687 = vld [vmem:[%s4 + $0x3c8] sm:$0xff]
  %v2688 = vld [vmem:[%s4 + $0x3d0] sm:$0xf]
  %v2689 = vld [vmem:[%s4 + $0x3d4] sm:$0xff]
  %v2690 = vld [vmem:[%s4 + $0x3dc] sm:$0xff]
  %v2691 = vld [vmem:[%s4 + $0x3e4] sm:$0xf]
  %v2692 = vld [vmem:[%s4 + $0x3e8] sm:$0xff]
  %v2693 = vld [vmem:[%s4 + $0x3f0] sm:$0xff]
  %v2694 = vld [vmem:[%s4 + $0x3f8] sm:$0xf]
  %v2695 = vld [vmem:[%s4 + $0x3fc] sm:$0xff]
  %v2696 = vld [vmem:[%s4 + $0x404] sm:$0xff]
  %v2697 = vld [vmem:[%s4 + $0x40c] sm:$0xf]
  %v2698 = vld [vmem:[%s4 + $0x410] sm:$0xff]
  %v2699 = vld [vmem:[%s4 + $0x418] sm:$0xff]
  %v2700 = vld [vmem:[%s4 + $0x420] sm:$0xf]
  %v2701 = vld [vmem:[%s4 + $0x424] sm:$0xff]
  %v2702 = vld [vmem:[%s4 + $0x42c] sm:$0xff]
  %v2703 = vld [vmem:[%s4 + $0x434] sm:$0xf]
  %v2704 = vld [vmem:[%s4 + $0x438] sm:$0xff]
  %v2705 = vld [vmem:[%s4 + $0x440] sm:$0xff]
  %v2706 = vld [vmem:[%s4 + $0x448] sm:$0xf]
  %v2707 = vld [vmem:[%s4 + $0x44c] sm:$0xff]
  %v2708 = vld [vmem:[%s4 + $0x454] sm:$0xff]
  %v2709 = vld [vmem:[%s4 + $0x45c] sm:$0xf]
  %v2710 = vld [vmem:[%s4 + $0x460] sm:$0xff]
  %v2711 = vld [vmem:[%s4 + $0x468] sm:$0xff]
  %v2712 = vld [vmem:[%s4 + $0x470] sm:$0xf]
  %v2713 = vld [vmem:[%s4 + $0x474] sm:$0xff]
  %v2714 = vld [vmem:[%s4 + $0x47c] sm:$0xff]
  %v2715 = vld [vmem:[%s4 + $0x484] sm:$0xf]
  %v2716 = vld [vmem:[%s4 + $0x488] sm:$0xff]
  %v2717 = vld [vmem:[%s4 + $0x490] sm:$0xff]
  %v2718 = vld [vmem:[%s4 + $0x498] sm:$0xf]
  %v2719 = vld [vmem:[%s4 + $0x49c] sm:$0xff]
  %v2720 = vld [vmem:[%s4 + $0x4a4] sm:$0xff]
  %v2721 = vld [vmem:[%s4 + $0x4ac] sm:$0xf]
  %v2722 = vld [vmem:[%s4 + $0x4b0] sm:$0xff]
  %v2723 = vld [vmem:[%s4 + $0x4b8] sm:$0xff]
  %v2724 = vld [vmem:[%s4 + $0x4c0] sm:$0xf]
  %v2725 = vld [vmem:[%s4 + $0x4c4] sm:$0xff]
  %v2726 = vld [vmem:[%s4 + $0x4cc] sm:$0xff]
  %v2727 = vld [vmem:[%s4 + $0x4d4] sm:$0xf]
  %v2728 = vld [vmem:[%s4 + $0x4d8] sm:$0xff]
  %v2729 = vld [vmem:[%s4 + $0x4e0] sm:$0xff]
  %v2730 = vld [vmem:[%s4 + $0x4e8] sm:$0xf]
  %v2731 = vld [vmem:[%s4 + $0x4ec] sm:$0xff]
  %v2732 = vld [vmem:[%s4 + $0x4f4] sm:$0xff]
  %v2733 = vld [vmem:[%s4 + $0x4fc] sm:$0xf]
  %v2734 = vld [vmem:[%s4 + $0x500] sm:$0xff]
  %v2735 = vld [vmem:[%s4 + $0x508] sm:$0xff]
  %v2736 = vld [vmem:[%s4 + $0x510] sm:$0xf]
  %v2737 = vld [vmem:[%s4 + $0x514] sm:$0xff]
  %v2738 = vld [vmem:[%s4 + $0x51c] sm:$0xff]
  %v2739 = vld [vmem:[%s4 + $0x524] sm:$0xf]
  %v2740 = vld [vmem:[%s4 + $0x528] sm:$0xff]
  %v2741 = vld [vmem:[%s4 + $0x530] sm:$0xff]
  %v2742 = vld [vmem:[%s4 + $0x538] sm:$0xf]
  %v2743 = vld [vmem:[%s4 + $0x53c] sm:$0xff]
  %v2744 = vld [vmem:[%s4 + $0x544] sm:$0xff]
  %v2745 = vld [vmem:[%s4 + $0x54c] sm:$0xf]
  %v2746 = vld [vmem:[%s4 + $0x550] sm:$0xff]
  %v2747 = vld [vmem:[%s4 + $0x558] sm:$0xff]
  %v2748 = vld [vmem:[%s4 + $0x560] sm:$0xf]
  %v2749 = vld [vmem:[%s4 + $0x564] sm:$0xff]
  %v2750 = vld [vmem:[%s4 + $0x56c] sm:$0xff]
  %v2751 = vld [vmem:[%s4 + $0x574] sm:$0xf]
  %v2752 = vld [vmem:[%s4 + $0x578] sm:$0xff]
  %v2753 = vld [vmem:[%s4 + $0x580] sm:$0xff]
  %v2754 = vld [vmem:[%s4 + $0x588] sm:$0xf]
  %v2755 = vld [vmem:[%s4 + $0x58c] sm:$0xff]
  %v2756 = vld [vmem:[%s4 + $0x594] sm:$0xff]
  %v2757 = vld [vmem:[%s4 + $0x59c] sm:$0xf]
  %v2758 = vld [vmem:[%s4 + $0x5a0] sm:$0xff]
  %v2759 = vld [vmem:[%s4 + $0x5a8] sm:$0xff]
  %v2760 = vld [vmem:[%s4 + $0x5b0] sm:$0xf]
  %v2761 = vld [vmem:[%s4 + $0x5b4] sm:$0xff]
  %v2762 = vld [vmem:[%s4 + $0x5bc] sm:$0xff]
  %v2763 = vld [vmem:[%s4 + $0x5c4] sm:$0xf]
  %v2764 = vld [vmem:[%s4 + $0x5c8] sm:$0xff]
  %v2765 = vld [vmem:[%s4 + $0x5d0] sm:$0xff]
  %v2766 = vld [vmem:[%s4 + $0x5d8] sm:$0xf]
  %v2767 = vld [vmem:[%s4 + $0x5dc] sm:$0xff]
  %v2768 = vld [vmem:[%s4 + $0x5e4] sm:$0xff]
  %v2769 = vld [vmem:[%s4 + $0x5ec] sm:$0xf]
  %v2770 = vld [vmem:[%s4 + $0x5f0] sm:$0xff]
  %v2771 = vld [vmem:[%s4 + $0x5f8] sm:$0xff]
  %v2772 = vld [vmem:[%s4 + $0x600] sm:$0xf]
  %v2773 = vld [vmem:[%s4 + $0x604] sm:$0xff]
  %v2774 = vld [vmem:[%s4 + $0x60c] sm:$0xff]
  %v2775 = vld [vmem:[%s4 + $0x614] sm:$0xf]
  %v2776 = vld [vmem:[%s4 + $0x618] sm:$0xff]
  %v2777 = vld [vmem:[%s4 + $0x620] sm:$0xff]
  %v2778 = vld [vmem:[%s4 + $0x628] sm:$0xf]
  %v2779 = vld [vmem:[%s4 + $0x62c] sm:$0xff]
  %v2780 = vld [vmem:[%s4 + $0x634] sm:$0xff]
  %v2781 = vld [vmem:[%s4 + $0x63c] sm:$0xf]
  %v2782 = vld [vmem:[%s4 + $0x640] sm:$0xff]
  %v2783 = vld [vmem:[%s4 + $0x648] sm:$0xff]
  %v2784 = vld [vmem:[%s4 + $0x650] sm:$0xf]
  %v2785 = vld [vmem:[%s4 + $0x654] sm:$0xff]
  %v2786 = vld [vmem:[%s4 + $0x65c] sm:$0xff]
  %v2787 = vld [vmem:[%s4 + $0x664] sm:$0xf]
  %v2788 = vld [vmem:[%s4 + $0x668] sm:$0xff]
  %v2789 = vld [vmem:[%s4 + $0x670] sm:$0xff]
  %v2790 = vld [vmem:[%s4 + $0x678] sm:$0xf]
  %v2791 = vld [vmem:[%s4 + $0x67c] sm:$0xff]
  %v2792 = vld [vmem:[%s4 + $0x684] sm:$0xff]
  %v2793 = vld [vmem:[%s4 + $0x68c] sm:$0xf]
  %v2794 = vld [vmem:[%s4 + $0x690] sm:$0xff]
  %v2795 = vld [vmem:[%s4 + $0x698] sm:$0xff]
  %v2796 = vld [vmem:[%s4 + $0x6a0] sm:$0xf]
  %v2797 = vld [vmem:[%s4 + $0x6a4] sm:$0xff]
  %v2798 = vld [vmem:[%s4 + $0x6ac] sm:$0xff]
  %v2799 = vld [vmem:[%s4 + $0x6b4] sm:$0xf]
  %v2800 = vld [vmem:[%s4 + $0x6b8] sm:$0xff]
  %v2801 = vld [vmem:[%s4 + $0x6c0] sm:$0xff]
  %v2802 = vld [vmem:[%s4 + $0x6c8] sm:$0xf]
  %v2803 = vld [vmem:[%s4 + $0x6cc] sm:$0xff]
  %v2804 = vld [vmem:[%s4 + $0x6d4] sm:$0xff]
  %v2805 = vld [vmem:[%s4 + $0x6dc] sm:$0xf]
  %v2806 = vld [vmem:[%s4 + $0x6e0] sm:$0xff]
  %v2807 = vld [vmem:[%s4 + $0x6e8] sm:$0xff]
  %v2808 = vld [vmem:[%s4 + $0x6f0] sm:$0xf]
  %v2809 = vld [vmem:[%s4 + $0x6f4] sm:$0xff]
  %v2810 = vld [vmem:[%s4 + $0x6fc] sm:$0xff]
  %v2811 = vld [vmem:[%s4 + $0x704] sm:$0xf]
  %v2812 = vld [vmem:[%s4 + $0x708] sm:$0xff]
  %v2813 = vld [vmem:[%s4 + $0x710] sm:$0xff]
  %v2814 = vld [vmem:[%s4 + $0x718] sm:$0xf]
  %v2815 = vld [vmem:[%s4 + $0x71c] sm:$0xff]
  %v2816 = vld [vmem:[%s4 + $0x724] sm:$0xff]
  %v2817 = vld [vmem:[%s4 + $0x72c] sm:$0xf]
  %v2818 = vld [vmem:[%s4 + $0x730] sm:$0xff]
  %v2819 = vld [vmem:[%s4 + $0x738] sm:$0xff]
  %v2820 = vld [vmem:[%s4 + $0x740] sm:$0xf]
  %v2821 = vld [vmem:[%s4 + $0x744] sm:$0xff]
  %v2822 = vld [vmem:[%s4 + $0x74c] sm:$0xff]
  %v2823 = vld [vmem:[%s4 + $0x754] sm:$0xf]
  %v2824 = vld [vmem:[%s4 + $0x758] sm:$0xff]
  %v2825 = vld [vmem:[%s4 + $0x760] sm:$0xff]
  %v2826 = vld [vmem:[%s4 + $0x768] sm:$0xf]
  %v2827 = vld [vmem:[%s4 + $0x76c] sm:$0xff]
  %v2828 = vld [vmem:[%s4 + $0x774] sm:$0xff]
  %v2829 = vld [vmem:[%s4 + $0x77c] sm:$0xf]
  %v3118 = vunpack.c.l.b16 %v2542
  %v3119 = vunpack.c.h.b16 %v2542
  %v3120 = vunpack.c.l.b16 %v2543
  %v3121 = vunpack.c.h.b16 %v2543
  %v3122 = vunpack.c.l.b16 %v2544
  %v3123 = vunpack.c.l.b16 %v2545
  %v3124 = vunpack.c.h.b16 %v2545
  %v3125 = vunpack.c.l.b16 %v2546
  %v3126 = vunpack.c.h.b16 %v2546
  %v3127 = vunpack.c.l.b16 %v2547
  %v3128 = vunpack.c.l.b16 %v2548
  %v3129 = vunpack.c.h.b16 %v2548
  %v3130 = vunpack.c.l.b16 %v2549
  %v3131 = vunpack.c.h.b16 %v2549
  %v3132 = vunpack.c.l.b16 %v2550
  %v3133 = vunpack.c.l.b16 %v2551
  %v3134 = vunpack.c.h.b16 %v2551
  %v3135 = vunpack.c.l.b16 %v2552
  %v3136 = vunpack.c.h.b16 %v2552
  %v3137 = vunpack.c.l.b16 %v2553
  %v3138 = vunpack.c.l.b16 %v2554
  %v3139 = vunpack.c.h.b16 %v2554
  %v3140 = vunpack.c.l.b16 %v2555
  %v3141 = vunpack.c.h.b16 %v2555
  %v3142 = vunpack.c.l.b16 %v2556
  %v3143 = vunpack.c.l.b16 %v2557
  %v3144 = vunpack.c.h.b16 %v2557
  %v3145 = vunpack.c.l.b16 %v2558
  %v3146 = vunpack.c.h.b16 %v2558
  %v3147 = vunpack.c.l.b16 %v2559
  %v3148 = vunpack.c.l.b16 %v2560
  %v3149 = vunpack.c.h.b16 %v2560
  %v3150 = vunpack.c.l.b16 %v2561
  %v3151 = vunpack.c.h.b16 %v2561
  %v3152 = vunpack.c.l.b16 %v2562
  %v3153 = vunpack.c.l.b16 %v2563
  %v3154 = vunpack.c.h.b16 %v2563
  %v3155 = vunpack.c.l.b16 %v2564
  %v3156 = vunpack.c.h.b16 %v2564
  %v3157 = vunpack.c.l.b16 %v2565
  %v3158 = vunpack.c.l.b16 %v2566
  %v3159 = vunpack.c.h.b16 %v2566
  %v3160 = vunpack.c.l.b16 %v2567
  %v3161 = vunpack.c.h.b16 %v2567
  %v3162 = vunpack.c.l.b16 %v2568
  %v3163 = vunpack.c.l.b16 %v2569
  %v3164 = vunpack.c.h.b16 %v2569
  %v3165 = vunpack.c.l.b16 %v2570
  %v3166 = vunpack.c.h.b16 %v2570
  %v3167 = vunpack.c.l.b16 %v2571
  %v3168 = vunpack.c.l.b16 %v2572
  %v3169 = vunpack.c.h.b16 %v2572
  %v3170 = vunpack.c.l.b16 %v2573
  %v3171 = vunpack.c.h.b16 %v2573
  %v3172 = vunpack.c.l.b16 %v2574
  %v3173 = vunpack.c.l.b16 %v2575
  %v3174 = vunpack.c.h.b16 %v2575
  %v3175 = vunpack.c.l.b16 %v2576
  %v3176 = vunpack.c.h.b16 %v2576
  %v3177 = vunpack.c.l.b16 %v2577
  %v3178 = vunpack.c.l.b16 %v2578
  %v3179 = vunpack.c.h.b16 %v2578
  %v3180 = vunpack.c.l.b16 %v2579
  %v3181 = vunpack.c.h.b16 %v2579
  %v3182 = vunpack.c.l.b16 %v2580
  %v3183 = vunpack.c.l.b16 %v2581
  %v3184 = vunpack.c.h.b16 %v2581
  %v3185 = vunpack.c.l.b16 %v2582
  %v3186 = vunpack.c.h.b16 %v2582
  %v3187 = vunpack.c.l.b16 %v2583
  %v3188 = vunpack.c.l.b16 %v2584
  %v3189 = vunpack.c.h.b16 %v2584
  %v3190 = vunpack.c.l.b16 %v2585
  %v3191 = vunpack.c.h.b16 %v2585
  %v3192 = vunpack.c.l.b16 %v2586
  %v3193 = vunpack.c.l.b16 %v2587
  %v3194 = vunpack.c.h.b16 %v2587
  %v3195 = vunpack.c.l.b16 %v2588
  %v3196 = vunpack.c.h.b16 %v2588
  %v3197 = vunpack.c.l.b16 %v2589
  %v3198 = vunpack.c.l.b16 %v2590
  %v3199 = vunpack.c.h.b16 %v2590
  %v3200 = vunpack.c.l.b16 %v2591
  %v3201 = vunpack.c.h.b16 %v2591
  %v3202 = vunpack.c.l.b16 %v2592
  %v3203 = vunpack.c.l.b16 %v2593
  %v3204 = vunpack.c.h.b16 %v2593
  %v3205 = vunpack.c.l.b16 %v2594
  %v3206 = vunpack.c.h.b16 %v2594
  %v3207 = vunpack.c.l.b16 %v2595
  %v3208 = vunpack.c.l.b16 %v2596
  %v3209 = vunpack.c.h.b16 %v2596
  %v3210 = vunpack.c.l.b16 %v2597
  %v3211 = vunpack.c.h.b16 %v2597
  %v3212 = vunpack.c.l.b16 %v2598
  %v3213 = vunpack.c.l.b16 %v2599
  %v3214 = vunpack.c.h.b16 %v2599
  %v3215 = vunpack.c.l.b16 %v2600
  %v3216 = vunpack.c.h.b16 %v2600
  %v3217 = vunpack.c.l.b16 %v2601
  %v3218 = vunpack.c.l.b16 %v2602
  %v3219 = vunpack.c.h.b16 %v2602
  %v3220 = vunpack.c.l.b16 %v2603
  %v3221 = vunpack.c.h.b16 %v2603
  %v3222 = vunpack.c.l.b16 %v2604
  %v3223 = vunpack.c.l.b16 %v2605
  %v3224 = vunpack.c.h.b16 %v2605
  %v3225 = vunpack.c.l.b16 %v2606
  %v3226 = vunpack.c.h.b16 %v2606
  %v3227 = vunpack.c.l.b16 %v2607
  %v3228 = vunpack.c.l.b16 %v2608
  %v3229 = vunpack.c.h.b16 %v2608
  %v3230 = vunpack.c.l.b16 %v2609
  %v3231 = vunpack.c.h.b16 %v2609
  %v3232 = vunpack.c.l.b16 %v2610
  %v3233 = vunpack.c.l.b16 %v2611
  %v3234 = vunpack.c.h.b16 %v2611
  %v3235 = vunpack.c.l.b16 %v2612
  %v3236 = vunpack.c.h.b16 %v2612
  %v3237 = vunpack.c.l.b16 %v2613
  %v3238 = vunpack.c.l.b16 %v2614
  %v3239 = vunpack.c.h.b16 %v2614
  %v3240 = vunpack.c.l.b16 %v2615
  %v3241 = vunpack.c.h.b16 %v2615
  %v3242 = vunpack.c.l.b16 %v2616
  %v3243 = vunpack.c.l.b16 %v2617
  %v3244 = vunpack.c.h.b16 %v2617
  %v3245 = vunpack.c.l.b16 %v2618
  %v3246 = vunpack.c.h.b16 %v2618
  %v3247 = vunpack.c.l.b16 %v2619
  %v3248 = vunpack.c.l.b16 %v2620
  %v3249 = vunpack.c.h.b16 %v2620
  %v3250 = vunpack.c.l.b16 %v2621
  %v3251 = vunpack.c.h.b16 %v2621
  %v3252 = vunpack.c.l.b16 %v2622
  %v3253 = vunpack.c.l.b16 %v2623
  %v3254 = vunpack.c.h.b16 %v2623
  %v3255 = vunpack.c.l.b16 %v2624
  %v3256 = vunpack.c.h.b16 %v2624
  %v3257 = vunpack.c.l.b16 %v2625
  %v3258 = vunpack.c.l.b16 %v2626
  %v3259 = vunpack.c.h.b16 %v2626
  %v3260 = vunpack.c.l.b16 %v2627
  %v3261 = vunpack.c.h.b16 %v2627
  %v3262 = vunpack.c.l.b16 %v2628
  %v3263 = vunpack.c.l.b16 %v2629
  %v3264 = vunpack.c.h.b16 %v2629
  %v3265 = vunpack.c.l.b16 %v2630
  %v3266 = vunpack.c.h.b16 %v2630
  %v3267 = vunpack.c.l.b16 %v2631
  %v3268 = vunpack.c.l.b16 %v2632
  %v3269 = vunpack.c.h.b16 %v2632
  %v3270 = vunpack.c.l.b16 %v2633
  %v3271 = vunpack.c.h.b16 %v2633
  %v3272 = vunpack.c.l.b16 %v2634
  %v3273 = vunpack.c.l.b16 %v2635
  %v3274 = vunpack.c.h.b16 %v2635
  %v3275 = vunpack.c.l.b16 %v2636
  %v3276 = vunpack.c.h.b16 %v2636
  %v3277 = vunpack.c.l.b16 %v2637
  %v3278 = vunpack.c.l.b16 %v2638
  %v3279 = vunpack.c.h.b16 %v2638
  %v3280 = vunpack.c.l.b16 %v2639
  %v3281 = vunpack.c.h.b16 %v2639
  %v3282 = vunpack.c.l.b16 %v2640
  %v3283 = vunpack.c.l.b16 %v2641
  %v3284 = vunpack.c.h.b16 %v2641
  %v3285 = vunpack.c.l.b16 %v2642
  %v3286 = vunpack.c.h.b16 %v2642
  %v3287 = vunpack.c.l.b16 %v2643
  %v3288 = vunpack.c.l.b16 %v2644
  %v3289 = vunpack.c.h.b16 %v2644
  %v3290 = vunpack.c.l.b16 %v2645
  %v3291 = vunpack.c.h.b16 %v2645
  %v3292 = vunpack.c.l.b16 %v2646
  %v3293 = vunpack.c.l.b16 %v2647
  %v3294 = vunpack.c.h.b16 %v2647
  %v3295 = vunpack.c.l.b16 %v2648
  %v3296 = vunpack.c.h.b16 %v2648
  %v3297 = vunpack.c.l.b16 %v2649
  %v3298 = vunpack.c.l.b16 %v2650
  %v3299 = vunpack.c.h.b16 %v2650
  %v3300 = vunpack.c.l.b16 %v2651
  %v3301 = vunpack.c.h.b16 %v2651
  %v3302 = vunpack.c.l.b16 %v2652
  %v3303 = vunpack.c.l.b16 %v2653
  %v3304 = vunpack.c.h.b16 %v2653
  %v3305 = vunpack.c.l.b16 %v2654
  %v3306 = vunpack.c.h.b16 %v2654
  %v3307 = vunpack.c.l.b16 %v2655
  %v3308 = vunpack.c.l.b16 %v2656
  %v3309 = vunpack.c.h.b16 %v2656
  %v3310 = vunpack.c.l.b16 %v2657
  %v3311 = vunpack.c.h.b16 %v2657
  %v3312 = vunpack.c.l.b16 %v2658
  %v3313 = vunpack.c.l.b16 %v2659
  %v3314 = vunpack.c.h.b16 %v2659
  %v3315 = vunpack.c.l.b16 %v2660
  %v3316 = vunpack.c.h.b16 %v2660
  %v3317 = vunpack.c.l.b16 %v2661
  %v3318 = vunpack.c.l.b16 %v2662
  %v3319 = vunpack.c.h.b16 %v2662
  %v3320 = vunpack.c.l.b16 %v2663
  %v3321 = vunpack.c.h.b16 %v2663
  %v3322 = vunpack.c.l.b16 %v2664
  %v3323 = vunpack.c.l.b16 %v2665
  %v3324 = vunpack.c.h.b16 %v2665
  %v3325 = vunpack.c.l.b16 %v2666
  %v3326 = vunpack.c.h.b16 %v2666
  %v3327 = vunpack.c.l.b16 %v2667
  %v3328 = vunpack.c.l.b16 %v2668
  %v3329 = vunpack.c.h.b16 %v2668
  %v3330 = vunpack.c.l.b16 %v2669
  %v3331 = vunpack.c.h.b16 %v2669
  %v3332 = vunpack.c.l.b16 %v2670
  %v3333 = vunpack.c.l.b16 %v2671
  %v3334 = vunpack.c.h.b16 %v2671
  %v3335 = vunpack.c.l.b16 %v2672
  %v3336 = vunpack.c.h.b16 %v2672
  %v3337 = vunpack.c.l.b16 %v2673
  %v3338 = vunpack.c.l.b16 %v2674
  %v3339 = vunpack.c.h.b16 %v2674
  %v3340 = vunpack.c.l.b16 %v2675
  %v3341 = vunpack.c.h.b16 %v2675
  %v3342 = vunpack.c.l.b16 %v2676
  %v3343 = vunpack.c.l.b16 %v2677
  %v3344 = vunpack.c.h.b16 %v2677
  %v3345 = vunpack.c.l.b16 %v2678
  %v3346 = vunpack.c.h.b16 %v2678
  %v3347 = vunpack.c.l.b16 %v2679
  %v3348 = vunpack.c.l.b16 %v2680
  %v3349 = vunpack.c.h.b16 %v2680
  %v3350 = vunpack.c.l.b16 %v2681
  %v3351 = vunpack.c.h.b16 %v2681
  %v3352 = vunpack.c.l.b16 %v2682
  %v3353 = vunpack.c.l.b16 %v2683
  %v3354 = vunpack.c.h.b16 %v2683
  %v3355 = vunpack.c.l.b16 %v2684
  %v3356 = vunpack.c.h.b16 %v2684
  %v3357 = vunpack.c.l.b16 %v2685
  %v3358 = vunpack.c.l.b16 %v2686
  %v3359 = vunpack.c.h.b16 %v2686
  %v3360 = vunpack.c.l.b16 %v2687
  %v3361 = vunpack.c.h.b16 %v2687
  %v3362 = vunpack.c.l.b16 %v2688
  %v3363 = vunpack.c.l.b16 %v2689
  %v3364 = vunpack.c.h.b16 %v2689
  %v3365 = vunpack.c.l.b16 %v2690
  %v3366 = vunpack.c.h.b16 %v2690
  %v3367 = vunpack.c.l.b16 %v2691
  %v3368 = vunpack.c.l.b16 %v2692
  %v3369 = vunpack.c.h.b16 %v2692
  %v3370 = vunpack.c.l.b16 %v2693
  %v3371 = vunpack.c.h.b16 %v2693
  %v3372 = vunpack.c.l.b16 %v2694
  %v3373 = vunpack.c.l.b16 %v2695
  %v3374 = vunpack.c.h.b16 %v2695
  %v3375 = vunpack.c.l.b16 %v2696
  %v3376 = vunpack.c.h.b16 %v2696
  %v3377 = vunpack.c.l.b16 %v2697
  %v3378 = vunpack.c.l.b16 %v2698
  %v3379 = vunpack.c.h.b16 %v2698
  %v3380 = vunpack.c.l.b16 %v2699
  %v3381 = vunpack.c.h.b16 %v2699
  %v3382 = vunpack.c.l.b16 %v2700
  %v3383 = vunpack.c.l.b16 %v2701
  %v3384 = vunpack.c.h.b16 %v2701
  %v3385 = vunpack.c.l.b16 %v2702
  %v3386 = vunpack.c.h.b16 %v2702
  %v3387 = vunpack.c.l.b16 %v2703
  %v3388 = vunpack.c.l.b16 %v2704
  %v3389 = vunpack.c.h.b16 %v2704
  %v3390 = vunpack.c.l.b16 %v2705
  %v3391 = vunpack.c.h.b16 %v2705
  %v3392 = vunpack.c.l.b16 %v2706
  %v3393 = vunpack.c.l.b16 %v2707
  %v3394 = vunpack.c.h.b16 %v2707
  %v3395 = vunpack.c.l.b16 %v2708
  %v3396 = vunpack.c.h.b16 %v2708
  %v3397 = vunpack.c.l.b16 %v2709
  %v3398 = vunpack.c.l.b16 %v2710
  %v3399 = vunpack.c.h.b16 %v2710
  %v3400 = vunpack.c.l.b16 %v2711
  %v3401 = vunpack.c.h.b16 %v2711
  %v3402 = vunpack.c.l.b16 %v2712
  %v3403 = vunpack.c.l.b16 %v2713
  %v3404 = vunpack.c.h.b16 %v2713
  %v3405 = vunpack.c.l.b16 %v2714
  %v3406 = vunpack.c.h.b16 %v2714
  %v3407 = vunpack.c.l.b16 %v2715
  %v3408 = vunpack.c.l.b16 %v2716
  %v3409 = vunpack.c.h.b16 %v2716
  %v3410 = vunpack.c.l.b16 %v2717
  %v3411 = vunpack.c.h.b16 %v2717
  %v3412 = vunpack.c.l.b16 %v2718
  %v3413 = vunpack.c.l.b16 %v2719
  %v3414 = vunpack.c.h.b16 %v2719
  %v3415 = vunpack.c.l.b16 %v2720
  %v3416 = vunpack.c.h.b16 %v2720
  %v3417 = vunpack.c.l.b16 %v2721
  %v3418 = vunpack.c.l.b16 %v2722
  %v3419 = vunpack.c.h.b16 %v2722
  %v3420 = vunpack.c.l.b16 %v2723
  %v3421 = vunpack.c.h.b16 %v2723
  %v3422 = vunpack.c.l.b16 %v2724
  %v3423 = vunpack.c.l.b16 %v2725
  %v3424 = vunpack.c.h.b16 %v2725
  %v3425 = vunpack.c.l.b16 %v2726
  %v3426 = vunpack.c.h.b16 %v2726
  %v3427 = vunpack.c.l.b16 %v2727
  %v3428 = vunpack.c.l.b16 %v2728
  %v3429 = vunpack.c.h.b16 %v2728
  %v3430 = vunpack.c.l.b16 %v2729
  %v3431 = vunpack.c.h.b16 %v2729
  %v3432 = vunpack.c.l.b16 %v2730
  %v3433 = vunpack.c.l.b16 %v2731
  %v3434 = vunpack.c.h.b16 %v2731
  %v3435 = vunpack.c.l.b16 %v2732
  %v3436 = vunpack.c.h.b16 %v2732
  %v3437 = vunpack.c.l.b16 %v2733
  %v3438 = vunpack.c.l.b16 %v2734
  %v3439 = vunpack.c.h.b16 %v2734
  %v3440 = vunpack.c.l.b16 %v2735
  %v3441 = vunpack.c.h.b16 %v2735
  %v3442 = vunpack.c.l.b16 %v2736
  %v3443 = vunpack.c.l.b16 %v2737
  %v3444 = vunpack.c.h.b16 %v2737
  %v3445 = vunpack.c.l.b16 %v2738
  %v3446 = vunpack.c.h.b16 %v2738
  %v3447 = vunpack.c.l.b16 %v2739
  %v3448 = vunpack.c.l.b16 %v2740
  %v3449 = vunpack.c.h.b16 %v2740
  %v3450 = vunpack.c.l.b16 %v2741
  %v3451 = vunpack.c.h.b16 %v2741
  %v3452 = vunpack.c.l.b16 %v2742
  %v3453 = vunpack.c.l.b16 %v2743
  %v3454 = vunpack.c.h.b16 %v2743
  %v3455 = vunpack.c.l.b16 %v2744
  %v3456 = vunpack.c.h.b16 %v2744
  %v3457 = vunpack.c.l.b16 %v2745
  %v3458 = vunpack.c.l.b16 %v2746
  %v3459 = vunpack.c.h.b16 %v2746
  %v3460 = vunpack.c.l.b16 %v2747
  %v3461 = vunpack.c.h.b16 %v2747
  %v3462 = vunpack.c.l.b16 %v2748
  %v3463 = vunpack.c.l.b16 %v2749
  %v3464 = vunpack.c.h.b16 %v2749
  %v3465 = vunpack.c.l.b16 %v2750
  %v3466 = vunpack.c.h.b16 %v2750
  %v3467 = vunpack.c.l.b16 %v2751
  %v3468 = vunpack.c.l.b16 %v2752
  %v3469 = vunpack.c.h.b16 %v2752
  %v3470 = vunpack.c.l.b16 %v2753
  %v3471 = vunpack.c.h.b16 %v2753
  %v3472 = vunpack.c.l.b16 %v2754
  %v3473 = vunpack.c.l.b16 %v2755
  %v3474 = vunpack.c.h.b16 %v2755
  %v3475 = vunpack.c.l.b16 %v2756
  %v3476 = vunpack.c.h.b16 %v2756
  %v3477 = vunpack.c.l.b16 %v2757
  %v3478 = vunpack.c.l.b16 %v2758
  %v3479 = vunpack.c.h.b16 %v2758
  %v3480 = vunpack.c.l.b16 %v2759
  %v3481 = vunpack.c.h.b16 %v2759
  %v3482 = vunpack.c.l.b16 %v2760
  %v3483 = vunpack.c.l.b16 %v2761
  %v3484 = vunpack.c.h.b16 %v2761
  %v3485 = vunpack.c.l.b16 %v2762
  %v3486 = vunpack.c.h.b16 %v2762
  %v3487 = vunpack.c.l.b16 %v2763
  %v3488 = vunpack.c.l.b16 %v2764
  %v3489 = vunpack.c.h.b16 %v2764
  %v3490 = vunpack.c.l.b16 %v2765
  %v3491 = vunpack.c.h.b16 %v2765
  %v3492 = vunpack.c.l.b16 %v2766
  %v3493 = vunpack.c.l.b16 %v2767
  %v3494 = vunpack.c.h.b16 %v2767
  %v3495 = vunpack.c.l.b16 %v2768
  %v3496 = vunpack.c.h.b16 %v2768
  %v3497 = vunpack.c.l.b16 %v2769
  %v3498 = vunpack.c.l.b16 %v2770
  %v3499 = vunpack.c.h.b16 %v2770
  %v3500 = vunpack.c.l.b16 %v2771
  %v3501 = vunpack.c.h.b16 %v2771
  %v3502 = vunpack.c.l.b16 %v2772
  %v3503 = vunpack.c.l.b16 %v2773
  %v3504 = vunpack.c.h.b16 %v2773
  %v3505 = vunpack.c.l.b16 %v2774
  %v3506 = vunpack.c.h.b16 %v2774
  %v3507 = vunpack.c.l.b16 %v2775
  %v3508 = vunpack.c.l.b16 %v2776
  %v3509 = vunpack.c.h.b16 %v2776
  %v3510 = vunpack.c.l.b16 %v2777
  %v3511 = vunpack.c.h.b16 %v2777
  %v3512 = vunpack.c.l.b16 %v2778
  %v3513 = vunpack.c.l.b16 %v2779
  %v3514 = vunpack.c.h.b16 %v2779
  %v3515 = vunpack.c.l.b16 %v2780
  %v3516 = vunpack.c.h.b16 %v2780
  %v3517 = vunpack.c.l.b16 %v2781
  %v3518 = vunpack.c.l.b16 %v2782
  %v3519 = vunpack.c.h.b16 %v2782
  %v3520 = vunpack.c.l.b16 %v2783
  %v3521 = vunpack.c.h.b16 %v2783
  %v3522 = vunpack.c.l.b16 %v2784
  %v3523 = vunpack.c.l.b16 %v2785
  %v3524 = vunpack.c.h.b16 %v2785
  %v3525 = vunpack.c.l.b16 %v2786
  %v3526 = vunpack.c.h.b16 %v2786
  %v3527 = vunpack.c.l.b16 %v2787
  %v3528 = vunpack.c.l.b16 %v2788
  %v3529 = vunpack.c.h.b16 %v2788
  %v3530 = vunpack.c.l.b16 %v2789
  %v3531 = vunpack.c.h.b16 %v2789
  %v3532 = vunpack.c.l.b16 %v2790
  %v3533 = vunpack.c.l.b16 %v2791
  %v3534 = vunpack.c.h.b16 %v2791
  %v3535 = vunpack.c.l.b16 %v2792
  %v3536 = vunpack.c.h.b16 %v2792
  %v3537 = vunpack.c.l.b16 %v2793
  %v3538 = vunpack.c.l.b16 %v2794
  %v3539 = vunpack.c.h.b16 %v2794
  %v3540 = vunpack.c.l.b16 %v2795
  %v3541 = vunpack.c.h.b16 %v2795
  %v3542 = vunpack.c.l.b16 %v2796
  %v3543 = vunpack.c.l.b16 %v2797
  %v3544 = vunpack.c.h.b16 %v2797
  %v3545 = vunpack.c.l.b16 %v2798
  %v3546 = vunpack.c.h.b16 %v2798
  %v3547 = vunpack.c.l.b16 %v2799
  %v3548 = vunpack.c.l.b16 %v2800
  %v3549 = vunpack.c.h.b16 %v2800
  %v3550 = vunpack.c.l.b16 %v2801
  %v3551 = vunpack.c.h.b16 %v2801
  %v3552 = vunpack.c.l.b16 %v2802
  %v3553 = vunpack.c.l.b16 %v2803
  %v3554 = vunpack.c.h.b16 %v2803
  %v3555 = vunpack.c.l.b16 %v2804
  %v3556 = vunpack.c.h.b16 %v2804
  %v3557 = vunpack.c.l.b16 %v2805
  %v3558 = vunpack.c.l.b16 %v2806
  %v3559 = vunpack.c.h.b16 %v2806
  %v3560 = vunpack.c.l.b16 %v2807
  %v3561 = vunpack.c.h.b16 %v2807
  %v3562 = vunpack.c.l.b16 %v2808
  %v3563 = vunpack.c.l.b16 %v2809
  %v3564 = vunpack.c.h.b16 %v2809
  %v3565 = vunpack.c.l.b16 %v2810
  %v3566 = vunpack.c.h.b16 %v2810
  %v3567 = vunpack.c.l.b16 %v2811
  %v3568 = vunpack.c.l.b16 %v2812
  %v3569 = vunpack.c.h.b16 %v2812
  %v3570 = vunpack.c.l.b16 %v2813
  %v3571 = vunpack.c.h.b16 %v2813
  %v3572 = vunpack.c.l.b16 %v2814
  %v3573 = vunpack.c.l.b16 %v2815
  %v3574 = vunpack.c.h.b16 %v2815
  %v3575 = vunpack.c.l.b16 %v2816
  %v3576 = vunpack.c.h.b16 %v2816
  %v3577 = vunpack.c.l.b16 %v2817
  %v3578 = vunpack.c.l.b16 %v2818
  %v3579 = vunpack.c.h.b16 %v2818
  %v3580 = vunpack.c.l.b16 %v2819
  %v3581 = vunpack.c.h.b16 %v2819
  %v3582 = vunpack.c.l.b16 %v2820
  %v3583 = vunpack.c.l.b16 %v2821
  %v3584 = vunpack.c.h.b16 %v2821
  %v3585 = vunpack.c.l.b16 %v2822
  %v3586 = vunpack.c.h.b16 %v2822
  %v3587 = vunpack.c.l.b16 %v2823
  %v3588 = vunpack.c.l.b16 %v2824
  %v3589 = vunpack.c.h.b16 %v2824
  %v3590 = vunpack.c.l.b16 %v2825
  %v3591 = vunpack.c.h.b16 %v2825
  %v3592 = vunpack.c.l.b16 %v2826
  %v3593 = vunpack.c.l.b16 %v2827
  %v3594 = vunpack.c.h.b16 %v2827
  %v3595 = vunpack.c.l.b16 %v2828
  %v3596 = vunpack.c.h.b16 %v2828
  %v3597 = vunpack.c.l.b16 %v2829
  %v3598 = vpack.c.b16 %v3123, %v3118
  %v3599 = vpack.c.b16 %v3124, %v3119
  %v3600 = vpack.c.b16 %v3125, %v3120
  %v3601 = vpack.c.b16 %v3126, %v3121
  %v3602 = vpack.c.b16 %v3127, %v3122
  %v3603 = vpack.c.b16 %v3133, %v3128
  %v3604 = vpack.c.b16 %v3134, %v3129
  %v3605 = vpack.c.b16 %v3135, %v3130
  %v3606 = vpack.c.b16 %v3136, %v3131
  %v3607 = vpack.c.b16 %v3137, %v3132
  %v3608 = vpack.c.b16 %v3143, %v3138
  %v3609 = vpack.c.b16 %v3144, %v3139
  %v3610 = vpack.c.b16 %v3145, %v3140
  %v3611 = vpack.c.b16 %v3146, %v3141
  %v3612 = vpack.c.b16 %v3147, %v3142
  %v3613 = vpack.c.b16 %v3153, %v3148
  %v3614 = vpack.c.b16 %v3154, %v3149
  %v3615 = vpack.c.b16 %v3155, %v3150
  %v3616 = vpack.c.b16 %v3156, %v3151
  %v3617 = vpack.c.b16 %v3157, %v3152
  %v3618 = vpack.c.b16 %v3163, %v3158
  %v3619 = vpack.c.b16 %v3164, %v3159
  %v3620 = vpack.c.b16 %v3165, %v3160
  %v3621 = vpack.c.b16 %v3166, %v3161
  %v3622 = vpack.c.b16 %v3167, %v3162
  %v3623 = vpack.c.b16 %v3173, %v3168
  %v3624 = vpack.c.b16 %v3174, %v3169
  %v3625 = vpack.c.b16 %v3175, %v3170
  %v3626 = vpack.c.b16 %v3176, %v3171
  %v3627 = vpack.c.b16 %v3177, %v3172
  %v3628 = vpack.c.b16 %v3183, %v3178
  %v3629 = vpack.c.b16 %v3184, %v3179
  %v3630 = vpack.c.b16 %v3185, %v3180
  %v3631 = vpack.c.b16 %v3186, %v3181
  %v3632 = vpack.c.b16 %v3187, %v3182
  %v3633 = vpack.c.b16 %v3193, %v3188
  %v3634 = vpack.c.b16 %v3194, %v3189
  %v3635 = vpack.c.b16 %v3195, %v3190
  %v3636 = vpack.c.b16 %v3196, %v3191
  %v3637 = vpack.c.b16 %v3197, %v3192
  %v3638 = vpack.c.b16 %v3203, %v3198
  %v3639 = vpack.c.b16 %v3204, %v3199
  %v3640 = vpack.c.b16 %v3205, %v3200
  %v3641 = vpack.c.b16 %v3206, %v3201
  %v3642 = vpack.c.b16 %v3207, %v3202
  %v3643 = vpack.c.b16 %v3213, %v3208
  %v3644 = vpack.c.b16 %v3214, %v3209
  %v3645 = vpack.c.b16 %v3215, %v3210
  %v3646 = vpack.c.b16 %v3216, %v3211
  %v3647 = vpack.c.b16 %v3217, %v3212
  %v3648 = vpack.c.b16 %v3223, %v3218
  %v3649 = vpack.c.b16 %v3224, %v3219
  %v3650 = vpack.c.b16 %v3225, %v3220
  %v3651 = vpack.c.b16 %v3226, %v3221
  %v3652 = vpack.c.b16 %v3227, %v3222
  %v3653 = vpack.c.b16 %v3233, %v3228
  %v3654 = vpack.c.b16 %v3234, %v3229
  %v3655 = vpack.c.b16 %v3235, %v3230
  %v3656 = vpack.c.b16 %v3236, %v3231
  %v3657 = vpack.c.b16 %v3237, %v3232
  %v3658 = vpack.c.b16 %v3243, %v3238
  %v3659 = vpack.c.b16 %v3244, %v3239
  %v3660 = vpack.c.b16 %v3245, %v3240
  %v3661 = vpack.c.b16 %v3246, %v3241
  %v3662 = vpack.c.b16 %v3247, %v3242
  %v3663 = vpack.c.b16 %v3253, %v3248
  %v3664 = vpack.c.b16 %v3254, %v3249
  %v3665 = vpack.c.b16 %v3255, %v3250
  %v3666 = vpack.c.b16 %v3256, %v3251
  %v3667 = vpack.c.b16 %v3257, %v3252
  %v3668 = vpack.c.b16 %v3263, %v3258
  %v3669 = vpack.c.b16 %v3264, %v3259
  %v3670 = vpack.c.b16 %v3265, %v3260
  %v3671 = vpack.c.b16 %v3266, %v3261
  %v3672 = vpack.c.b16 %v3267, %v3262
  %v3673 = vpack.c.b16 %v3273, %v3268
  %v3674 = vpack.c.b16 %v3274, %v3269
  %v3675 = vpack.c.b16 %v3275, %v3270
  %v3676 = vpack.c.b16 %v3276, %v3271
  %v3677 = vpack.c.b16 %v3277, %v3272
  %v3678 = vpack.c.b16 %v3283, %v3278
  %v3679 = vpack.c.b16 %v3284, %v3279
  %v3680 = vpack.c.b16 %v3285, %v3280
  %v3681 = vpack.c.b16 %v3286, %v3281
  %v3682 = vpack.c.b16 %v3287, %v3282
  %v3683 = vpack.c.b16 %v3293, %v3288
  %v3684 = vpack.c.b16 %v3294, %v3289
  %v3685 = vpack.c.b16 %v3295, %v3290
  %v3686 = vpack.c.b16 %v3296, %v3291
  %v3687 = vpack.c.b16 %v3297, %v3292
  %v3688 = vpack.c.b16 %v3303, %v3298
  %v3689 = vpack.c.b16 %v3304, %v3299
  %v3690 = vpack.c.b16 %v3305, %v3300
  %v3691 = vpack.c.b16 %v3306, %v3301
  %v3692 = vpack.c.b16 %v3307, %v3302
  %v3693 = vpack.c.b16 %v3313, %v3308
  %v3694 = vpack.c.b16 %v3314, %v3309
  %v3695 = vpack.c.b16 %v3315, %v3310
  %v3696 = vpack.c.b16 %v3316, %v3311
  %v3697 = vpack.c.b16 %v3317, %v3312
  %v3698 = vpack.c.b16 %v3323, %v3318
  %v3699 = vpack.c.b16 %v3324, %v3319
  %v3700 = vpack.c.b16 %v3325, %v3320
  %v3701 = vpack.c.b16 %v3326, %v3321
  %v3702 = vpack.c.b16 %v3327, %v3322
  %v3703 = vpack.c.b16 %v3333, %v3328
  %v3704 = vpack.c.b16 %v3334, %v3329
  %v3705 = vpack.c.b16 %v3335, %v3330
  %v3706 = vpack.c.b16 %v3336, %v3331
  %v3707 = vpack.c.b16 %v3337, %v3332
  %v3708 = vpack.c.b16 %v3343, %v3338
  %v3709 = vpack.c.b16 %v3344, %v3339
  %v3710 = vpack.c.b16 %v3345, %v3340
  %v3711 = vpack.c.b16 %v3346, %v3341
  %v3712 = vpack.c.b16 %v3347, %v3342
  %v3713 = vpack.c.b16 %v3353, %v3348
  %v3714 = vpack.c.b16 %v3354, %v3349
  %v3715 = vpack.c.b16 %v3355, %v3350
  %v3716 = vpack.c.b16 %v3356, %v3351
  %v3717 = vpack.c.b16 %v3357, %v3352
  %v3718 = vpack.c.b16 %v3363, %v3358
  %v3719 = vpack.c.b16 %v3364, %v3359
  %v3720 = vpack.c.b16 %v3365, %v3360
  %v3721 = vpack.c.b16 %v3366, %v3361
  %v3722 = vpack.c.b16 %v3367, %v3362
  %v3723 = vpack.c.b16 %v3373, %v3368
  %v3724 = vpack.c.b16 %v3374, %v3369
  %v3725 = vpack.c.b16 %v3375, %v3370
  %v3726 = vpack.c.b16 %v3376, %v3371
  %v3727 = vpack.c.b16 %v3377, %v3372
  %v3728 = vpack.c.b16 %v3383, %v3378
  %v3729 = vpack.c.b16 %v3384, %v3379
  %v3730 = vpack.c.b16 %v3385, %v3380
  %v3731 = vpack.c.b16 %v3386, %v3381
  %v3732 = vpack.c.b16 %v3387, %v3382
  %v3733 = vpack.c.b16 %v3393, %v3388
  %v3734 = vpack.c.b16 %v3394, %v3389
  %v3735 = vpack.c.b16 %v3395, %v3390
  %v3736 = vpack.c.b16 %v3396, %v3391
  %v3737 = vpack.c.b16 %v3397, %v3392
  %v3738 = vpack.c.b16 %v3403, %v3398
  %v3739 = vpack.c.b16 %v3404, %v3399
  %v3740 = vpack.c.b16 %v3405, %v3400
  %v3741 = vpack.c.b16 %v3406, %v3401
  %v3742 = vpack.c.b16 %v3407, %v3402
  %v3743 = vpack.c.b16 %v3413, %v3408
  %v3744 = vpack.c.b16 %v3414, %v3409
  %v3745 = vpack.c.b16 %v3415, %v3410
  %v3746 = vpack.c.b16 %v3416, %v3411
  %v3747 = vpack.c.b16 %v3417, %v3412
  %v3748 = vpack.c.b16 %v3423, %v3418
  %v3749 = vpack.c.b16 %v3424, %v3419
  %v3750 = vpack.c.b16 %v3425, %v3420
  %v3751 = vpack.c.b16 %v3426, %v3421
  %v3752 = vpack.c.b16 %v3427, %v3422
  %v3753 = vpack.c.b16 %v3433, %v3428
  %v3754 = vpack.c.b16 %v3434, %v3429
  %v3755 = vpack.c.b16 %v3435, %v3430
  %v3756 = vpack.c.b16 %v3436, %v3431
  %v3757 = vpack.c.b16 %v3437, %v3432
  %v3758 = vpack.c.b16 %v3443, %v3438
  %v3759 = vpack.c.b16 %v3444, %v3439
  %v3760 = vpack.c.b16 %v3445, %v3440
  %v3761 = vpack.c.b16 %v3446, %v3441
  %v3762 = vpack.c.b16 %v3447, %v3442
  %v3763 = vpack.c.b16 %v3453, %v3448
  %v3764 = vpack.c.b16 %v3454, %v3449
  %v3765 = vpack.c.b16 %v3455, %v3450
  %v3766 = vpack.c.b16 %v3456, %v3451
  %v3767 = vpack.c.b16 %v3457, %v3452
  %v3768 = vpack.c.b16 %v3463, %v3458
  %v3769 = vpack.c.b16 %v3464, %v3459
  %v3770 = vpack.c.b16 %v3465, %v3460
  %v3771 = vpack.c.b16 %v3466, %v3461
  %v3772 = vpack.c.b16 %v3467, %v3462
  %v3773 = vpack.c.b16 %v3473, %v3468
  %v3774 = vpack.c.b16 %v3474, %v3469
  %v3775 = vpack.c.b16 %v3475, %v3470
  %v3776 = vpack.c.b16 %v3476, %v3471
  %v3777 = vpack.c.b16 %v3477, %v3472
  %v3778 = vpack.c.b16 %v3483, %v3478
  %v3779 = vpack.c.b16 %v3484, %v3479
  %v3780 = vpack.c.b16 %v3485, %v3480
  %v3781 = vpack.c.b16 %v3486, %v3481
  %v3782 = vpack.c.b16 %v3487, %v3482
  %v3783 = vpack.c.b16 %v3493, %v3488
  %v3784 = vpack.c.b16 %v3494, %v3489
  %v3785 = vpack.c.b16 %v3495, %v3490
  %v3786 = vpack.c.b16 %v3496, %v3491
  %v3787 = vpack.c.b16 %v3497, %v3492
  %v3788 = vpack.c.b16 %v3503, %v3498
  %v3789 = vpack.c.b16 %v3504, %v3499
  %v3790 = vpack.c.b16 %v3505, %v3500
  %v3791 = vpack.c.b16 %v3506, %v3501
  %v3792 = vpack.c.b16 %v3507, %v3502
  %v3793 = vpack.c.b16 %v3513, %v3508
  %v3794 = vpack.c.b16 %v3514, %v3509
  %v3795 = vpack.c.b16 %v3515, %v3510
  %v3796 = vpack.c.b16 %v3516, %v3511
  %v3797 = vpack.c.b16 %v3517, %v3512
  %v3798 = vpack.c.b16 %v3523, %v3518
  %v3799 = vpack.c.b16 %v3524, %v3519
  %v3800 = vpack.c.b16 %v3525, %v3520
  %v3801 = vpack.c.b16 %v3526, %v3521
  %v3802 = vpack.c.b16 %v3527, %v3522
  %v3803 = vpack.c.b16 %v3533, %v3528
  %v3804 = vpack.c.b16 %v3534, %v3529
  %v3805 = vpack.c.b16 %v3535, %v3530
  %v3806 = vpack.c.b16 %v3536, %v3531
  %v3807 = vpack.c.b16 %v3537, %v3532
  %v3808 = vpack.c.b16 %v3543, %v3538
  %v3809 = vpack.c.b16 %v3544, %v3539
  %v3810 = vpack.c.b16 %v3545, %v3540
  %v3811 = vpack.c.b16 %v3546, %v3541
  %v3812 = vpack.c.b16 %v3547, %v3542
  %v3813 = vpack.c.b16 %v3553, %v3548
  %v3814 = vpack.c.b16 %v3554, %v3549
  %v3815 = vpack.c.b16 %v3555, %v3550
  %v3816 = vpack.c.b16 %v3556, %v3551
  %v3817 = vpack.c.b16 %v3557, %v3552
  %v3818 = vpack.c.b16 %v3563, %v3558
  %v3819 = vpack.c.b16 %v3564, %v3559
  %v3820 = vpack.c.b16 %v3565, %v3560
  %v3821 = vpack.c.b16 %v3566, %v3561
  %v3822 = vpack.c.b16 %v3567, %v3562
  %v3823 = vpack.c.b16 %v3573, %v3568
  %v3824 = vpack.c.b16 %v3574, %v3569
  %v3825 = vpack.c.b16 %v3575, %v3570
  %v3826 = vpack.c.b16 %v3576, %v3571
  %v3827 = vpack.c.b16 %v3577, %v3572
  %v3828 = vpack.c.b16 %v3583, %v3578
  %v3829 = vpack.c.b16 %v3584, %v3579
  %v3830 = vpack.c.b16 %v3585, %v3580
  %v3831 = vpack.c.b16 %v3586, %v3581
  %v3832 = vpack.c.b16 %v3587, %v3582
  %v3833 = vpack.c.b16 %v3593, %v3588
  %v3834 = vpack.c.b16 %v3594, %v3589
  %v3835 = vpack.c.b16 %v3595, %v3590
  %v3836 = vpack.c.b16 %v3596, %v3591
  %v3837 = vpack.c.b16 %v3597, %v3592
  %v4031 = vsel %vm531, %v3602, 0
  %v4034 = vsel %vm531, %v3607, 0
  %v4037 = vsel %vm531, %v3612, 0
  %v4040 = vsel %vm531, %v3617, 0
  %v4043 = vsel %vm531, %v3622, 0
  %v4046 = vsel %vm531, %v3627, 0
  %v4049 = vsel %vm531, %v3632, 0
  %v4052 = vsel %vm531, %v3637, 0
  %v4055 = vsel %vm531, %v3642, 0
  %v4058 = vsel %vm531, %v3647, 0
  %v4061 = vsel %vm531, %v3652, 0
  %v4064 = vsel %vm531, %v3657, 0
  %v4067 = vsel %vm531, %v3662, 0
  %v4070 = vsel %vm531, %v3667, 0
  %v4073 = vsel %vm531, %v3672, 0
  %v4076 = vsel %vm531, %v3677, 0
  %v4079 = vsel %vm531, %v3682, 0
  %v4082 = vsel %vm531, %v3687, 0
  %v4085 = vsel %vm531, %v3692, 0
  %v4088 = vsel %vm531, %v3697, 0
  %v4091 = vsel %vm531, %v3702, 0
  %v4094 = vsel %vm531, %v3707, 0
  %v4097 = vsel %vm531, %v3712, 0
  %v4100 = vsel %vm531, %v3717, 0
  %v4103 = vsel %vm531, %v3722, 0
  %v4106 = vsel %vm531, %v3727, 0
  %v4109 = vsel %vm531, %v3732, 0
  %v4112 = vsel %vm531, %v3737, 0
  %v4115 = vsel %vm531, %v3742, 0
  %v4118 = vsel %vm531, %v3747, 0
  %v4121 = vsel %vm531, %v3752, 0
  %v4124 = vsel %vm531, %v3757, 0
  %v4127 = vsel %vm531, %v3762, 0
  %v4130 = vsel %vm531, %v3767, 0
  %v4133 = vsel %vm531, %v3772, 0
  %v4136 = vsel %vm531, %v3777, 0
  %v4139 = vsel %vm531, %v3782, 0
  %v4142 = vsel %vm531, %v3787, 0
  %v4145 = vsel %vm531, %v3792, 0
  %v4148 = vsel %vm531, %v3797, 0
  %v4151 = vsel %vm531, %v3802, 0
  %v4154 = vsel %vm531, %v3807, 0
  %v4157 = vsel %vm531, %v3812, 0
  %v4160 = vsel %vm531, %v3817, 0
  %v4163 = vsel %vm531, %v3822, 0
  %v4166 = vsel %vm531, %v3827, 0
  %v4169 = vsel %vm531, %v3832, 0
  %v4172 = vsel %vm531, %v3837, 0
  %4174 = vmatprep.subr.bf16.mxu0 0
  %4175 = vmatpush1.bf16.msra.mxu0 %v2506
  %4176 = vmatprep.subr.bf16.mxu0 0
  %4177 = vmatpush1.bf16.msra.mxu0 %v2507
  %4178 = vmatprep.subr.bf16.mxu0 0
  %4179 = vmatpush1.bf16.msra.mxu0 %v2508
  %4180 = vmatprep.subr.bf16.mxu0 0
  %4181 = vmatpush1.bf16.msra.mxu0 %v2509
  %4182 = vmatprep.subr.bf16.mxu0 0
  %4183 = vmatpush1.bf16.msra.mxu0 %v2510
  %4184 = vmatprep.subr.bf16.mxu0 0
  %4185 = vmatpush1.bf16.msra.mxu0 %v2511
  %4186 = vmatprep.subr.bf16.mxu0 0
  %4187 = vmatpush1.bf16.msra.mxu0 %v2512
  %4188 = vmatprep.subr.bf16.mxu0 0
  %4189 = vmatpush1.bf16.msra.mxu0 %v2513
  %4190 = vmatprep.subr.bf16.mxu0 0
  %4191 = vmatpush1.bf16.msra.mxu0 %v2514
  %4192 = vmatprep.subr.bf16.mxu0 0
  %4193 = vmatpush1.bf16.msra.mxu0 %v2515
  %4194 = vmatprep.subr.bf16.mxu0 0
  %4195 = vmatpush1.bf16.msra.mxu0 %v2516
  %4196 = vmatprep.subr.bf16.mxu0 0
  %4197 = vmatpush1.bf16.msra.mxu0 %v2517
  %4198 = vmatprep.subr.bf16.mxu0 0
  %4199 = vmatpush1.bf16.msra.mxu0 %v2518
  %4200 = vmatprep.subr.bf16.mxu0 0
  %4201 = vmatpush1.bf16.msra.mxu0 %v2519
  %4202 = vmatprep.subr.bf16.mxu0 0
  %4203 = vmatpush1.bf16.msra.mxu0 %v2520
  %4204 = vmatprep.subr.bf16.mxu0 0
  %4205 = vmatpush1.bf16.msra.mxu0 %v2521
  %4206 = vmatprep.mubr.bf16.mxu0 %v3599
  %4207 = vmatmul.mubr.bf16.gmra.mrb[0].mxu0 %v3598
  %v4208 = vpop.f32.mrb[0].mxu0
  %v4209 = vadd.f32 0.0, %v4208
  %v4210 = vpop.f32.mrb[0].mxu0
  %v4211 = vpop.f32.mrb[0].mxu0
  %v4212 = vadd.f32 0.0, %v4211
  %v4213 = vpop.f32.mrb[0].mxu0
  %4214 = vmatprep.mubr.bf16.mxu0 %v3604
  %4215 = vmatmul.mubr.bf16.gmra.mrb[0].mxu0 %v3603
  %v4216 = vpop.f32.mrb[0].mxu0
  %v4217 = vadd.f32 0.0, %v4216
  %v4218 = vpop.f32.mrb[0].mxu0
  %v4219 = vpop.f32.mrb[0].mxu0
  %v4220 = vadd.f32 0.0, %v4219
  %v4221 = vpop.f32.mrb[0].mxu0
  %4222 = vmatprep.mubr.bf16.mxu0 %v3609
  %4223 = vmatmul.mubr.bf16.gmra.mrb[0].mxu0 %v3608
  %v4224 = vpop.f32.mrb[0].mxu0
  %v4225 = vadd.f32 0.0, %v4224
  %v4226 = vpop.f32.mrb[0].mxu0
  %v4227 = vpop.f32.mrb[0].mxu0
  %v4228 = vadd.f32 0.0, %v4227
  %v4229 = vpop.f32.mrb[0].mxu0
  %4230 = vmatprep.mubr.bf16.mxu0 %v3614
  %4231 = vmatmul.mubr.bf16.gmra.mrb[0].mxu0 %v3613
  %v4232 = vpop.f32.mrb[0].mxu0
  %v4233 = vadd.f32 0.0, %v4232
  %v4234 = vpop.f32.mrb[0].mxu0
  %v4235 = vpop.f32.mrb[0].mxu0
  %v4236 = vadd.f32 0.0, %v4235
  %v4237 = vpop.f32.mrb[0].mxu0
  %4238 = vmatprep.mubr.bf16.mxu0 %v3619
  %4239 = vmatmul.mubr.bf16.gmra.mrb[0].mxu0 %v3618
  %v4240 = vpop.f32.mrb[0].mxu0
  %v4241 = vadd.f32 0.0, %v4240
  %v4242 = vpop.f32.mrb[0].mxu0
  %v4243 = vpop.f32.mrb[0].mxu0
  %v4244 = vadd.f32 0.0, %v4243
  %v4245 = vpop.f32.mrb[0].mxu0
  %4246 = vmatprep.mubr.bf16.mxu0 %v3624
  %4247 = vmatmul.mubr.bf16.gmra.mrb[0].mxu0 %v3623
  %v4248 = vpop.f32.mrb[0].mxu0
  %v4249 = vadd.f32 0.0, %v4248
  %v4250 = vpop.f32.mrb[0].mxu0
  %v4251 = vpop.f32.mrb[0].mxu0
  %v4252 = vadd.f32 0.0, %v4251
  %v4253 = vpop.f32.mrb[0].mxu0
  %4254 = vmatprep.mubr.bf16.mxu0 %v3629
  %4255 = vmatmul.mubr.bf16.gmra.mrb[0].mxu0 %v3628
  %v4256 = vpop.f32.mrb[0].mxu0
  %v4257 = vadd.f32 0.0, %v4256
  %v4258 = vpop.f32.mrb[0].mxu0
  %v4259 = vpop.f32.mrb[0].mxu0
  %v4260 = vadd.f32 0.0, %v4259
  %v4261 = vpop.f32.mrb[0].mxu0
  %4262 = vmatprep.mubr.bf16.mxu0 %v3634
  %4263 = vmatmul.mubr.bf16.gmra.mrb[0].mxu0 %v3633
  %v4264 = vpop.f32.mrb[0].mxu0
  %v4265 = vadd.f32 0.0, %v4264
  %v4266 = vpop.f32.mrb[0].mxu0
  %v4267 = vpop.f32.mrb[0].mxu0
  %v4268 = vadd.f32 0.0, %v4267
  %v4269 = vpop.f32.mrb[0].mxu0
  %4270 = vmatprep.mubr.bf16.mxu0 %v3639
  %4271 = vmatmul.mubr.bf16.gmra.mrb[0].mxu0 %v3638
  %v4272 = vpop.f32.mrb[0].mxu0
  %v4273 = vadd.f32 0.0, %v4272
  %v4274 = vpop.f32.mrb[0].mxu0
  %v4275 = vpop.f32.mrb[0].mxu0
  %v4276 = vadd.f32 0.0, %v4275
  %v4277 = vpop.f32.mrb[0].mxu0
  %4278 = vmatprep.mubr.bf16.mxu0 %v3644
  %4279 = vmatmul.mubr.bf16.gmra.mrb[0].mxu0 %v3643
  %v4280 = vpop.f32.mrb[0].mxu0
  %v4281 = vadd.f32 0.0, %v4280
  %v4282 = vpop.f32.mrb[0].mxu0
  %v4283 = vpop.f32.mrb[0].mxu0
  %v4284 = vadd.f32 0.0, %v4283
  %v4285 = vpop.f32.mrb[0].mxu0
  %4286 = vmatprep.mubr.bf16.mxu0 %v3649
  %4287 = vmatmul.mubr.bf16.gmra.mrb[0].mxu0 %v3648
  %v4288 = vpop.f32.mrb[0].mxu0
  %v4289 = vadd.f32 0.0, %v4288
  %v4290 = vpop.f32.mrb[0].mxu0
  %v4291 = vpop.f32.mrb[0].mxu0
  %v4292 = vadd.f32 0.0, %v4291
  %v4293 = vpop.f32.mrb[0].mxu0
  %4294 = vmatprep.mubr.bf16.mxu0 %v3654
  %4295 = vmatmul.mubr.bf16.gmra.mrb[0].mxu0 %v3653
  %v4296 = vpop.f32.mrb[0].mxu0
  %v4297 = vadd.f32 0.0, %v4296
  %v4298 = vpop.f32.mrb[0].mxu0
  %v4299 = vpop.f32.mrb[0].mxu0
  %v4300 = vadd.f32 0.0, %v4299
  %v4301 = vpop.f32.mrb[0].mxu0
  %4302 = vmatprep.mubr.bf16.mxu0 %v3659
  %4303 = vmatmul.mubr.bf16.gmra.mrb[0].mxu0 %v3658
  %v4304 = vpop.f32.mrb[0].mxu0
  %v4305 = vadd.f32 0.0, %v4304
  %v4306 = vpop.f32.mrb[0].mxu0
  %v4307 = vpop.f32.mrb[0].mxu0
  %v4308 = vadd.f32 0.0, %v4307
  %v4309 = vpop.f32.mrb[0].mxu0
  %4310 = vmatprep.mubr.bf16.mxu0 %v3664
  %4311 = vmatmul.mubr.bf16.gmra.mrb[0].mxu0 %v3663
  %v4312 = vpop.f32.mrb[0].mxu0
  %v4313 = vadd.f32 0.0, %v4312
  %v4314 = vpop.f32.mrb[0].mxu0
  %v4315 = vpop.f32.mrb[0].mxu0
  %v4316 = vadd.f32 0.0, %v4315
  %v4317 = vpop.f32.mrb[0].mxu0
  %4318 = vmatprep.mubr.bf16.mxu0 %v3669
  %4319 = vmatmul.mubr.bf16.gmra.mrb[0].mxu0 %v3668
  %v4320 = vpop.f32.mrb[0].mxu0
  %v4321 = vadd.f32 0.0, %v4320
  %v4322 = vpop.f32.mrb[0].mxu0
  %v4323 = vpop.f32.mrb[0].mxu0
  %v4324 = vadd.f32 0.0, %v4323
  %v4325 = vpop.f32.mrb[0].mxu0
  %4326 = vmatprep.mubr.bf16.mxu0 %v3674
  %4327 = vmatmul.mubr.bf16.gmra.mrb[0].mxu0 %v3673
  %v4328 = vpop.f32.mrb[0].mxu0
  %v4329 = vadd.f32 0.0, %v4328
  %v4330 = vpop.f32.mrb[0].mxu0
  %v4331 = vpop.f32.mrb[0].mxu0
  %v4332 = vadd.f32 0.0, %v4331
  %v4333 = vpop.f32.mrb[0].mxu0
  %4334 = vmatprep.mubr.bf16.mxu0 %v3679
  %4335 = vmatmul.mubr.bf16.gmra.mrb[0].mxu0 %v3678
  %v4336 = vpop.f32.mrb[0].mxu0
  %v4337 = vadd.f32 0.0, %v4336
  %v4338 = vpop.f32.mrb[0].mxu0
  %v4339 = vpop.f32.mrb[0].mxu0
  %v4340 = vadd.f32 0.0, %v4339
  %v4341 = vpop.f32.mrb[0].mxu0
  %4342 = vmatprep.mubr.bf16.mxu0 %v3684
  %4343 = vmatmul.mubr.bf16.gmra.mrb[0].mxu0 %v3683
  %v4344 = vpop.f32.mrb[0].mxu0
  %v4345 = vadd.f32 0.0, %v4344
  %v4346 = vpop.f32.mrb[0].mxu0
  %v4347 = vpop.f32.mrb[0].mxu0
  %v4348 = vadd.f32 0.0, %v4347
  %v4349 = vpop.f32.mrb[0].mxu0
  %4350 = vmatprep.mubr.bf16.mxu0 %v3689
  %4351 = vmatmul.mubr.bf16.gmra.mrb[0].mxu0 %v3688
  %v4352 = vpop.f32.mrb[0].mxu0
  %v4353 = vadd.f32 0.0, %v4352
  %v4354 = vpop.f32.mrb[0].mxu0
  %v4355 = vpop.f32.mrb[0].mxu0
  %v4356 = vadd.f32 0.0, %v4355
  %v4357 = vpop.f32.mrb[0].mxu0
  %4358 = vmatprep.mubr.bf16.mxu0 %v3694
  %4359 = vmatmul.mubr.bf16.gmra.mrb[0].mxu0 %v3693
  %v4360 = vpop.f32.mrb[0].mxu0
  %v4361 = vadd.f32 0.0, %v4360
  %v4362 = vpop.f32.mrb[0].mxu0
  %v4363 = vpop.f32.mrb[0].mxu0
  %v4364 = vadd.f32 0.0, %v4363
  %v4365 = vpop.f32.mrb[0].mxu0
  %4366 = vmatprep.mubr.bf16.mxu0 %v3699
  %4367 = vmatmul.mubr.bf16.gmra.mrb[0].mxu0 %v3698
  %v4368 = vpop.f32.mrb[0].mxu0
  %v4369 = vadd.f32 0.0, %v4368
  %v4370 = vpop.f32.mrb[0].mxu0
  %v4371 = vpop.f32.mrb[0].mxu0
  %v4372 = vadd.f32 0.0, %v4371
  %v4373 = vpop.f32.mrb[0].mxu0
  %4374 = vmatprep.mubr.bf16.mxu0 %v3704
  %4375 = vmatmul.mubr.bf16.gmra.mrb[0].mxu0 %v3703
  %v4376 = vpop.f32.mrb[0].mxu0
  %v4377 = vadd.f32 0.0, %v4376
  %v4378 = vpop.f32.mrb[0].mxu0
  %v4379 = vpop.f32.mrb[0].mxu0
  %v4380 = vadd.f32 0.0, %v4379
  %v4381 = vpop.f32.mrb[0].mxu0
  %4382 = vmatprep.mubr.bf16.mxu0 %v3709
  %4383 = vmatmul.mubr.bf16.gmra.mrb[0].mxu0 %v3708
  %v4384 = vpop.f32.mrb[0].mxu0
  %v4385 = vadd.f32 0.0, %v4384
  %v4386 = vpop.f32.mrb[0].mxu0
  %v4387 = vpop.f32.mrb[0].mxu0
  %v4388 = vadd.f32 0.0, %v4387
  %v4389 = vpop.f32.mrb[0].mxu0
  %4390 = vmatprep.mubr.bf16.mxu0 %v3714
  %4391 = vmatmul.mubr.bf16.gmra.mrb[0].mxu0 %v3713
  %v4392 = vpop.f32.mrb[0].mxu0
  %v4393 = vadd.f32 0.0, %v4392
  %v4394 = vpop.f32.mrb[0].mxu0
  %v4395 = vpop.f32.mrb[0].mxu0
  %v4396 = vadd.f32 0.0, %v4395
  %v4397 = vpop.f32.mrb[0].mxu0
  %4398 = vmatprep.mubr.bf16.mxu0 %v3719
  %4399 = vmatmul.mubr.bf16.gmra.mrb[0].mxu0 %v3718
  %v4400 = vpop.f32.mrb[0].mxu0
  %v4401 = vadd.f32 0.0, %v4400
  %v4402 = vpop.f32.mrb[0].mxu0
  %v4403 = vpop.f32.mrb[0].mxu0
  %v4404 = vadd.f32 0.0, %v4403
  %v4405 = vpop.f32.mrb[0].mxu0
  %4406 = vmatprep.mubr.bf16.mxu0 %v3724
  %4407 = vmatmul.mubr.bf16.gmra.mrb[0].mxu0 %v3723
  %v4408 = vpop.f32.mrb[0].mxu0
  %v4409 = vadd.f32 0.0, %v4408
  %v4410 = vpop.f32.mrb[0].mxu0
  %v4411 = vpop.f32.mrb[0].mxu0
  %v4412 = vadd.f32 0.0, %v4411
  %v4413 = vpop.f32.mrb[0].mxu0
  %4414 = vmatprep.mubr.bf16.mxu0 %v3729
  %4415 = vmatmul.mubr.bf16.gmra.mrb[0].mxu0 %v3728
  %v4416 = vpop.f32.mrb[0].mxu0
  %v4417 = vadd.f32 0.0, %v4416
  %v4418 = vpop.f32.mrb[0].mxu0
  %v4419 = vpop.f32.mrb[0].mxu0
  %v4420 = vadd.f32 0.0, %v4419
  %v4421 = vpop.f32.mrb[0].mxu0
  %4422 = vmatprep.mubr.bf16.mxu0 %v3734
  %4423 = vmatmul.mubr.bf16.gmra.mrb[0].mxu0 %v3733
  %v4424 = vpop.f32.mrb[0].mxu0
  %v4425 = vadd.f32 0.0, %v4424
  %v4426 = vpop.f32.mrb[0].mxu0
  %v4427 = vpop.f32.mrb[0].mxu0
  %v4428 = vadd.f32 0.0, %v4427
  %v4429 = vpop.f32.mrb[0].mxu0
  %4430 = vmatprep.mubr.bf16.mxu0 %v3739
  %4431 = vmatmul.mubr.bf16.gmra.mrb[0].mxu0 %v3738
  %v4432 = vpop.f32.mrb[0].mxu0
  %v4433 = vadd.f32 0.0, %v4432
  %v4434 = vpop.f32.mrb[0].mxu0
  %v4435 = vpop.f32.mrb[0].mxu0
  %v4436 = vadd.f32 0.0, %v4435
  %v4437 = vpop.f32.mrb[0].mxu0
  %4438 = vmatprep.mubr.bf16.mxu0 %v3744
  %4439 = vmatmul.mubr.bf16.gmra.mrb[0].mxu0 %v3743
  %v4440 = vpop.f32.mrb[0].mxu0
  %v4441 = vadd.f32 0.0, %v4440
  %v4442 = vpop.f32.mrb[0].mxu0
  %v4443 = vpop.f32.mrb[0].mxu0
  %v4444 = vadd.f32 0.0, %v4443
  %v4445 = vpop.f32.mrb[0].mxu0
  %4446 = vmatprep.mubr.bf16.mxu0 %v3749
  %4447 = vmatmul.mubr.bf16.gmra.mrb[0].mxu0 %v3748
  %v4448 = vpop.f32.mrb[0].mxu0
  %v4449 = vadd.f32 0.0, %v4448
  %v4450 = vpop.f32.mrb[0].mxu0
  %v4451 = vpop.f32.mrb[0].mxu0
  %v4452 = vadd.f32 0.0, %v4451
  %v4453 = vpop.f32.mrb[0].mxu0
  %4454 = vmatprep.mubr.bf16.mxu0 %v3754
  %4455 = vmatmul.mubr.bf16.gmra.mrb[0].mxu0 %v3753
  %v4456 = vpop.f32.mrb[0].mxu0
  %v4457 = vadd.f32 0.0, %v4456
  %v4458 = vpop.f32.mrb[0].mxu0
  %v4459 = vpop.f32.mrb[0].mxu0
  %v4460 = vadd.f32 0.0, %v4459
  %v4461 = vpop.f32.mrb[0].mxu0
  %4462 = vmatprep.mubr.bf16.mxu0 %v3759
  %4463 = vmatmul.mubr.bf16.gmra.mrb[0].mxu0 %v3758
  %v4464 = vpop.f32.mrb[0].mxu0
  %v4465 = vadd.f32 0.0, %v4464
  %v4466 = vpop.f32.mrb[0].mxu0
  %v4467 = vpop.f32.mrb[0].mxu0
  %v4468 = vadd.f32 0.0, %v4467
  %v4469 = vpop.f32.mrb[0].mxu0
  %4470 = vmatprep.mubr.bf16.mxu0 %v3764
  %4471 = vmatmul.mubr.bf16.gmra.mrb[0].mxu0 %v3763
  %v4472 = vpop.f32.mrb[0].mxu0
  %v4473 = vadd.f32 0.0, %v4472
  %v4474 = vpop.f32.mrb[0].mxu0
  %v4475 = vpop.f32.mrb[0].mxu0
  %v4476 = vadd.f32 0.0, %v4475
  %v4477 = vpop.f32.mrb[0].mxu0
  %4478 = vmatprep.mubr.bf16.mxu0 %v3769
  %4479 = vmatmul.mubr.bf16.gmra.mrb[0].mxu0 %v3768
  %v4480 = vpop.f32.mrb[0].mxu0
  %v4481 = vadd.f32 0.0, %v4480
  %v4482 = vpop.f32.mrb[0].mxu0
  %v4483 = vpop.f32.mrb[0].mxu0
  %v4484 = vadd.f32 0.0, %v4483
  %v4485 = vpop.f32.mrb[0].mxu0
  %4486 = vmatprep.mubr.bf16.mxu0 %v3774
  %4487 = vmatmul.mubr.bf16.gmra.mrb[0].mxu0 %v3773
  %v4488 = vpop.f32.mrb[0].mxu0
  %v4489 = vadd.f32 0.0, %v4488
  %v4490 = vpop.f32.mrb[0].mxu0
  %v4491 = vpop.f32.mrb[0].mxu0
  %v4492 = vadd.f32 0.0, %v4491
  %v4493 = vpop.f32.mrb[0].mxu0
  %4494 = vmatprep.mubr.bf16.mxu0 %v3779
  %4495 = vmatmul.mubr.bf16.gmra.mrb[0].mxu0 %v3778
  %v4496 = vpop.f32.mrb[0].mxu0
  %v4497 = vadd.f32 0.0, %v4496
  %v4498 = vpop.f32.mrb[0].mxu0
  %v4499 = vpop.f32.mrb[0].mxu0
  %v4500 = vadd.f32 0.0, %v4499
  %v4501 = vpop.f32.mrb[0].mxu0
  %4502 = vmatprep.mubr.bf16.mxu0 %v3784
  %4503 = vmatmul.mubr.bf16.gmra.mrb[0].mxu0 %v3783
  %v4504 = vpop.f32.mrb[0].mxu0
  %v4505 = vadd.f32 0.0, %v4504
  %v4506 = vpop.f32.mrb[0].mxu0
  %v4507 = vpop.f32.mrb[0].mxu0
  %v4508 = vadd.f32 0.0, %v4507
  %v4509 = vpop.f32.mrb[0].mxu0
  %4510 = vmatprep.mubr.bf16.mxu0 %v3789
  %4511 = vmatmul.mubr.bf16.gmra.mrb[0].mxu0 %v3788
  %v4512 = vpop.f32.mrb[0].mxu0
  %v4513 = vadd.f32 0.0, %v4512
  %v4514 = vpop.f32.mrb[0].mxu0
  %v4515 = vpop.f32.mrb[0].mxu0
  %v4516 = vadd.f32 0.0, %v4515
  %v4517 = vpop.f32.mrb[0].mxu0
  %4518 = vmatprep.mubr.bf16.mxu0 %v3794
  %4519 = vmatmul.mubr.bf16.gmra.mrb[0].mxu0 %v3793
  %v4520 = vpop.f32.mrb[0].mxu0
  %v4521 = vadd.f32 0.0, %v4520
  %v4522 = vpop.f32.mrb[0].mxu0
  %v4523 = vpop.f32.mrb[0].mxu0
  %v4524 = vadd.f32 0.0, %v4523
  %v4525 = vpop.f32.mrb[0].mxu0
  %4526 = vmatprep.mubr.bf16.mxu0 %v3799
  %4527 = vmatmul.mubr.bf16.gmra.mrb[0].mxu0 %v3798
  %v4528 = vpop.f32.mrb[0].mxu0
  %v4529 = vadd.f32 0.0, %v4528
  %v4530 = vpop.f32.mrb[0].mxu0
  %v4531 = vpop.f32.mrb[0].mxu0
  %v4532 = vadd.f32 0.0, %v4531
  %v4533 = vpop.f32.mrb[0].mxu0
  %4534 = vmatprep.mubr.bf16.mxu0 %v3804
  %4535 = vmatmul.mubr.bf16.gmra.mrb[0].mxu0 %v3803
  %v4536 = vpop.f32.mrb[0].mxu0
  %v4537 = vadd.f32 0.0, %v4536
  %v4538 = vpop.f32.mrb[0].mxu0
  %v4539 = vpop.f32.mrb[0].mxu0
  %v4540 = vadd.f32 0.0, %v4539
  %v4541 = vpop.f32.mrb[0].mxu0
  %4542 = vmatprep.mubr.bf16.mxu0 %v3809
  %4543 = vmatmul.mubr.bf16.gmra.mrb[0].mxu0 %v3808
  %v4544 = vpop.f32.mrb[0].mxu0
  %v4545 = vadd.f32 0.0, %v4544
  %v4546 = vpop.f32.mrb[0].mxu0
  %v4547 = vpop.f32.mrb[0].mxu0
  %v4548 = vadd.f32 0.0, %v4547
  %v4549 = vpop.f32.mrb[0].mxu0
  %4550 = vmatprep.mubr.bf16.mxu0 %v3814
  %4551 = vmatmul.mubr.bf16.gmra.mrb[0].mxu0 %v3813
  %v4552 = vpop.f32.mrb[0].mxu0
  %v4553 = vadd.f32 0.0, %v4552
  %v4554 = vpop.f32.mrb[0].mxu0
  %v4555 = vpop.f32.mrb[0].mxu0
  %v4556 = vadd.f32 0.0, %v4555
  %v4557 = vpop.f32.mrb[0].mxu0
  %4558 = vmatprep.mubr.bf16.mxu0 %v3819
  %4559 = vmatmul.mubr.bf16.gmra.mrb[0].mxu0 %v3818
  %v4560 = vpop.f32.mrb[0].mxu0
  %v4561 = vadd.f32 0.0, %v4560
  %v4562 = vpop.f32.mrb[0].mxu0
  %v4563 = vpop.f32.mrb[0].mxu0
  %v4564 = vadd.f32 0.0, %v4563
  %v4565 = vpop.f32.mrb[0].mxu0
  %4566 = vmatprep.mubr.bf16.mxu0 %v3824
  %4567 = vmatmul.mubr.bf16.gmra.mrb[0].mxu0 %v3823
  %v4568 = vpop.f32.mrb[0].mxu0
  %v4569 = vadd.f32 0.0, %v4568
  %v4570 = vpop.f32.mrb[0].mxu0
  %v4571 = vpop.f32.mrb[0].mxu0
  %v4572 = vadd.f32 0.0, %v4571
  %v4573 = vpop.f32.mrb[0].mxu0
  %4574 = vmatprep.mubr.bf16.mxu0 %v3829
  %4575 = vmatmul.mubr.bf16.gmra.mrb[0].mxu0 %v3828
  %v4576 = vpop.f32.mrb[0].mxu0
  %v4577 = vadd.f32 0.0, %v4576
  %v4578 = vpop.f32.mrb[0].mxu0
  %v4579 = vpop.f32.mrb[0].mxu0
  %v4580 = vadd.f32 0.0, %v4579
  %v4581 = vpop.f32.mrb[0].mxu0
  %4582 = vmatprep.mubr.bf16.mxu0 %v3834
  %4583 = vmatmul.mubr.bf16.gmra.mrb[0].mxu0 %v3833
  %v4584 = vpop.f32.mrb[0].mxu0
  %v4585 = vadd.f32 0.0, %v4584
  %v4586 = vpop.f32.mrb[0].mxu0
  %v4587 = vpop.f32.mrb[0].mxu0
  %v4588 = vadd.f32 0.0, %v4587
  %v4589 = vpop.f32.mrb[0].mxu0
  %4590 = vdwg.mxu0
  %4591 = vmatprep.subr.bf16.mxu0 0
  %4592 = vmatpush1.bf16.msra.mxu0 %v2522
  %4593 = vmatprep.subr.bf16.mxu0 0
  %4594 = vmatpush1.bf16.msra.mxu0 %v2523
  %4595 = vmatprep.subr.bf16.mxu0 0
  %4596 = vmatpush1.bf16.msra.mxu0 %v2524
  %4597 = vmatprep.subr.bf16.mxu0 0
  %4598 = vmatpush1.bf16.msra.mxu0 %v2525
  %4599 = vmatprep.subr.bf16.mxu0 0
  %4600 = vmatpush1.bf16.msra.mxu0 %v2526
  %4601 = vmatprep.subr.bf16.mxu0 0
  %4602 = vmatpush1.bf16.msra.mxu0 %v2527
  %4603 = vmatprep.subr.bf16.mxu0 0
  %4604 = vmatpush1.bf16.msra.mxu0 %v2528
  %4605 = vmatprep.subr.bf16.mxu0 0
  %4606 = vmatpush1.bf16.msra.mxu0 %v2529
  %4607 = vmatprep.subr.bf16.mxu0 0
  %4608 = vmatpush1.bf16.msra.mxu0 %v2530
  %4609 = vmatprep.subr.bf16.mxu0 0
  %4610 = vmatpush1.bf16.msra.mxu0 %v2531
  %4611 = vmatprep.subr.bf16.mxu0 0
  %4612 = vmatpush1.bf16.msra.mxu0 %v2532
  %4613 = vmatprep.subr.bf16.mxu0 0
  %4614 = vmatpush1.bf16.msra.mxu0 %v2533
  %4615 = vmatprep.subr.bf16.mxu0 0
  %4616 = vmatpush1.bf16.msra.mxu0 %v2534
  %4617 = vmatprep.subr.bf16.mxu0 0
  %4618 = vmatpush1.bf16.msra.mxu0 %v2535
  %4619 = vmatprep.subr.bf16.mxu0 0
  %4620 = vmatpush1.bf16.msra.mxu0 %v2536
  %4621 = vmatprep.subr.bf16.mxu0 0
  %4622 = vmatpush1.bf16.msra.mxu0 %v2537
  %4623 = vmatprep.mubr.bf16.mxu0 %v3601
  %4624 = vmatmul.mubr.bf16.gmra.mrb[0].mxu0 %v3600
  %v4625 = vpop.f32.mrb[0].mxu0
  %v4626 = vadd.f32 %v4209, %v4625
  %v4627 = vpop.f32.mrb[0].mxu0
  %v4628 = vpop.f32.mrb[0].mxu0
  %v4629 = vadd.f32 %v4212, %v4628
  %v4630 = vpop.f32.mrb[0].mxu0
  %4631 = vmatprep.mubr.bf16.mxu0 %v3606
  %4632 = vmatmul.mubr.bf16.gmra.mrb[0].mxu0 %v3605
  %v4633 = vpop.f32.mrb[0].mxu0
  %v4634 = vadd.f32 %v4217, %v4633
  %v4635 = vpop.f32.mrb[0].mxu0
  %v4636 = vpop.f32.mrb[0].mxu0
  %v4637 = vadd.f32 %v4220, %v4636
  %v4638 = vpop.f32.mrb[0].mxu0
  %4639 = vmatprep.mubr.bf16.mxu0 %v3611
  %4640 = vmatmul.mubr.bf16.gmra.mrb[0].mxu0 %v3610
  %v4641 = vpop.f32.mrb[0].mxu0
  %v4642 = vadd.f32 %v4225, %v4641
  %v4643 = vpop.f32.mrb[0].mxu0
  %v4644 = vpop.f32.mrb[0].mxu0
  %v4645 = vadd.f32 %v4228, %v4644
  %v4646 = vpop.f32.mrb[0].mxu0
  %4647 = vmatprep.mubr.bf16.mxu0 %v3616
  %4648 = vmatmul.mubr.bf16.gmra.mrb[0].mxu0 %v3615
  %v4649 = vpop.f32.mrb[0].mxu0
  %v4650 = vadd.f32 %v4233, %v4649
  %v4651 = vpop.f32.mrb[0].mxu0
  %v4652 = vpop.f32.mrb[0].mxu0
  %v4653 = vadd.f32 %v4236, %v4652
  %v4654 = vpop.f32.mrb[0].mxu0
  %4655 = vmatprep.mubr.bf16.mxu0 %v3621
  %4656 = vmatmul.mubr.bf16.gmra.mrb[0].mxu0 %v3620
  %v4657 = vpop.f32.mrb[0].mxu0
  %v4658 = vadd.f32 %v4241, %v4657
  %v4659 = vpop.f32.mrb[0].mxu0
  %v4660 = vpop.f32.mrb[0].mxu0
  %v4661 = vadd.f32 %v4244, %v4660
  %v4662 = vpop.f32.mrb[0].mxu0
  %4663 = vmatprep.mubr.bf16.mxu0 %v3626
  %4664 = vmatmul.mubr.bf16.gmra.mrb[0].mxu0 %v3625
  %v4665 = vpop.f32.mrb[0].mxu0
  %v4666 = vadd.f32 %v4249, %v4665
  %v4667 = vpop.f32.mrb[0].mxu0
  %v4668 = vpop.f32.mrb[0].mxu0
  %v4669 = vadd.f32 %v4252, %v4668
  %v4670 = vpop.f32.mrb[0].mxu0
  %4671 = vmatprep.mubr.bf16.mxu0 %v3631
  %4672 = vmatmul.mubr.bf16.gmra.mrb[0].mxu0 %v3630
  %v4673 = vpop.f32.mrb[0].mxu0
  %v4674 = vadd.f32 %v4257, %v4673
  %v4675 = vpop.f32.mrb[0].mxu0
  %v4676 = vpop.f32.mrb[0].mxu0
  %v4677 = vadd.f32 %v4260, %v4676
  %v4678 = vpop.f32.mrb[0].mxu0
  %4679 = vmatprep.mubr.bf16.mxu0 %v3636
  %4680 = vmatmul.mubr.bf16.gmra.mrb[0].mxu0 %v3635
  %v4681 = vpop.f32.mrb[0].mxu0
  %v4682 = vadd.f32 %v4265, %v4681
  %v4683 = vpop.f32.mrb[0].mxu0
  %v4684 = vpop.f32.mrb[0].mxu0
  %v4685 = vadd.f32 %v4268, %v4684
  %v4686 = vpop.f32.mrb[0].mxu0
  %4687 = vmatprep.mubr.bf16.mxu0 %v3641
  %4688 = vmatmul.mubr.bf16.gmra.mrb[0].mxu0 %v3640
  %v4689 = vpop.f32.mrb[0].mxu0
  %v4690 = vadd.f32 %v4273, %v4689
  %v4691 = vpop.f32.mrb[0].mxu0
  %v4692 = vpop.f32.mrb[0].mxu0
  %v4693 = vadd.f32 %v4276, %v4692
  %v4694 = vpop.f32.mrb[0].mxu0
  %4695 = vmatprep.mubr.bf16.mxu0 %v3646
  %4696 = vmatmul.mubr.bf16.gmra.mrb[0].mxu0 %v3645
  %v4697 = vpop.f32.mrb[0].mxu0
  %v4698 = vadd.f32 %v4281, %v4697
  %v4699 = vpop.f32.mrb[0].mxu0
  %v4700 = vpop.f32.mrb[0].mxu0
  %v4701 = vadd.f32 %v4284, %v4700
  %v4702 = vpop.f32.mrb[0].mxu0
  %4703 = vmatprep.mubr.bf16.mxu0 %v3651
  %4704 = vmatmul.mubr.bf16.gmra.mrb[0].mxu0 %v3650
  %v4705 = vpop.f32.mrb[0].mxu0
  %v4706 = vadd.f32 %v4289, %v4705
  %v4707 = vpop.f32.mrb[0].mxu0
  %v4708 = vpop.f32.mrb[0].mxu0
  %v4709 = vadd.f32 %v4292, %v4708
  %v4710 = vpop.f32.mrb[0].mxu0
  %4711 = vmatprep.mubr.bf16.mxu0 %v3656
  %4712 = vmatmul.mubr.bf16.gmra.mrb[0].mxu0 %v3655
  %v4713 = vpop.f32.mrb[0].mxu0
  %v4714 = vadd.f32 %v4297, %v4713
  %v4715 = vpop.f32.mrb[0].mxu0
  %v4716 = vpop.f32.mrb[0].mxu0
  %v4717 = vadd.f32 %v4300, %v4716
  %v4718 = vpop.f32.mrb[0].mxu0
  %4719 = vmatprep.mubr.bf16.mxu0 %v3661
  %4720 = vmatmul.mubr.bf16.gmra.mrb[0].mxu0 %v3660
  %v4721 = vpop.f32.mrb[0].mxu0
  %v4722 = vadd.f32 %v4305, %v4721
  %v4723 = vpop.f32.mrb[0].mxu0
  %v4724 = vpop.f32.mrb[0].mxu0
  %v4725 = vadd.f32 %v4308, %v4724
  %v4726 = vpop.f32.mrb[0].mxu0
  %4727 = vmatprep.mubr.bf16.mxu0 %v3666
  %4728 = vmatmul.mubr.bf16.gmra.mrb[0].mxu0 %v3665
  %v4729 = vpop.f32.mrb[0].mxu0
  %v4730 = vadd.f32 %v4313, %v4729
  %v4731 = vpop.f32.mrb[0].mxu0
  %v4732 = vpop.f32.mrb[0].mxu0
  %v4733 = vadd.f32 %v4316, %v4732
  %v4734 = vpop.f32.mrb[0].mxu0
  %4735 = vmatprep.mubr.bf16.mxu0 %v3671
  %4736 = vmatmul.mubr.bf16.gmra.mrb[0].mxu0 %v3670
  %v4737 = vpop.f32.mrb[0].mxu0
  %v4738 = vadd.f32 %v4321, %v4737
  %v4739 = vpop.f32.mrb[0].mxu0
  %v4740 = vpop.f32.mrb[0].mxu0
  %v4741 = vadd.f32 %v4324, %v4740
  %v4742 = vpop.f32.mrb[0].mxu0
  %4743 = vmatprep.mubr.bf16.mxu0 %v3676
  %4744 = vmatmul.mubr.bf16.gmra.mrb[0].mxu0 %v3675
  %v4745 = vpop.f32.mrb[0].mxu0
  %v4746 = vadd.f32 %v4329, %v4745
  %v4747 = vpop.f32.mrb[0].mxu0
  %v4748 = vpop.f32.mrb[0].mxu0
  %v4749 = vadd.f32 %v4332, %v4748
  %v4750 = vpop.f32.mrb[0].mxu0
  %4751 = vmatprep.mubr.bf16.mxu0 %v3681
  %4752 = vmatmul.mubr.bf16.gmra.mrb[0].mxu0 %v3680
  %v4753 = vpop.f32.mrb[0].mxu0
  %v4754 = vadd.f32 %v4337, %v4753
  %v4755 = vpop.f32.mrb[0].mxu0
  %v4756 = vpop.f32.mrb[0].mxu0
  %v4757 = vadd.f32 %v4340, %v4756
  %v4758 = vpop.f32.mrb[0].mxu0
  %4759 = vmatprep.mubr.bf16.mxu0 %v3686
  %4760 = vmatmul.mubr.bf16.gmra.mrb[0].mxu0 %v3685
  %v4761 = vpop.f32.mrb[0].mxu0
  %v4762 = vadd.f32 %v4345, %v4761
  %v4763 = vpop.f32.mrb[0].mxu0
  %v4764 = vpop.f32.mrb[0].mxu0
  %v4765 = vadd.f32 %v4348, %v4764
  %v4766 = vpop.f32.mrb[0].mxu0
  %4767 = vmatprep.mubr.bf16.mxu0 %v3691
  %4768 = vmatmul.mubr.bf16.gmra.mrb[0].mxu0 %v3690
  %v4769 = vpop.f32.mrb[0].mxu0
  %v4770 = vadd.f32 %v4353, %v4769
  %v4771 = vpop.f32.mrb[0].mxu0
  %v4772 = vpop.f32.mrb[0].mxu0
  %v4773 = vadd.f32 %v4356, %v4772
  %v4774 = vpop.f32.mrb[0].mxu0
  %4775 = vmatprep.mubr.bf16.mxu0 %v3696
  %4776 = vmatmul.mubr.bf16.gmra.mrb[0].mxu0 %v3695
  %v4777 = vpop.f32.mrb[0].mxu0
  %v4778 = vadd.f32 %v4361, %v4777
  %v4779 = vpop.f32.mrb[0].mxu0
  %v4780 = vpop.f32.mrb[0].mxu0
  %v4781 = vadd.f32 %v4364, %v4780
  %v4782 = vpop.f32.mrb[0].mxu0
  %4783 = vmatprep.mubr.bf16.mxu0 %v3701
  %4784 = vmatmul.mubr.bf16.gmra.mrb[0].mxu0 %v3700
  %v4785 = vpop.f32.mrb[0].mxu0
  %v4786 = vadd.f32 %v4369, %v4785
  %v4787 = vpop.f32.mrb[0].mxu0
  %v4788 = vpop.f32.mrb[0].mxu0
  %v4789 = vadd.f32 %v4372, %v4788
  %v4790 = vpop.f32.mrb[0].mxu0
  %4791 = vmatprep.mubr.bf16.mxu0 %v3706
  %4792 = vmatmul.mubr.bf16.gmra.mrb[0].mxu0 %v3705
  %v4793 = vpop.f32.mrb[0].mxu0
  %v4794 = vadd.f32 %v4377, %v4793
  %v4795 = vpop.f32.mrb[0].mxu0
  %v4796 = vpop.f32.mrb[0].mxu0
  %v4797 = vadd.f32 %v4380, %v4796
  %v4798 = vpop.f32.mrb[0].mxu0
  %4799 = vmatprep.mubr.bf16.mxu0 %v3711
  %4800 = vmatmul.mubr.bf16.gmra.mrb[0].mxu0 %v3710
  %v4801 = vpop.f32.mrb[0].mxu0
  %v4802 = vadd.f32 %v4385, %v4801
  %v4803 = vpop.f32.mrb[0].mxu0
  %v4804 = vpop.f32.mrb[0].mxu0
  %v4805 = vadd.f32 %v4388, %v4804
  %v4806 = vpop.f32.mrb[0].mxu0
  %4807 = vmatprep.mubr.bf16.mxu0 %v3716
  %4808 = vmatmul.mubr.bf16.gmra.mrb[0].mxu0 %v3715
  %v4809 = vpop.f32.mrb[0].mxu0
  %v4810 = vadd.f32 %v4393, %v4809
  %v4811 = vpop.f32.mrb[0].mxu0
  %v4812 = vpop.f32.mrb[0].mxu0
  %v4813 = vadd.f32 %v4396, %v4812
  %v4814 = vpop.f32.mrb[0].mxu0
  %4815 = vmatprep.mubr.bf16.mxu0 %v3721
  %4816 = vmatmul.mubr.bf16.gmra.mrb[0].mxu0 %v3720
  %v4817 = vpop.f32.mrb[0].mxu0
  %v4818 = vadd.f32 %v4401, %v4817
  %v4819 = vpop.f32.mrb[0].mxu0
  %v4820 = vpop.f32.mrb[0].mxu0
  %v4821 = vadd.f32 %v4404, %v4820
  %v4822 = vpop.f32.mrb[0].mxu0
  %4823 = vmatprep.mubr.bf16.mxu0 %v3726
  %4824 = vmatmul.mubr.bf16.gmra.mrb[0].mxu0 %v3725
  %v4825 = vpop.f32.mrb[0].mxu0
  %v4826 = vadd.f32 %v4409, %v4825
  %v4827 = vpop.f32.mrb[0].mxu0
  %v4828 = vpop.f32.mrb[0].mxu0
  %v4829 = vadd.f32 %v4412, %v4828
  %v4830 = vpop.f32.mrb[0].mxu0
  %4831 = vmatprep.mubr.bf16.mxu0 %v3731
  %4832 = vmatmul.mubr.bf16.gmra.mrb[0].mxu0 %v3730
  %v4833 = vpop.f32.mrb[0].mxu0
  %v4834 = vadd.f32 %v4417, %v4833
  %v4835 = vpop.f32.mrb[0].mxu0
  %v4836 = vpop.f32.mrb[0].mxu0
  %v4837 = vadd.f32 %v4420, %v4836
  %v4838 = vpop.f32.mrb[0].mxu0
  %4839 = vmatprep.mubr.bf16.mxu0 %v3736
  %4840 = vmatmul.mubr.bf16.gmra.mrb[0].mxu0 %v3735
  %v4841 = vpop.f32.mrb[0].mxu0
  %v4842 = vadd.f32 %v4425, %v4841
  %v4843 = vpop.f32.mrb[0].mxu0
  %v4844 = vpop.f32.mrb[0].mxu0
  %v4845 = vadd.f32 %v4428, %v4844
  %v4846 = vpop.f32.mrb[0].mxu0
  %4847 = vmatprep.mubr.bf16.mxu0 %v3741
  %4848 = vmatmul.mubr.bf16.gmra.mrb[0].mxu0 %v3740
  %v4849 = vpop.f32.mrb[0].mxu0
  %v4850 = vadd.f32 %v4433, %v4849
  %v4851 = vpop.f32.mrb[0].mxu0
  %v4852 = vpop.f32.mrb[0].mxu0
  %v4853 = vadd.f32 %v4436, %v4852
  %v4854 = vpop.f32.mrb[0].mxu0
  %4855 = vmatprep.mubr.bf16.mxu0 %v3746
  %4856 = vmatmul.mubr.bf16.gmra.mrb[0].mxu0 %v3745
  %v4857 = vpop.f32.mrb[0].mxu0
  %v4858 = vadd.f32 %v4441, %v4857
  %v4859 = vpop.f32.mrb[0].mxu0
  %v4860 = vpop.f32.mrb[0].mxu0
  %v4861 = vadd.f32 %v4444, %v4860
  %v4862 = vpop.f32.mrb[0].mxu0
  %4863 = vmatprep.mubr.bf16.mxu0 %v3751
  %4864 = vmatmul.mubr.bf16.gmra.mrb[0].mxu0 %v3750
  %v4865 = vpop.f32.mrb[0].mxu0
  %v4866 = vadd.f32 %v4449, %v4865
  %v4867 = vpop.f32.mrb[0].mxu0
  %v4868 = vpop.f32.mrb[0].mxu0
  %v4869 = vadd.f32 %v4452, %v4868
  %v4870 = vpop.f32.mrb[0].mxu0
  %4871 = vmatprep.mubr.bf16.mxu0 %v3756
  %4872 = vmatmul.mubr.bf16.gmra.mrb[0].mxu0 %v3755
  %v4873 = vpop.f32.mrb[0].mxu0
  %v4874 = vadd.f32 %v4457, %v4873
  %v4875 = vpop.f32.mrb[0].mxu0
  %v4876 = vpop.f32.mrb[0].mxu0
  %v4877 = vadd.f32 %v4460, %v4876
  %v4878 = vpop.f32.mrb[0].mxu0
  %4879 = vmatprep.mubr.bf16.mxu0 %v3761
  %4880 = vmatmul.mubr.bf16.gmra.mrb[0].mxu0 %v3760
  %v4881 = vpop.f32.mrb[0].mxu0
  %v4882 = vadd.f32 %v4465, %v4881
  %v4883 = vpop.f32.mrb[0].mxu0
  %v4884 = vpop.f32.mrb[0].mxu0
  %v4885 = vadd.f32 %v4468, %v4884
  %v4886 = vpop.f32.mrb[0].mxu0
  %4887 = vmatprep.mubr.bf16.mxu0 %v3766
  %4888 = vmatmul.mubr.bf16.gmra.mrb[0].mxu0 %v3765
  %v4889 = vpop.f32.mrb[0].mxu0
  %v4890 = vadd.f32 %v4473, %v4889
  %v4891 = vpop.f32.mrb[0].mxu0
  %v4892 = vpop.f32.mrb[0].mxu0
  %v4893 = vadd.f32 %v4476, %v4892
  %v4894 = vpop.f32.mrb[0].mxu0
  %4895 = vmatprep.mubr.bf16.mxu0 %v3771
  %4896 = vmatmul.mubr.bf16.gmra.mrb[0].mxu0 %v3770
  %v4897 = vpop.f32.mrb[0].mxu0
  %v4898 = vadd.f32 %v4481, %v4897
  %v4899 = vpop.f32.mrb[0].mxu0
  %v4900 = vpop.f32.mrb[0].mxu0
  %v4901 = vadd.f32 %v4484, %v4900
  %v4902 = vpop.f32.mrb[0].mxu0
  %4903 = vmatprep.mubr.bf16.mxu0 %v3776
  %4904 = vmatmul.mubr.bf16.gmra.mrb[0].mxu0 %v3775
  %v4905 = vpop.f32.mrb[0].mxu0
  %v4906 = vadd.f32 %v4489, %v4905
  %v4907 = vpop.f32.mrb[0].mxu0
  %v4908 = vpop.f32.mrb[0].mxu0
  %v4909 = vadd.f32 %v4492, %v4908
  %v4910 = vpop.f32.mrb[0].mxu0
  %4911 = vmatprep.mubr.bf16.mxu0 %v3781
  %4912 = vmatmul.mubr.bf16.gmra.mrb[0].mxu0 %v3780
  %v4913 = vpop.f32.mrb[0].mxu0
  %v4914 = vadd.f32 %v4497, %v4913
  %v4915 = vpop.f32.mrb[0].mxu0
  %v4916 = vpop.f32.mrb[0].mxu0
  %v4917 = vadd.f32 %v4500, %v4916
  %v4918 = vpop.f32.mrb[0].mxu0
  %4919 = vmatprep.mubr.bf16.mxu0 %v3786
  %4920 = vmatmul.mubr.bf16.gmra.mrb[0].mxu0 %v3785
  %v4921 = vpop.f32.mrb[0].mxu0
  %v4922 = vadd.f32 %v4505, %v4921
  %v4923 = vpop.f32.mrb[0].mxu0
  %v4924 = vpop.f32.mrb[0].mxu0
  %v4925 = vadd.f32 %v4508, %v4924
  %v4926 = vpop.f32.mrb[0].mxu0
  %4927 = vmatprep.mubr.bf16.mxu0 %v3791
  %4928 = vmatmul.mubr.bf16.gmra.mrb[0].mxu0 %v3790
  %v4929 = vpop.f32.mrb[0].mxu0
  %v4930 = vadd.f32 %v4513, %v4929
  %v4931 = vpop.f32.mrb[0].mxu0
  %v4932 = vpop.f32.mrb[0].mxu0
  %v4933 = vadd.f32 %v4516, %v4932
  %v4934 = vpop.f32.mrb[0].mxu0
  %4935 = vmatprep.mubr.bf16.mxu0 %v3796
  %4936 = vmatmul.mubr.bf16.gmra.mrb[0].mxu0 %v3795
  %v4937 = vpop.f32.mrb[0].mxu0
  %v4938 = vadd.f32 %v4521, %v4937
  %v4939 = vpop.f32.mrb[0].mxu0
  %v4940 = vpop.f32.mrb[0].mxu0
  %v4941 = vadd.f32 %v4524, %v4940
  %v4942 = vpop.f32.mrb[0].mxu0
  %4943 = vmatprep.mubr.bf16.mxu0 %v3801
  %4944 = vmatmul.mubr.bf16.gmra.mrb[0].mxu0 %v3800
  %v4945 = vpop.f32.mrb[0].mxu0
  %v4946 = vadd.f32 %v4529, %v4945
  %v4947 = vpop.f32.mrb[0].mxu0
  %v4948 = vpop.f32.mrb[0].mxu0
  %v4949 = vadd.f32 %v4532, %v4948
  %v4950 = vpop.f32.mrb[0].mxu0
  %4951 = vmatprep.mubr.bf16.mxu0 %v3806
  %4952 = vmatmul.mubr.bf16.gmra.mrb[0].mxu0 %v3805
  %v4953 = vpop.f32.mrb[0].mxu0
  %v4954 = vadd.f32 %v4537, %v4953
  %v4955 = vpop.f32.mrb[0].mxu0
  %v4956 = vpop.f32.mrb[0].mxu0
  %v4957 = vadd.f32 %v4540, %v4956
  %v4958 = vpop.f32.mrb[0].mxu0
  %4959 = vmatprep.mubr.bf16.mxu0 %v3811
  %4960 = vmatmul.mubr.bf16.gmra.mrb[0].mxu0 %v3810
  %v4961 = vpop.f32.mrb[0].mxu0
  %v4962 = vadd.f32 %v4545, %v4961
  %v4963 = vpop.f32.mrb[0].mxu0
  %v4964 = vpop.f32.mrb[0].mxu0
  %v4965 = vadd.f32 %v4548, %v4964
  %v4966 = vpop.f32.mrb[0].mxu0
  %4967 = vmatprep.mubr.bf16.mxu0 %v3816
  %4968 = vmatmul.mubr.bf16.gmra.mrb[0].mxu0 %v3815
  %v4969 = vpop.f32.mrb[0].mxu0
  %v4970 = vadd.f32 %v4553, %v4969
  %v4971 = vpop.f32.mrb[0].mxu0
  %v4972 = vpop.f32.mrb[0].mxu0
  %v4973 = vadd.f32 %v4556, %v4972
  %v4974 = vpop.f32.mrb[0].mxu0
  %4975 = vmatprep.mubr.bf16.mxu0 %v3821
  %4976 = vmatmul.mubr.bf16.gmra.mrb[0].mxu0 %v3820
  %v4977 = vpop.f32.mrb[0].mxu0
  %v4978 = vadd.f32 %v4561, %v4977
  %v4979 = vpop.f32.mrb[0].mxu0
  %v4980 = vpop.f32.mrb[0].mxu0
  %v4981 = vadd.f32 %v4564, %v4980
  %v4982 = vpop.f32.mrb[0].mxu0
  %4983 = vmatprep.mubr.bf16.mxu0 %v3826
  %4984 = vmatmul.mubr.bf16.gmra.mrb[0].mxu0 %v3825
  %v4985 = vpop.f32.mrb[0].mxu0
  %v4986 = vadd.f32 %v4569, %v4985
  %v4987 = vpop.f32.mrb[0].mxu0
  %v4988 = vpop.f32.mrb[0].mxu0
  %v4989 = vadd.f32 %v4572, %v4988
  %v4990 = vpop.f32.mrb[0].mxu0
  %4991 = vmatprep.mubr.bf16.mxu0 %v3831
  %4992 = vmatmul.mubr.bf16.gmra.mrb[0].mxu0 %v3830
  %v4993 = vpop.f32.mrb[0].mxu0
  %v4994 = vadd.f32 %v4577, %v4993
  %v4995 = vpop.f32.mrb[0].mxu0
  %v4996 = vpop.f32.mrb[0].mxu0
  %v4997 = vadd.f32 %v4580, %v4996
  %v4998 = vpop.f32.mrb[0].mxu0
  %4999 = vmatprep.mubr.bf16.mxu0 %v3836
  %5000 = vmatmul.mubr.bf16.gmra.mrb[0].mxu0 %v3835
  %v5001 = vpop.f32.mrb[0].mxu0
  %v5002 = vadd.f32 %v4585, %v5001
  %v5003 = vpop.f32.mrb[0].mxu0
  %v5004 = vpop.f32.mrb[0].mxu0
  %v5005 = vadd.f32 %v4588, %v5004
  %v5006 = vpop.f32.mrb[0].mxu0
  %5007 = vdwg.mxu0
  %5008 = vmatprep.subr.bf16.mxu0 0
  %5009 = vmatpush1.bf16.msra.mxu0 %v2538
  %5010 = vmatprep.subr.bf16.mxu0 0
  %5011 = vmatpush1.bf16.msra.mxu0 %v2539
  %5012 = vmatprep.subr.bf16.mxu0 0
  %5013 = vmatpush1.bf16.msra.mxu0 %v2540
  %5014 = vmatprep.subr.bf16.mxu0 0
  %5015 = vmatpush1.bf16.msra.mxu0 %v2541
  %5016 = vmatprep.subr.bf16.mxu0 0
  %5017 = vmatpush1.bf16.msra.mxu0 0
  %5018 = vmatprep.subr.bf16.mxu0 0
  %5019 = vmatpush1.bf16.msra.mxu0 0
  %5020 = vmatprep.subr.bf16.mxu0 0
  %5021 = vmatpush1.bf16.msra.mxu0 0
  %5022 = vmatprep.subr.bf16.mxu0 0
  %5023 = vmatpush1.bf16.msra.mxu0 0
  %5024 = vmatprep.subr.bf16.mxu0 0
  %5025 = vmatpush1.bf16.msra.mxu0 0
  %5026 = vmatprep.subr.bf16.mxu0 0
  %5027 = vmatpush1.bf16.msra.mxu0 0
  %5028 = vmatprep.subr.bf16.mxu0 0
  %5029 = vmatpush1.bf16.msra.mxu0 0
  %5030 = vmatprep.subr.bf16.mxu0 0
  %5031 = vmatpush1.bf16.msra.mxu0 0
  %5032 = vmatprep.subr.bf16.mxu0 0
  %5033 = vmatpush1.bf16.msra.mxu0 0
  %5034 = vmatprep.subr.bf16.mxu0 0
  %5035 = vmatpush1.bf16.msra.mxu0 0
  %5036 = vmatprep.subr.bf16.mxu0 0
  %5037 = vmatpush1.bf16.msra.mxu0 0
  %5038 = vmatprep.subr.bf16.mxu0 0
  %5039 = vmatpush1.bf16.msra.mxu0 0
  %5040 = vmatprep.mubr.bf16.mxu0 0
  %5041 = vmatmul.mubr.bf16.gmra.mrb[0].mxu0 %v4031
  %v5042 = vpop.f32.mrb[0].mxu0
  %v5043 = vadd.f32 %v4626, %v5042
  %v5044 = vpop.f32.mrb[0].mxu0
  %v5045 = vpop.f32.mrb[0].mxu0
  %v5046 = vadd.f32 %v4629, %v5045
  %v5047 = vpop.f32.mrb[0].mxu0
  %5048 = vmatprep.mubr.bf16.mxu0 0
  %5049 = vmatmul.mubr.bf16.gmra.mrb[0].mxu0 %v4034
  %v5050 = vpop.f32.mrb[0].mxu0
  %v5051 = vadd.f32 %v4634, %v5050
  %v5052 = vpop.f32.mrb[0].mxu0
  %v5053 = vpop.f32.mrb[0].mxu0
  %v5054 = vadd.f32 %v4637, %v5053
  %v5055 = vpop.f32.mrb[0].mxu0
  %5056 = vmatprep.mubr.bf16.mxu0 0
  %5057 = vmatmul.mubr.bf16.gmra.mrb[0].mxu0 %v4037
  %v5058 = vpop.f32.mrb[0].mxu0
  %v5059 = vadd.f32 %v4642, %v5058
  %v5060 = vpop.f32.mrb[0].mxu0
  %v5061 = vpop.f32.mrb[0].mxu0
  %v5062 = vadd.f32 %v4645, %v5061
  %v5063 = vpop.f32.mrb[0].mxu0
  %5064 = vmatprep.mubr.bf16.mxu0 0
  %5065 = vmatmul.mubr.bf16.gmra.mrb[0].mxu0 %v4040
  %v5066 = vpop.f32.mrb[0].mxu0
  %v5067 = vadd.f32 %v4650, %v5066
  %v5068 = vpop.f32.mrb[0].mxu0
  %v5069 = vpop.f32.mrb[0].mxu0
  %v5070 = vadd.f32 %v4653, %v5069
  %v5071 = vpop.f32.mrb[0].mxu0
  %5072 = vmatprep.mubr.bf16.mxu0 0
  %5073 = vmatmul.mubr.bf16.gmra.mrb[0].mxu0 %v4043
  %v5074 = vpop.f32.mrb[0].mxu0
  %v5075 = vadd.f32 %v4658, %v5074
  %v5076 = vpop.f32.mrb[0].mxu0
  %v5077 = vpop.f32.mrb[0].mxu0
  %v5078 = vadd.f32 %v4661, %v5077
  %v5079 = vpop.f32.mrb[0].mxu0
  %5080 = vmatprep.mubr.bf16.mxu0 0
  %5081 = vmatmul.mubr.bf16.gmra.mrb[0].mxu0 %v4046
  %v5082 = vpop.f32.mrb[0].mxu0
  %v5083 = vadd.f32 %v4666, %v5082
  %v5084 = vpop.f32.mrb[0].mxu0
  %v5085 = vpop.f32.mrb[0].mxu0
  %v5086 = vadd.f32 %v4669, %v5085
  %v5087 = vpop.f32.mrb[0].mxu0
  %5088 = vmatprep.mubr.bf16.mxu0 0
  %5089 = vmatmul.mubr.bf16.gmra.mrb[0].mxu0 %v4049
  %v5090 = vpop.f32.mrb[0].mxu0
  %v5091 = vadd.f32 %v4674, %v5090
  %v5092 = vpop.f32.mrb[0].mxu0
  %v5093 = vpop.f32.mrb[0].mxu0
  %v5094 = vadd.f32 %v4677, %v5093
  %v5095 = vpop.f32.mrb[0].mxu0
  %5096 = vmatprep.mubr.bf16.mxu0 0
  %5097 = vmatmul.mubr.bf16.gmra.mrb[0].mxu0 %v4052
  %v5098 = vpop.f32.mrb[0].mxu0
  %v5099 = vadd.f32 %v4682, %v5098
  %v5100 = vpop.f32.mrb[0].mxu0
  %v5101 = vpop.f32.mrb[0].mxu0
  %v5102 = vadd.f32 %v4685, %v5101
  %v5103 = vpop.f32.mrb[0].mxu0
  %5104 = vmatprep.mubr.bf16.mxu0 0
  %5105 = vmatmul.mubr.bf16.gmra.mrb[0].mxu0 %v4055
  %v5106 = vpop.f32.mrb[0].mxu0
  %v5107 = vadd.f32 %v4690, %v5106
  %v5108 = vpop.f32.mrb[0].mxu0
  %v5109 = vpop.f32.mrb[0].mxu0
  %v5110 = vadd.f32 %v4693, %v5109
  %v5111 = vpop.f32.mrb[0].mxu0
  %5112 = vmatprep.mubr.bf16.mxu0 0
  %5113 = vmatmul.mubr.bf16.gmra.mrb[0].mxu0 %v4058
  %v5114 = vpop.f32.mrb[0].mxu0
  %v5115 = vadd.f32 %v4698, %v5114
  %v5116 = vpop.f32.mrb[0].mxu0
  %v5117 = vpop.f32.mrb[0].mxu0
  %v5118 = vadd.f32 %v4701, %v5117
  %v5119 = vpop.f32.mrb[0].mxu0
  %5120 = vmatprep.mubr.bf16.mxu0 0
  %5121 = vmatmul.mubr.bf16.gmra.mrb[0].mxu0 %v4061
  %v5122 = vpop.f32.mrb[0].mxu0
  %v5123 = vadd.f32 %v4706, %v5122
  %v5124 = vpop.f32.mrb[0].mxu0
  %v5125 = vpop.f32.mrb[0].mxu0
  %v5126 = vadd.f32 %v4709, %v5125
  %v5127 = vpop.f32.mrb[0].mxu0
  %5128 = vmatprep.mubr.bf16.mxu0 0
  %5129 = vmatmul.mubr.bf16.gmra.mrb[0].mxu0 %v4064
  %v5130 = vpop.f32.mrb[0].mxu0
  %v5131 = vadd.f32 %v4714, %v5130
  %v5132 = vpop.f32.mrb[0].mxu0
  %v5133 = vpop.f32.mrb[0].mxu0
  %v5134 = vadd.f32 %v4717, %v5133
  %v5135 = vpop.f32.mrb[0].mxu0
  %5136 = vmatprep.mubr.bf16.mxu0 0
  %5137 = vmatmul.mubr.bf16.gmra.mrb[0].mxu0 %v4067
  %v5138 = vpop.f32.mrb[0].mxu0
  %v5139 = vadd.f32 %v4722, %v5138
  %v5140 = vpop.f32.mrb[0].mxu0
  %v5141 = vpop.f32.mrb[0].mxu0
  %v5142 = vadd.f32 %v4725, %v5141
  %v5143 = vpop.f32.mrb[0].mxu0
  %5144 = vmatprep.mubr.bf16.mxu0 0
  %5145 = vmatmul.mubr.bf16.gmra.mrb[0].mxu0 %v4070
  %v5146 = vpop.f32.mrb[0].mxu0
  %v5147 = vadd.f32 %v4730, %v5146
  %v5148 = vpop.f32.mrb[0].mxu0
  %v5149 = vpop.f32.mrb[0].mxu0
  %v5150 = vadd.f32 %v4733, %v5149
  %v5151 = vpop.f32.mrb[0].mxu0
  %5152 = vmatprep.mubr.bf16.mxu0 0
  %5153 = vmatmul.mubr.bf16.gmra.mrb[0].mxu0 %v4073
  %v5154 = vpop.f32.mrb[0].mxu0
  %v5155 = vadd.f32 %v4738, %v5154
  %v5156 = vpop.f32.mrb[0].mxu0
  %v5157 = vpop.f32.mrb[0].mxu0
  %v5158 = vadd.f32 %v4741, %v5157
  %v5159 = vpop.f32.mrb[0].mxu0
  %5160 = vmatprep.mubr.bf16.mxu0 0
  %5161 = vmatmul.mubr.bf16.gmra.mrb[0].mxu0 %v4076
  %v5162 = vpop.f32.mrb[0].mxu0
  %v5163 = vadd.f32 %v4746, %v5162
  %v5164 = vpop.f32.mrb[0].mxu0
  %v5165 = vpop.f32.mrb[0].mxu0
  %v5166 = vadd.f32 %v4749, %v5165
  %v5167 = vpop.f32.mrb[0].mxu0
  %5168 = vmatprep.mubr.bf16.mxu0 0
  %5169 = vmatmul.mubr.bf16.gmra.mrb[0].mxu0 %v4079
  %v5170 = vpop.f32.mrb[0].mxu0
  %v5171 = vadd.f32 %v4754, %v5170
  %v5172 = vpop.f32.mrb[0].mxu0
  %v5173 = vpop.f32.mrb[0].mxu0
  %v5174 = vadd.f32 %v4757, %v5173
  %v5175 = vpop.f32.mrb[0].mxu0
  %5176 = vmatprep.mubr.bf16.mxu0 0
  %5177 = vmatmul.mubr.bf16.gmra.mrb[0].mxu0 %v4082
  %v5178 = vpop.f32.mrb[0].mxu0
  %v5179 = vadd.f32 %v4762, %v5178
  %v5180 = vpop.f32.mrb[0].mxu0
  %v5181 = vpop.f32.mrb[0].mxu0
  %v5182 = vadd.f32 %v4765, %v5181
  %v5183 = vpop.f32.mrb[0].mxu0
  %5184 = vmatprep.mubr.bf16.mxu0 0
  %5185 = vmatmul.mubr.bf16.gmra.mrb[0].mxu0 %v4085
  %v5186 = vpop.f32.mrb[0].mxu0
  %v5187 = vadd.f32 %v4770, %v5186
  %v5188 = vpop.f32.mrb[0].mxu0
  %v5189 = vpop.f32.mrb[0].mxu0
  %v5190 = vadd.f32 %v4773, %v5189
  %v5191 = vpop.f32.mrb[0].mxu0
  %5192 = vmatprep.mubr.bf16.mxu0 0
  %5193 = vmatmul.mubr.bf16.gmra.mrb[0].mxu0 %v4088
  %v5194 = vpop.f32.mrb[0].mxu0
  %v5195 = vadd.f32 %v4778, %v5194
  %v5196 = vpop.f32.mrb[0].mxu0
  %v5197 = vpop.f32.mrb[0].mxu0
  %v5198 = vadd.f32 %v4781, %v5197
  %v5199 = vpop.f32.mrb[0].mxu0
  %5200 = vmatprep.mubr.bf16.mxu0 0
  %5201 = vmatmul.mubr.bf16.gmra.mrb[0].mxu0 %v4091
  %v5202 = vpop.f32.mrb[0].mxu0
  %v5203 = vadd.f32 %v4786, %v5202
  %v5204 = vpop.f32.mrb[0].mxu0
  %v5205 = vpop.f32.mrb[0].mxu0
  %v5206 = vadd.f32 %v4789, %v5205
  %v5207 = vpop.f32.mrb[0].mxu0
  %5208 = vmatprep.mubr.bf16.mxu0 0
  %5209 = vmatmul.mubr.bf16.gmra.mrb[0].mxu0 %v4094
  %v5210 = vpop.f32.mrb[0].mxu0
  %v5211 = vadd.f32 %v4794, %v5210
  %v5212 = vpop.f32.mrb[0].mxu0
  %v5213 = vpop.f32.mrb[0].mxu0
  %v5214 = vadd.f32 %v4797, %v5213
  %v5215 = vpop.f32.mrb[0].mxu0
  %5216 = vmatprep.mubr.bf16.mxu0 0
  %5217 = vmatmul.mubr.bf16.gmra.mrb[0].mxu0 %v4097
  %v5218 = vpop.f32.mrb[0].mxu0
  %v5219 = vadd.f32 %v4802, %v5218
  %v5220 = vpop.f32.mrb[0].mxu0
  %v5221 = vpop.f32.mrb[0].mxu0
  %v5222 = vadd.f32 %v4805, %v5221
  %v5223 = vpop.f32.mrb[0].mxu0
  %5224 = vmatprep.mubr.bf16.mxu0 0
  %5225 = vmatmul.mubr.bf16.gmra.mrb[0].mxu0 %v4100
  %v5226 = vpop.f32.mrb[0].mxu0
  %v5227 = vadd.f32 %v4810, %v5226
  %v5228 = vpop.f32.mrb[0].mxu0
  %v5229 = vpop.f32.mrb[0].mxu0
  %v5230 = vadd.f32 %v4813, %v5229
  %v5231 = vpop.f32.mrb[0].mxu0
  %5232 = vmatprep.mubr.bf16.mxu0 0
  %5233 = vmatmul.mubr.bf16.gmra.mrb[0].mxu0 %v4103
  %v5234 = vpop.f32.mrb[0].mxu0
  %v5235 = vadd.f32 %v4818, %v5234
  %v5236 = vpop.f32.mrb[0].mxu0
  %v5237 = vpop.f32.mrb[0].mxu0
  %v5238 = vadd.f32 %v4821, %v5237
  %v5239 = vpop.f32.mrb[0].mxu0
  %5240 = vmatprep.mubr.bf16.mxu0 0
  %5241 = vmatmul.mubr.bf16.gmra.mrb[0].mxu0 %v4106
  %v5242 = vpop.f32.mrb[0].mxu0
  %v5243 = vadd.f32 %v4826, %v5242
  %v5244 = vpop.f32.mrb[0].mxu0
  %v5245 = vpop.f32.mrb[0].mxu0
  %v5246 = vadd.f32 %v4829, %v5245
  %v5247 = vpop.f32.mrb[0].mxu0
  %5248 = vmatprep.mubr.bf16.mxu0 0
  %5249 = vmatmul.mubr.bf16.gmra.mrb[0].mxu0 %v4109
  %v5250 = vpop.f32.mrb[0].mxu0
  %v5251 = vadd.f32 %v4834, %v5250
  %v5252 = vpop.f32.mrb[0].mxu0
  %v5253 = vpop.f32.mrb[0].mxu0
  %v5254 = vadd.f32 %v4837, %v5253
  %v5255 = vpop.f32.mrb[0].mxu0
  %5256 = vmatprep.mubr.bf16.mxu0 0
  %5257 = vmatmul.mubr.bf16.gmra.mrb[0].mxu0 %v4112
  %v5258 = vpop.f32.mrb[0].mxu0
  %v5259 = vadd.f32 %v4842, %v5258
  %v5260 = vpop.f32.mrb[0].mxu0
  %v5261 = vpop.f32.mrb[0].mxu0
  %v5262 = vadd.f32 %v4845, %v5261
  %v5263 = vpop.f32.mrb[0].mxu0
  %5264 = vmatprep.mubr.bf16.mxu0 0
  %5265 = vmatmul.mubr.bf16.gmra.mrb[0].mxu0 %v4115
  %v5266 = vpop.f32.mrb[0].mxu0
  %v5267 = vadd.f32 %v4850, %v5266
  %v5268 = vpop.f32.mrb[0].mxu0
  %v5269 = vpop.f32.mrb[0].mxu0
  %v5270 = vadd.f32 %v4853, %v5269
  %v5271 = vpop.f32.mrb[0].mxu0
  %5272 = vmatprep.mubr.bf16.mxu0 0
  %5273 = vmatmul.mubr.bf16.gmra.mrb[0].mxu0 %v4118
  %v5274 = vpop.f32.mrb[0].mxu0
  %v5275 = vadd.f32 %v4858, %v5274
  %v5276 = vpop.f32.mrb[0].mxu0
  %v5277 = vpop.f32.mrb[0].mxu0
  %v5278 = vadd.f32 %v4861, %v5277
  %v5279 = vpop.f32.mrb[0].mxu0
  %5280 = vmatprep.mubr.bf16.mxu0 0
  %5281 = vmatmul.mubr.bf16.gmra.mrb[0].mxu0 %v4121
  %v5282 = vpop.f32.mrb[0].mxu0
  %v5283 = vadd.f32 %v4866, %v5282
  %v5284 = vpop.f32.mrb[0].mxu0
  %v5285 = vpop.f32.mrb[0].mxu0
  %v5286 = vadd.f32 %v4869, %v5285
  %v5287 = vpop.f32.mrb[0].mxu0
  %5288 = vmatprep.mubr.bf16.mxu0 0
  %5289 = vmatmul.mubr.bf16.gmra.mrb[0].mxu0 %v4124
  %v5290 = vpop.f32.mrb[0].mxu0
  %v5291 = vadd.f32 %v4874, %v5290
  %v5292 = vpop.f32.mrb[0].mxu0
  %v5293 = vpop.f32.mrb[0].mxu0
  %v5294 = vadd.f32 %v4877, %v5293
  %v5295 = vpop.f32.mrb[0].mxu0
  %5296 = vmatprep.mubr.bf16.mxu0 0
  %5297 = vmatmul.mubr.bf16.gmra.mrb[0].mxu0 %v4127
  %v5298 = vpop.f32.mrb[0].mxu0
  %v5299 = vadd.f32 %v4882, %v5298
  %v5300 = vpop.f32.mrb[0].mxu0
  %v5301 = vpop.f32.mrb[0].mxu0
  %v5302 = vadd.f32 %v4885, %v5301
  %v5303 = vpop.f32.mrb[0].mxu0
  %5304 = vmatprep.mubr.bf16.mxu0 0
  %5305 = vmatmul.mubr.bf16.gmra.mrb[0].mxu0 %v4130
  %v5306 = vpop.f32.mrb[0].mxu0
  %v5307 = vadd.f32 %v4890, %v5306
  %v5308 = vpop.f32.mrb[0].mxu0
  %v5309 = vpop.f32.mrb[0].mxu0
  %v5310 = vadd.f32 %v4893, %v5309
  %v5311 = vpop.f32.mrb[0].mxu0
  %5312 = vmatprep.mubr.bf16.mxu0 0
  %5313 = vmatmul.mubr.bf16.gmra.mrb[0].mxu0 %v4133
  %v5314 = vpop.f32.mrb[0].mxu0
  %v5315 = vadd.f32 %v4898, %v5314
  %v5316 = vpop.f32.mrb[0].mxu0
  %v5317 = vpop.f32.mrb[0].mxu0
  %v5318 = vadd.f32 %v4901, %v5317
  %v5319 = vpop.f32.mrb[0].mxu0
  %5320 = vmatprep.mubr.bf16.mxu0 0
  %5321 = vmatmul.mubr.bf16.gmra.mrb[0].mxu0 %v4136
  %v5322 = vpop.f32.mrb[0].mxu0
  %v5323 = vadd.f32 %v4906, %v5322
  %v5324 = vpop.f32.mrb[0].mxu0
  %v5325 = vpop.f32.mrb[0].mxu0
  %v5326 = vadd.f32 %v4909, %v5325
  %v5327 = vpop.f32.mrb[0].mxu0
  %5328 = vmatprep.mubr.bf16.mxu0 0
  %5329 = vmatmul.mubr.bf16.gmra.mrb[0].mxu0 %v4139
  %v5330 = vpop.f32.mrb[0].mxu0
  %v5331 = vadd.f32 %v4914, %v5330
  %v5332 = vpop.f32.mrb[0].mxu0
  %v5333 = vpop.f32.mrb[0].mxu0
  %v5334 = vadd.f32 %v4917, %v5333
  %v5335 = vpop.f32.mrb[0].mxu0
  %5336 = vmatprep.mubr.bf16.mxu0 0
  %5337 = vmatmul.mubr.bf16.gmra.mrb[0].mxu0 %v4142
  %v5338 = vpop.f32.mrb[0].mxu0
  %v5339 = vadd.f32 %v4922, %v5338
  %v5340 = vpop.f32.mrb[0].mxu0
  %v5341 = vpop.f32.mrb[0].mxu0
  %v5342 = vadd.f32 %v4925, %v5341
  %v5343 = vpop.f32.mrb[0].mxu0
  %5344 = vmatprep.mubr.bf16.mxu0 0
  %5345 = vmatmul.mubr.bf16.gmra.mrb[0].mxu0 %v4145
  %v5346 = vpop.f32.mrb[0].mxu0
  %v5347 = vadd.f32 %v4930, %v5346
  %v5348 = vpop.f32.mrb[0].mxu0
  %v5349 = vpop.f32.mrb[0].mxu0
  %v5350 = vadd.f32 %v4933, %v5349
  %v5351 = vpop.f32.mrb[0].mxu0
  %5352 = vmatprep.mubr.bf16.mxu0 0
  %5353 = vmatmul.mubr.bf16.gmra.mrb[0].mxu0 %v4148
  %v5354 = vpop.f32.mrb[0].mxu0
  %v5355 = vadd.f32 %v4938, %v5354
  %v5356 = vpop.f32.mrb[0].mxu0
  %v5357 = vpop.f32.mrb[0].mxu0
  %v5358 = vadd.f32 %v4941, %v5357
  %v5359 = vpop.f32.mrb[0].mxu0
  %5360 = vmatprep.mubr.bf16.mxu0 0
  %5361 = vmatmul.mubr.bf16.gmra.mrb[0].mxu0 %v4151
  %v5362 = vpop.f32.mrb[0].mxu0
  %v5363 = vadd.f32 %v4946, %v5362
  %v5364 = vpop.f32.mrb[0].mxu0
  %v5365 = vpop.f32.mrb[0].mxu0
  %v5366 = vadd.f32 %v4949, %v5365
  %v5367 = vpop.f32.mrb[0].mxu0
  %5368 = vmatprep.mubr.bf16.mxu0 0
  %5369 = vmatmul.mubr.bf16.gmra.mrb[0].mxu0 %v4154
  %v5370 = vpop.f32.mrb[0].mxu0
  %v5371 = vadd.f32 %v4954, %v5370
  %v5372 = vpop.f32.mrb[0].mxu0
  %v5373 = vpop.f32.mrb[0].mxu0
  %v5374 = vadd.f32 %v4957, %v5373
  %v5375 = vpop.f32.mrb[0].mxu0
  %5376 = vmatprep.mubr.bf16.mxu0 0
  %5377 = vmatmul.mubr.bf16.gmra.mrb[0].mxu0 %v4157
  %v5378 = vpop.f32.mrb[0].mxu0
  %v5379 = vadd.f32 %v4962, %v5378
  %v5380 = vpop.f32.mrb[0].mxu0
  %v5381 = vpop.f32.mrb[0].mxu0
  %v5382 = vadd.f32 %v4965, %v5381
  %v5383 = vpop.f32.mrb[0].mxu0
  %5384 = vmatprep.mubr.bf16.mxu0 0
  %5385 = vmatmul.mubr.bf16.gmra.mrb[0].mxu0 %v4160
  %v5386 = vpop.f32.mrb[0].mxu0
  %v5387 = vadd.f32 %v4970, %v5386
  %v5388 = vpop.f32.mrb[0].mxu0
  %v5389 = vpop.f32.mrb[0].mxu0
  %v5390 = vadd.f32 %v4973, %v5389
  %v5391 = vpop.f32.mrb[0].mxu0
  %5392 = vmatprep.mubr.bf16.mxu0 0
  %5393 = vmatmul.mubr.bf16.gmra.mrb[0].mxu0 %v4163
  %v5394 = vpop.f32.mrb[0].mxu0
  %v5395 = vadd.f32 %v4978, %v5394
  %v5396 = vpop.f32.mrb[0].mxu0
  %v5397 = vpop.f32.mrb[0].mxu0
  %v5398 = vadd.f32 %v4981, %v5397
  %v5399 = vpop.f32.mrb[0].mxu0
  %5400 = vmatprep.mubr.bf16.mxu0 0
  %5401 = vmatmul.mubr.bf16.gmra.mrb[0].mxu0 %v4166
  %v5402 = vpop.f32.mrb[0].mxu0
  %v5403 = vadd.f32 %v4986, %v5402
  %v5404 = vpop.f32.mrb[0].mxu0
  %v5405 = vpop.f32.mrb[0].mxu0
  %v5406 = vadd.f32 %v4989, %v5405
  %v5407 = vpop.f32.mrb[0].mxu0
  %5408 = vmatprep.mubr.bf16.mxu0 0
  %5409 = vmatmul.mubr.bf16.gmra.mrb[0].mxu0 %v4169
  %v5410 = vpop.f32.mrb[0].mxu0
  %v5411 = vadd.f32 %v4994, %v5410
  %v5412 = vpop.f32.mrb[0].mxu0
  %v5413 = vpop.f32.mrb[0].mxu0
  %v5414 = vadd.f32 %v4997, %v5413
  %v5415 = vpop.f32.mrb[0].mxu0
  %5416 = vmatprep.mubr.bf16.mxu0 0
  %5417 = vmatmul.mubr.bf16.gmra.mrb[0].mxu0 %v4172
  %v5418 = vpop.f32.mrb[0].mxu0
  %v5419 = vadd.f32 %v5002, %v5418
  %v5420 = vpop.f32.mrb[0].mxu0
  %v5421 = vpop.f32.mrb[0].mxu0
  %v5422 = vadd.f32 %v5005, %v5421
  %v5423 = vpop.f32.mrb[0].mxu0
  %5424 = vdwg.mxu0
  %v5425 = vld [vmem:[%s5] sm:$0xff]
  %v5426 = vld [vmem:[%s5 + $0x8] sm:$0xff]
  %v5427 = vld [vmem:[%s5 + $0x10] sm:$0xf]
  %v5428 = vld [vmem:[%s5 + $0x14] sm:$0xff]
  %v5429 = vld [vmem:[%s5 + $0x1c] sm:$0xff]
  %v5430 = vld [vmem:[%s5 + $0x24] sm:$0xf]
  %v5431 = vld [vmem:[%s5 + $0x28] sm:$0xff]
  %v5432 = vld [vmem:[%s5 + $0x30] sm:$0xff]
  %v5433 = vld [vmem:[%s5 + $0x38] sm:$0xf]
  %v5434 = vld [vmem:[%s5 + $0x3c] sm:$0xff]
  %v5435 = vld [vmem:[%s5 + $0x44] sm:$0xff]
  %v5436 = vld [vmem:[%s5 + $0x4c] sm:$0xf]
  %v5437 = vld [vmem:[%s5 + $0x50] sm:$0xff]
  %v5438 = vld [vmem:[%s5 + $0x58] sm:$0xff]
  %v5439 = vld [vmem:[%s5 + $0x60] sm:$0xf]
  %v5440 = vld [vmem:[%s5 + $0x64] sm:$0xff]
  %v5441 = vld [vmem:[%s5 + $0x6c] sm:$0xff]
  %v5442 = vld [vmem:[%s5 + $0x74] sm:$0xf]
  %v5443 = vld [vmem:[%s5 + $0x78] sm:$0xff]
  %v5444 = vld [vmem:[%s5 + $0x80] sm:$0xff]
  %v5445 = vld [vmem:[%s5 + $0x88] sm:$0xf]
  %v5446 = vld [vmem:[%s5 + $0x8c] sm:$0xff]
  %v5447 = vld [vmem:[%s5 + $0x94] sm:$0xff]
  %v5448 = vld [vmem:[%s5 + $0x9c] sm:$0xf]
  %v5449 = vld [vmem:[%s5 + $0xa0] sm:$0xff]
  %v5450 = vld [vmem:[%s5 + $0xa8] sm:$0xff]
  %v5451 = vld [vmem:[%s5 + $0xb0] sm:$0xf]
  %v5452 = vld [vmem:[%s5 + $0xb4] sm:$0xff]
  %v5453 = vld [vmem:[%s5 + $0xbc] sm:$0xff]
  %v5454 = vld [vmem:[%s5 + $0xc4] sm:$0xf]
  %v5455 = vld [vmem:[%s5 + $0xc8] sm:$0xff]
  %v5456 = vld [vmem:[%s5 + $0xd0] sm:$0xff]
  %v5457 = vld [vmem:[%s5 + $0xd8] sm:$0xf]
  %v5458 = vld [vmem:[%s5 + $0xdc] sm:$0xff]
  %v5459 = vld [vmem:[%s5 + $0xe4] sm:$0xff]
  %v5460 = vld [vmem:[%s5 + $0xec] sm:$0xf]
  %v5461 = vld [vmem:[%s5 + $0xf0] sm:$0xff]
  %v5462 = vld [vmem:[%s5 + $0xf8] sm:$0xff]
  %v5463 = vld [vmem:[%s5 + $0x100] sm:$0xf]
  %v5464 = vld [vmem:[%s5 + $0x104] sm:$0xff]
  %v5465 = vld [vmem:[%s5 + $0x10c] sm:$0xff]
  %v5466 = vld [vmem:[%s5 + $0x114] sm:$0xf]
  %v5467 = vld [vmem:[%s5 + $0x118] sm:$0xff]
  %v5468 = vld [vmem:[%s5 + $0x120] sm:$0xff]
  %v5469 = vld [vmem:[%s5 + $0x128] sm:$0xf]
  %v5470 = vld [vmem:[%s5 + $0x12c] sm:$0xff]
  %v5471 = vld [vmem:[%s5 + $0x134] sm:$0xff]
  %v5472 = vld [vmem:[%s5 + $0x13c] sm:$0xf]
  %v5473 = vld [vmem:[%s5 + $0x140] sm:$0xff]
  %v5474 = vld [vmem:[%s5 + $0x148] sm:$0xff]
  %v5475 = vld [vmem:[%s5 + $0x150] sm:$0xf]
  %v5476 = vld [vmem:[%s5 + $0x154] sm:$0xff]
  %v5477 = vld [vmem:[%s5 + $0x15c] sm:$0xff]
  %v5478 = vld [vmem:[%s5 + $0x164] sm:$0xf]
  %v5479 = vld [vmem:[%s5 + $0x168] sm:$0xff]
  %v5480 = vld [vmem:[%s5 + $0x170] sm:$0xff]
  %v5481 = vld [vmem:[%s5 + $0x178] sm:$0xf]
  %v5482 = vld [vmem:[%s5 + $0x17c] sm:$0xff]
  %v5483 = vld [vmem:[%s5 + $0x184] sm:$0xff]
  %v5484 = vld [vmem:[%s5 + $0x18c] sm:$0xf]
  %v5485 = vld [vmem:[%s5 + $0x190] sm:$0xff]
  %v5486 = vld [vmem:[%s5 + $0x198] sm:$0xff]
  %v5487 = vld [vmem:[%s5 + $0x1a0] sm:$0xf]
  %v5488 = vld [vmem:[%s5 + $0x1a4] sm:$0xff]
  %v5489 = vld [vmem:[%s5 + $0x1ac] sm:$0xff]
  %v5490 = vld [vmem:[%s5 + $0x1b4] sm:$0xf]
  %v5491 = vld [vmem:[%s5 + $0x1b8] sm:$0xff]
  %v5492 = vld [vmem:[%s5 + $0x1c0] sm:$0xff]
  %v5493 = vld [vmem:[%s5 + $0x1c8] sm:$0xf]
  %v5494 = vld [vmem:[%s5 + $0x1cc] sm:$0xff]
  %v5495 = vld [vmem:[%s5 + $0x1d4] sm:$0xff]
  %v5496 = vld [vmem:[%s5 + $0x1dc] sm:$0xf]
  %v5497 = vld [vmem:[%s5 + $0x1e0] sm:$0xff]
  %v5498 = vld [vmem:[%s5 + $0x1e8] sm:$0xff]
  %v5499 = vld [vmem:[%s5 + $0x1f0] sm:$0xf]
  %v5500 = vld [vmem:[%s5 + $0x1f4] sm:$0xff]
  %v5501 = vld [vmem:[%s5 + $0x1fc] sm:$0xff]
  %v5502 = vld [vmem:[%s5 + $0x204] sm:$0xf]
  %v5503 = vld [vmem:[%s5 + $0x208] sm:$0xff]
  %v5504 = vld [vmem:[%s5 + $0x210] sm:$0xff]
  %v5505 = vld [vmem:[%s5 + $0x218] sm:$0xf]
  %v5506 = vld [vmem:[%s5 + $0x21c] sm:$0xff]
  %v5507 = vld [vmem:[%s5 + $0x224] sm:$0xff]
  %v5508 = vld [vmem:[%s5 + $0x22c] sm:$0xf]
  %v5509 = vld [vmem:[%s5 + $0x230] sm:$0xff]
  %v5510 = vld [vmem:[%s5 + $0x238] sm:$0xff]
  %v5511 = vld [vmem:[%s5 + $0x240] sm:$0xf]
  %v5512 = vld [vmem:[%s5 + $0x244] sm:$0xff]
  %v5513 = vld [vmem:[%s5 + $0x24c] sm:$0xff]
  %v5514 = vld [vmem:[%s5 + $0x254] sm:$0xf]
  %v5515 = vld [vmem:[%s5 + $0x258] sm:$0xff]
  %v5516 = vld [vmem:[%s5 + $0x260] sm:$0xff]
  %v5517 = vld [vmem:[%s5 + $0x268] sm:$0xf]
  %v5518 = vld [vmem:[%s5 + $0x26c] sm:$0xff]
  %v5519 = vld [vmem:[%s5 + $0x274] sm:$0xff]
  %v5520 = vld [vmem:[%s5 + $0x27c] sm:$0xf]
  %v5521 = vld [vmem:[%s5 + $0x280] sm:$0xff]
  %v5522 = vld [vmem:[%s5 + $0x288] sm:$0xff]
  %v5523 = vld [vmem:[%s5 + $0x290] sm:$0xf]
  %v5524 = vld [vmem:[%s5 + $0x294] sm:$0xff]
  %v5525 = vld [vmem:[%s5 + $0x29c] sm:$0xff]
  %v5526 = vld [vmem:[%s5 + $0x2a4] sm:$0xf]
  %v5527 = vld [vmem:[%s5 + $0x2a8] sm:$0xff]
  %v5528 = vld [vmem:[%s5 + $0x2b0] sm:$0xff]
  %v5529 = vld [vmem:[%s5 + $0x2b8] sm:$0xf]
  %v5530 = vld [vmem:[%s5 + $0x2bc] sm:$0xff]
  %v5531 = vld [vmem:[%s5 + $0x2c4] sm:$0xff]
  %v5532 = vld [vmem:[%s5 + $0x2cc] sm:$0xf]
  %v5533 = vld [vmem:[%s5 + $0x2d0] sm:$0xff]
  %v5534 = vld [vmem:[%s5 + $0x2d8] sm:$0xff]
  %v5535 = vld [vmem:[%s5 + $0x2e0] sm:$0xf]
  %v5536 = vld [vmem:[%s5 + $0x2e4] sm:$0xff]
  %v5537 = vld [vmem:[%s5 + $0x2ec] sm:$0xff]
  %v5538 = vld [vmem:[%s5 + $0x2f4] sm:$0xf]
  %v5539 = vld [vmem:[%s5 + $0x2f8] sm:$0xff]
  %v5540 = vld [vmem:[%s5 + $0x300] sm:$0xff]
  %v5541 = vld [vmem:[%s5 + $0x308] sm:$0xf]
  %v5542 = vld [vmem:[%s5 + $0x30c] sm:$0xff]
  %v5543 = vld [vmem:[%s5 + $0x314] sm:$0xff]
  %v5544 = vld [vmem:[%s5 + $0x31c] sm:$0xf]
  %v5545 = vld [vmem:[%s5 + $0x320] sm:$0xff]
  %v5546 = vld [vmem:[%s5 + $0x328] sm:$0xff]
  %v5547 = vld [vmem:[%s5 + $0x330] sm:$0xf]
  %v5548 = vld [vmem:[%s5 + $0x334] sm:$0xff]
  %v5549 = vld [vmem:[%s5 + $0x33c] sm:$0xff]
  %v5550 = vld [vmem:[%s5 + $0x344] sm:$0xf]
  %v5551 = vld [vmem:[%s5 + $0x348] sm:$0xff]
  %v5552 = vld [vmem:[%s5 + $0x350] sm:$0xff]
  %v5553 = vld [vmem:[%s5 + $0x358] sm:$0xf]
  %v5554 = vld [vmem:[%s5 + $0x35c] sm:$0xff]
  %v5555 = vld [vmem:[%s5 + $0x364] sm:$0xff]
  %v5556 = vld [vmem:[%s5 + $0x36c] sm:$0xf]
  %v5557 = vld [vmem:[%s5 + $0x370] sm:$0xff]
  %v5558 = vld [vmem:[%s5 + $0x378] sm:$0xff]
  %v5559 = vld [vmem:[%s5 + $0x380] sm:$0xf]
  %v5560 = vld [vmem:[%s5 + $0x384] sm:$0xff]
  %v5561 = vld [vmem:[%s5 + $0x38c] sm:$0xff]
  %v5562 = vld [vmem:[%s5 + $0x394] sm:$0xf]
  %v5563 = vld [vmem:[%s5 + $0x398] sm:$0xff]
  %v5564 = vld [vmem:[%s5 + $0x3a0] sm:$0xff]
  %v5565 = vld [vmem:[%s5 + $0x3a8] sm:$0xf]
  %v5566 = vld [vmem:[%s5 + $0x3ac] sm:$0xff]
  %v5567 = vld [vmem:[%s5 + $0x3b4] sm:$0xff]
  %v5568 = vld [vmem:[%s5 + $0x3bc] sm:$0xf]
  %v5569 = vld [vmem:[%s5 + $0x3c0] sm:$0xff]
  %v5570 = vld [vmem:[%s5 + $0x3c8] sm:$0xff]
  %v5571 = vld [vmem:[%s5 + $0x3d0] sm:$0xf]
  %v5572 = vld [vmem:[%s5 + $0x3d4] sm:$0xff]
  %v5573 = vld [vmem:[%s5 + $0x3dc] sm:$0xff]
  %v5574 = vld [vmem:[%s5 + $0x3e4] sm:$0xf]
  %v5575 = vld [vmem:[%s5 + $0x3e8] sm:$0xff]
  %v5576 = vld [vmem:[%s5 + $0x3f0] sm:$0xff]
  %v5577 = vld [vmem:[%s5 + $0x3f8] sm:$0xf]
  %v5578 = vld [vmem:[%s5 + $0x3fc] sm:$0xff]
  %v5579 = vld [vmem:[%s5 + $0x404] sm:$0xff]
  %v5580 = vld [vmem:[%s5 + $0x40c] sm:$0xf]
  %v5581 = vld [vmem:[%s5 + $0x410] sm:$0xff]
  %v5582 = vld [vmem:[%s5 + $0x418] sm:$0xff]
  %v5583 = vld [vmem:[%s5 + $0x420] sm:$0xf]
  %v5584 = vld [vmem:[%s5 + $0x424] sm:$0xff]
  %v5585 = vld [vmem:[%s5 + $0x42c] sm:$0xff]
  %v5586 = vld [vmem:[%s5 + $0x434] sm:$0xf]
  %v5587 = vld [vmem:[%s5 + $0x438] sm:$0xff]
  %v5588 = vld [vmem:[%s5 + $0x440] sm:$0xff]
  %v5589 = vld [vmem:[%s5 + $0x448] sm:$0xf]
  %v5590 = vld [vmem:[%s5 + $0x44c] sm:$0xff]
  %v5591 = vld [vmem:[%s5 + $0x454] sm:$0xff]
  %v5592 = vld [vmem:[%s5 + $0x45c] sm:$0xf]
  %v5593 = vld [vmem:[%s5 + $0x460] sm:$0xff]
  %v5594 = vld [vmem:[%s5 + $0x468] sm:$0xff]
  %v5595 = vld [vmem:[%s5 + $0x470] sm:$0xf]
  %v5596 = vld [vmem:[%s5 + $0x474] sm:$0xff]
  %v5597 = vld [vmem:[%s5 + $0x47c] sm:$0xff]
  %v5598 = vld [vmem:[%s5 + $0x484] sm:$0xf]
  %v5599 = vld [vmem:[%s5 + $0x488] sm:$0xff]
  %v5600 = vld [vmem:[%s5 + $0x490] sm:$0xff]
  %v5601 = vld [vmem:[%s5 + $0x498] sm:$0xf]
  %v5602 = vld [vmem:[%s5 + $0x49c] sm:$0xff]
  %v5603 = vld [vmem:[%s5 + $0x4a4] sm:$0xff]
  %v5604 = vld [vmem:[%s5 + $0x4ac] sm:$0xf]
  %v5605 = vld [vmem:[%s5 + $0x4b0] sm:$0xff]
  %v5606 = vld [vmem:[%s5 + $0x4b8] sm:$0xff]
  %v5607 = vld [vmem:[%s5 + $0x4c0] sm:$0xf]
  %v5608 = vld [vmem:[%s5 + $0x4c4] sm:$0xff]
  %v5609 = vld [vmem:[%s5 + $0x4cc] sm:$0xff]
  %v5610 = vld [vmem:[%s5 + $0x4d4] sm:$0xf]
  %v5611 = vld [vmem:[%s5 + $0x4d8] sm:$0xff]
  %v5612 = vld [vmem:[%s5 + $0x4e0] sm:$0xff]
  %v5613 = vld [vmem:[%s5 + $0x4e8] sm:$0xf]
  %v5614 = vld [vmem:[%s5 + $0x4ec] sm:$0xff]
  %v5615 = vld [vmem:[%s5 + $0x4f4] sm:$0xff]
  %v5616 = vld [vmem:[%s5 + $0x4fc] sm:$0xf]
  %v5617 = vld [vmem:[%s5 + $0x500] sm:$0xff]
  %v5618 = vld [vmem:[%s5 + $0x508] sm:$0xff]
  %v5619 = vld [vmem:[%s5 + $0x510] sm:$0xf]
  %v5620 = vld [vmem:[%s5 + $0x514] sm:$0xff]
  %v5621 = vld [vmem:[%s5 + $0x51c] sm:$0xff]
  %v5622 = vld [vmem:[%s5 + $0x524] sm:$0xf]
  %v5623 = vld [vmem:[%s5 + $0x528] sm:$0xff]
  %v5624 = vld [vmem:[%s5 + $0x530] sm:$0xff]
  %v5625 = vld [vmem:[%s5 + $0x538] sm:$0xf]
  %v5626 = vld [vmem:[%s5 + $0x53c] sm:$0xff]
  %v5627 = vld [vmem:[%s5 + $0x544] sm:$0xff]
  %v5628 = vld [vmem:[%s5 + $0x54c] sm:$0xf]
  %v5629 = vld [vmem:[%s5 + $0x550] sm:$0xff]
  %v5630 = vld [vmem:[%s5 + $0x558] sm:$0xff]
  %v5631 = vld [vmem:[%s5 + $0x560] sm:$0xf]
  %v5632 = vld [vmem:[%s5 + $0x564] sm:$0xff]
  %v5633 = vld [vmem:[%s5 + $0x56c] sm:$0xff]
  %v5634 = vld [vmem:[%s5 + $0x574] sm:$0xf]
  %v5635 = vld [vmem:[%s5 + $0x578] sm:$0xff]
  %v5636 = vld [vmem:[%s5 + $0x580] sm:$0xff]
  %v5637 = vld [vmem:[%s5 + $0x588] sm:$0xf]
  %v5638 = vld [vmem:[%s5 + $0x58c] sm:$0xff]
  %v5639 = vld [vmem:[%s5 + $0x594] sm:$0xff]
  %v5640 = vld [vmem:[%s5 + $0x59c] sm:$0xf]
  %v5641 = vld [vmem:[%s5 + $0x5a0] sm:$0xff]
  %v5642 = vld [vmem:[%s5 + $0x5a8] sm:$0xff]
  %v5643 = vld [vmem:[%s5 + $0x5b0] sm:$0xf]
  %v5644 = vld [vmem:[%s5 + $0x5b4] sm:$0xff]
  %v5645 = vld [vmem:[%s5 + $0x5bc] sm:$0xff]
  %v5646 = vld [vmem:[%s5 + $0x5c4] sm:$0xf]
  %v5647 = vld [vmem:[%s5 + $0x5c8] sm:$0xff]
  %v5648 = vld [vmem:[%s5 + $0x5d0] sm:$0xff]
  %v5649 = vld [vmem:[%s5 + $0x5d8] sm:$0xf]
  %v5650 = vld [vmem:[%s5 + $0x5dc] sm:$0xff]
  %v5651 = vld [vmem:[%s5 + $0x5e4] sm:$0xff]
  %v5652 = vld [vmem:[%s5 + $0x5ec] sm:$0xf]
  %v5653 = vld [vmem:[%s5 + $0x5f0] sm:$0xff]
  %v5654 = vld [vmem:[%s5 + $0x5f8] sm:$0xff]
  %v5655 = vld [vmem:[%s5 + $0x600] sm:$0xf]
  %v5656 = vld [vmem:[%s5 + $0x604] sm:$0xff]
  %v5657 = vld [vmem:[%s5 + $0x60c] sm:$0xff]
  %v5658 = vld [vmem:[%s5 + $0x614] sm:$0xf]
  %v5659 = vld [vmem:[%s5 + $0x618] sm:$0xff]
  %v5660 = vld [vmem:[%s5 + $0x620] sm:$0xff]
  %v5661 = vld [vmem:[%s5 + $0x628] sm:$0xf]
  %v5662 = vld [vmem:[%s5 + $0x62c] sm:$0xff]
  %v5663 = vld [vmem:[%s5 + $0x634] sm:$0xff]
  %v5664 = vld [vmem:[%s5 + $0x63c] sm:$0xf]
  %v5665 = vld [vmem:[%s5 + $0x640] sm:$0xff]
  %v5666 = vld [vmem:[%s5 + $0x648] sm:$0xff]
  %v5667 = vld [vmem:[%s5 + $0x650] sm:$0xf]
  %v5668 = vld [vmem:[%s5 + $0x654] sm:$0xff]
  %v5669 = vld [vmem:[%s5 + $0x65c] sm:$0xff]
  %v5670 = vld [vmem:[%s5 + $0x664] sm:$0xf]
  %v5671 = vld [vmem:[%s5 + $0x668] sm:$0xff]
  %v5672 = vld [vmem:[%s5 + $0x670] sm:$0xff]
  %v5673 = vld [vmem:[%s5 + $0x678] sm:$0xf]
  %v5674 = vld [vmem:[%s5 + $0x67c] sm:$0xff]
  %v5675 = vld [vmem:[%s5 + $0x684] sm:$0xff]
  %v5676 = vld [vmem:[%s5 + $0x68c] sm:$0xf]
  %v5677 = vld [vmem:[%s5 + $0x690] sm:$0xff]
  %v5678 = vld [vmem:[%s5 + $0x698] sm:$0xff]
  %v5679 = vld [vmem:[%s5 + $0x6a0] sm:$0xf]
  %v5680 = vld [vmem:[%s5 + $0x6a4] sm:$0xff]
  %v5681 = vld [vmem:[%s5 + $0x6ac] sm:$0xff]
  %v5682 = vld [vmem:[%s5 + $0x6b4] sm:$0xf]
  %v5683 = vld [vmem:[%s5 + $0x6b8] sm:$0xff]
  %v5684 = vld [vmem:[%s5 + $0x6c0] sm:$0xff]
  %v5685 = vld [vmem:[%s5 + $0x6c8] sm:$0xf]
  %v5686 = vld [vmem:[%s5 + $0x6cc] sm:$0xff]
  %v5687 = vld [vmem:[%s5 + $0x6d4] sm:$0xff]
  %v5688 = vld [vmem:[%s5 + $0x6dc] sm:$0xf]
  %v5689 = vld [vmem:[%s5 + $0x6e0] sm:$0xff]
  %v5690 = vld [vmem:[%s5 + $0x6e8] sm:$0xff]
  %v5691 = vld [vmem:[%s5 + $0x6f0] sm:$0xf]
  %v5692 = vld [vmem:[%s5 + $0x6f4] sm:$0xff]
  %v5693 = vld [vmem:[%s5 + $0x6fc] sm:$0xff]
  %v5694 = vld [vmem:[%s5 + $0x704] sm:$0xf]
  %v5695 = vld [vmem:[%s5 + $0x708] sm:$0xff]
  %v5696 = vld [vmem:[%s5 + $0x710] sm:$0xff]
  %v5697 = vld [vmem:[%s5 + $0x718] sm:$0xf]
  %v5698 = vld [vmem:[%s5 + $0x71c] sm:$0xff]
  %v5699 = vld [vmem:[%s5 + $0x724] sm:$0xff]
  %v5700 = vld [vmem:[%s5 + $0x72c] sm:$0xf]
  %v5701 = vld [vmem:[%s5 + $0x730] sm:$0xff]
  %v5702 = vld [vmem:[%s5 + $0x738] sm:$0xff]
  %v5703 = vld [vmem:[%s5 + $0x740] sm:$0xf]
  %v5704 = vld [vmem:[%s5 + $0x744] sm:$0xff]
  %v5705 = vld [vmem:[%s5 + $0x74c] sm:$0xff]
  %v5706 = vld [vmem:[%s5 + $0x754] sm:$0xf]
  %v5707 = vld [vmem:[%s5 + $0x758] sm:$0xff]
  %v5708 = vld [vmem:[%s5 + $0x760] sm:$0xff]
  %v5709 = vld [vmem:[%s5 + $0x768] sm:$0xf]
  %v5710 = vld [vmem:[%s5 + $0x76c] sm:$0xff]
  %v5711 = vld [vmem:[%s5 + $0x774] sm:$0xff]
  %v5712 = vld [vmem:[%s5 + $0x77c] sm:$0xf]
  %v6001 = vunpack.c.l.b16 %v5425
  %v6002 = vunpack.c.h.b16 %v5425
  %v6003 = vunpack.c.l.b16 %v5426
  %v6004 = vunpack.c.h.b16 %v5426
  %v6005 = vunpack.c.l.b16 %v5427
  %v6006 = vunpack.c.l.b16 %v5428
  %v6007 = vunpack.c.h.b16 %v5428
  %v6008 = vunpack.c.l.b16 %v5429
  %v6009 = vunpack.c.h.b16 %v5429
  %v6010 = vunpack.c.l.b16 %v5430
  %v6011 = vunpack.c.l.b16 %v5431
  %v6012 = vunpack.c.h.b16 %v5431
  %v6013 = vunpack.c.l.b16 %v5432
  %v6014 = vunpack.c.h.b16 %v5432
  %v6015 = vunpack.c.l.b16 %v5433
  %v6016 = vunpack.c.l.b16 %v5434
  %v6017 = vunpack.c.h.b16 %v5434
  %v6018 = vunpack.c.l.b16 %v5435
  %v6019 = vunpack.c.h.b16 %v5435
  %v6020 = vunpack.c.l.b16 %v5436
  %v6021 = vunpack.c.l.b16 %v5437
  %v6022 = vunpack.c.h.b16 %v5437
  %v6023 = vunpack.c.l.b16 %v5438
  %v6024 = vunpack.c.h.b16 %v5438
  %v6025 = vunpack.c.l.b16 %v5439
  %v6026 = vunpack.c.l.b16 %v5440
  %v6027 = vunpack.c.h.b16 %v5440
  %v6028 = vunpack.c.l.b16 %v5441
  %v6029 = vunpack.c.h.b16 %v5441
  %v6030 = vunpack.c.l.b16 %v5442
  %v6031 = vunpack.c.l.b16 %v5443
  %v6032 = vunpack.c.h.b16 %v5443
  %v6033 = vunpack.c.l.b16 %v5444
  %v6034 = vunpack.c.h.b16 %v5444
  %v6035 = vunpack.c.l.b16 %v5445
  %v6036 = vunpack.c.l.b16 %v5446
  %v6037 = vunpack.c.h.b16 %v5446
  %v6038 = vunpack.c.l.b16 %v5447
  %v6039 = vunpack.c.h.b16 %v5447
  %v6040 = vunpack.c.l.b16 %v5448
  %v6041 = vunpack.c.l.b16 %v5449
  %v6042 = vunpack.c.h.b16 %v5449
  %v6043 = vunpack.c.l.b16 %v5450
  %v6044 = vunpack.c.h.b16 %v5450
  %v6045 = vunpack.c.l.b16 %v5451
  %v6046 = vunpack.c.l.b16 %v5452
  %v6047 = vunpack.c.h.b16 %v5452
  %v6048 = vunpack.c.l.b16 %v5453
  %v6049 = vunpack.c.h.b16 %v5453
  %v6050 = vunpack.c.l.b16 %v5454
  %v6051 = vunpack.c.l.b16 %v5455
  %v6052 = vunpack.c.h.b16 %v5455
  %v6053 = vunpack.c.l.b16 %v5456
  %v6054 = vunpack.c.h.b16 %v5456
  %v6055 = vunpack.c.l.b16 %v5457
  %v6056 = vunpack.c.l.b16 %v5458
  %v6057 = vunpack.c.h.b16 %v5458
  %v6058 = vunpack.c.l.b16 %v5459
  %v6059 = vunpack.c.h.b16 %v5459
  %v6060 = vunpack.c.l.b16 %v5460
  %v6061 = vunpack.c.l.b16 %v5461
  %v6062 = vunpack.c.h.b16 %v5461
  %v6063 = vunpack.c.l.b16 %v5462
  %v6064 = vunpack.c.h.b16 %v5462
  %v6065 = vunpack.c.l.b16 %v5463
  %v6066 = vunpack.c.l.b16 %v5464
  %v6067 = vunpack.c.h.b16 %v5464
  %v6068 = vunpack.c.l.b16 %v5465
  %v6069 = vunpack.c.h.b16 %v5465
  %v6070 = vunpack.c.l.b16 %v5466
  %v6071 = vunpack.c.l.b16 %v5467
  %v6072 = vunpack.c.h.b16 %v5467
  %v6073 = vunpack.c.l.b16 %v5468
  %v6074 = vunpack.c.h.b16 %v5468
  %v6075 = vunpack.c.l.b16 %v5469
  %v6076 = vunpack.c.l.b16 %v5470
  %v6077 = vunpack.c.h.b16 %v5470
  %v6078 = vunpack.c.l.b16 %v5471
  %v6079 = vunpack.c.h.b16 %v5471
  %v6080 = vunpack.c.l.b16 %v5472
  %v6081 = vunpack.c.l.b16 %v5473
  %v6082 = vunpack.c.h.b16 %v5473
  %v6083 = vunpack.c.l.b16 %v5474
  %v6084 = vunpack.c.h.b16 %v5474
  %v6085 = vunpack.c.l.b16 %v5475
  %v6086 = vunpack.c.l.b16 %v5476
  %v6087 = vunpack.c.h.b16 %v5476
  %v6088 = vunpack.c.l.b16 %v5477
  %v6089 = vunpack.c.h.b16 %v5477
  %v6090 = vunpack.c.l.b16 %v5478
  %v6091 = vunpack.c.l.b16 %v5479
  %v6092 = vunpack.c.h.b16 %v5479
  %v6093 = vunpack.c.l.b16 %v5480
  %v6094 = vunpack.c.h.b16 %v5480
  %v6095 = vunpack.c.l.b16 %v5481
  %v6096 = vunpack.c.l.b16 %v5482
  %v6097 = vunpack.c.h.b16 %v5482
  %v6098 = vunpack.c.l.b16 %v5483
  %v6099 = vunpack.c.h.b16 %v5483
  %v6100 = vunpack.c.l.b16 %v5484
  %v6101 = vunpack.c.l.b16 %v5485
  %v6102 = vunpack.c.h.b16 %v5485
  %v6103 = vunpack.c.l.b16 %v5486
  %v6104 = vunpack.c.h.b16 %v5486
  %v6105 = vunpack.c.l.b16 %v5487
  %v6106 = vunpack.c.l.b16 %v5488
  %v6107 = vunpack.c.h.b16 %v5488
  %v6108 = vunpack.c.l.b16 %v5489
  %v6109 = vunpack.c.h.b16 %v5489
  %v6110 = vunpack.c.l.b16 %v5490
  %v6111 = vunpack.c.l.b16 %v5491
  %v6112 = vunpack.c.h.b16 %v5491
  %v6113 = vunpack.c.l.b16 %v5492
  %v6114 = vunpack.c.h.b16 %v5492
  %v6115 = vunpack.c.l.b16 %v5493
  %v6116 = vunpack.c.l.b16 %v5494
  %v6117 = vunpack.c.h.b16 %v5494
  %v6118 = vunpack.c.l.b16 %v5495
  %v6119 = vunpack.c.h.b16 %v5495
  %v6120 = vunpack.c.l.b16 %v5496
  %v6121 = vunpack.c.l.b16 %v5497
  %v6122 = vunpack.c.h.b16 %v5497
  %v6123 = vunpack.c.l.b16 %v5498
  %v6124 = vunpack.c.h.b16 %v5498
  %v6125 = vunpack.c.l.b16 %v5499
  %v6126 = vunpack.c.l.b16 %v5500
  %v6127 = vunpack.c.h.b16 %v5500
  %v6128 = vunpack.c.l.b16 %v5501
  %v6129 = vunpack.c.h.b16 %v5501
  %v6130 = vunpack.c.l.b16 %v5502
  %v6131 = vunpack.c.l.b16 %v5503
  %v6132 = vunpack.c.h.b16 %v5503
  %v6133 = vunpack.c.l.b16 %v5504
  %v6134 = vunpack.c.h.b16 %v5504
  %v6135 = vunpack.c.l.b16 %v5505
  %v6136 = vunpack.c.l.b16 %v5506
  %v6137 = vunpack.c.h.b16 %v5506
  %v6138 = vunpack.c.l.b16 %v5507
  %v6139 = vunpack.c.h.b16 %v5507
  %v6140 = vunpack.c.l.b16 %v5508
  %v6141 = vunpack.c.l.b16 %v5509
  %v6142 = vunpack.c.h.b16 %v5509
  %v6143 = vunpack.c.l.b16 %v5510
  %v6144 = vunpack.c.h.b16 %v5510
  %v6145 = vunpack.c.l.b16 %v5511
  %v6146 = vunpack.c.l.b16 %v5512
  %v6147 = vunpack.c.h.b16 %v5512
  %v6148 = vunpack.c.l.b16 %v5513
  %v6149 = vunpack.c.h.b16 %v5513
  %v6150 = vunpack.c.l.b16 %v5514
  %v6151 = vunpack.c.l.b16 %v5515
  %v6152 = vunpack.c.h.b16 %v5515
  %v6153 = vunpack.c.l.b16 %v5516
  %v6154 = vunpack.c.h.b16 %v5516
  %v6155 = vunpack.c.l.b16 %v5517
  %v6156 = vunpack.c.l.b16 %v5518
  %v6157 = vunpack.c.h.b16 %v5518
  %v6158 = vunpack.c.l.b16 %v5519
  %v6159 = vunpack.c.h.b16 %v5519
  %v6160 = vunpack.c.l.b16 %v5520
  %v6161 = vunpack.c.l.b16 %v5521
  %v6162 = vunpack.c.h.b16 %v5521
  %v6163 = vunpack.c.l.b16 %v5522
  %v6164 = vunpack.c.h.b16 %v5522
  %v6165 = vunpack.c.l.b16 %v5523
  %v6166 = vunpack.c.l.b16 %v5524
  %v6167 = vunpack.c.h.b16 %v5524
  %v6168 = vunpack.c.l.b16 %v5525
  %v6169 = vunpack.c.h.b16 %v5525
  %v6170 = vunpack.c.l.b16 %v5526
  %v6171 = vunpack.c.l.b16 %v5527
  %v6172 = vunpack.c.h.b16 %v5527
  %v6173 = vunpack.c.l.b16 %v5528
  %v6174 = vunpack.c.h.b16 %v5528
  %v6175 = vunpack.c.l.b16 %v5529
  %v6176 = vunpack.c.l.b16 %v5530
  %v6177 = vunpack.c.h.b16 %v5530
  %v6178 = vunpack.c.l.b16 %v5531
  %v6179 = vunpack.c.h.b16 %v5531
  %v6180 = vunpack.c.l.b16 %v5532
  %v6181 = vunpack.c.l.b16 %v5533
  %v6182 = vunpack.c.h.b16 %v5533
  %v6183 = vunpack.c.l.b16 %v5534
  %v6184 = vunpack.c.h.b16 %v5534
  %v6185 = vunpack.c.l.b16 %v5535
  %v6186 = vunpack.c.l.b16 %v5536
  %v6187 = vunpack.c.h.b16 %v5536
  %v6188 = vunpack.c.l.b16 %v5537
  %v6189 = vunpack.c.h.b16 %v5537
  %v6190 = vunpack.c.l.b16 %v5538
  %v6191 = vunpack.c.l.b16 %v5539
  %v6192 = vunpack.c.h.b16 %v5539
  %v6193 = vunpack.c.l.b16 %v5540
  %v6194 = vunpack.c.h.b16 %v5540
  %v6195 = vunpack.c.l.b16 %v5541
  %v6196 = vunpack.c.l.b16 %v5542
  %v6197 = vunpack.c.h.b16 %v5542
  %v6198 = vunpack.c.l.b16 %v5543
  %v6199 = vunpack.c.h.b16 %v5543
  %v6200 = vunpack.c.l.b16 %v5544
  %v6201 = vunpack.c.l.b16 %v5545
  %v6202 = vunpack.c.h.b16 %v5545
  %v6203 = vunpack.c.l.b16 %v5546
  %v6204 = vunpack.c.h.b16 %v5546
  %v6205 = vunpack.c.l.b16 %v5547
  %v6206 = vunpack.c.l.b16 %v5548
  %v6207 = vunpack.c.h.b16 %v5548
  %v6208 = vunpack.c.l.b16 %v5549
  %v6209 = vunpack.c.h.b16 %v5549
  %v6210 = vunpack.c.l.b16 %v5550
  %v6211 = vunpack.c.l.b16 %v5551
  %v6212 = vunpack.c.h.b16 %v5551
  %v6213 = vunpack.c.l.b16 %v5552
  %v6214 = vunpack.c.h.b16 %v5552
  %v6215 = vunpack.c.l.b16 %v5553
  %v6216 = vunpack.c.l.b16 %v5554
  %v6217 = vunpack.c.h.b16 %v5554
  %v6218 = vunpack.c.l.b16 %v5555
  %v6219 = vunpack.c.h.b16 %v5555
  %v6220 = vunpack.c.l.b16 %v5556
  %v6221 = vunpack.c.l.b16 %v5557
  %v6222 = vunpack.c.h.b16 %v5557
  %v6223 = vunpack.c.l.b16 %v5558
  %v6224 = vunpack.c.h.b16 %v5558
  %v6225 = vunpack.c.l.b16 %v5559
  %v6226 = vunpack.c.l.b16 %v5560
  %v6227 = vunpack.c.h.b16 %v5560
  %v6228 = vunpack.c.l.b16 %v5561
  %v6229 = vunpack.c.h.b16 %v5561
  %v6230 = vunpack.c.l.b16 %v5562
  %v6231 = vunpack.c.l.b16 %v5563
  %v6232 = vunpack.c.h.b16 %v5563
  %v6233 = vunpack.c.l.b16 %v5564
  %v6234 = vunpack.c.h.b16 %v5564
  %v6235 = vunpack.c.l.b16 %v5565
  %v6236 = vunpack.c.l.b16 %v5566
  %v6237 = vunpack.c.h.b16 %v5566
  %v6238 = vunpack.c.l.b16 %v5567
  %v6239 = vunpack.c.h.b16 %v5567
  %v6240 = vunpack.c.l.b16 %v5568
  %v6241 = vunpack.c.l.b16 %v5569
  %v6242 = vunpack.c.h.b16 %v5569
  %v6243 = vunpack.c.l.b16 %v5570
  %v6244 = vunpack.c.h.b16 %v5570
  %v6245 = vunpack.c.l.b16 %v5571
  %v6246 = vunpack.c.l.b16 %v5572
  %v6247 = vunpack.c.h.b16 %v5572
  %v6248 = vunpack.c.l.b16 %v5573
  %v6249 = vunpack.c.h.b16 %v5573
  %v6250 = vunpack.c.l.b16 %v5574
  %v6251 = vunpack.c.l.b16 %v5575
  %v6252 = vunpack.c.h.b16 %v5575
  %v6253 = vunpack.c.l.b16 %v5576
  %v6254 = vunpack.c.h.b16 %v5576
  %v6255 = vunpack.c.l.b16 %v5577
  %v6256 = vunpack.c.l.b16 %v5578
  %v6257 = vunpack.c.h.b16 %v5578
  %v6258 = vunpack.c.l.b16 %v5579
  %v6259 = vunpack.c.h.b16 %v5579
  %v6260 = vunpack.c.l.b16 %v5580
  %v6261 = vunpack.c.l.b16 %v5581
  %v6262 = vunpack.c.h.b16 %v5581
  %v6263 = vunpack.c.l.b16 %v5582
  %v6264 = vunpack.c.h.b16 %v5582
  %v6265 = vunpack.c.l.b16 %v5583
  %v6266 = vunpack.c.l.b16 %v5584
  %v6267 = vunpack.c.h.b16 %v5584
  %v6268 = vunpack.c.l.b16 %v5585
  %v6269 = vunpack.c.h.b16 %v5585
  %v6270 = vunpack.c.l.b16 %v5586
  %v6271 = vunpack.c.l.b16 %v5587
  %v6272 = vunpack.c.h.b16 %v5587
  %v6273 = vunpack.c.l.b16 %v5588
  %v6274 = vunpack.c.h.b16 %v5588
  %v6275 = vunpack.c.l.b16 %v5589
  %v6276 = vunpack.c.l.b16 %v5590
  %v6277 = vunpack.c.h.b16 %v5590
  %v6278 = vunpack.c.l.b16 %v5591
  %v6279 = vunpack.c.h.b16 %v5591
  %v6280 = vunpack.c.l.b16 %v5592
  %v6281 = vunpack.c.l.b16 %v5593
  %v6282 = vunpack.c.h.b16 %v5593
  %v6283 = vunpack.c.l.b16 %v5594
  %v6284 = vunpack.c.h.b16 %v5594
  %v6285 = vunpack.c.l.b16 %v5595
  %v6286 = vunpack.c.l.b16 %v5596
  %v6287 = vunpack.c.h.b16 %v5596
  %v6288 = vunpack.c.l.b16 %v5597
  %v6289 = vunpack.c.h.b16 %v5597
  %v6290 = vunpack.c.l.b16 %v5598
  %v6291 = vunpack.c.l.b16 %v5599
  %v6292 = vunpack.c.h.b16 %v5599
  %v6293 = vunpack.c.l.b16 %v5600
  %v6294 = vunpack.c.h.b16 %v5600
  %v6295 = vunpack.c.l.b16 %v5601
  %v6296 = vunpack.c.l.b16 %v5602
  %v6297 = vunpack.c.h.b16 %v5602
  %v6298 = vunpack.c.l.b16 %v5603
  %v6299 = vunpack.c.h.b16 %v5603
  %v6300 = vunpack.c.l.b16 %v5604
  %v6301 = vunpack.c.l.b16 %v5605
  %v6302 = vunpack.c.h.b16 %v5605
  %v6303 = vunpack.c.l.b16 %v5606
  %v6304 = vunpack.c.h.b16 %v5606
  %v6305 = vunpack.c.l.b16 %v5607
  %v6306 = vunpack.c.l.b16 %v5608
  %v6307 = vunpack.c.h.b16 %v5608
  %v6308 = vunpack.c.l.b16 %v5609
  %v6309 = vunpack.c.h.b16 %v5609
  %v6310 = vunpack.c.l.b16 %v5610
  %v6311 = vunpack.c.l.b16 %v5611
  %v6312 = vunpack.c.h.b16 %v5611
  %v6313 = vunpack.c.l.b16 %v5612
  %v6314 = vunpack.c.h.b16 %v5612
  %v6315 = vunpack.c.l.b16 %v5613
  %v6316 = vunpack.c.l.b16 %v5614
  %v6317 = vunpack.c.h.b16 %v5614
  %v6318 = vunpack.c.l.b16 %v5615
  %v6319 = vunpack.c.h.b16 %v5615
  %v6320 = vunpack.c.l.b16 %v5616
  %v6321 = vunpack.c.l.b16 %v5617
  %v6322 = vunpack.c.h.b16 %v5617
  %v6323 = vunpack.c.l.b16 %v5618
  %v6324 = vunpack.c.h.b16 %v5618
  %v6325 = vunpack.c.l.b16 %v5619
  %v6326 = vunpack.c.l.b16 %v5620
  %v6327 = vunpack.c.h.b16 %v5620
  %v6328 = vunpack.c.l.b16 %v5621
  %v6329 = vunpack.c.h.b16 %v5621
  %v6330 = vunpack.c.l.b16 %v5622
  %v6331 = vunpack.c.l.b16 %v5623
  %v6332 = vunpack.c.h.b16 %v5623
  %v6333 = vunpack.c.l.b16 %v5624
  %v6334 = vunpack.c.h.b16 %v5624
  %v6335 = vunpack.c.l.b16 %v5625
  %v6336 = vunpack.c.l.b16 %v5626
  %v6337 = vunpack.c.h.b16 %v5626
  %v6338 = vunpack.c.l.b16 %v5627
  %v6339 = vunpack.c.h.b16 %v5627
  %v6340 = vunpack.c.l.b16 %v5628
  %v6341 = vunpack.c.l.b16 %v5629
  %v6342 = vunpack.c.h.b16 %v5629
  %v6343 = vunpack.c.l.b16 %v5630
  %v6344 = vunpack.c.h.b16 %v5630
  %v6345 = vunpack.c.l.b16 %v5631
  %v6346 = vunpack.c.l.b16 %v5632
  %v6347 = vunpack.c.h.b16 %v5632
  %v6348 = vunpack.c.l.b16 %v5633
  %v6349 = vunpack.c.h.b16 %v5633
  %v6350 = vunpack.c.l.b16 %v5634
  %v6351 = vunpack.c.l.b16 %v5635
  %v6352 = vunpack.c.h.b16 %v5635
  %v6353 = vunpack.c.l.b16 %v5636
  %v6354 = vunpack.c.h.b16 %v5636
  %v6355 = vunpack.c.l.b16 %v5637
  %v6356 = vunpack.c.l.b16 %v5638
  %v6357 = vunpack.c.h.b16 %v5638
  %v6358 = vunpack.c.l.b16 %v5639
  %v6359 = vunpack.c.h.b16 %v5639
  %v6360 = vunpack.c.l.b16 %v5640
  %v6361 = vunpack.c.l.b16 %v5641
  %v6362 = vunpack.c.h.b16 %v5641
  %v6363 = vunpack.c.l.b16 %v5642
  %v6364 = vunpack.c.h.b16 %v5642
  %v6365 = vunpack.c.l.b16 %v5643
  %v6366 = vunpack.c.l.b16 %v5644
  %v6367 = vunpack.c.h.b16 %v5644
  %v6368 = vunpack.c.l.b16 %v5645
  %v6369 = vunpack.c.h.b16 %v5645
  %v6370 = vunpack.c.l.b16 %v5646
  %v6371 = vunpack.c.l.b16 %v5647
  %v6372 = vunpack.c.h.b16 %v5647
  %v6373 = vunpack.c.l.b16 %v5648
  %v6374 = vunpack.c.h.b16 %v5648
  %v6375 = vunpack.c.l.b16 %v5649
  %v6376 = vunpack.c.l.b16 %v5650
  %v6377 = vunpack.c.h.b16 %v5650
  %v6378 = vunpack.c.l.b16 %v5651
  %v6379 = vunpack.c.h.b16 %v5651
  %v6380 = vunpack.c.l.b16 %v5652
  %v6381 = vunpack.c.l.b16 %v5653
  %v6382 = vunpack.c.h.b16 %v5653
  %v6383 = vunpack.c.l.b16 %v5654
  %v6384 = vunpack.c.h.b16 %v5654
  %v6385 = vunpack.c.l.b16 %v5655
  %v6386 = vunpack.c.l.b16 %v5656
  %v6387 = vunpack.c.h.b16 %v5656
  %v6388 = vunpack.c.l.b16 %v5657
  %v6389 = vunpack.c.h.b16 %v5657
  %v6390 = vunpack.c.l.b16 %v5658
  %v6391 = vunpack.c.l.b16 %v5659
  %v6392 = vunpack.c.h.b16 %v5659
  %v6393 = vunpack.c.l.b16 %v5660
  %v6394 = vunpack.c.h.b16 %v5660
  %v6395 = vunpack.c.l.b16 %v5661
  %v6396 = vunpack.c.l.b16 %v5662
  %v6397 = vunpack.c.h.b16 %v5662
  %v6398 = vunpack.c.l.b16 %v5663
  %v6399 = vunpack.c.h.b16 %v5663
  %v6400 = vunpack.c.l.b16 %v5664
  %v6401 = vunpack.c.l.b16 %v5665
  %v6402 = vunpack.c.h.b16 %v5665
  %v6403 = vunpack.c.l.b16 %v5666
  %v6404 = vunpack.c.h.b16 %v5666
  %v6405 = vunpack.c.l.b16 %v5667
  %v6406 = vunpack.c.l.b16 %v5668
  %v6407 = vunpack.c.h.b16 %v5668
  %v6408 = vunpack.c.l.b16 %v5669
  %v6409 = vunpack.c.h.b16 %v5669
  %v6410 = vunpack.c.l.b16 %v5670
  %v6411 = vunpack.c.l.b16 %v5671
  %v6412 = vunpack.c.h.b16 %v5671
  %v6413 = vunpack.c.l.b16 %v5672
  %v6414 = vunpack.c.h.b16 %v5672
  %v6415 = vunpack.c.l.b16 %v5673
  %v6416 = vunpack.c.l.b16 %v5674
  %v6417 = vunpack.c.h.b16 %v5674
  %v6418 = vunpack.c.l.b16 %v5675
  %v6419 = vunpack.c.h.b16 %v5675
  %v6420 = vunpack.c.l.b16 %v5676
  %v6421 = vunpack.c.l.b16 %v5677
  %v6422 = vunpack.c.h.b16 %v5677
  %v6423 = vunpack.c.l.b16 %v5678
  %v6424 = vunpack.c.h.b16 %v5678
  %v6425 = vunpack.c.l.b16 %v5679
  %v6426 = vunpack.c.l.b16 %v5680
  %v6427 = vunpack.c.h.b16 %v5680
  %v6428 = vunpack.c.l.b16 %v5681
  %v6429 = vunpack.c.h.b16 %v5681
  %v6430 = vunpack.c.l.b16 %v5682
  %v6431 = vunpack.c.l.b16 %v5683
  %v6432 = vunpack.c.h.b16 %v5683
  %v6433 = vunpack.c.l.b16 %v5684
  %v6434 = vunpack.c.h.b16 %v5684
  %v6435 = vunpack.c.l.b16 %v5685
  %v6436 = vunpack.c.l.b16 %v5686
  %v6437 = vunpack.c.h.b16 %v5686
  %v6438 = vunpack.c.l.b16 %v5687
  %v6439 = vunpack.c.h.b16 %v5687
  %v6440 = vunpack.c.l.b16 %v5688
  %v6441 = vunpack.c.l.b16 %v5689
  %v6442 = vunpack.c.h.b16 %v5689
  %v6443 = vunpack.c.l.b16 %v5690
  %v6444 = vunpack.c.h.b16 %v5690
  %v6445 = vunpack.c.l.b16 %v5691
  %v6446 = vunpack.c.l.b16 %v5692
  %v6447 = vunpack.c.h.b16 %v5692
  %v6448 = vunpack.c.l.b16 %v5693
  %v6449 = vunpack.c.h.b16 %v5693
  %v6450 = vunpack.c.l.b16 %v5694
  %v6451 = vunpack.c.l.b16 %v5695
  %v6452 = vunpack.c.h.b16 %v5695
  %v6453 = vunpack.c.l.b16 %v5696
  %v6454 = vunpack.c.h.b16 %v5696
  %v6455 = vunpack.c.l.b16 %v5697
  %v6456 = vunpack.c.l.b16 %v5698
  %v6457 = vunpack.c.h.b16 %v5698
  %v6458 = vunpack.c.l.b16 %v5699
  %v6459 = vunpack.c.h.b16 %v5699
  %v6460 = vunpack.c.l.b16 %v5700
  %v6461 = vunpack.c.l.b16 %v5701
  %v6462 = vunpack.c.h.b16 %v5701
  %v6463 = vunpack.c.l.b16 %v5702
  %v6464 = vunpack.c.h.b16 %v5702
  %v6465 = vunpack.c.l.b16 %v5703
  %v6466 = vunpack.c.l.b16 %v5704
  %v6467 = vunpack.c.h.b16 %v5704
  %v6468 = vunpack.c.l.b16 %v5705
  %v6469 = vunpack.c.h.b16 %v5705
  %v6470 = vunpack.c.l.b16 %v5706
  %v6471 = vunpack.c.l.b16 %v5707
  %v6472 = vunpack.c.h.b16 %v5707
  %v6473 = vunpack.c.l.b16 %v5708
  %v6474 = vunpack.c.h.b16 %v5708
  %v6475 = vunpack.c.l.b16 %v5709
  %v6476 = vunpack.c.l.b16 %v5710
  %v6477 = vunpack.c.h.b16 %v5710
  %v6478 = vunpack.c.l.b16 %v5711
  %v6479 = vunpack.c.h.b16 %v5711
  %v6480 = vunpack.c.l.b16 %v5712
  %v6481 = vpack.c.b16 %v6006, %v6001
  %v6482 = vpack.c.b16 %v6007, %v6002
  %v6483 = vpack.c.b16 %v6008, %v6003
  %v6484 = vpack.c.b16 %v6009, %v6004
  %v6485 = vpack.c.b16 %v6010, %v6005
  %v6486 = vpack.c.b16 %v6016, %v6011
  %v6487 = vpack.c.b16 %v6017, %v6012
  %v6488 = vpack.c.b16 %v6018, %v6013
  %v6489 = vpack.c.b16 %v6019, %v6014
  %v6490 = vpack.c.b16 %v6020, %v6015
  %v6491 = vpack.c.b16 %v6026, %v6021
  %v6492 = vpack.c.b16 %v6027, %v6022
  %v6493 = vpack.c.b16 %v6028, %v6023
  %v6494 = vpack.c.b16 %v6029, %v6024
  %v6495 = vpack.c.b16 %v6030, %v6025
  %v6496 = vpack.c.b16 %v6036, %v6031
  %v6497 = vpack.c.b16 %v6037, %v6032
  %v6498 = vpack.c.b16 %v6038, %v6033
  %v6499 = vpack.c.b16 %v6039, %v6034
  %v6500 = vpack.c.b16 %v6040, %v6035
  %v6501 = vpack.c.b16 %v6046, %v6041
  %v6502 = vpack.c.b16 %v6047, %v6042
  %v6503 = vpack.c.b16 %v6048, %v6043
  %v6504 = vpack.c.b16 %v6049, %v6044
  %v6505 = vpack.c.b16 %v6050, %v6045
  %v6506 = vpack.c.b16 %v6056, %v6051
  %v6507 = vpack.c.b16 %v6057, %v6052
  %v6508 = vpack.c.b16 %v6058, %v6053
  %v6509 = vpack.c.b16 %v6059, %v6054
  %v6510 = vpack.c.b16 %v6060, %v6055
  %v6511 = vpack.c.b16 %v6066, %v6061
  %v6512 = vpack.c.b16 %v6067, %v6062
  %v6513 = vpack.c.b16 %v6068, %v6063
  %v6514 = vpack.c.b16 %v6069, %v6064
  %v6515 = vpack.c.b16 %v6070, %v6065
  %v6516 = vpack.c.b16 %v6076, %v6071
  %v6517 = vpack.c.b16 %v6077, %v6072
  %v6518 = vpack.c.b16 %v6078, %v6073
  %v6519 = vpack.c.b16 %v6079, %v6074
  %v6520 = vpack.c.b16 %v6080, %v6075
  %v6521 = vpack.c.b16 %v6086, %v6081
  %v6522 = vpack.c.b16 %v6087, %v6082
  %v6523 = vpack.c.b16 %v6088, %v6083
  %v6524 = vpack.c.b16 %v6089, %v6084
  %v6525 = vpack.c.b16 %v6090, %v6085
  %v6526 = vpack.c.b16 %v6096, %v6091
  %v6527 = vpack.c.b16 %v6097, %v6092
  %v6528 = vpack.c.b16 %v6098, %v6093
  %v6529 = vpack.c.b16 %v6099, %v6094
  %v6530 = vpack.c.b16 %v6100, %v6095
  %v6531 = vpack.c.b16 %v6106, %v6101
  %v6532 = vpack.c.b16 %v6107, %v6102
  %v6533 = vpack.c.b16 %v6108, %v6103
  %v6534 = vpack.c.b16 %v6109, %v6104
  %v6535 = vpack.c.b16 %v6110, %v6105
  %v6536 = vpack.c.b16 %v6116, %v6111
  %v6537 = vpack.c.b16 %v6117, %v6112
  %v6538 = vpack.c.b16 %v6118, %v6113
  %v6539 = vpack.c.b16 %v6119, %v6114
  %v6540 = vpack.c.b16 %v6120, %v6115
  %v6541 = vpack.c.b16 %v6126, %v6121
  %v6542 = vpack.c.b16 %v6127, %v6122
  %v6543 = vpack.c.b16 %v6128, %v6123
  %v6544 = vpack.c.b16 %v6129, %v6124
  %v6545 = vpack.c.b16 %v6130, %v6125
  %v6546 = vpack.c.b16 %v6136, %v6131
  %v6547 = vpack.c.b16 %v6137, %v6132
  %v6548 = vpack.c.b16 %v6138, %v6133
  %v6549 = vpack.c.b16 %v6139, %v6134
  %v6550 = vpack.c.b16 %v6140, %v6135
  %v6551 = vpack.c.b16 %v6146, %v6141
  %v6552 = vpack.c.b16 %v6147, %v6142
  %v6553 = vpack.c.b16 %v6148, %v6143
  %v6554 = vpack.c.b16 %v6149, %v6144
  %v6555 = vpack.c.b16 %v6150, %v6145
  %v6556 = vpack.c.b16 %v6156, %v6151
  %v6557 = vpack.c.b16 %v6157, %v6152
  %v6558 = vpack.c.b16 %v6158, %v6153
  %v6559 = vpack.c.b16 %v6159, %v6154
  %v6560 = vpack.c.b16 %v6160, %v6155
  %v6561 = vpack.c.b16 %v6166, %v6161
  %v6562 = vpack.c.b16 %v6167, %v6162
  %v6563 = vpack.c.b16 %v6168, %v6163
  %v6564 = vpack.c.b16 %v6169, %v6164
  %v6565 = vpack.c.b16 %v6170, %v6165
  %v6566 = vpack.c.b16 %v6176, %v6171
  %v6567 = vpack.c.b16 %v6177, %v6172
  %v6568 = vpack.c.b16 %v6178, %v6173
  %v6569 = vpack.c.b16 %v6179, %v6174
  %v6570 = vpack.c.b16 %v6180, %v6175
  %v6571 = vpack.c.b16 %v6186, %v6181
  %v6572 = vpack.c.b16 %v6187, %v6182
  %v6573 = vpack.c.b16 %v6188, %v6183
  %v6574 = vpack.c.b16 %v6189, %v6184
  %v6575 = vpack.c.b16 %v6190, %v6185
  %v6576 = vpack.c.b16 %v6196, %v6191
  %v6577 = vpack.c.b16 %v6197, %v6192
  %v6578 = vpack.c.b16 %v6198, %v6193
  %v6579 = vpack.c.b16 %v6199, %v6194
  %v6580 = vpack.c.b16 %v6200, %v6195
  %v6581 = vpack.c.b16 %v6206, %v6201
  %v6582 = vpack.c.b16 %v6207, %v6202
  %v6583 = vpack.c.b16 %v6208, %v6203
  %v6584 = vpack.c.b16 %v6209, %v6204
  %v6585 = vpack.c.b16 %v6210, %v6205
  %v6586 = vpack.c.b16 %v6216, %v6211
  %v6587 = vpack.c.b16 %v6217, %v6212
  %v6588 = vpack.c.b16 %v6218, %v6213
  %v6589 = vpack.c.b16 %v6219, %v6214
  %v6590 = vpack.c.b16 %v6220, %v6215
  %v6591 = vpack.c.b16 %v6226, %v6221
  %v6592 = vpack.c.b16 %v6227, %v6222
  %v6593 = vpack.c.b16 %v6228, %v6223
  %v6594 = vpack.c.b16 %v6229, %v6224
  %v6595 = vpack.c.b16 %v6230, %v6225
  %v6596 = vpack.c.b16 %v6236, %v6231
  %v6597 = vpack.c.b16 %v6237, %v6232
  %v6598 = vpack.c.b16 %v6238, %v6233
  %v6599 = vpack.c.b16 %v6239, %v6234
  %v6600 = vpack.c.b16 %v6240, %v6235
  %v6601 = vpack.c.b16 %v6246, %v6241
  %v6602 = vpack.c.b16 %v6247, %v6242
  %v6603 = vpack.c.b16 %v6248, %v6243
  %v6604 = vpack.c.b16 %v6249, %v6244
  %v6605 = vpack.c.b16 %v6250, %v6245
  %v6606 = vpack.c.b16 %v6256, %v6251
  %v6607 = vpack.c.b16 %v6257, %v6252
  %v6608 = vpack.c.b16 %v6258, %v6253
  %v6609 = vpack.c.b16 %v6259, %v6254
  %v6610 = vpack.c.b16 %v6260, %v6255
  %v6611 = vpack.c.b16 %v6266, %v6261
  %v6612 = vpack.c.b16 %v6267, %v6262
  %v6613 = vpack.c.b16 %v6268, %v6263
  %v6614 = vpack.c.b16 %v6269, %v6264
  %v6615 = vpack.c.b16 %v6270, %v6265
  %v6616 = vpack.c.b16 %v6276, %v6271
  %v6617 = vpack.c.b16 %v6277, %v6272
  %v6618 = vpack.c.b16 %v6278, %v6273
  %v6619 = vpack.c.b16 %v6279, %v6274
  %v6620 = vpack.c.b16 %v6280, %v6275
  %v6621 = vpack.c.b16 %v6286, %v6281
  %v6622 = vpack.c.b16 %v6287, %v6282
  %v6623 = vpack.c.b16 %v6288, %v6283
  %v6624 = vpack.c.b16 %v6289, %v6284
  %v6625 = vpack.c.b16 %v6290, %v6285
  %v6626 = vpack.c.b16 %v6296, %v6291
  %v6627 = vpack.c.b16 %v6297, %v6292
  %v6628 = vpack.c.b16 %v6298, %v6293
  %v6629 = vpack.c.b16 %v6299, %v6294
  %v6630 = vpack.c.b16 %v6300, %v6295
  %v6631 = vpack.c.b16 %v6306, %v6301
  %v6632 = vpack.c.b16 %v6307, %v6302
  %v6633 = vpack.c.b16 %v6308, %v6303
  %v6634 = vpack.c.b16 %v6309, %v6304
  %v6635 = vpack.c.b16 %v6310, %v6305
  %v6636 = vpack.c.b16 %v6316, %v6311
  %v6637 = vpack.c.b16 %v6317, %v6312
  %v6638 = vpack.c.b16 %v6318, %v6313
  %v6639 = vpack.c.b16 %v6319, %v6314
  %v6640 = vpack.c.b16 %v6320, %v6315
  %v6641 = vpack.c.b16 %v6326, %v6321
  %v6642 = vpack.c.b16 %v6327, %v6322
  %v6643 = vpack.c.b16 %v6328, %v6323
  %v6644 = vpack.c.b16 %v6329, %v6324
  %v6645 = vpack.c.b16 %v6330, %v6325
  %v6646 = vpack.c.b16 %v6336, %v6331
  %v6647 = vpack.c.b16 %v6337, %v6332
  %v6648 = vpack.c.b16 %v6338, %v6333
  %v6649 = vpack.c.b16 %v6339, %v6334
  %v6650 = vpack.c.b16 %v6340, %v6335
  %v6651 = vpack.c.b16 %v6346, %v6341
  %v6652 = vpack.c.b16 %v6347, %v6342
  %v6653 = vpack.c.b16 %v6348, %v6343
  %v6654 = vpack.c.b16 %v6349, %v6344
  %v6655 = vpack.c.b16 %v6350, %v6345
  %v6656 = vpack.c.b16 %v6356, %v6351
  %v6657 = vpack.c.b16 %v6357, %v6352
  %v6658 = vpack.c.b16 %v6358, %v6353
  %v6659 = vpack.c.b16 %v6359, %v6354
  %v6660 = vpack.c.b16 %v6360, %v6355
  %v6661 = vpack.c.b16 %v6366, %v6361
  %v6662 = vpack.c.b16 %v6367, %v6362
  %v6663 = vpack.c.b16 %v6368, %v6363
  %v6664 = vpack.c.b16 %v6369, %v6364
  %v6665 = vpack.c.b16 %v6370, %v6365
  %v6666 = vpack.c.b16 %v6376, %v6371
  %v6667 = vpack.c.b16 %v6377, %v6372
  %v6668 = vpack.c.b16 %v6378, %v6373
  %v6669 = vpack.c.b16 %v6379, %v6374
  %v6670 = vpack.c.b16 %v6380, %v6375
  %v6671 = vpack.c.b16 %v6386, %v6381
  %v6672 = vpack.c.b16 %v6387, %v6382
  %v6673 = vpack.c.b16 %v6388, %v6383
  %v6674 = vpack.c.b16 %v6389, %v6384
  %v6675 = vpack.c.b16 %v6390, %v6385
  %v6676 = vpack.c.b16 %v6396, %v6391
  %v6677 = vpack.c.b16 %v6397, %v6392
  %v6678 = vpack.c.b16 %v6398, %v6393
  %v6679 = vpack.c.b16 %v6399, %v6394
  %v6680 = vpack.c.b16 %v6400, %v6395
  %v6681 = vpack.c.b16 %v6406, %v6401
  %v6682 = vpack.c.b16 %v6407, %v6402
  %v6683 = vpack.c.b16 %v6408, %v6403
  %v6684 = vpack.c.b16 %v6409, %v6404
  %v6685 = vpack.c.b16 %v6410, %v6405
  %v6686 = vpack.c.b16 %v6416, %v6411
  %v6687 = vpack.c.b16 %v6417, %v6412
  %v6688 = vpack.c.b16 %v6418, %v6413
  %v6689 = vpack.c.b16 %v6419, %v6414
  %v6690 = vpack.c.b16 %v6420, %v6415
  %v6691 = vpack.c.b16 %v6426, %v6421
  %v6692 = vpack.c.b16 %v6427, %v6422
  %v6693 = vpack.c.b16 %v6428, %v6423
  %v6694 = vpack.c.b16 %v6429, %v6424
  %v6695 = vpack.c.b16 %v6430, %v6425
  %v6696 = vpack.c.b16 %v6436, %v6431
  %v6697 = vpack.c.b16 %v6437, %v6432
  %v6698 = vpack.c.b16 %v6438, %v6433
  %v6699 = vpack.c.b16 %v6439, %v6434
  %v6700 = vpack.c.b16 %v6440, %v6435
  %v6701 = vpack.c.b16 %v6446, %v6441
  %v6702 = vpack.c.b16 %v6447, %v6442
  %v6703 = vpack.c.b16 %v6448, %v6443
  %v6704 = vpack.c.b16 %v6449, %v6444
  %v6705 = vpack.c.b16 %v6450, %v6445
  %v6706 = vpack.c.b16 %v6456, %v6451
  %v6707 = vpack.c.b16 %v6457, %v6452
  %v6708 = vpack.c.b16 %v6458, %v6453
  %v6709 = vpack.c.b16 %v6459, %v6454
  %v6710 = vpack.c.b16 %v6460, %v6455
  %v6711 = vpack.c.b16 %v6466, %v6461
  %v6712 = vpack.c.b16 %v6467, %v6462
  %v6713 = vpack.c.b16 %v6468, %v6463
  %v6714 = vpack.c.b16 %v6469, %v6464
  %v6715 = vpack.c.b16 %v6470, %v6465
  %v6716 = vpack.c.b16 %v6476, %v6471
  %v6717 = vpack.c.b16 %v6477, %v6472
  %v6718 = vpack.c.b16 %v6478, %v6473
  %v6719 = vpack.c.b16 %v6479, %v6474
  %v6720 = vpack.c.b16 %v6480, %v6475
  %v6914 = vsel %vm531, %v6485, 0
  %v6917 = vsel %vm531, %v6490, 0
  %v6920 = vsel %vm531, %v6495, 0
  %v6923 = vsel %vm531, %v6500, 0
  %v6926 = vsel %vm531, %v6505, 0
  %v6929 = vsel %vm531, %v6510, 0
  %v6932 = vsel %vm531, %v6515, 0
  %v6935 = vsel %vm531, %v6520, 0
  %v6938 = vsel %vm531, %v6525, 0
  %v6941 = vsel %vm531, %v6530, 0
  %v6944 = vsel %vm531, %v6535, 0
  %v6947 = vsel %vm531, %v6540, 0
  %v6950 = vsel %vm531, %v6545, 0
  %v6953 = vsel %vm531, %v6550, 0
  %v6956 = vsel %vm531, %v6555, 0
  %v6959 = vsel %vm531, %v6560, 0
  %v6962 = vsel %vm531, %v6565, 0
  %v6965 = vsel %vm531, %v6570, 0
  %v6968 = vsel %vm531, %v6575, 0
  %v6971 = vsel %vm531, %v6580, 0
  %v6974 = vsel %vm531, %v6585, 0
  %v6977 = vsel %vm531, %v6590, 0
  %v6980 = vsel %vm531, %v6595, 0
  %v6983 = vsel %vm531, %v6600, 0
  %v6986 = vsel %vm531, %v6605, 0
  %v6989 = vsel %vm531, %v6610, 0
  %v6992 = vsel %vm531, %v6615, 0
  %v6995 = vsel %vm531, %v6620, 0
  %v6998 = vsel %vm531, %v6625, 0
  %v7001 = vsel %vm531, %v6630, 0
  %v7004 = vsel %vm531, %v6635, 0
  %v7007 = vsel %vm531, %v6640, 0
  %v7010 = vsel %vm531, %v6645, 0
  %v7013 = vsel %vm531, %v6650, 0
  %v7016 = vsel %vm531, %v6655, 0
  %v7019 = vsel %vm531, %v6660, 0
  %v7022 = vsel %vm531, %v6665, 0
  %v7025 = vsel %vm531, %v6670, 0
  %v7028 = vsel %vm531, %v6675, 0
  %v7031 = vsel %vm531, %v6680, 0
  %v7034 = vsel %vm531, %v6685, 0
  %v7037 = vsel %vm531, %v6690, 0
  %v7040 = vsel %vm531, %v6695, 0
  %v7043 = vsel %vm531, %v6700, 0
  %v7046 = vsel %vm531, %v6705, 0
  %v7049 = vsel %vm531, %v6710, 0
  %v7052 = vsel %vm531, %v6715, 0
  %v7055 = vsel %vm531, %v6720, 0
  %7057 = vmatprep.subr.bf16.mxu0 0
  %7058 = vmatpush1.bf16.msra.mxu0 %v2506
  %7059 = vmatprep.subr.bf16.mxu0 0
  %7060 = vmatpush1.bf16.msra.mxu0 %v2507
  %7061 = vmatprep.subr.bf16.mxu0 0
  %7062 = vmatpush1.bf16.msra.mxu0 %v2508
  %7063 = vmatprep.subr.bf16.mxu0 0
  %7064 = vmatpush1.bf16.msra.mxu0 %v2509
  %7065 = vmatprep.subr.bf16.mxu0 0
  %7066 = vmatpush1.bf16.msra.mxu0 %v2510
  %7067 = vmatprep.subr.bf16.mxu0 0
  %7068 = vmatpush1.bf16.msra.mxu0 %v2511
  %7069 = vmatprep.subr.bf16.mxu0 0
  %7070 = vmatpush1.bf16.msra.mxu0 %v2512
  %7071 = vmatprep.subr.bf16.mxu0 0
  %7072 = vmatpush1.bf16.msra.mxu0 %v2513
  %7073 = vmatprep.subr.bf16.mxu0 0
  %7074 = vmatpush1.bf16.msra.mxu0 %v2514
  %7075 = vmatprep.subr.bf16.mxu0 0
  %7076 = vmatpush1.bf16.msra.mxu0 %v2515
  %7077 = vmatprep.subr.bf16.mxu0 0
  %7078 = vmatpush1.bf16.msra.mxu0 %v2516
  %7079 = vmatprep.subr.bf16.mxu0 0
  %7080 = vmatpush1.bf16.msra.mxu0 %v2517
  %7081 = vmatprep.subr.bf16.mxu0 0
  %7082 = vmatpush1.bf16.msra.mxu0 %v2518
  %7083 = vmatprep.subr.bf16.mxu0 0
  %7084 = vmatpush1.bf16.msra.mxu0 %v2519
  %7085 = vmatprep.subr.bf16.mxu0 0
  %7086 = vmatpush1.bf16.msra.mxu0 %v2520
  %7087 = vmatprep.subr.bf16.mxu0 0
  %7088 = vmatpush1.bf16.msra.mxu0 %v2521
  %7089 = vmatprep.mubr.bf16.mxu0 %v6482
  %7090 = vmatmul.mubr.bf16.gmra.mrb[0].mxu0 %v6481
  %v7091 = vpop.f32.mrb[0].mxu0
  %v7092 = vadd.f32 0.0, %v7091
  %v7093 = vpop.f32.mrb[0].mxu0
  %v7094 = vpop.f32.mrb[0].mxu0
  %v7095 = vadd.f32 0.0, %v7094
  %v7096 = vpop.f32.mrb[0].mxu0
  %7097 = vmatprep.mubr.bf16.mxu0 %v6487
  %7098 = vmatmul.mubr.bf16.gmra.mrb[0].mxu0 %v6486
  %v7099 = vpop.f32.mrb[0].mxu0
  %v7100 = vadd.f32 0.0, %v7099
  %v7101 = vpop.f32.mrb[0].mxu0
  %v7102 = vpop.f32.mrb[0].mxu0
  %v7103 = vadd.f32 0.0, %v7102
  %v7104 = vpop.f32.mrb[0].mxu0
  %7105 = vmatprep.mubr.bf16.mxu0 %v6492
  %7106 = vmatmul.mubr.bf16.gmra.mrb[0].mxu0 %v6491
  %v7107 = vpop.f32.mrb[0].mxu0
  %v7108 = vadd.f32 0.0, %v7107
  %v7109 = vpop.f32.mrb[0].mxu0
  %v7110 = vpop.f32.mrb[0].mxu0
  %v7111 = vadd.f32 0.0, %v7110
  %v7112 = vpop.f32.mrb[0].mxu0
  %7113 = vmatprep.mubr.bf16.mxu0 %v6497
  %7114 = vmatmul.mubr.bf16.gmra.mrb[0].mxu0 %v6496
  %v7115 = vpop.f32.mrb[0].mxu0
  %v7116 = vadd.f32 0.0, %v7115
  %v7117 = vpop.f32.mrb[0].mxu0
  %v7118 = vpop.f32.mrb[0].mxu0
  %v7119 = vadd.f32 0.0, %v7118
  %v7120 = vpop.f32.mrb[0].mxu0
  %7121 = vmatprep.mubr.bf16.mxu0 %v6502
  %7122 = vmatmul.mubr.bf16.gmra.mrb[0].mxu0 %v6501
  %v7123 = vpop.f32.mrb[0].mxu0
  %v7124 = vadd.f32 0.0, %v7123
  %v7125 = vpop.f32.mrb[0].mxu0
  %v7126 = vpop.f32.mrb[0].mxu0
  %v7127 = vadd.f32 0.0, %v7126
  %v7128 = vpop.f32.mrb[0].mxu0
  %7129 = vmatprep.mubr.bf16.mxu0 %v6507
  %7130 = vmatmul.mubr.bf16.gmra.mrb[0].mxu0 %v6506
  %v7131 = vpop.f32.mrb[0].mxu0
  %v7132 = vadd.f32 0.0, %v7131
  %v7133 = vpop.f32.mrb[0].mxu0
  %v7134 = vpop.f32.mrb[0].mxu0
  %v7135 = vadd.f32 0.0, %v7134
  %v7136 = vpop.f32.mrb[0].mxu0
  %7137 = vmatprep.mubr.bf16.mxu0 %v6512
  %7138 = vmatmul.mubr.bf16.gmra.mrb[0].mxu0 %v6511
  %v7139 = vpop.f32.mrb[0].mxu0
  %v7140 = vadd.f32 0.0, %v7139
  %v7141 = vpop.f32.mrb[0].mxu0
  %v7142 = vpop.f32.mrb[0].mxu0
  %v7143 = vadd.f32 0.0, %v7142
  %v7144 = vpop.f32.mrb[0].mxu0
  %7145 = vmatprep.mubr.bf16.mxu0 %v6517
  %7146 = vmatmul.mubr.bf16.gmra.mrb[0].mxu0 %v6516
  %v7147 = vpop.f32.mrb[0].mxu0
  %v7148 = vadd.f32 0.0, %v7147
  %v7149 = vpop.f32.mrb[0].mxu0
  %v7150 = vpop.f32.mrb[0].mxu0
  %v7151 = vadd.f32 0.0, %v7150
  %v7152 = vpop.f32.mrb[0].mxu0
  %7153 = vmatprep.mubr.bf16.mxu0 %v6522
  %7154 = vmatmul.mubr.bf16.gmra.mrb[0].mxu0 %v6521
  %v7155 = vpop.f32.mrb[0].mxu0
  %v7156 = vadd.f32 0.0, %v7155
  %v7157 = vpop.f32.mrb[0].mxu0
  %v7158 = vpop.f32.mrb[0].mxu0
  %v7159 = vadd.f32 0.0, %v7158
  %v7160 = vpop.f32.mrb[0].mxu0
  %7161 = vmatprep.mubr.bf16.mxu0 %v6527
  %7162 = vmatmul.mubr.bf16.gmra.mrb[0].mxu0 %v6526
  %v7163 = vpop.f32.mrb[0].mxu0
  %v7164 = vadd.f32 0.0, %v7163
  %v7165 = vpop.f32.mrb[0].mxu0
  %v7166 = vpop.f32.mrb[0].mxu0
  %v7167 = vadd.f32 0.0, %v7166
  %v7168 = vpop.f32.mrb[0].mxu0
  %7169 = vmatprep.mubr.bf16.mxu0 %v6532
  %7170 = vmatmul.mubr.bf16.gmra.mrb[0].mxu0 %v6531
  %v7171 = vpop.f32.mrb[0].mxu0
  %v7172 = vadd.f32 0.0, %v7171
  %v7173 = vpop.f32.mrb[0].mxu0
  %v7174 = vpop.f32.mrb[0].mxu0
  %v7175 = vadd.f32 0.0, %v7174
  %v7176 = vpop.f32.mrb[0].mxu0
  %7177 = vmatprep.mubr.bf16.mxu0 %v6537
  %7178 = vmatmul.mubr.bf16.gmra.mrb[0].mxu0 %v6536
  %v7179 = vpop.f32.mrb[0].mxu0
  %v7180 = vadd.f32 0.0, %v7179
  %v7181 = vpop.f32.mrb[0].mxu0
  %v7182 = vpop.f32.mrb[0].mxu0
  %v7183 = vadd.f32 0.0, %v7182
  %v7184 = vpop.f32.mrb[0].mxu0
  %7185 = vmatprep.mubr.bf16.mxu0 %v6542
  %7186 = vmatmul.mubr.bf16.gmra.mrb[0].mxu0 %v6541
  %v7187 = vpop.f32.mrb[0].mxu0
  %v7188 = vadd.f32 0.0, %v7187
  %v7189 = vpop.f32.mrb[0].mxu0
  %v7190 = vpop.f32.mrb[0].mxu0
  %v7191 = vadd.f32 0.0, %v7190
  %v7192 = vpop.f32.mrb[0].mxu0
  %7193 = vmatprep.mubr.bf16.mxu0 %v6547
  %7194 = vmatmul.mubr.bf16.gmra.mrb[0].mxu0 %v6546
  %v7195 = vpop.f32.mrb[0].mxu0
  %v7196 = vadd.f32 0.0, %v7195
  %v7197 = vpop.f32.mrb[0].mxu0
  %v7198 = vpop.f32.mrb[0].mxu0
  %v7199 = vadd.f32 0.0, %v7198
  %v7200 = vpop.f32.mrb[0].mxu0
  %7201 = vmatprep.mubr.bf16.mxu0 %v6552
  %7202 = vmatmul.mubr.bf16.gmra.mrb[0].mxu0 %v6551
  %v7203 = vpop.f32.mrb[0].mxu0
  %v7204 = vadd.f32 0.0, %v7203
  %v7205 = vpop.f32.mrb[0].mxu0
  %v7206 = vpop.f32.mrb[0].mxu0
  %v7207 = vadd.f32 0.0, %v7206
  %v7208 = vpop.f32.mrb[0].mxu0
  %7209 = vmatprep.mubr.bf16.mxu0 %v6557
  %7210 = vmatmul.mubr.bf16.gmra.mrb[0].mxu0 %v6556
  %v7211 = vpop.f32.mrb[0].mxu0
  %v7212 = vadd.f32 0.0, %v7211
  %v7213 = vpop.f32.mrb[0].mxu0
  %v7214 = vpop.f32.mrb[0].mxu0
  %v7215 = vadd.f32 0.0, %v7214
  %v7216 = vpop.f32.mrb[0].mxu0
  %7217 = vmatprep.mubr.bf16.mxu0 %v6562
  %7218 = vmatmul.mubr.bf16.gmra.mrb[0].mxu0 %v6561
  %v7219 = vpop.f32.mrb[0].mxu0
  %v7220 = vadd.f32 0.0, %v7219
  %v7221 = vpop.f32.mrb[0].mxu0
  %v7222 = vpop.f32.mrb[0].mxu0
  %v7223 = vadd.f32 0.0, %v7222
  %v7224 = vpop.f32.mrb[0].mxu0
  %7225 = vmatprep.mubr.bf16.mxu0 %v6567
  %7226 = vmatmul.mubr.bf16.gmra.mrb[0].mxu0 %v6566
  %v7227 = vpop.f32.mrb[0].mxu0
  %v7228 = vadd.f32 0.0, %v7227
  %v7229 = vpop.f32.mrb[0].mxu0
  %v7230 = vpop.f32.mrb[0].mxu0
  %v7231 = vadd.f32 0.0, %v7230
  %v7232 = vpop.f32.mrb[0].mxu0
  %7233 = vmatprep.mubr.bf16.mxu0 %v6572
  %7234 = vmatmul.mubr.bf16.gmra.mrb[0].mxu0 %v6571
  %v7235 = vpop.f32.mrb[0].mxu0
  %v7236 = vadd.f32 0.0, %v7235
  %v7237 = vpop.f32.mrb[0].mxu0
  %v7238 = vpop.f32.mrb[0].mxu0
  %v7239 = vadd.f32 0.0, %v7238
  %v7240 = vpop.f32.mrb[0].mxu0
  %7241 = vmatprep.mubr.bf16.mxu0 %v6577
  %7242 = vmatmul.mubr.bf16.gmra.mrb[0].mxu0 %v6576
  %v7243 = vpop.f32.mrb[0].mxu0
  %v7244 = vadd.f32 0.0, %v7243
  %v7245 = vpop.f32.mrb[0].mxu0
  %v7246 = vpop.f32.mrb[0].mxu0
  %v7247 = vadd.f32 0.0, %v7246
  %v7248 = vpop.f32.mrb[0].mxu0
  %7249 = vmatprep.mubr.bf16.mxu0 %v6582
  %7250 = vmatmul.mubr.bf16.gmra.mrb[0].mxu0 %v6581
  %v7251 = vpop.f32.mrb[0].mxu0
  %v7252 = vadd.f32 0.0, %v7251
  %v7253 = vpop.f32.mrb[0].mxu0
  %v7254 = vpop.f32.mrb[0].mxu0
  %v7255 = vadd.f32 0.0, %v7254
  %v7256 = vpop.f32.mrb[0].mxu0
  %7257 = vmatprep.mubr.bf16.mxu0 %v6587
  %7258 = vmatmul.mubr.bf16.gmra.mrb[0].mxu0 %v6586
  %v7259 = vpop.f32.mrb[0].mxu0
  %v7260 = vadd.f32 0.0, %v7259
  %v7261 = vpop.f32.mrb[0].mxu0
  %v7262 = vpop.f32.mrb[0].mxu0
  %v7263 = vadd.f32 0.0, %v7262
  %v7264 = vpop.f32.mrb[0].mxu0
  %7265 = vmatprep.mubr.bf16.mxu0 %v6592
  %7266 = vmatmul.mubr.bf16.gmra.mrb[0].mxu0 %v6591
  %v7267 = vpop.f32.mrb[0].mxu0
  %v7268 = vadd.f32 0.0, %v7267
  %v7269 = vpop.f32.mrb[0].mxu0
  %v7270 = vpop.f32.mrb[0].mxu0
  %v7271 = vadd.f32 0.0, %v7270
  %v7272 = vpop.f32.mrb[0].mxu0
  %7273 = vmatprep.mubr.bf16.mxu0 %v6597
  %7274 = vmatmul.mubr.bf16.gmra.mrb[0].mxu0 %v6596
  %v7275 = vpop.f32.mrb[0].mxu0
  %v7276 = vadd.f32 0.0, %v7275
  %v7277 = vpop.f32.mrb[0].mxu0
  %v7278 = vpop.f32.mrb[0].mxu0
  %v7279 = vadd.f32 0.0, %v7278
  %v7280 = vpop.f32.mrb[0].mxu0
  %7281 = vmatprep.mubr.bf16.mxu0 %v6602
  %7282 = vmatmul.mubr.bf16.gmra.mrb[0].mxu0 %v6601
  %v7283 = vpop.f32.mrb[0].mxu0
  %v7284 = vadd.f32 0.0, %v7283
  %v7285 = vpop.f32.mrb[0].mxu0
  %v7286 = vpop.f32.mrb[0].mxu0
  %v7287 = vadd.f32 0.0, %v7286
  %v7288 = vpop.f32.mrb[0].mxu0
  %7289 = vmatprep.mubr.bf16.mxu0 %v6607
  %7290 = vmatmul.mubr.bf16.gmra.mrb[0].mxu0 %v6606
  %v7291 = vpop.f32.mrb[0].mxu0
  %v7292 = vadd.f32 0.0, %v7291
  %v7293 = vpop.f32.mrb[0].mxu0
  %v7294 = vpop.f32.mrb[0].mxu0
  %v7295 = vadd.f32 0.0, %v7294
  %v7296 = vpop.f32.mrb[0].mxu0
  %7297 = vmatprep.mubr.bf16.mxu0 %v6612
  %7298 = vmatmul.mubr.bf16.gmra.mrb[0].mxu0 %v6611
  %v7299 = vpop.f32.mrb[0].mxu0
  %v7300 = vadd.f32 0.0, %v7299
  %v7301 = vpop.f32.mrb[0].mxu0
  %v7302 = vpop.f32.mrb[0].mxu0
  %v7303 = vadd.f32 0.0, %v7302
  %v7304 = vpop.f32.mrb[0].mxu0
  %7305 = vmatprep.mubr.bf16.mxu0 %v6617
  %7306 = vmatmul.mubr.bf16.gmra.mrb[0].mxu0 %v6616
  %v7307 = vpop.f32.mrb[0].mxu0
  %v7308 = vadd.f32 0.0, %v7307
  %v7309 = vpop.f32.mrb[0].mxu0
  %v7310 = vpop.f32.mrb[0].mxu0
  %v7311 = vadd.f32 0.0, %v7310
  %v7312 = vpop.f32.mrb[0].mxu0
  %7313 = vmatprep.mubr.bf16.mxu0 %v6622
  %7314 = vmatmul.mubr.bf16.gmra.mrb[0].mxu0 %v6621
  %v7315 = vpop.f32.mrb[0].mxu0
  %v7316 = vadd.f32 0.0, %v7315
  %v7317 = vpop.f32.mrb[0].mxu0
  %v7318 = vpop.f32.mrb[0].mxu0
  %v7319 = vadd.f32 0.0, %v7318
  %v7320 = vpop.f32.mrb[0].mxu0
  %7321 = vmatprep.mubr.bf16.mxu0 %v6627
  %7322 = vmatmul.mubr.bf16.gmra.mrb[0].mxu0 %v6626
  %v7323 = vpop.f32.mrb[0].mxu0
  %v7324 = vadd.f32 0.0, %v7323
  %v7325 = vpop.f32.mrb[0].mxu0
  %v7326 = vpop.f32.mrb[0].mxu0
  %v7327 = vadd.f32 0.0, %v7326
  %v7328 = vpop.f32.mrb[0].mxu0
  %7329 = vmatprep.mubr.bf16.mxu0 %v6632
  %7330 = vmatmul.mubr.bf16.gmra.mrb[0].mxu0 %v6631
  %v7331 = vpop.f32.mrb[0].mxu0
  %v7332 = vadd.f32 0.0, %v7331
  %v7333 = vpop.f32.mrb[0].mxu0
  %v7334 = vpop.f32.mrb[0].mxu0
  %v7335 = vadd.f32 0.0, %v7334
  %v7336 = vpop.f32.mrb[0].mxu0
  %7337 = vmatprep.mubr.bf16.mxu0 %v6637
  %7338 = vmatmul.mubr.bf16.gmra.mrb[0].mxu0 %v6636
  %v7339 = vpop.f32.mrb[0].mxu0
  %v7340 = vadd.f32 0.0, %v7339
  %v7341 = vpop.f32.mrb[0].mxu0
  %v7342 = vpop.f32.mrb[0].mxu0
  %v7343 = vadd.f32 0.0, %v7342
  %v7344 = vpop.f32.mrb[0].mxu0
  %7345 = vmatprep.mubr.bf16.mxu0 %v6642
  %7346 = vmatmul.mubr.bf16.gmra.mrb[0].mxu0 %v6641
  %v7347 = vpop.f32.mrb[0].mxu0
  %v7348 = vadd.f32 0.0, %v7347
  %v7349 = vpop.f32.mrb[0].mxu0
  %v7350 = vpop.f32.mrb[0].mxu0
  %v7351 = vadd.f32 0.0, %v7350
  %v7352 = vpop.f32.mrb[0].mxu0
  %7353 = vmatprep.mubr.bf16.mxu0 %v6647
  %7354 = vmatmul.mubr.bf16.gmra.mrb[0].mxu0 %v6646
  %v7355 = vpop.f32.mrb[0].mxu0
  %v7356 = vadd.f32 0.0, %v7355
  %v7357 = vpop.f32.mrb[0].mxu0
  %v7358 = vpop.f32.mrb[0].mxu0
  %v7359 = vadd.f32 0.0, %v7358
  %v7360 = vpop.f32.mrb[0].mxu0
  %7361 = vmatprep.mubr.bf16.mxu0 %v6652
  %7362 = vmatmul.mubr.bf16.gmra.mrb[0].mxu0 %v6651
  %v7363 = vpop.f32.mrb[0].mxu0
  %v7364 = vadd.f32 0.0, %v7363
  %v7365 = vpop.f32.mrb[0].mxu0
  %v7366 = vpop.f32.mrb[0].mxu0
  %v7367 = vadd.f32 0.0, %v7366
  %v7368 = vpop.f32.mrb[0].mxu0
  %7369 = vmatprep.mubr.bf16.mxu0 %v6657
  %7370 = vmatmul.mubr.bf16.gmra.mrb[0].mxu0 %v6656
  %v7371 = vpop.f32.mrb[0].mxu0
  %v7372 = vadd.f32 0.0, %v7371
  %v7373 = vpop.f32.mrb[0].mxu0
  %v7374 = vpop.f32.mrb[0].mxu0
  %v7375 = vadd.f32 0.0, %v7374
  %v7376 = vpop.f32.mrb[0].mxu0
  %7377 = vmatprep.mubr.bf16.mxu0 %v6662
  %7378 = vmatmul.mubr.bf16.gmra.mrb[0].mxu0 %v6661
  %v7379 = vpop.f32.mrb[0].mxu0
  %v7380 = vadd.f32 0.0, %v7379
  %v7381 = vpop.f32.mrb[0].mxu0
  %v7382 = vpop.f32.mrb[0].mxu0
  %v7383 = vadd.f32 0.0, %v7382
  %v7384 = vpop.f32.mrb[0].mxu0
  %7385 = vmatprep.mubr.bf16.mxu0 %v6667
  %7386 = vmatmul.mubr.bf16.gmra.mrb[0].mxu0 %v6666
  %v7387 = vpop.f32.mrb[0].mxu0
  %v7388 = vadd.f32 0.0, %v7387
  %v7389 = vpop.f32.mrb[0].mxu0
  %v7390 = vpop.f32.mrb[0].mxu0
  %v7391 = vadd.f32 0.0, %v7390
  %v7392 = vpop.f32.mrb[0].mxu0
  %7393 = vmatprep.mubr.bf16.mxu0 %v6672
  %7394 = vmatmul.mubr.bf16.gmra.mrb[0].mxu0 %v6671
  %v7395 = vpop.f32.mrb[0].mxu0
  %v7396 = vadd.f32 0.0, %v7395
  %v7397 = vpop.f32.mrb[0].mxu0
  %v7398 = vpop.f32.mrb[0].mxu0
  %v7399 = vadd.f32 0.0, %v7398
  %v7400 = vpop.f32.mrb[0].mxu0
  %7401 = vmatprep.mubr.bf16.mxu0 %v6677
  %7402 = vmatmul.mubr.bf16.gmra.mrb[0].mxu0 %v6676
  %v7403 = vpop.f32.mrb[0].mxu0
  %v7404 = vadd.f32 0.0, %v7403
  %v7405 = vpop.f32.mrb[0].mxu0
  %v7406 = vpop.f32.mrb[0].mxu0
  %v7407 = vadd.f32 0.0, %v7406
  %v7408 = vpop.f32.mrb[0].mxu0
  %7409 = vmatprep.mubr.bf16.mxu0 %v6682
  %7410 = vmatmul.mubr.bf16.gmra.mrb[0].mxu0 %v6681
  %v7411 = vpop.f32.mrb[0].mxu0
  %v7412 = vadd.f32 0.0, %v7411
  %v7413 = vpop.f32.mrb[0].mxu0
  %v7414 = vpop.f32.mrb[0].mxu0
  %v7415 = vadd.f32 0.0, %v7414
  %v7416 = vpop.f32.mrb[0].mxu0
  %7417 = vmatprep.mubr.bf16.mxu0 %v6687
  %7418 = vmatmul.mubr.bf16.gmra.mrb[0].mxu0 %v6686
  %v7419 = vpop.f32.mrb[0].mxu0
  %v7420 = vadd.f32 0.0, %v7419
  %v7421 = vpop.f32.mrb[0].mxu0
  %v7422 = vpop.f32.mrb[0].mxu0
  %v7423 = vadd.f32 0.0, %v7422
  %v7424 = vpop.f32.mrb[0].mxu0
  %7425 = vmatprep.mubr.bf16.mxu0 %v6692
  %7426 = vmatmul.mubr.bf16.gmra.mrb[0].mxu0 %v6691
  %v7427 = vpop.f32.mrb[0].mxu0
  %v7428 = vadd.f32 0.0, %v7427
  %v7429 = vpop.f32.mrb[0].mxu0
  %v7430 = vpop.f32.mrb[0].mxu0
  %v7431 = vadd.f32 0.0, %v7430
  %v7432 = vpop.f32.mrb[0].mxu0
  %7433 = vmatprep.mubr.bf16.mxu0 %v6697
  %7434 = vmatmul.mubr.bf16.gmra.mrb[0].mxu0 %v6696
  %v7435 = vpop.f32.mrb[0].mxu0
  %v7436 = vadd.f32 0.0, %v7435
  %v7437 = vpop.f32.mrb[0].mxu0
  %v7438 = vpop.f32.mrb[0].mxu0
  %v7439 = vadd.f32 0.0, %v7438
  %v7440 = vpop.f32.mrb[0].mxu0
  %7441 = vmatprep.mubr.bf16.mxu0 %v6702
  %7442 = vmatmul.mubr.bf16.gmra.mrb[0].mxu0 %v6701
  %v7443 = vpop.f32.mrb[0].mxu0
  %v7444 = vadd.f32 0.0, %v7443
  %v7445 = vpop.f32.mrb[0].mxu0
  %v7446 = vpop.f32.mrb[0].mxu0
  %v7447 = vadd.f32 0.0, %v7446
  %v7448 = vpop.f32.mrb[0].mxu0
  %7449 = vmatprep.mubr.bf16.mxu0 %v6707
  %7450 = vmatmul.mubr.bf16.gmra.mrb[0].mxu0 %v6706
  %v7451 = vpop.f32.mrb[0].mxu0
  %v7452 = vadd.f32 0.0, %v7451
  %v7453 = vpop.f32.mrb[0].mxu0
  %v7454 = vpop.f32.mrb[0].mxu0
  %v7455 = vadd.f32 0.0, %v7454
  %v7456 = vpop.f32.mrb[0].mxu0
  %7457 = vmatprep.mubr.bf16.mxu0 %v6712
  %7458 = vmatmul.mubr.bf16.gmra.mrb[0].mxu0 %v6711
  %v7459 = vpop.f32.mrb[0].mxu0
  %v7460 = vadd.f32 0.0, %v7459
  %v7461 = vpop.f32.mrb[0].mxu0
  %v7462 = vpop.f32.mrb[0].mxu0
  %v7463 = vadd.f32 0.0, %v7462
  %v7464 = vpop.f32.mrb[0].mxu0
  %7465 = vmatprep.mubr.bf16.mxu0 %v6717
  %7466 = vmatmul.mubr.bf16.gmra.mrb[0].mxu0 %v6716
  %v7467 = vpop.f32.mrb[0].mxu0
  %v7468 = vadd.f32 0.0, %v7467
  %v7469 = vpop.f32.mrb[0].mxu0
  %v7470 = vpop.f32.mrb[0].mxu0
  %v7471 = vadd.f32 0.0, %v7470
  %v7472 = vpop.f32.mrb[0].mxu0
  %7473 = vdwg.mxu0
  %7474 = vmatprep.subr.bf16.mxu0 0
  %7475 = vmatpush1.bf16.msra.mxu0 %v2522
  %7476 = vmatprep.subr.bf16.mxu0 0
  %7477 = vmatpush1.bf16.msra.mxu0 %v2523
  %7478 = vmatprep.subr.bf16.mxu0 0
  %7479 = vmatpush1.bf16.msra.mxu0 %v2524
  %7480 = vmatprep.subr.bf16.mxu0 0
  %7481 = vmatpush1.bf16.msra.mxu0 %v2525
  %7482 = vmatprep.subr.bf16.mxu0 0
  %7483 = vmatpush1.bf16.msra.mxu0 %v2526
  %7484 = vmatprep.subr.bf16.mxu0 0
  %7485 = vmatpush1.bf16.msra.mxu0 %v2527
  %7486 = vmatprep.subr.bf16.mxu0 0
  %7487 = vmatpush1.bf16.msra.mxu0 %v2528
  %7488 = vmatprep.subr.bf16.mxu0 0
  %7489 = vmatpush1.bf16.msra.mxu0 %v2529
  %7490 = vmatprep.subr.bf16.mxu0 0
  %7491 = vmatpush1.bf16.msra.mxu0 %v2530
  %7492 = vmatprep.subr.bf16.mxu0 0
  %7493 = vmatpush1.bf16.msra.mxu0 %v2531
  %7494 = vmatprep.subr.bf16.mxu0 0
  %7495 = vmatpush1.bf16.msra.mxu0 %v2532
  %7496 = vmatprep.subr.bf16.mxu0 0
  %7497 = vmatpush1.bf16.msra.mxu0 %v2533
  %7498 = vmatprep.subr.bf16.mxu0 0
  %7499 = vmatpush1.bf16.msra.mxu0 %v2534
  %7500 = vmatprep.subr.bf16.mxu0 0
  %7501 = vmatpush1.bf16.msra.mxu0 %v2535
  %7502 = vmatprep.subr.bf16.mxu0 0
  %7503 = vmatpush1.bf16.msra.mxu0 %v2536
  %7504 = vmatprep.subr.bf16.mxu0 0
  %7505 = vmatpush1.bf16.msra.mxu0 %v2537
  %7506 = vmatprep.mubr.bf16.mxu0 %v6484
  %7507 = vmatmul.mubr.bf16.gmra.mrb[0].mxu0 %v6483
  %v7508 = vpop.f32.mrb[0].mxu0
  %v7509 = vadd.f32 %v7092, %v7508
  %v7510 = vpop.f32.mrb[0].mxu0
  %v7511 = vpop.f32.mrb[0].mxu0
  %v7512 = vadd.f32 %v7095, %v7511
  %v7513 = vpop.f32.mrb[0].mxu0
  %7514 = vmatprep.mubr.bf16.mxu0 %v6489
  %7515 = vmatmul.mubr.bf16.gmra.mrb[0].mxu0 %v6488
  %v7516 = vpop.f32.mrb[0].mxu0
  %v7517 = vadd.f32 %v7100, %v7516
  %v7518 = vpop.f32.mrb[0].mxu0
  %v7519 = vpop.f32.mrb[0].mxu0
  %v7520 = vadd.f32 %v7103, %v7519
  %v7521 = vpop.f32.mrb[0].mxu0
  %7522 = vmatprep.mubr.bf16.mxu0 %v6494
  %7523 = vmatmul.mubr.bf16.gmra.mrb[0].mxu0 %v6493
  %v7524 = vpop.f32.mrb[0].mxu0
  %v7525 = vadd.f32 %v7108, %v7524
  %v7526 = vpop.f32.mrb[0].mxu0
  %v7527 = vpop.f32.mrb[0].mxu0
  %v7528 = vadd.f32 %v7111, %v7527
  %v7529 = vpop.f32.mrb[0].mxu0
  %7530 = vmatprep.mubr.bf16.mxu0 %v6499
  %7531 = vmatmul.mubr.bf16.gmra.mrb[0].mxu0 %v6498
  %v7532 = vpop.f32.mrb[0].mxu0
  %v7533 = vadd.f32 %v7116, %v7532
  %v7534 = vpop.f32.mrb[0].mxu0
  %v7535 = vpop.f32.mrb[0].mxu0
  %v7536 = vadd.f32 %v7119, %v7535
  %v7537 = vpop.f32.mrb[0].mxu0
  %7538 = vmatprep.mubr.bf16.mxu0 %v6504
  %7539 = vmatmul.mubr.bf16.gmra.mrb[0].mxu0 %v6503
  %v7540 = vpop.f32.mrb[0].mxu0
  %v7541 = vadd.f32 %v7124, %v7540
  %v7542 = vpop.f32.mrb[0].mxu0
  %v7543 = vpop.f32.mrb[0].mxu0
  %v7544 = vadd.f32 %v7127, %v7543
  %v7545 = vpop.f32.mrb[0].mxu0
  %7546 = vmatprep.mubr.bf16.mxu0 %v6509
  %7547 = vmatmul.mubr.bf16.gmra.mrb[0].mxu0 %v6508
  %v7548 = vpop.f32.mrb[0].mxu0
  %v7549 = vadd.f32 %v7132, %v7548
  %v7550 = vpop.f32.mrb[0].mxu0
  %v7551 = vpop.f32.mrb[0].mxu0
  %v7552 = vadd.f32 %v7135, %v7551
  %v7553 = vpop.f32.mrb[0].mxu0
  %7554 = vmatprep.mubr.bf16.mxu0 %v6514
  %7555 = vmatmul.mubr.bf16.gmra.mrb[0].mxu0 %v6513
  %v7556 = vpop.f32.mrb[0].mxu0
  %v7557 = vadd.f32 %v7140, %v7556
  %v7558 = vpop.f32.mrb[0].mxu0
  %v7559 = vpop.f32.mrb[0].mxu0
  %v7560 = vadd.f32 %v7143, %v7559
  %v7561 = vpop.f32.mrb[0].mxu0
  %7562 = vmatprep.mubr.bf16.mxu0 %v6519
  %7563 = vmatmul.mubr.bf16.gmra.mrb[0].mxu0 %v6518
  %v7564 = vpop.f32.mrb[0].mxu0
  %v7565 = vadd.f32 %v7148, %v7564
  %v7566 = vpop.f32.mrb[0].mxu0
  %v7567 = vpop.f32.mrb[0].mxu0
  %v7568 = vadd.f32 %v7151, %v7567
  %v7569 = vpop.f32.mrb[0].mxu0
  %7570 = vmatprep.mubr.bf16.mxu0 %v6524
  %7571 = vmatmul.mubr.bf16.gmra.mrb[0].mxu0 %v6523
  %v7572 = vpop.f32.mrb[0].mxu0
  %v7573 = vadd.f32 %v7156, %v7572
  %v7574 = vpop.f32.mrb[0].mxu0
  %v7575 = vpop.f32.mrb[0].mxu0
  %v7576 = vadd.f32 %v7159, %v7575
  %v7577 = vpop.f32.mrb[0].mxu0
  %7578 = vmatprep.mubr.bf16.mxu0 %v6529
  %7579 = vmatmul.mubr.bf16.gmra.mrb[0].mxu0 %v6528
  %v7580 = vpop.f32.mrb[0].mxu0
  %v7581 = vadd.f32 %v7164, %v7580
  %v7582 = vpop.f32.mrb[0].mxu0
  %v7583 = vpop.f32.mrb[0].mxu0
  %v7584 = vadd.f32 %v7167, %v7583
  %v7585 = vpop.f32.mrb[0].mxu0
  %7586 = vmatprep.mubr.bf16.mxu0 %v6534
  %7587 = vmatmul.mubr.bf16.gmra.mrb[0].mxu0 %v6533
  %v7588 = vpop.f32.mrb[0].mxu0
  %v7589 = vadd.f32 %v7172, %v7588
  %v7590 = vpop.f32.mrb[0].mxu0
  %v7591 = vpop.f32.mrb[0].mxu0
  %v7592 = vadd.f32 %v7175, %v7591
  %v7593 = vpop.f32.mrb[0].mxu0
  %7594 = vmatprep.mubr.bf16.mxu0 %v6539
  %7595 = vmatmul.mubr.bf16.gmra.mrb[0].mxu0 %v6538
  %v7596 = vpop.f32.mrb[0].mxu0
  %v7597 = vadd.f32 %v7180, %v7596
  %v7598 = vpop.f32.mrb[0].mxu0
  %v7599 = vpop.f32.mrb[0].mxu0
  %v7600 = vadd.f32 %v7183, %v7599
  %v7601 = vpop.f32.mrb[0].mxu0
  %7602 = vmatprep.mubr.bf16.mxu0 %v6544
  %7603 = vmatmul.mubr.bf16.gmra.mrb[0].mxu0 %v6543
  %v7604 = vpop.f32.mrb[0].mxu0
  %v7605 = vadd.f32 %v7188, %v7604
  %v7606 = vpop.f32.mrb[0].mxu0
  %v7607 = vpop.f32.mrb[0].mxu0
  %v7608 = vadd.f32 %v7191, %v7607
  %v7609 = vpop.f32.mrb[0].mxu0
  %7610 = vmatprep.mubr.bf16.mxu0 %v6549
  %7611 = vmatmul.mubr.bf16.gmra.mrb[0].mxu0 %v6548
  %v7612 = vpop.f32.mrb[0].mxu0
  %v7613 = vadd.f32 %v7196, %v7612
  %v7614 = vpop.f32.mrb[0].mxu0
  %v7615 = vpop.f32.mrb[0].mxu0
  %v7616 = vadd.f32 %v7199, %v7615
  %v7617 = vpop.f32.mrb[0].mxu0
  %7618 = vmatprep.mubr.bf16.mxu0 %v6554
  %7619 = vmatmul.mubr.bf16.gmra.mrb[0].mxu0 %v6553
  %v7620 = vpop.f32.mrb[0].mxu0
  %v7621 = vadd.f32 %v7204, %v7620
  %v7622 = vpop.f32.mrb[0].mxu0
  %v7623 = vpop.f32.mrb[0].mxu0
  %v7624 = vadd.f32 %v7207, %v7623
  %v7625 = vpop.f32.mrb[0].mxu0
  %7626 = vmatprep.mubr.bf16.mxu0 %v6559
  %7627 = vmatmul.mubr.bf16.gmra.mrb[0].mxu0 %v6558
  %v7628 = vpop.f32.mrb[0].mxu0
  %v7629 = vadd.f32 %v7212, %v7628
  %v7630 = vpop.f32.mrb[0].mxu0
  %v7631 = vpop.f32.mrb[0].mxu0
  %v7632 = vadd.f32 %v7215, %v7631
  %v7633 = vpop.f32.mrb[0].mxu0
  %7634 = vmatprep.mubr.bf16.mxu0 %v6564
  %7635 = vmatmul.mubr.bf16.gmra.mrb[0].mxu0 %v6563
  %v7636 = vpop.f32.mrb[0].mxu0
  %v7637 = vadd.f32 %v7220, %v7636
  %v7638 = vpop.f32.mrb[0].mxu0
  %v7639 = vpop.f32.mrb[0].mxu0
  %v7640 = vadd.f32 %v7223, %v7639
  %v7641 = vpop.f32.mrb[0].mxu0
  %7642 = vmatprep.mubr.bf16.mxu0 %v6569
  %7643 = vmatmul.mubr.bf16.gmra.mrb[0].mxu0 %v6568
  %v7644 = vpop.f32.mrb[0].mxu0
  %v7645 = vadd.f32 %v7228, %v7644
  %v7646 = vpop.f32.mrb[0].mxu0
  %v7647 = vpop.f32.mrb[0].mxu0
  %v7648 = vadd.f32 %v7231, %v7647
  %v7649 = vpop.f32.mrb[0].mxu0
  %7650 = vmatprep.mubr.bf16.mxu0 %v6574
  %7651 = vmatmul.mubr.bf16.gmra.mrb[0].mxu0 %v6573
  %v7652 = vpop.f32.mrb[0].mxu0
  %v7653 = vadd.f32 %v7236, %v7652
  %v7654 = vpop.f32.mrb[0].mxu0
  %v7655 = vpop.f32.mrb[0].mxu0
  %v7656 = vadd.f32 %v7239, %v7655
  %v7657 = vpop.f32.mrb[0].mxu0
  %7658 = vmatprep.mubr.bf16.mxu0 %v6579
  %7659 = vmatmul.mubr.bf16.gmra.mrb[0].mxu0 %v6578
  %v7660 = vpop.f32.mrb[0].mxu0
  %v7661 = vadd.f32 %v7244, %v7660
  %v7662 = vpop.f32.mrb[0].mxu0
  %v7663 = vpop.f32.mrb[0].mxu0
  %v7664 = vadd.f32 %v7247, %v7663
  %v7665 = vpop.f32.mrb[0].mxu0
  %7666 = vmatprep.mubr.bf16.mxu0 %v6584
  %7667 = vmatmul.mubr.bf16.gmra.mrb[0].mxu0 %v6583
  %v7668 = vpop.f32.mrb[0].mxu0
  %v7669 = vadd.f32 %v7252, %v7668
  %v7670 = vpop.f32.mrb[0].mxu0
  %v7671 = vpop.f32.mrb[0].mxu0
  %v7672 = vadd.f32 %v7255, %v7671
  %v7673 = vpop.f32.mrb[0].mxu0
  %7674 = vmatprep.mubr.bf16.mxu0 %v6589
  %7675 = vmatmul.mubr.bf16.gmra.mrb[0].mxu0 %v6588
  %v7676 = vpop.f32.mrb[0].mxu0
  %v7677 = vadd.f32 %v7260, %v7676
  %v7678 = vpop.f32.mrb[0].mxu0
  %v7679 = vpop.f32.mrb[0].mxu0
  %v7680 = vadd.f32 %v7263, %v7679
  %v7681 = vpop.f32.mrb[0].mxu0
  %7682 = vmatprep.mubr.bf16.mxu0 %v6594
  %7683 = vmatmul.mubr.bf16.gmra.mrb[0].mxu0 %v6593
  %v7684 = vpop.f32.mrb[0].mxu0
  %v7685 = vadd.f32 %v7268, %v7684
  %v7686 = vpop.f32.mrb[0].mxu0
  %v7687 = vpop.f32.mrb[0].mxu0
  %v7688 = vadd.f32 %v7271, %v7687
  %v7689 = vpop.f32.mrb[0].mxu0
  %7690 = vmatprep.mubr.bf16.mxu0 %v6599
  %7691 = vmatmul.mubr.bf16.gmra.mrb[0].mxu0 %v6598
  %v7692 = vpop.f32.mrb[0].mxu0
  %v7693 = vadd.f32 %v7276, %v7692
  %v7694 = vpop.f32.mrb[0].mxu0
  %v7695 = vpop.f32.mrb[0].mxu0
  %v7696 = vadd.f32 %v7279, %v7695
  %v7697 = vpop.f32.mrb[0].mxu0
  %7698 = vmatprep.mubr.bf16.mxu0 %v6604
  %7699 = vmatmul.mubr.bf16.gmra.mrb[0].mxu0 %v6603
  %v7700 = vpop.f32.mrb[0].mxu0
  %v7701 = vadd.f32 %v7284, %v7700
  %v7702 = vpop.f32.mrb[0].mxu0
  %v7703 = vpop.f32.mrb[0].mxu0
  %v7704 = vadd.f32 %v7287, %v7703
  %v7705 = vpop.f32.mrb[0].mxu0
  %7706 = vmatprep.mubr.bf16.mxu0 %v6609
  %7707 = vmatmul.mubr.bf16.gmra.mrb[0].mxu0 %v6608
  %v7708 = vpop.f32.mrb[0].mxu0
  %v7709 = vadd.f32 %v7292, %v7708
  %v7710 = vpop.f32.mrb[0].mxu0
  %v7711 = vpop.f32.mrb[0].mxu0
  %v7712 = vadd.f32 %v7295, %v7711
  %v7713 = vpop.f32.mrb[0].mxu0
  %7714 = vmatprep.mubr.bf16.mxu0 %v6614
  %7715 = vmatmul.mubr.bf16.gmra.mrb[0].mxu0 %v6613
  %v7716 = vpop.f32.mrb[0].mxu0
  %v7717 = vadd.f32 %v7300, %v7716
  %v7718 = vpop.f32.mrb[0].mxu0
  %v7719 = vpop.f32.mrb[0].mxu0
  %v7720 = vadd.f32 %v7303, %v7719
  %v7721 = vpop.f32.mrb[0].mxu0
  %7722 = vmatprep.mubr.bf16.mxu0 %v6619
  %7723 = vmatmul.mubr.bf16.gmra.mrb[0].mxu0 %v6618
  %v7724 = vpop.f32.mrb[0].mxu0
  %v7725 = vadd.f32 %v7308, %v7724
  %v7726 = vpop.f32.mrb[0].mxu0
  %v7727 = vpop.f32.mrb[0].mxu0
  %v7728 = vadd.f32 %v7311, %v7727
  %v7729 = vpop.f32.mrb[0].mxu0
  %7730 = vmatprep.mubr.bf16.mxu0 %v6624
  %7731 = vmatmul.mubr.bf16.gmra.mrb[0].mxu0 %v6623
  %v7732 = vpop.f32.mrb[0].mxu0
  %v7733 = vadd.f32 %v7316, %v7732
  %v7734 = vpop.f32.mrb[0].mxu0
  %v7735 = vpop.f32.mrb[0].mxu0
  %v7736 = vadd.f32 %v7319, %v7735
  %v7737 = vpop.f32.mrb[0].mxu0
  %7738 = vmatprep.mubr.bf16.mxu0 %v6629
  %7739 = vmatmul.mubr.bf16.gmra.mrb[0].mxu0 %v6628
  %v7740 = vpop.f32.mrb[0].mxu0
  %v7741 = vadd.f32 %v7324, %v7740
  %v7742 = vpop.f32.mrb[0].mxu0
  %v7743 = vpop.f32.mrb[0].mxu0
  %v7744 = vadd.f32 %v7327, %v7743
  %v7745 = vpop.f32.mrb[0].mxu0
  %7746 = vmatprep.mubr.bf16.mxu0 %v6634
  %7747 = vmatmul.mubr.bf16.gmra.mrb[0].mxu0 %v6633
  %v7748 = vpop.f32.mrb[0].mxu0
  %v7749 = vadd.f32 %v7332, %v7748
  %v7750 = vpop.f32.mrb[0].mxu0
  %v7751 = vpop.f32.mrb[0].mxu0
  %v7752 = vadd.f32 %v7335, %v7751
  %v7753 = vpop.f32.mrb[0].mxu0
  %7754 = vmatprep.mubr.bf16.mxu0 %v6639
  %7755 = vmatmul.mubr.bf16.gmra.mrb[0].mxu0 %v6638
  %v7756 = vpop.f32.mrb[0].mxu0
  %v7757 = vadd.f32 %v7340, %v7756
  %v7758 = vpop.f32.mrb[0].mxu0
  %v7759 = vpop.f32.mrb[0].mxu0
  %v7760 = vadd.f32 %v7343, %v7759
  %v7761 = vpop.f32.mrb[0].mxu0
  %7762 = vmatprep.mubr.bf16.mxu0 %v6644
  %7763 = vmatmul.mubr.bf16.gmra.mrb[0].mxu0 %v6643
  %v7764 = vpop.f32.mrb[0].mxu0
  %v7765 = vadd.f32 %v7348, %v7764
  %v7766 = vpop.f32.mrb[0].mxu0
  %v7767 = vpop.f32.mrb[0].mxu0
  %v7768 = vadd.f32 %v7351, %v7767
  %v7769 = vpop.f32.mrb[0].mxu0
  %7770 = vmatprep.mubr.bf16.mxu0 %v6649
  %7771 = vmatmul.mubr.bf16.gmra.mrb[0].mxu0 %v6648
  %v7772 = vpop.f32.mrb[0].mxu0
  %v7773 = vadd.f32 %v7356, %v7772
  %v7774 = vpop.f32.mrb[0].mxu0
  %v7775 = vpop.f32.mrb[0].mxu0
  %v7776 = vadd.f32 %v7359, %v7775
  %v7777 = vpop.f32.mrb[0].mxu0
  %7778 = vmatprep.mubr.bf16.mxu0 %v6654
  %7779 = vmatmul.mubr.bf16.gmra.mrb[0].mxu0 %v6653
  %v7780 = vpop.f32.mrb[0].mxu0
  %v7781 = vadd.f32 %v7364, %v7780
  %v7782 = vpop.f32.mrb[0].mxu0
  %v7783 = vpop.f32.mrb[0].mxu0
  %v7784 = vadd.f32 %v7367, %v7783
  %v7785 = vpop.f32.mrb[0].mxu0
  %7786 = vmatprep.mubr.bf16.mxu0 %v6659
  %7787 = vmatmul.mubr.bf16.gmra.mrb[0].mxu0 %v6658
  %v7788 = vpop.f32.mrb[0].mxu0
  %v7789 = vadd.f32 %v7372, %v7788
  %v7790 = vpop.f32.mrb[0].mxu0
  %v7791 = vpop.f32.mrb[0].mxu0
  %v7792 = vadd.f32 %v7375, %v7791
  %v7793 = vpop.f32.mrb[0].mxu0
  %7794 = vmatprep.mubr.bf16.mxu0 %v6664
  %7795 = vmatmul.mubr.bf16.gmra.mrb[0].mxu0 %v6663
  %v7796 = vpop.f32.mrb[0].mxu0
  %v7797 = vadd.f32 %v7380, %v7796
  %v7798 = vpop.f32.mrb[0].mxu0
  %v7799 = vpop.f32.mrb[0].mxu0
  %v7800 = vadd.f32 %v7383, %v7799
  %v7801 = vpop.f32.mrb[0].mxu0
  %7802 = vmatprep.mubr.bf16.mxu0 %v6669
  %7803 = vmatmul.mubr.bf16.gmra.mrb[0].mxu0 %v6668
  %v7804 = vpop.f32.mrb[0].mxu0
  %v7805 = vadd.f32 %v7388, %v7804
  %v7806 = vpop.f32.mrb[0].mxu0
  %v7807 = vpop.f32.mrb[0].mxu0
  %v7808 = vadd.f32 %v7391, %v7807
  %v7809 = vpop.f32.mrb[0].mxu0
  %7810 = vmatprep.mubr.bf16.mxu0 %v6674
  %7811 = vmatmul.mubr.bf16.gmra.mrb[0].mxu0 %v6673
  %v7812 = vpop.f32.mrb[0].mxu0
  %v7813 = vadd.f32 %v7396, %v7812
  %v7814 = vpop.f32.mrb[0].mxu0
  %v7815 = vpop.f32.mrb[0].mxu0
  %v7816 = vadd.f32 %v7399, %v7815
  %v7817 = vpop.f32.mrb[0].mxu0
  %7818 = vmatprep.mubr.bf16.mxu0 %v6679
  %7819 = vmatmul.mubr.bf16.gmra.mrb[0].mxu0 %v6678
  %v7820 = vpop.f32.mrb[0].mxu0
  %v7821 = vadd.f32 %v7404, %v7820
  %v7822 = vpop.f32.mrb[0].mxu0
  %v7823 = vpop.f32.mrb[0].mxu0
  %v7824 = vadd.f32 %v7407, %v7823
  %v7825 = vpop.f32.mrb[0].mxu0
  %7826 = vmatprep.mubr.bf16.mxu0 %v6684
  %7827 = vmatmul.mubr.bf16.gmra.mrb[0].mxu0 %v6683
  %v7828 = vpop.f32.mrb[0].mxu0
  %v7829 = vadd.f32 %v7412, %v7828
  %v7830 = vpop.f32.mrb[0].mxu0
  %v7831 = vpop.f32.mrb[0].mxu0
  %v7832 = vadd.f32 %v7415, %v7831
  %v7833 = vpop.f32.mrb[0].mxu0
  %7834 = vmatprep.mubr.bf16.mxu0 %v6689
  %7835 = vmatmul.mubr.bf16.gmra.mrb[0].mxu0 %v6688
  %v7836 = vpop.f32.mrb[0].mxu0
  %v7837 = vadd.f32 %v7420, %v7836
  %v7838 = vpop.f32.mrb[0].mxu0
  %v7839 = vpop.f32.mrb[0].mxu0
  %v7840 = vadd.f32 %v7423, %v7839
  %v7841 = vpop.f32.mrb[0].mxu0
  %7842 = vmatprep.mubr.bf16.mxu0 %v6694
  %7843 = vmatmul.mubr.bf16.gmra.mrb[0].mxu0 %v6693
  %v7844 = vpop.f32.mrb[0].mxu0
  %v7845 = vadd.f32 %v7428, %v7844
  %v7846 = vpop.f32.mrb[0].mxu0
  %v7847 = vpop.f32.mrb[0].mxu0
  %v7848 = vadd.f32 %v7431, %v7847
  %v7849 = vpop.f32.mrb[0].mxu0
  %7850 = vmatprep.mubr.bf16.mxu0 %v6699
  %7851 = vmatmul.mubr.bf16.gmra.mrb[0].mxu0 %v6698
  %v7852 = vpop.f32.mrb[0].mxu0
  %v7853 = vadd.f32 %v7436, %v7852
  %v7854 = vpop.f32.mrb[0].mxu0
  %v7855 = vpop.f32.mrb[0].mxu0
  %v7856 = vadd.f32 %v7439, %v7855
  %v7857 = vpop.f32.mrb[0].mxu0
  %7858 = vmatprep.mubr.bf16.mxu0 %v6704
  %7859 = vmatmul.mubr.bf16.gmra.mrb[0].mxu0 %v6703
  %v7860 = vpop.f32.mrb[0].mxu0
  %v7861 = vadd.f32 %v7444, %v7860
  %v7862 = vpop.f32.mrb[0].mxu0
  %v7863 = vpop.f32.mrb[0].mxu0
  %v7864 = vadd.f32 %v7447, %v7863
  %v7865 = vpop.f32.mrb[0].mxu0
  %7866 = vmatprep.mubr.bf16.mxu0 %v6709
  %7867 = vmatmul.mubr.bf16.gmra.mrb[0].mxu0 %v6708
  %v7868 = vpop.f32.mrb[0].mxu0
  %v7869 = vadd.f32 %v7452, %v7868
  %v7870 = vpop.f32.mrb[0].mxu0
  %v7871 = vpop.f32.mrb[0].mxu0
  %v7872 = vadd.f32 %v7455, %v7871
  %v7873 = vpop.f32.mrb[0].mxu0
  %7874 = vmatprep.mubr.bf16.mxu0 %v6714
  %7875 = vmatmul.mubr.bf16.gmra.mrb[0].mxu0 %v6713
  %v7876 = vpop.f32.mrb[0].mxu0
  %v7877 = vadd.f32 %v7460, %v7876
  %v7878 = vpop.f32.mrb[0].mxu0
  %v7879 = vpop.f32.mrb[0].mxu0
  %v7880 = vadd.f32 %v7463, %v7879
  %v7881 = vpop.f32.mrb[0].mxu0
  %7882 = vmatprep.mubr.bf16.mxu0 %v6719
  %7883 = vmatmul.mubr.bf16.gmra.mrb[0].mxu0 %v6718
  %v7884 = vpop.f32.mrb[0].mxu0
  %v7885 = vadd.f32 %v7468, %v7884
  %v7886 = vpop.f32.mrb[0].mxu0
  %v7887 = vpop.f32.mrb[0].mxu0
  %v7888 = vadd.f32 %v7471, %v7887
  %v7889 = vpop.f32.mrb[0].mxu0
  %7890 = vdwg.mxu0
  %7891 = vmatprep.subr.bf16.mxu0 0
  %7892 = vmatpush1.bf16.msra.mxu0 %v2538
  %7893 = vmatprep.subr.bf16.mxu0 0
  %7894 = vmatpush1.bf16.msra.mxu0 %v2539
  %7895 = vmatprep.subr.bf16.mxu0 0
  %7896 = vmatpush1.bf16.msra.mxu0 %v2540
  %7897 = vmatprep.subr.bf16.mxu0 0
  %7898 = vmatpush1.bf16.msra.mxu0 %v2541
  %7899 = vmatprep.subr.bf16.mxu0 0
  %7900 = vmatpush1.bf16.msra.mxu0 0
  %7901 = vmatprep.subr.bf16.mxu0 0
  %7902 = vmatpush1.bf16.msra.mxu0 0
  %7903 = vmatprep.subr.bf16.mxu0 0
  %7904 = vmatpush1.bf16.msra.mxu0 0
  %7905 = vmatprep.subr.bf16.mxu0 0
  %7906 = vmatpush1.bf16.msra.mxu0 0
  %7907 = vmatprep.subr.bf16.mxu0 0
  %7908 = vmatpush1.bf16.msra.mxu0 0
  %7909 = vmatprep.subr.bf16.mxu0 0
  %7910 = vmatpush1.bf16.msra.mxu0 0
  %7911 = vmatprep.subr.bf16.mxu0 0
  %7912 = vmatpush1.bf16.msra.mxu0 0
  %7913 = vmatprep.subr.bf16.mxu0 0
  %7914 = vmatpush1.bf16.msra.mxu0 0
  %7915 = vmatprep.subr.bf16.mxu0 0
  %7916 = vmatpush1.bf16.msra.mxu0 0
  %7917 = vmatprep.subr.bf16.mxu0 0
  %7918 = vmatpush1.bf16.msra.mxu0 0
  %7919 = vmatprep.subr.bf16.mxu0 0
  %7920 = vmatpush1.bf16.msra.mxu0 0
  %7921 = vmatprep.subr.bf16.mxu0 0
  %7922 = vmatpush1.bf16.msra.mxu0 0
  %7923 = vmatprep.mubr.bf16.mxu0 0
  %7924 = vmatmul.mubr.bf16.gmra.mrb[0].mxu0 %v6914
  %v7925 = vpop.f32.mrb[0].mxu0
  %v7926 = vadd.f32 %v7509, %v7925
  %v7927 = vpop.f32.mrb[0].mxu0
  %v7928 = vpop.f32.mrb[0].mxu0
  %v7929 = vadd.f32 %v7512, %v7928
  %v7930 = vpop.f32.mrb[0].mxu0
  %7931 = vmatprep.mubr.bf16.mxu0 0
  %7932 = vmatmul.mubr.bf16.gmra.mrb[0].mxu0 %v6917
  %v7933 = vpop.f32.mrb[0].mxu0
  %v7934 = vadd.f32 %v7517, %v7933
  %v7935 = vpop.f32.mrb[0].mxu0
  %v7936 = vpop.f32.mrb[0].mxu0
  %v7937 = vadd.f32 %v7520, %v7936
  %v7938 = vpop.f32.mrb[0].mxu0
  %7939 = vmatprep.mubr.bf16.mxu0 0
  %7940 = vmatmul.mubr.bf16.gmra.mrb[0].mxu0 %v6920
  %v7941 = vpop.f32.mrb[0].mxu0
  %v7942 = vadd.f32 %v7525, %v7941
  %v7943 = vpop.f32.mrb[0].mxu0
  %v7944 = vpop.f32.mrb[0].mxu0
  %v7945 = vadd.f32 %v7528, %v7944
  %v7946 = vpop.f32.mrb[0].mxu0
  %7947 = vmatprep.mubr.bf16.mxu0 0
  %7948 = vmatmul.mubr.bf16.gmra.mrb[0].mxu0 %v6923
  %v7949 = vpop.f32.mrb[0].mxu0
  %v7950 = vadd.f32 %v7533, %v7949
  %v7951 = vpop.f32.mrb[0].mxu0
  %v7952 = vpop.f32.mrb[0].mxu0
  %v7953 = vadd.f32 %v7536, %v7952
  %v7954 = vpop.f32.mrb[0].mxu0
  %7955 = vmatprep.mubr.bf16.mxu0 0
  %7956 = vmatmul.mubr.bf16.gmra.mrb[0].mxu0 %v6926
  %v7957 = vpop.f32.mrb[0].mxu0
  %v7958 = vadd.f32 %v7541, %v7957
  %v7959 = vpop.f32.mrb[0].mxu0
  %v7960 = vpop.f32.mrb[0].mxu0
  %v7961 = vadd.f32 %v7544, %v7960
  %v7962 = vpop.f32.mrb[0].mxu0
  %7963 = vmatprep.mubr.bf16.mxu0 0
  %7964 = vmatmul.mubr.bf16.gmra.mrb[0].mxu0 %v6929
  %v7965 = vpop.f32.mrb[0].mxu0
  %v7966 = vadd.f32 %v7549, %v7965
  %v7967 = vpop.f32.mrb[0].mxu0
  %v7968 = vpop.f32.mrb[0].mxu0
  %v7969 = vadd.f32 %v7552, %v7968
  %v7970 = vpop.f32.mrb[0].mxu0
  %7971 = vmatprep.mubr.bf16.mxu0 0
  %7972 = vmatmul.mubr.bf16.gmra.mrb[0].mxu0 %v6932
  %v7973 = vpop.f32.mrb[0].mxu0
  %v7974 = vadd.f32 %v7557, %v7973
  %v7975 = vpop.f32.mrb[0].mxu0
  %v7976 = vpop.f32.mrb[0].mxu0
  %v7977 = vadd.f32 %v7560, %v7976
  %v7978 = vpop.f32.mrb[0].mxu0
  %7979 = vmatprep.mubr.bf16.mxu0 0
  %7980 = vmatmul.mubr.bf16.gmra.mrb[0].mxu0 %v6935
  %v7981 = vpop.f32.mrb[0].mxu0
  %v7982 = vadd.f32 %v7565, %v7981
  %v7983 = vpop.f32.mrb[0].mxu0
  %v7984 = vpop.f32.mrb[0].mxu0
  %v7985 = vadd.f32 %v7568, %v7984
  %v7986 = vpop.f32.mrb[0].mxu0
  %7987 = vmatprep.mubr.bf16.mxu0 0
  %7988 = vmatmul.mubr.bf16.gmra.mrb[0].mxu0 %v6938
  %v7989 = vpop.f32.mrb[0].mxu0
  %v7990 = vadd.f32 %v7573, %v7989
  %v7991 = vpop.f32.mrb[0].mxu0
  %v7992 = vpop.f32.mrb[0].mxu0
  %v7993 = vadd.f32 %v7576, %v7992
  %v7994 = vpop.f32.mrb[0].mxu0
  %7995 = vmatprep.mubr.bf16.mxu0 0
  %7996 = vmatmul.mubr.bf16.gmra.mrb[0].mxu0 %v6941
  %v7997 = vpop.f32.mrb[0].mxu0
  %v7998 = vadd.f32 %v7581, %v7997
  %v7999 = vpop.f32.mrb[0].mxu0
  %v8000 = vpop.f32.mrb[0].mxu0
  %v8001 = vadd.f32 %v7584, %v8000
  %v8002 = vpop.f32.mrb[0].mxu0
  %8003 = vmatprep.mubr.bf16.mxu0 0
  %8004 = vmatmul.mubr.bf16.gmra.mrb[0].mxu0 %v6944
  %v8005 = vpop.f32.mrb[0].mxu0
  %v8006 = vadd.f32 %v7589, %v8005
  %v8007 = vpop.f32.mrb[0].mxu0
  %v8008 = vpop.f32.mrb[0].mxu0
  %v8009 = vadd.f32 %v7592, %v8008
  %v8010 = vpop.f32.mrb[0].mxu0
  %8011 = vmatprep.mubr.bf16.mxu0 0
  %8012 = vmatmul.mubr.bf16.gmra.mrb[0].mxu0 %v6947
  %v8013 = vpop.f32.mrb[0].mxu0
  %v8014 = vadd.f32 %v7597, %v8013
  %v8015 = vpop.f32.mrb[0].mxu0
  %v8016 = vpop.f32.mrb[0].mxu0
  %v8017 = vadd.f32 %v7600, %v8016
  %v8018 = vpop.f32.mrb[0].mxu0
  %8019 = vmatprep.mubr.bf16.mxu0 0
  %8020 = vmatmul.mubr.bf16.gmra.mrb[0].mxu0 %v6950
  %v8021 = vpop.f32.mrb[0].mxu0
  %v8022 = vadd.f32 %v7605, %v8021
  %v8023 = vpop.f32.mrb[0].mxu0
  %v8024 = vpop.f32.mrb[0].mxu0
  %v8025 = vadd.f32 %v7608, %v8024
  %v8026 = vpop.f32.mrb[0].mxu0
  %8027 = vmatprep.mubr.bf16.mxu0 0
  %8028 = vmatmul.mubr.bf16.gmra.mrb[0].mxu0 %v6953
  %v8029 = vpop.f32.mrb[0].mxu0
  %v8030 = vadd.f32 %v7613, %v8029
  %v8031 = vpop.f32.mrb[0].mxu0
  %v8032 = vpop.f32.mrb[0].mxu0
  %v8033 = vadd.f32 %v7616, %v8032
  %v8034 = vpop.f32.mrb[0].mxu0
  %8035 = vmatprep.mubr.bf16.mxu0 0
  %8036 = vmatmul.mubr.bf16.gmra.mrb[0].mxu0 %v6956
  %v8037 = vpop.f32.mrb[0].mxu0
  %v8038 = vadd.f32 %v7621, %v8037
  %v8039 = vpop.f32.mrb[0].mxu0
  %v8040 = vpop.f32.mrb[0].mxu0
  %v8041 = vadd.f32 %v7624, %v8040
  %v8042 = vpop.f32.mrb[0].mxu0
  %8043 = vmatprep.mubr.bf16.mxu0 0
  %8044 = vmatmul.mubr.bf16.gmra.mrb[0].mxu0 %v6959
  %v8045 = vpop.f32.mrb[0].mxu0
  %v8046 = vadd.f32 %v7629, %v8045
  %v8047 = vpop.f32.mrb[0].mxu0
  %v8048 = vpop.f32.mrb[0].mxu0
  %v8049 = vadd.f32 %v7632, %v8048
  %v8050 = vpop.f32.mrb[0].mxu0
  %8051 = vmatprep.mubr.bf16.mxu0 0
  %8052 = vmatmul.mubr.bf16.gmra.mrb[0].mxu0 %v6962
  %v8053 = vpop.f32.mrb[0].mxu0
  %v8054 = vadd.f32 %v7637, %v8053
  %v8055 = vpop.f32.mrb[0].mxu0
  %v8056 = vpop.f32.mrb[0].mxu0
  %v8057 = vadd.f32 %v7640, %v8056
  %v8058 = vpop.f32.mrb[0].mxu0
  %8059 = vmatprep.mubr.bf16.mxu0 0
  %8060 = vmatmul.mubr.bf16.gmra.mrb[0].mxu0 %v6965
  %v8061 = vpop.f32.mrb[0].mxu0
  %v8062 = vadd.f32 %v7645, %v8061
  %v8063 = vpop.f32.mrb[0].mxu0
  %v8064 = vpop.f32.mrb[0].mxu0
  %v8065 = vadd.f32 %v7648, %v8064
  %v8066 = vpop.f32.mrb[0].mxu0
  %8067 = vmatprep.mubr.bf16.mxu0 0
  %8068 = vmatmul.mubr.bf16.gmra.mrb[0].mxu0 %v6968
  %v8069 = vpop.f32.mrb[0].mxu0
  %v8070 = vadd.f32 %v7653, %v8069
  %v8071 = vpop.f32.mrb[0].mxu0
  %v8072 = vpop.f32.mrb[0].mxu0
  %v8073 = vadd.f32 %v7656, %v8072
  %v8074 = vpop.f32.mrb[0].mxu0
  %8075 = vmatprep.mubr.bf16.mxu0 0
  %8076 = vmatmul.mubr.bf16.gmra.mrb[0].mxu0 %v6971
  %v8077 = vpop.f32.mrb[0].mxu0
  %v8078 = vadd.f32 %v7661, %v8077
  %v8079 = vpop.f32.mrb[0].mxu0
  %v8080 = vpop.f32.mrb[0].mxu0
  %v8081 = vadd.f32 %v7664, %v8080
  %v8082 = vpop.f32.mrb[0].mxu0
  %8083 = vmatprep.mubr.bf16.mxu0 0
  %8084 = vmatmul.mubr.bf16.gmra.mrb[0].mxu0 %v6974
  %v8085 = vpop.f32.mrb[0].mxu0
  %v8086 = vadd.f32 %v7669, %v8085
  %v8087 = vpop.f32.mrb[0].mxu0
  %v8088 = vpop.f32.mrb[0].mxu0
  %v8089 = vadd.f32 %v7672, %v8088
  %v8090 = vpop.f32.mrb[0].mxu0
  %8091 = vmatprep.mubr.bf16.mxu0 0
  %8092 = vmatmul.mubr.bf16.gmra.mrb[0].mxu0 %v6977
  %v8093 = vpop.f32.mrb[0].mxu0
  %v8094 = vadd.f32 %v7677, %v8093
  %v8095 = vpop.f32.mrb[0].mxu0
  %v8096 = vpop.f32.mrb[0].mxu0
  %v8097 = vadd.f32 %v7680, %v8096
  %v8098 = vpop.f32.mrb[0].mxu0
  %8099 = vmatprep.mubr.bf16.mxu0 0
  %8100 = vmatmul.mubr.bf16.gmra.mrb[0].mxu0 %v6980
  %v8101 = vpop.f32.mrb[0].mxu0
  %v8102 = vadd.f32 %v7685, %v8101
  %v8103 = vpop.f32.mrb[0].mxu0
  %v8104 = vpop.f32.mrb[0].mxu0
  %v8105 = vadd.f32 %v7688, %v8104
  %v8106 = vpop.f32.mrb[0].mxu0
  %8107 = vmatprep.mubr.bf16.mxu0 0
  %8108 = vmatmul.mubr.bf16.gmra.mrb[0].mxu0 %v6983
  %v8109 = vpop.f32.mrb[0].mxu0
  %v8110 = vadd.f32 %v7693, %v8109
  %v8111 = vpop.f32.mrb[0].mxu0
  %v8112 = vpop.f32.mrb[0].mxu0
  %v8113 = vadd.f32 %v7696, %v8112
  %v8114 = vpop.f32.mrb[0].mxu0
  %8115 = vmatprep.mubr.bf16.mxu0 0
  %8116 = vmatmul.mubr.bf16.gmra.mrb[0].mxu0 %v6986
  %v8117 = vpop.f32.mrb[0].mxu0
  %v8118 = vadd.f32 %v7701, %v8117
  %v8119 = vpop.f32.mrb[0].mxu0
  %v8120 = vpop.f32.mrb[0].mxu0
  %v8121 = vadd.f32 %v7704, %v8120
  %v8122 = vpop.f32.mrb[0].mxu0
  %8123 = vmatprep.mubr.bf16.mxu0 0
  %8124 = vmatmul.mubr.bf16.gmra.mrb[0].mxu0 %v6989
  %v8125 = vpop.f32.mrb[0].mxu0
  %v8126 = vadd.f32 %v7709, %v8125
  %v8127 = vpop.f32.mrb[0].mxu0
  %v8128 = vpop.f32.mrb[0].mxu0
  %v8129 = vadd.f32 %v7712, %v8128
  %v8130 = vpop.f32.mrb[0].mxu0
  %8131 = vmatprep.mubr.bf16.mxu0 0
  %8132 = vmatmul.mubr.bf16.gmra.mrb[0].mxu0 %v6992
  %v8133 = vpop.f32.mrb[0].mxu0
  %v8134 = vadd.f32 %v7717, %v8133
  %v8135 = vpop.f32.mrb[0].mxu0
  %v8136 = vpop.f32.mrb[0].mxu0
  %v8137 = vadd.f32 %v7720, %v8136
  %v8138 = vpop.f32.mrb[0].mxu0
  %8139 = vmatprep.mubr.bf16.mxu0 0
  %8140 = vmatmul.mubr.bf16.gmra.mrb[0].mxu0 %v6995
  %v8141 = vpop.f32.mrb[0].mxu0
  %v8142 = vadd.f32 %v7725, %v8141
  %v8143 = vpop.f32.mrb[0].mxu0
  %v8144 = vpop.f32.mrb[0].mxu0
  %v8145 = vadd.f32 %v7728, %v8144
  %v8146 = vpop.f32.mrb[0].mxu0
  %8147 = vmatprep.mubr.bf16.mxu0 0
  %8148 = vmatmul.mubr.bf16.gmra.mrb[0].mxu0 %v6998
  %v8149 = vpop.f32.mrb[0].mxu0
  %v8150 = vadd.f32 %v7733, %v8149
  %v8151 = vpop.f32.mrb[0].mxu0
  %v8152 = vpop.f32.mrb[0].mxu0
  %v8153 = vadd.f32 %v7736, %v8152
  %v8154 = vpop.f32.mrb[0].mxu0
  %8155 = vmatprep.mubr.bf16.mxu0 0
  %8156 = vmatmul.mubr.bf16.gmra.mrb[0].mxu0 %v7001
  %v8157 = vpop.f32.mrb[0].mxu0
  %v8158 = vadd.f32 %v7741, %v8157
  %v8159 = vpop.f32.mrb[0].mxu0
  %v8160 = vpop.f32.mrb[0].mxu0
  %v8161 = vadd.f32 %v7744, %v8160
  %v8162 = vpop.f32.mrb[0].mxu0
  %8163 = vmatprep.mubr.bf16.mxu0 0
  %8164 = vmatmul.mubr.bf16.gmra.mrb[0].mxu0 %v7004
  %v8165 = vpop.f32.mrb[0].mxu0
  %v8166 = vadd.f32 %v7749, %v8165
  %v8167 = vpop.f32.mrb[0].mxu0
  %v8168 = vpop.f32.mrb[0].mxu0
  %v8169 = vadd.f32 %v7752, %v8168
  %v8170 = vpop.f32.mrb[0].mxu0
  %8171 = vmatprep.mubr.bf16.mxu0 0
  %8172 = vmatmul.mubr.bf16.gmra.mrb[0].mxu0 %v7007
  %v8173 = vpop.f32.mrb[0].mxu0
  %v8174 = vadd.f32 %v7757, %v8173
  %v8175 = vpop.f32.mrb[0].mxu0
  %v8176 = vpop.f32.mrb[0].mxu0
  %v8177 = vadd.f32 %v7760, %v8176
  %v8178 = vpop.f32.mrb[0].mxu0
  %8179 = vmatprep.mubr.bf16.mxu0 0
  %8180 = vmatmul.mubr.bf16.gmra.mrb[0].mxu0 %v7010
  %v8181 = vpop.f32.mrb[0].mxu0
  %v8182 = vadd.f32 %v7765, %v8181
  %v8183 = vpop.f32.mrb[0].mxu0
  %v8184 = vpop.f32.mrb[0].mxu0
  %v8185 = vadd.f32 %v7768, %v8184
  %v8186 = vpop.f32.mrb[0].mxu0
  %8187 = vmatprep.mubr.bf16.mxu0 0
  %8188 = vmatmul.mubr.bf16.gmra.mrb[0].mxu0 %v7013
  %v8189 = vpop.f32.mrb[0].mxu0
  %v8190 = vadd.f32 %v7773, %v8189
  %v8191 = vpop.f32.mrb[0].mxu0
  %v8192 = vpop.f32.mrb[0].mxu0
  %v8193 = vadd.f32 %v7776, %v8192
  %v8194 = vpop.f32.mrb[0].mxu0
  %8195 = vmatprep.mubr.bf16.mxu0 0
  %8196 = vmatmul.mubr.bf16.gmra.mrb[0].mxu0 %v7016
  %v8197 = vpop.f32.mrb[0].mxu0
  %v8198 = vadd.f32 %v7781, %v8197
  %v8199 = vpop.f32.mrb[0].mxu0
  %v8200 = vpop.f32.mrb[0].mxu0
  %v8201 = vadd.f32 %v7784, %v8200
  %v8202 = vpop.f32.mrb[0].mxu0
  %8203 = vmatprep.mubr.bf16.mxu0 0
  %8204 = vmatmul.mubr.bf16.gmra.mrb[0].mxu0 %v7019
  %v8205 = vpop.f32.mrb[0].mxu0
  %v8206 = vadd.f32 %v7789, %v8205
  %v8207 = vpop.f32.mrb[0].mxu0
  %v8208 = vpop.f32.mrb[0].mxu0
  %v8209 = vadd.f32 %v7792, %v8208
  %v8210 = vpop.f32.mrb[0].mxu0
  %8211 = vmatprep.mubr.bf16.mxu0 0
  %8212 = vmatmul.mubr.bf16.gmra.mrb[0].mxu0 %v7022
  %v8213 = vpop.f32.mrb[0].mxu0
  %v8214 = vadd.f32 %v7797, %v8213
  %v8215 = vpop.f32.mrb[0].mxu0
  %v8216 = vpop.f32.mrb[0].mxu0
  %v8217 = vadd.f32 %v7800, %v8216
  %v8218 = vpop.f32.mrb[0].mxu0
  %8219 = vmatprep.mubr.bf16.mxu0 0
  %8220 = vmatmul.mubr.bf16.gmra.mrb[0].mxu0 %v7025
  %v8221 = vpop.f32.mrb[0].mxu0
  %v8222 = vadd.f32 %v7805, %v8221
  %v8223 = vpop.f32.mrb[0].mxu0
  %v8224 = vpop.f32.mrb[0].mxu0
  %v8225 = vadd.f32 %v7808, %v8224
  %v8226 = vpop.f32.mrb[0].mxu0
  %8227 = vmatprep.mubr.bf16.mxu0 0
  %8228 = vmatmul.mubr.bf16.gmra.mrb[0].mxu0 %v7028
  %v8229 = vpop.f32.mrb[0].mxu0
  %v8230 = vadd.f32 %v7813, %v8229
  %v8231 = vpop.f32.mrb[0].mxu0
  %v8232 = vpop.f32.mrb[0].mxu0
  %v8233 = vadd.f32 %v7816, %v8232
  %v8234 = vpop.f32.mrb[0].mxu0
  %8235 = vmatprep.mubr.bf16.mxu0 0
  %8236 = vmatmul.mubr.bf16.gmra.mrb[0].mxu0 %v7031
  %v8237 = vpop.f32.mrb[0].mxu0
  %v8238 = vadd.f32 %v7821, %v8237
  %v8239 = vpop.f32.mrb[0].mxu0
  %v8240 = vpop.f32.mrb[0].mxu0
  %v8241 = vadd.f32 %v7824, %v8240
  %v8242 = vpop.f32.mrb[0].mxu0
  %8243 = vmatprep.mubr.bf16.mxu0 0
  %8244 = vmatmul.mubr.bf16.gmra.mrb[0].mxu0 %v7034
  %v8245 = vpop.f32.mrb[0].mxu0
  %v8246 = vadd.f32 %v7829, %v8245
  %v8247 = vpop.f32.mrb[0].mxu0
  %v8248 = vpop.f32.mrb[0].mxu0
  %v8249 = vadd.f32 %v7832, %v8248
  %v8250 = vpop.f32.mrb[0].mxu0
  %8251 = vmatprep.mubr.bf16.mxu0 0
  %8252 = vmatmul.mubr.bf16.gmra.mrb[0].mxu0 %v7037
  %v8253 = vpop.f32.mrb[0].mxu0
  %v8254 = vadd.f32 %v7837, %v8253
  %v8255 = vpop.f32.mrb[0].mxu0
  %v8256 = vpop.f32.mrb[0].mxu0
  %v8257 = vadd.f32 %v7840, %v8256
  %v8258 = vpop.f32.mrb[0].mxu0
  %8259 = vmatprep.mubr.bf16.mxu0 0
  %8260 = vmatmul.mubr.bf16.gmra.mrb[0].mxu0 %v7040
  %v8261 = vpop.f32.mrb[0].mxu0
  %v8262 = vadd.f32 %v7845, %v8261
  %v8263 = vpop.f32.mrb[0].mxu0
  %v8264 = vpop.f32.mrb[0].mxu0
  %v8265 = vadd.f32 %v7848, %v8264
  %v8266 = vpop.f32.mrb[0].mxu0
  %8267 = vmatprep.mubr.bf16.mxu0 0
  %8268 = vmatmul.mubr.bf16.gmra.mrb[0].mxu0 %v7043
  %v8269 = vpop.f32.mrb[0].mxu0
  %v8270 = vadd.f32 %v7853, %v8269
  %v8271 = vpop.f32.mrb[0].mxu0
  %v8272 = vpop.f32.mrb[0].mxu0
  %v8273 = vadd.f32 %v7856, %v8272
  %v8274 = vpop.f32.mrb[0].mxu0
  %8275 = vmatprep.mubr.bf16.mxu0 0
  %8276 = vmatmul.mubr.bf16.gmra.mrb[0].mxu0 %v7046
  %v8277 = vpop.f32.mrb[0].mxu0
  %v8278 = vadd.f32 %v7861, %v8277
  %v8279 = vpop.f32.mrb[0].mxu0
  %v8280 = vpop.f32.mrb[0].mxu0
  %v8281 = vadd.f32 %v7864, %v8280
  %v8282 = vpop.f32.mrb[0].mxu0
  %8283 = vmatprep.mubr.bf16.mxu0 0
  %8284 = vmatmul.mubr.bf16.gmra.mrb[0].mxu0 %v7049
  %v8285 = vpop.f32.mrb[0].mxu0
  %v8286 = vadd.f32 %v7869, %v8285
  %v8287 = vpop.f32.mrb[0].mxu0
  %v8288 = vpop.f32.mrb[0].mxu0
  %v8289 = vadd.f32 %v7872, %v8288
  %v8290 = vpop.f32.mrb[0].mxu0
  %8291 = vmatprep.mubr.bf16.mxu0 0
  %8292 = vmatmul.mubr.bf16.gmra.mrb[0].mxu0 %v7052
  %v8293 = vpop.f32.mrb[0].mxu0
  %v8294 = vadd.f32 %v7877, %v8293
  %v8295 = vpop.f32.mrb[0].mxu0
  %v8296 = vpop.f32.mrb[0].mxu0
  %v8297 = vadd.f32 %v7880, %v8296
  %v8298 = vpop.f32.mrb[0].mxu0
  %8299 = vmatprep.mubr.bf16.mxu0 0
  %8300 = vmatmul.mubr.bf16.gmra.mrb[0].mxu0 %v7055
  %v8301 = vpop.f32.mrb[0].mxu0
  %v8302 = vadd.f32 %v7885, %v8301
  %v8303 = vpop.f32.mrb[0].mxu0
  %v8304 = vpop.f32.mrb[0].mxu0
  %v8305 = vadd.f32 %v7888, %v8304
  %v8306 = vpop.f32.mrb[0].mxu0
  %8307 = vdwg.mxu0
  %v8308 = vmax.f32 %v5043, %v7926
  %v8309 = vmax.f32 %v5046, %v7929
  %v8310 = vmax.f32 %v5051, %v7934
  %v8311 = vmax.f32 %v5054, %v7937
  %v8312 = vmax.f32 %v5059, %v7942
  %v8313 = vmax.f32 %v5062, %v7945
  %v8314 = vmax.f32 %v5067, %v7950
  %v8315 = vmax.f32 %v5070, %v7953
  %v8316 = vmax.f32 %v5075, %v7958
  %v8317 = vmax.f32 %v5078, %v7961
  %v8318 = vmax.f32 %v5083, %v7966
  %v8319 = vmax.f32 %v5086, %v7969
  %v8320 = vmax.f32 %v5091, %v7974
  %v8321 = vmax.f32 %v5094, %v7977
  %v8322 = vmax.f32 %v5099, %v7982
  %v8323 = vmax.f32 %v5102, %v7985
  %v8324 = vmax.f32 %v5107, %v7990
  %v8325 = vmax.f32 %v5110, %v7993
  %v8326 = vmax.f32 %v5115, %v7998
  %v8327 = vmax.f32 %v5118, %v8001
  %v8328 = vmax.f32 %v5123, %v8006
  %v8329 = vmax.f32 %v5126, %v8009
  %v8330 = vmax.f32 %v5131, %v8014
  %v8331 = vmax.f32 %v5134, %v8017
  %v8332 = vmax.f32 %v5139, %v8022
  %v8333 = vmax.f32 %v5142, %v8025
  %v8334 = vmax.f32 %v5147, %v8030
  %v8335 = vmax.f32 %v5150, %v8033
  %v8336 = vmax.f32 %v5155, %v8038
  %v8337 = vmax.f32 %v5158, %v8041
  %v8338 = vmax.f32 %v5163, %v8046
  %v8339 = vmax.f32 %v5166, %v8049
  %v8340 = vmax.f32 %v5171, %v8054
  %v8341 = vmax.f32 %v5174, %v8057
  %v8342 = vmax.f32 %v5179, %v8062
  %v8343 = vmax.f32 %v5182, %v8065
  %v8344 = vmax.f32 %v5187, %v8070
  %v8345 = vmax.f32 %v5190, %v8073
  %v8346 = vmax.f32 %v5195, %v8078
  %v8347 = vmax.f32 %v5198, %v8081
  %v8348 = vmax.f32 %v5203, %v8086
  %v8349 = vmax.f32 %v5206, %v8089
  %v8350 = vmax.f32 %v5211, %v8094
  %v8351 = vmax.f32 %v5214, %v8097
  %v8352 = vmax.f32 %v5219, %v8102
  %v8353 = vmax.f32 %v5222, %v8105
  %v8354 = vmax.f32 %v5227, %v8110
  %v8355 = vmax.f32 %v5230, %v8113
  %v8356 = vmax.f32 %v5235, %v8118
  %v8357 = vmax.f32 %v5238, %v8121
  %v8358 = vmax.f32 %v5243, %v8126
  %v8359 = vmax.f32 %v5246, %v8129
  %v8360 = vmax.f32 %v5251, %v8134
  %v8361 = vmax.f32 %v5254, %v8137
  %v8362 = vmax.f32 %v5259, %v8142
  %v8363 = vmax.f32 %v5262, %v8145
  %v8364 = vmax.f32 %v5267, %v8150
  %v8365 = vmax.f32 %v5270, %v8153
  %v8366 = vmax.f32 %v5275, %v8158
  %v8367 = vmax.f32 %v5278, %v8161
  %v8368 = vmax.f32 %v5283, %v8166
  %v8369 = vmax.f32 %v5286, %v8169
  %v8370 = vmax.f32 %v5291, %v8174
  %v8371 = vmax.f32 %v5294, %v8177
  %v8372 = vmax.f32 %v5299, %v8182
  %v8373 = vmax.f32 %v5302, %v8185
  %v8374 = vmax.f32 %v5307, %v8190
  %v8375 = vmax.f32 %v5310, %v8193
  %v8376 = vmax.f32 %v5315, %v8198
  %v8377 = vmax.f32 %v5318, %v8201
  %v8378 = vmax.f32 %v5323, %v8206
  %v8379 = vmax.f32 %v5326, %v8209
  %v8380 = vmax.f32 %v5331, %v8214
  %v8381 = vmax.f32 %v5334, %v8217
  %v8382 = vmax.f32 %v5339, %v8222
  %v8383 = vmax.f32 %v5342, %v8225
  %v8384 = vmax.f32 %v5347, %v8230
  %v8385 = vmax.f32 %v5350, %v8233
  %v8386 = vmax.f32 %v5355, %v8238
  %v8387 = vmax.f32 %v5358, %v8241
  %v8388 = vmax.f32 %v5363, %v8246
  %v8389 = vmax.f32 %v5366, %v8249
  %v8390 = vmax.f32 %v5371, %v8254
  %v8391 = vmax.f32 %v5374, %v8257
  %v8392 = vmax.f32 %v5379, %v8262
  %v8393 = vmax.f32 %v5382, %v8265
  %v8394 = vmax.f32 %v5387, %v8270
  %v8395 = vmax.f32 %v5390, %v8273
  %v8396 = vmax.f32 %v5395, %v8278
  %v8397 = vmax.f32 %v5398, %v8281
  %v8398 = vmax.f32 %v5403, %v8286
  %v8399 = vmax.f32 %v5406, %v8289
  %v8400 = vmax.f32 %v5411, %v8294
  %v8401 = vmax.f32 %v5414, %v8297
  %v8402 = vmax.f32 %v5419, %v8302
  %v8403 = vmax.f32 %v5422, %v8305
  %v8404 = vld [vmem:[%s6] sm:$0xff]
  %v8405 = vld [vmem:[%s6 + $0x8] sm:$0xff]
  %v8406 = vld [vmem:[%s6 + $0x10] sm:$0xff]
  %v8407 = vld [vmem:[%s6 + $0x18] sm:$0xff]
  %v8408 = vld [vmem:[%s6 + $0x20] sm:$0xff]
  %v8409 = vld [vmem:[%s6 + $0x28] sm:$0xff]
  %v8410 = vld [vmem:[%s6 + $0x30] sm:$0xff]
  %v8411 = vld [vmem:[%s6 + $0x38] sm:$0xff]
  %v8412 = vld [vmem:[%s6 + $0x40] sm:$0xff]
  %v8413 = vld [vmem:[%s6 + $0x48] sm:$0xff]
  %v8414 = vld [vmem:[%s6 + $0x50] sm:$0xff]
  %v8415 = vld [vmem:[%s6 + $0x58] sm:$0xff]
  %v8416 = vld [vmem:[%s6 + $0x60] sm:$0xff]
  %v8417 = vld [vmem:[%s6 + $0x68] sm:$0xff]
  %v8418 = vld [vmem:[%s6 + $0x70] sm:$0xff]
  %v8419 = vld [vmem:[%s6 + $0x78] sm:$0xff]
  %v8420 = vld [vmem:[%s6 + $0x80] sm:$0xff]
  %v8421 = vld [vmem:[%s6 + $0x88] sm:$0xff]
  %v8422 = vld [vmem:[%s6 + $0x90] sm:$0xff]
  %v8423 = vld [vmem:[%s6 + $0x98] sm:$0xff]
  %v8424 = vld [vmem:[%s6 + $0xa0] sm:$0xff]
  %v8425 = vld [vmem:[%s6 + $0xa8] sm:$0xff]
  %v8426 = vld [vmem:[%s6 + $0xb0] sm:$0xff]
  %v8427 = vld [vmem:[%s6 + $0xb8] sm:$0xff]
  %v8428 = vld [vmem:[%s6 + $0xc0] sm:$0xff]
  %v8429 = vld [vmem:[%s6 + $0xc8] sm:$0xff]
  %v8430 = vld [vmem:[%s6 + $0xd0] sm:$0xff]
  %v8431 = vld [vmem:[%s6 + $0xd8] sm:$0xff]
  %v8432 = vld [vmem:[%s6 + $0xe0] sm:$0xff]
  %v8433 = vld [vmem:[%s6 + $0xe8] sm:$0xff]
  %v8434 = vld [vmem:[%s6 + $0xf0] sm:$0xff]
  %v8435 = vld [vmem:[%s6 + $0xf8] sm:$0xff]
  %v8436 = vld [vmem:[%s6 + $0x100] sm:$0xff]
  %v8437 = vld [vmem:[%s6 + $0x108] sm:$0xff]
  %v8438 = vld [vmem:[%s6 + $0x110] sm:$0xff]
  %v8439 = vld [vmem:[%s6 + $0x118] sm:$0xff]
  %v8440 = vld [vmem:[%s6 + $0x120] sm:$0xff]
  %v8441 = vld [vmem:[%s6 + $0x128] sm:$0xff]
  %v8442 = vld [vmem:[%s6 + $0x130] sm:$0xff]
  %v8443 = vld [vmem:[%s6 + $0x138] sm:$0xff]
  %v8444 = vld [vmem:[%s6 + $0x140] sm:$0xff]
  %v8445 = vld [vmem:[%s6 + $0x148] sm:$0xff]
  %v8446 = vld [vmem:[%s6 + $0x150] sm:$0xff]
  %v8447 = vld [vmem:[%s6 + $0x158] sm:$0xff]
  %v8448 = vld [vmem:[%s6 + $0x160] sm:$0xff]
  %v8449 = vld [vmem:[%s6 + $0x168] sm:$0xff]
  %v8450 = vld [vmem:[%s6 + $0x170] sm:$0xff]
  %v8451 = vld [vmem:[%s6 + $0x178] sm:$0xff]
  %v8452 = vld [vmem:[%s6 + $0x180] sm:$0xff]
  %v8453 = vld [vmem:[%s6 + $0x188] sm:$0xff]
  %v8454 = vld [vmem:[%s6 + $0x190] sm:$0xff]
  %v8455 = vld [vmem:[%s6 + $0x198] sm:$0xff]
  %v8456 = vld [vmem:[%s6 + $0x1a0] sm:$0xff]
  %v8457 = vld [vmem:[%s6 + $0x1a8] sm:$0xff]
  %v8458 = vld [vmem:[%s6 + $0x1b0] sm:$0xff]
  %v8459 = vld [vmem:[%s6 + $0x1b8] sm:$0xff]
  %v8460 = vld [vmem:[%s6 + $0x1c0] sm:$0xff]
  %v8461 = vld [vmem:[%s6 + $0x1c8] sm:$0xff]
  %v8462 = vld [vmem:[%s6 + $0x1d0] sm:$0xff]
  %v8463 = vld [vmem:[%s6 + $0x1d8] sm:$0xff]
  %v8464 = vld [vmem:[%s6 + $0x1e0] sm:$0xff]
  %v8465 = vld [vmem:[%s6 + $0x1e8] sm:$0xff]
  %v8466 = vld [vmem:[%s6 + $0x1f0] sm:$0xff]
  %v8467 = vld [vmem:[%s6 + $0x1f8] sm:$0xff]
  %v8468 = vld [vmem:[%s6 + $0x200] sm:$0xff]
  %v8469 = vld [vmem:[%s6 + $0x208] sm:$0xff]
  %v8470 = vld [vmem:[%s6 + $0x210] sm:$0xff]
  %v8471 = vld [vmem:[%s6 + $0x218] sm:$0xff]
  %v8472 = vld [vmem:[%s6 + $0x220] sm:$0xff]
  %v8473 = vld [vmem:[%s6 + $0x228] sm:$0xff]
  %v8474 = vld [vmem:[%s6 + $0x230] sm:$0xff]
  %v8475 = vld [vmem:[%s6 + $0x238] sm:$0xff]
  %v8476 = vld [vmem:[%s6 + $0x240] sm:$0xff]
  %v8477 = vld [vmem:[%s6 + $0x248] sm:$0xff]
  %v8478 = vld [vmem:[%s6 + $0x250] sm:$0xff]
  %v8479 = vld [vmem:[%s6 + $0x258] sm:$0xff]
  %v8480 = vld [vmem:[%s6 + $0x260] sm:$0xff]
  %v8481 = vld [vmem:[%s6 + $0x268] sm:$0xff]
  %v8482 = vld [vmem:[%s6 + $0x270] sm:$0xff]
  %v8483 = vld [vmem:[%s6 + $0x278] sm:$0xff]
  %v8484 = vld [vmem:[%s6 + $0x280] sm:$0xff]
  %v8485 = vld [vmem:[%s6 + $0x288] sm:$0xff]
  %v8486 = vld [vmem:[%s6 + $0x290] sm:$0xff]
  %v8487 = vld [vmem:[%s6 + $0x298] sm:$0xff]
  %v8488 = vld [vmem:[%s6 + $0x2a0] sm:$0xff]
  %v8489 = vld [vmem:[%s6 + $0x2a8] sm:$0xff]
  %v8490 = vld [vmem:[%s6 + $0x2b0] sm:$0xff]
  %v8491 = vld [vmem:[%s6 + $0x2b8] sm:$0xff]
  %v8492 = vld [vmem:[%s6 + $0x2c0] sm:$0xff]
  %v8493 = vld [vmem:[%s6 + $0x2c8] sm:$0xff]
  %v8494 = vld [vmem:[%s6 + $0x2d0] sm:$0xff]
  %v8495 = vld [vmem:[%s6 + $0x2d8] sm:$0xff]
  %v8496 = vld [vmem:[%s6 + $0x2e0] sm:$0xff]
  %v8497 = vld [vmem:[%s6 + $0x2e8] sm:$0xff]
  %v8498 = vld [vmem:[%s6 + $0x2f0] sm:$0xff]
  %v8499 = vld [vmem:[%s6 + $0x2f8] sm:$0xff]
  %8501 = vset.pattern.permute.xlu0 0
  %8502 = vperm.xlu0 %8501, %v8404
  %v8503 = vpop.permute.xlu0 %8502
  %8506 = vset.pattern.permute.xlu0 0
  %8507 = vperm.xlu0 %8506, %v8405
  %v8508 = vpop.permute.xlu0 %8507
  %8511 = vset.pattern.permute.xlu0 0
  %8512 = vperm.xlu0 %8511, %v8406
  %v8513 = vpop.permute.xlu0 %8512
  %8516 = vset.pattern.permute.xlu0 0
  %8517 = vperm.xlu0 %8516, %v8407
  %v8518 = vpop.permute.xlu0 %8517
  %8521 = vset.pattern.permute.xlu0 0
  %8522 = vperm.xlu0 %8521, %v8408
  %v8523 = vpop.permute.xlu0 %8522
  %8526 = vset.pattern.permute.xlu0 0
  %8527 = vperm.xlu0 %8526, %v8409
  %v8528 = vpop.permute.xlu0 %8527
  %8531 = vset.pattern.permute.xlu0 0
  %8532 = vperm.xlu0 %8531, %v8410
  %v8533 = vpop.permute.xlu0 %8532
  %8536 = vset.pattern.permute.xlu0 0
  %8537 = vperm.xlu0 %8536, %v8411
  %v8538 = vpop.permute.xlu0 %8537
  %8541 = vset.pattern.permute.xlu0 0
  %8542 = vperm.xlu0 %8541, %v8412
  %v8543 = vpop.permute.xlu0 %8542
  %8546 = vset.pattern.permute.xlu0 0
  %8547 = vperm.xlu0 %8546, %v8413
  %v8548 = vpop.permute.xlu0 %8547
  %8551 = vset.pattern.permute.xlu0 0
  %8552 = vperm.xlu0 %8551, %v8414
  %v8553 = vpop.permute.xlu0 %8552
  %8556 = vset.pattern.permute.xlu0 0
  %8557 = vperm.xlu0 %8556, %v8415
  %v8558 = vpop.permute.xlu0 %8557
  %8561 = vset.pattern.permute.xlu0 0
  %8562 = vperm.xlu0 %8561, %v8416
  %v8563 = vpop.permute.xlu0 %8562
  %8566 = vset.pattern.permute.xlu0 0
  %8567 = vperm.xlu0 %8566, %v8417
  %v8568 = vpop.permute.xlu0 %8567
  %8571 = vset.pattern.permute.xlu0 0
  %8572 = vperm.xlu0 %8571, %v8418
  %v8573 = vpop.permute.xlu0 %8572
  %8576 = vset.pattern.permute.xlu0 0
  %8577 = vperm.xlu0 %8576, %v8419
  %v8578 = vpop.permute.xlu0 %8577
  %8581 = vset.pattern.permute.xlu0 0
  %8582 = vperm.xlu0 %8581, %v8420
  %v8583 = vpop.permute.xlu0 %8582
  %8586 = vset.pattern.permute.xlu0 0
  %8587 = vperm.xlu0 %8586, %v8421
  %v8588 = vpop.permute.xlu0 %8587
  %8591 = vset.pattern.permute.xlu0 0
  %8592 = vperm.xlu0 %8591, %v8422
  %v8593 = vpop.permute.xlu0 %8592
  %8596 = vset.pattern.permute.xlu0 0
  %8597 = vperm.xlu0 %8596, %v8423
  %v8598 = vpop.permute.xlu0 %8597
  %8601 = vset.pattern.permute.xlu0 0
  %8602 = vperm.xlu0 %8601, %v8424
  %v8603 = vpop.permute.xlu0 %8602
  %8606 = vset.pattern.permute.xlu0 0
  %8607 = vperm.xlu0 %8606, %v8425
  %v8608 = vpop.permute.xlu0 %8607
  %8611 = vset.pattern.permute.xlu0 0
  %8612 = vperm.xlu0 %8611, %v8426
  %v8613 = vpop.permute.xlu0 %8612
  %8616 = vset.pattern.permute.xlu0 0
  %8617 = vperm.xlu0 %8616, %v8427
  %v8618 = vpop.permute.xlu0 %8617
  %8621 = vset.pattern.permute.xlu0 0
  %8622 = vperm.xlu0 %8621, %v8428
  %v8623 = vpop.permute.xlu0 %8622
  %8626 = vset.pattern.permute.xlu0 0
  %8627 = vperm.xlu0 %8626, %v8429
  %v8628 = vpop.permute.xlu0 %8627
  %8631 = vset.pattern.permute.xlu0 0
  %8632 = vperm.xlu0 %8631, %v8430
  %v8633 = vpop.permute.xlu0 %8632
  %8636 = vset.pattern.permute.xlu0 0
  %8637 = vperm.xlu0 %8636, %v8431
  %v8638 = vpop.permute.xlu0 %8637
  %8641 = vset.pattern.permute.xlu0 0
  %8642 = vperm.xlu0 %8641, %v8432
  %v8643 = vpop.permute.xlu0 %8642
  %8646 = vset.pattern.permute.xlu0 0
  %8647 = vperm.xlu0 %8646, %v8433
  %v8648 = vpop.permute.xlu0 %8647
  %8651 = vset.pattern.permute.xlu0 0
  %8652 = vperm.xlu0 %8651, %v8434
  %v8653 = vpop.permute.xlu0 %8652
  %8656 = vset.pattern.permute.xlu0 0
  %8657 = vperm.xlu0 %8656, %v8435
  %v8658 = vpop.permute.xlu0 %8657
  %8661 = vset.pattern.permute.xlu0 0
  %8662 = vperm.xlu0 %8661, %v8436
  %v8663 = vpop.permute.xlu0 %8662
  %8666 = vset.pattern.permute.xlu0 0
  %8667 = vperm.xlu0 %8666, %v8437
  %v8668 = vpop.permute.xlu0 %8667
  %8671 = vset.pattern.permute.xlu0 0
  %8672 = vperm.xlu0 %8671, %v8438
  %v8673 = vpop.permute.xlu0 %8672
  %8676 = vset.pattern.permute.xlu0 0
  %8677 = vperm.xlu0 %8676, %v8439
  %v8678 = vpop.permute.xlu0 %8677
  %8681 = vset.pattern.permute.xlu0 0
  %8682 = vperm.xlu0 %8681, %v8440
  %v8683 = vpop.permute.xlu0 %8682
  %8686 = vset.pattern.permute.xlu0 0
  %8687 = vperm.xlu0 %8686, %v8441
  %v8688 = vpop.permute.xlu0 %8687
  %8691 = vset.pattern.permute.xlu0 0
  %8692 = vperm.xlu0 %8691, %v8442
  %v8693 = vpop.permute.xlu0 %8692
  %8696 = vset.pattern.permute.xlu0 0
  %8697 = vperm.xlu0 %8696, %v8443
  %v8698 = vpop.permute.xlu0 %8697
  %8701 = vset.pattern.permute.xlu0 0
  %8702 = vperm.xlu0 %8701, %v8444
  %v8703 = vpop.permute.xlu0 %8702
  %8706 = vset.pattern.permute.xlu0 0
  %8707 = vperm.xlu0 %8706, %v8445
  %v8708 = vpop.permute.xlu0 %8707
  %8711 = vset.pattern.permute.xlu0 0
  %8712 = vperm.xlu0 %8711, %v8446
  %v8713 = vpop.permute.xlu0 %8712
  %8716 = vset.pattern.permute.xlu0 0
  %8717 = vperm.xlu0 %8716, %v8447
  %v8718 = vpop.permute.xlu0 %8717
  %8721 = vset.pattern.permute.xlu0 0
  %8722 = vperm.xlu0 %8721, %v8448
  %v8723 = vpop.permute.xlu0 %8722
  %8726 = vset.pattern.permute.xlu0 0
  %8727 = vperm.xlu0 %8726, %v8449
  %v8728 = vpop.permute.xlu0 %8727
  %8731 = vset.pattern.permute.xlu0 0
  %8732 = vperm.xlu0 %8731, %v8450
  %v8733 = vpop.permute.xlu0 %8732
  %8736 = vset.pattern.permute.xlu0 0
  %8737 = vperm.xlu0 %8736, %v8451
  %v8738 = vpop.permute.xlu0 %8737
  %8741 = vset.pattern.permute.xlu0 0
  %8742 = vperm.xlu0 %8741, %v8452
  %v8743 = vpop.permute.xlu0 %8742
  %8746 = vset.pattern.permute.xlu0 0
  %8747 = vperm.xlu0 %8746, %v8453
  %v8748 = vpop.permute.xlu0 %8747
  %8751 = vset.pattern.permute.xlu0 0
  %8752 = vperm.xlu0 %8751, %v8454
  %v8753 = vpop.permute.xlu0 %8752
  %8756 = vset.pattern.permute.xlu0 0
  %8757 = vperm.xlu0 %8756, %v8455
  %v8758 = vpop.permute.xlu0 %8757
  %8761 = vset.pattern.permute.xlu0 0
  %8762 = vperm.xlu0 %8761, %v8456
  %v8763 = vpop.permute.xlu0 %8762
  %8766 = vset.pattern.permute.xlu0 0
  %8767 = vperm.xlu0 %8766, %v8457
  %v8768 = vpop.permute.xlu0 %8767
  %8771 = vset.pattern.permute.xlu0 0
  %8772 = vperm.xlu0 %8771, %v8458
  %v8773 = vpop.permute.xlu0 %8772
  %8776 = vset.pattern.permute.xlu0 0
  %8777 = vperm.xlu0 %8776, %v8459
  %v8778 = vpop.permute.xlu0 %8777
  %8781 = vset.pattern.permute.xlu0 0
  %8782 = vperm.xlu0 %8781, %v8460
  %v8783 = vpop.permute.xlu0 %8782
  %8786 = vset.pattern.permute.xlu0 0
  %8787 = vperm.xlu0 %8786, %v8461
  %v8788 = vpop.permute.xlu0 %8787
  %8791 = vset.pattern.permute.xlu0 0
  %8792 = vperm.xlu0 %8791, %v8462
  %v8793 = vpop.permute.xlu0 %8792
  %8796 = vset.pattern.permute.xlu0 0
  %8797 = vperm.xlu0 %8796, %v8463
  %v8798 = vpop.permute.xlu0 %8797
  %8801 = vset.pattern.permute.xlu0 0
  %8802 = vperm.xlu0 %8801, %v8464
  %v8803 = vpop.permute.xlu0 %8802
  %8806 = vset.pattern.permute.xlu0 0
  %8807 = vperm.xlu0 %8806, %v8465
  %v8808 = vpop.permute.xlu0 %8807
  %8811 = vset.pattern.permute.xlu0 0
  %8812 = vperm.xlu0 %8811, %v8466
  %v8813 = vpop.permute.xlu0 %8812
  %8816 = vset.pattern.permute.xlu0 0
  %8817 = vperm.xlu0 %8816, %v8467
  %v8818 = vpop.permute.xlu0 %8817
  %8821 = vset.pattern.permute.xlu0 0
  %8822 = vperm.xlu0 %8821, %v8468
  %v8823 = vpop.permute.xlu0 %8822
  %8826 = vset.pattern.permute.xlu0 0
  %8827 = vperm.xlu0 %8826, %v8469
  %v8828 = vpop.permute.xlu0 %8827
  %8831 = vset.pattern.permute.xlu0 0
  %8832 = vperm.xlu0 %8831, %v8470
  %v8833 = vpop.permute.xlu0 %8832
  %8836 = vset.pattern.permute.xlu0 0
  %8837 = vperm.xlu0 %8836, %v8471
  %v8838 = vpop.permute.xlu0 %8837
  %8841 = vset.pattern.permute.xlu0 0
  %8842 = vperm.xlu0 %8841, %v8472
  %v8843 = vpop.permute.xlu0 %8842
  %8846 = vset.pattern.permute.xlu0 0
  %8847 = vperm.xlu0 %8846, %v8473
  %v8848 = vpop.permute.xlu0 %8847
  %8851 = vset.pattern.permute.xlu0 0
  %8852 = vperm.xlu0 %8851, %v8474
  %v8853 = vpop.permute.xlu0 %8852
  %8856 = vset.pattern.permute.xlu0 0
  %8857 = vperm.xlu0 %8856, %v8475
  %v8858 = vpop.permute.xlu0 %8857
  %8861 = vset.pattern.permute.xlu0 0
  %8862 = vperm.xlu0 %8861, %v8476
  %v8863 = vpop.permute.xlu0 %8862
  %8866 = vset.pattern.permute.xlu0 0
  %8867 = vperm.xlu0 %8866, %v8477
  %v8868 = vpop.permute.xlu0 %8867
  %8871 = vset.pattern.permute.xlu0 0
  %8872 = vperm.xlu0 %8871, %v8478
  %v8873 = vpop.permute.xlu0 %8872
  %8876 = vset.pattern.permute.xlu0 0
  %8877 = vperm.xlu0 %8876, %v8479
  %v8878 = vpop.permute.xlu0 %8877
  %8881 = vset.pattern.permute.xlu0 0
  %8882 = vperm.xlu0 %8881, %v8480
  %v8883 = vpop.permute.xlu0 %8882
  %8886 = vset.pattern.permute.xlu0 0
  %8887 = vperm.xlu0 %8886, %v8481
  %v8888 = vpop.permute.xlu0 %8887
  %8891 = vset.pattern.permute.xlu0 0
  %8892 = vperm.xlu0 %8891, %v8482
  %v8893 = vpop.permute.xlu0 %8892
  %8896 = vset.pattern.permute.xlu0 0
  %8897 = vperm.xlu0 %8896, %v8483
  %v8898 = vpop.permute.xlu0 %8897
  %8901 = vset.pattern.permute.xlu0 0
  %8902 = vperm.xlu0 %8901, %v8484
  %v8903 = vpop.permute.xlu0 %8902
  %8906 = vset.pattern.permute.xlu0 0
  %8907 = vperm.xlu0 %8906, %v8485
  %v8908 = vpop.permute.xlu0 %8907
  %8911 = vset.pattern.permute.xlu0 0
  %8912 = vperm.xlu0 %8911, %v8486
  %v8913 = vpop.permute.xlu0 %8912
  %8916 = vset.pattern.permute.xlu0 0
  %8917 = vperm.xlu0 %8916, %v8487
  %v8918 = vpop.permute.xlu0 %8917
  %8921 = vset.pattern.permute.xlu0 0
  %8922 = vperm.xlu0 %8921, %v8488
  %v8923 = vpop.permute.xlu0 %8922
  %8926 = vset.pattern.permute.xlu0 0
  %8927 = vperm.xlu0 %8926, %v8489
  %v8928 = vpop.permute.xlu0 %8927
  %8931 = vset.pattern.permute.xlu0 0
  %8932 = vperm.xlu0 %8931, %v8490
  %v8933 = vpop.permute.xlu0 %8932
  %8936 = vset.pattern.permute.xlu0 0
  %8937 = vperm.xlu0 %8936, %v8491
  %v8938 = vpop.permute.xlu0 %8937
  %8941 = vset.pattern.permute.xlu0 0
  %8942 = vperm.xlu0 %8941, %v8492
  %v8943 = vpop.permute.xlu0 %8942
  %8946 = vset.pattern.permute.xlu0 0
  %8947 = vperm.xlu0 %8946, %v8493
  %v8948 = vpop.permute.xlu0 %8947
  %8951 = vset.pattern.permute.xlu0 0
  %8952 = vperm.xlu0 %8951, %v8494
  %v8953 = vpop.permute.xlu0 %8952
  %8956 = vset.pattern.permute.xlu0 0
  %8957 = vperm.xlu0 %8956, %v8495
  %v8958 = vpop.permute.xlu0 %8957
  %8961 = vset.pattern.permute.xlu0 0
  %8962 = vperm.xlu0 %8961, %v8496
  %v8963 = vpop.permute.xlu0 %8962
  %8966 = vset.pattern.permute.xlu0 0
  %8967 = vperm.xlu0 %8966, %v8497
  %v8968 = vpop.permute.xlu0 %8967
  %8971 = vset.pattern.permute.xlu0 0
  %8972 = vperm.xlu0 %8971, %v8498
  %v8973 = vpop.permute.xlu0 %8972
  %8976 = vset.pattern.permute.xlu0 0
  %8977 = vperm.xlu0 %8976, %v8499
  %v8978 = vpop.permute.xlu0 %8977
  %v8980 = vadd.f32 %v8308, %v8503
  %v8981 = vadd.f32 %v8309, %v8508
  %v8982 = vadd.f32 %v8310, %v8513
  %v8983 = vadd.f32 %v8311, %v8518
  %v8984 = vadd.f32 %v8312, %v8523
  %v8985 = vadd.f32 %v8313, %v8528
  %v8986 = vadd.f32 %v8314, %v8533
  %v8987 = vadd.f32 %v8315, %v8538
  %v8988 = vadd.f32 %v8316, %v8543
  %v8989 = vadd.f32 %v8317, %v8548
  %v8990 = vadd.f32 %v8318, %v8553
  %v8991 = vadd.f32 %v8319, %v8558
  %v8992 = vadd.f32 %v8320, %v8563
  %v8993 = vadd.f32 %v8321, %v8568
  %v8994 = vadd.f32 %v8322, %v8573
  %v8995 = vadd.f32 %v8323, %v8578
  %v8996 = vadd.f32 %v8324, %v8583
  %v8997 = vadd.f32 %v8325, %v8588
  %v8998 = vadd.f32 %v8326, %v8593
  %v8999 = vadd.f32 %v8327, %v8598
  %v9000 = vadd.f32 %v8328, %v8603
  %v9001 = vadd.f32 %v8329, %v8608
  %v9002 = vadd.f32 %v8330, %v8613
  %v9003 = vadd.f32 %v8331, %v8618
  %v9004 = vadd.f32 %v8332, %v8623
  %v9005 = vadd.f32 %v8333, %v8628
  %v9006 = vadd.f32 %v8334, %v8633
  %v9007 = vadd.f32 %v8335, %v8638
  %v9008 = vadd.f32 %v8336, %v8643
  %v9009 = vadd.f32 %v8337, %v8648
  %v9010 = vadd.f32 %v8338, %v8653
  %v9011 = vadd.f32 %v8339, %v8658
  %v9012 = vadd.f32 %v8340, %v8663
  %v9013 = vadd.f32 %v8341, %v8668
  %v9014 = vadd.f32 %v8342, %v8673
  %v9015 = vadd.f32 %v8343, %v8678
  %v9016 = vadd.f32 %v8344, %v8683
  %v9017 = vadd.f32 %v8345, %v8688
  %v9018 = vadd.f32 %v8346, %v8693
  %v9019 = vadd.f32 %v8347, %v8698
  %v9020 = vadd.f32 %v8348, %v8703
  %v9021 = vadd.f32 %v8349, %v8708
  %v9022 = vadd.f32 %v8350, %v8713
  %v9023 = vadd.f32 %v8351, %v8718
  %v9024 = vadd.f32 %v8352, %v8723
  %v9025 = vadd.f32 %v8353, %v8728
  %v9026 = vadd.f32 %v8354, %v8733
  %v9027 = vadd.f32 %v8355, %v8738
  %v9028 = vadd.f32 %v8356, %v8743
  %v9029 = vadd.f32 %v8357, %v8748
  %v9030 = vadd.f32 %v8358, %v8753
  %v9031 = vadd.f32 %v8359, %v8758
  %v9032 = vadd.f32 %v8360, %v8763
  %v9033 = vadd.f32 %v8361, %v8768
  %v9034 = vadd.f32 %v8362, %v8773
  %v9035 = vadd.f32 %v8363, %v8778
  %v9036 = vadd.f32 %v8364, %v8783
  %v9037 = vadd.f32 %v8365, %v8788
  %v9038 = vadd.f32 %v8366, %v8793
  %v9039 = vadd.f32 %v8367, %v8798
  %v9040 = vadd.f32 %v8368, %v8803
  %v9041 = vadd.f32 %v8369, %v8808
  %v9042 = vadd.f32 %v8370, %v8813
  %v9043 = vadd.f32 %v8371, %v8818
  %v9044 = vadd.f32 %v8372, %v8823
  %v9045 = vadd.f32 %v8373, %v8828
  %v9046 = vadd.f32 %v8374, %v8833
  %v9047 = vadd.f32 %v8375, %v8838
  %v9048 = vadd.f32 %v8376, %v8843
  %v9049 = vadd.f32 %v8377, %v8848
  %v9050 = vadd.f32 %v8378, %v8853
  %v9051 = vadd.f32 %v8379, %v8858
  %v9052 = vadd.f32 %v8380, %v8863
  %v9053 = vadd.f32 %v8381, %v8868
  %v9054 = vadd.f32 %v8382, %v8873
  %v9055 = vadd.f32 %v8383, %v8878
  %v9056 = vadd.f32 %v8384, %v8883
  %v9057 = vadd.f32 %v8385, %v8888
  %v9058 = vadd.f32 %v8386, %v8893
  %v9059 = vadd.f32 %v8387, %v8898
  %v9060 = vadd.f32 %v8388, %v8903
  %v9061 = vadd.f32 %v8389, %v8908
  %v9062 = vadd.f32 %v8390, %v8913
  %v9063 = vadd.f32 %v8391, %v8918
  %v9064 = vadd.f32 %v8392, %v8923
  %v9065 = vadd.f32 %v8393, %v8928
  %v9066 = vadd.f32 %v8394, %v8933
  %v9067 = vadd.f32 %v8395, %v8938
  %v9068 = vadd.f32 %v8396, %v8943
  %v9069 = vadd.f32 %v8397, %v8948
  %v9070 = vadd.f32 %v8398, %v8953
  %v9071 = vadd.f32 %v8399, %v8958
  %v9072 = vadd.f32 %v8400, %v8963
  %v9073 = vadd.f32 %v8401, %v8968
  %v9074 = vadd.f32 %v8402, %v8973
  %v9075 = vadd.f32 %v8403, %v8978
  %v9076 = vmax.f32 %v8980, 0.0
  %v9077 = vmax.f32 %v8981, 0.0
  %v9078 = vmax.f32 %v8982, 0.0
  %v9079 = vmax.f32 %v8983, 0.0
  %v9080 = vmax.f32 %v8984, 0.0
  %v9081 = vmax.f32 %v8985, 0.0
  %v9082 = vmax.f32 %v8986, 0.0
  %v9083 = vmax.f32 %v8987, 0.0
  %v9084 = vmax.f32 %v8988, 0.0
  %v9085 = vmax.f32 %v8989, 0.0
  %v9086 = vmax.f32 %v8990, 0.0
  %v9087 = vmax.f32 %v8991, 0.0
  %v9088 = vmax.f32 %v8992, 0.0
  %v9089 = vmax.f32 %v8993, 0.0
  %v9090 = vmax.f32 %v8994, 0.0
  %v9091 = vmax.f32 %v8995, 0.0
  %v9092 = vmax.f32 %v8996, 0.0
  %v9093 = vmax.f32 %v8997, 0.0
  %v9094 = vmax.f32 %v8998, 0.0
  %v9095 = vmax.f32 %v8999, 0.0
  %v9096 = vmax.f32 %v9000, 0.0
  %v9097 = vmax.f32 %v9001, 0.0
  %v9098 = vmax.f32 %v9002, 0.0
  %v9099 = vmax.f32 %v9003, 0.0
  %v9100 = vmax.f32 %v9004, 0.0
  %v9101 = vmax.f32 %v9005, 0.0
  %v9102 = vmax.f32 %v9006, 0.0
  %v9103 = vmax.f32 %v9007, 0.0
  %v9104 = vmax.f32 %v9008, 0.0
  %v9105 = vmax.f32 %v9009, 0.0
  %v9106 = vmax.f32 %v9010, 0.0
  %v9107 = vmax.f32 %v9011, 0.0
  %v9108 = vmax.f32 %v9012, 0.0
  %v9109 = vmax.f32 %v9013, 0.0
  %v9110 = vmax.f32 %v9014, 0.0
  %v9111 = vmax.f32 %v9015, 0.0
  %v9112 = vmax.f32 %v9016, 0.0
  %v9113 = vmax.f32 %v9017, 0.0
  %v9114 = vmax.f32 %v9018, 0.0
  %v9115 = vmax.f32 %v9019, 0.0
  %v9116 = vmax.f32 %v9020, 0.0
  %v9117 = vmax.f32 %v9021, 0.0
  %v9118 = vmax.f32 %v9022, 0.0
  %v9119 = vmax.f32 %v9023, 0.0
  %v9120 = vmax.f32 %v9024, 0.0
  %v9121 = vmax.f32 %v9025, 0.0
  %v9122 = vmax.f32 %v9026, 0.0
  %v9123 = vmax.f32 %v9027, 0.0
  %v9124 = vmax.f32 %v9028, 0.0
  %v9125 = vmax.f32 %v9029, 0.0
  %v9126 = vmax.f32 %v9030, 0.0
  %v9127 = vmax.f32 %v9031, 0.0
  %v9128 = vmax.f32 %v9032, 0.0
  %v9129 = vmax.f32 %v9033, 0.0
  %v9130 = vmax.f32 %v9034, 0.0
  %v9131 = vmax.f32 %v9035, 0.0
  %v9132 = vmax.f32 %v9036, 0.0
  %v9133 = vmax.f32 %v9037, 0.0
  %v9134 = vmax.f32 %v9038, 0.0
  %v9135 = vmax.f32 %v9039, 0.0
  %v9136 = vmax.f32 %v9040, 0.0
  %v9137 = vmax.f32 %v9041, 0.0
  %v9138 = vmax.f32 %v9042, 0.0
  %v9139 = vmax.f32 %v9043, 0.0
  %v9140 = vmax.f32 %v9044, 0.0
  %v9141 = vmax.f32 %v9045, 0.0
  %v9142 = vmax.f32 %v9046, 0.0
  %v9143 = vmax.f32 %v9047, 0.0
  %v9144 = vmax.f32 %v9048, 0.0
  %v9145 = vmax.f32 %v9049, 0.0
  %v9146 = vmax.f32 %v9050, 0.0
  %v9147 = vmax.f32 %v9051, 0.0
  %v9148 = vmax.f32 %v9052, 0.0
  %v9149 = vmax.f32 %v9053, 0.0
  %v9150 = vmax.f32 %v9054, 0.0
  %v9151 = vmax.f32 %v9055, 0.0
  %v9152 = vmax.f32 %v9056, 0.0
  %v9153 = vmax.f32 %v9057, 0.0
  %v9154 = vmax.f32 %v9058, 0.0
  %v9155 = vmax.f32 %v9059, 0.0
  %v9156 = vmax.f32 %v9060, 0.0
  %v9157 = vmax.f32 %v9061, 0.0
  %v9158 = vmax.f32 %v9062, 0.0
  %v9159 = vmax.f32 %v9063, 0.0
  %v9160 = vmax.f32 %v9064, 0.0
  %v9161 = vmax.f32 %v9065, 0.0
  %v9162 = vmax.f32 %v9066, 0.0
  %v9163 = vmax.f32 %v9067, 0.0
  %v9164 = vmax.f32 %v9068, 0.0
  %v9165 = vmax.f32 %v9069, 0.0
  %v9166 = vmax.f32 %v9070, 0.0
  %v9167 = vmax.f32 %v9071, 0.0
  %v9168 = vmax.f32 %v9072, 0.0
  %v9169 = vmax.f32 %v9073, 0.0
  %v9170 = vmax.f32 %v9074, 0.0
  %v9171 = vmax.f32 %v9075, 0.0
  %v9172 = vpack.c.bf16 %v9077, %v9076
  %v9173 = vpack.c.bf16 %v9079, %v9078
  %v9174 = vpack.c.bf16 %v9081, %v9080
  %v9175 = vpack.c.bf16 %v9083, %v9082
  %v9176 = vpack.c.bf16 %v9085, %v9084
  %v9177 = vpack.c.bf16 %v9087, %v9086
  %v9178 = vpack.c.bf16 %v9089, %v9088
  %v9179 = vpack.c.bf16 %v9091, %v9090
  %v9180 = vpack.c.bf16 %v9093, %v9092
  %v9181 = vpack.c.bf16 %v9095, %v9094
  %v9182 = vpack.c.bf16 %v9097, %v9096
  %v9183 = vpack.c.bf16 %v9099, %v9098
  %v9184 = vpack.c.bf16 %v9101, %v9100
  %v9185 = vpack.c.bf16 %v9103, %v9102
  %v9186 = vpack.c.bf16 %v9105, %v9104
  %v9187 = vpack.c.bf16 %v9107, %v9106
  %v9188 = vpack.c.bf16 %v9109, %v9108
  %v9189 = vpack.c.bf16 %v9111, %v9110
  %v9190 = vpack.c.bf16 %v9113, %v9112
  %v9191 = vpack.c.bf16 %v9115, %v9114
  %v9192 = vpack.c.bf16 %v9117, %v9116
  %v9193 = vpack.c.bf16 %v9119, %v9118
  %v9194 = vpack.c.bf16 %v9121, %v9120
  %v9195 = vpack.c.bf16 %v9123, %v9122
  %v9196 = vpack.c.bf16 %v9125, %v9124
  %v9197 = vpack.c.bf16 %v9127, %v9126
  %v9198 = vpack.c.bf16 %v9129, %v9128
  %v9199 = vpack.c.bf16 %v9131, %v9130
  %v9200 = vpack.c.bf16 %v9133, %v9132
  %v9201 = vpack.c.bf16 %v9135, %v9134
  %v9202 = vpack.c.bf16 %v9137, %v9136
  %v9203 = vpack.c.bf16 %v9139, %v9138
  %v9204 = vpack.c.bf16 %v9141, %v9140
  %v9205 = vpack.c.bf16 %v9143, %v9142
  %v9206 = vpack.c.bf16 %v9145, %v9144
  %v9207 = vpack.c.bf16 %v9147, %v9146
  %v9208 = vpack.c.bf16 %v9149, %v9148
  %v9209 = vpack.c.bf16 %v9151, %v9150
  %v9210 = vpack.c.bf16 %v9153, %v9152
  %v9211 = vpack.c.bf16 %v9155, %v9154
  %v9212 = vpack.c.bf16 %v9157, %v9156
  %v9213 = vpack.c.bf16 %v9159, %v9158
  %v9214 = vpack.c.bf16 %v9161, %v9160
  %v9215 = vpack.c.bf16 %v9163, %v9162
  %v9216 = vpack.c.bf16 %v9165, %v9164
  %v9217 = vpack.c.bf16 %v9167, %v9166
  %v9218 = vpack.c.bf16 %v9169, %v9168
  %v9219 = vpack.c.bf16 %v9171, %v9170
  %9220 = vst [vmem:[#allocation3] sm:$0xff] %v9172
  %9221 = vst [vmem:[#allocation3 + $0x8] sm:$0xff] %v9173
  %9222 = vst [vmem:[#allocation3 + $0x10] sm:$0xff] %v9174
  %9223 = vst [vmem:[#allocation3 + $0x18] sm:$0xff] %v9175
  %9224 = vst [vmem:[#allocation3 + $0x20] sm:$0xff] %v9176
  %9225 = vst [vmem:[#allocation3 + $0x28] sm:$0xff] %v9177
  %9226 = vst [vmem:[#allocation3 + $0x30] sm:$0xff] %v9178
  %9227 = vst [vmem:[#allocation3 + $0x38] sm:$0xff] %v9179
  %9228 = vst [vmem:[#allocation3 + $0x40] sm:$0xff] %v9180
  %9229 = vst [vmem:[#allocation3 + $0x48] sm:$0xff] %v9181
  %9230 = vst [vmem:[#allocation3 + $0x50] sm:$0xff] %v9182
  %9231 = vst [vmem:[#allocation3 + $0x58] sm:$0xff] %v9183
  %9232 = vst [vmem:[#allocation3 + $0x60] sm:$0xff] %v9184
  %9233 = vst [vmem:[#allocation3 + $0x68] sm:$0xff] %v9185
  %9234 = vst [vmem:[#allocation3 + $0x70] sm:$0xff] %v9186
  %9235 = vst [vmem:[#allocation3 + $0x78] sm:$0xff] %v9187
  %9236 = vst [vmem:[#allocation3 + $0x80] sm:$0xff] %v9188
  %9237 = vst [vmem:[#allocation3 + $0x88] sm:$0xff] %v9189
  %9238 = vst [vmem:[#allocation3 + $0x90] sm:$0xff] %v9190
  %9239 = vst [vmem:[#allocation3 + $0x98] sm:$0xff] %v9191
  %9240 = vst [vmem:[#allocation3 + $0xa0] sm:$0xff] %v9192
  %9241 = vst [vmem:[#allocation3 + $0xa8] sm:$0xff] %v9193
  %9242 = vst [vmem:[#allocation3 + $0xb0] sm:$0xff] %v9194
  %9243 = vst [vmem:[#allocation3 + $0xb8] sm:$0xff] %v9195
  %9244 = vst [vmem:[#allocation3 + $0xc0] sm:$0xff] %v9196
  %9245 = vst [vmem:[#allocation3 + $0xc8] sm:$0xff] %v9197
  %9246 = vst [vmem:[#allocation3 + $0xd0] sm:$0xff] %v9198
  %9247 = vst [vmem:[#allocation3 + $0xd8] sm:$0xff] %v9199
  %9248 = vst [vmem:[#allocation3 + $0xe0] sm:$0xff] %v9200
  %9249 = vst [vmem:[#allocation3 + $0xe8] sm:$0xff] %v9201
  %9250 = vst [vmem:[#allocation3 + $0xf0] sm:$0xff] %v9202
  %9251 = vst [vmem:[#allocation3 + $0xf8] sm:$0xff] %v9203
  %9252 = vst [vmem:[#allocation3 + $0x100] sm:$0xff] %v9204
  %9253 = vst [vmem:[#allocation3 + $0x108] sm:$0xff] %v9205
  %9254 = vst [vmem:[#allocation3 + $0x110] sm:$0xff] %v9206
  %9255 = vst [vmem:[#allocation3 + $0x118] sm:$0xff] %v9207
  %9256 = vst [vmem:[#allocation3 + $0x120] sm:$0xff] %v9208
  %9257 = vst [vmem:[#allocation3 + $0x128] sm:$0xff] %v9209
  %9258 = vst [vmem:[#allocation3 + $0x130] sm:$0xff] %v9210
  %9259 = vst [vmem:[#allocation3 + $0x138] sm:$0xff] %v9211
  %9260 = vst [vmem:[#allocation3 + $0x140] sm:$0xff] %v9212
  %9261 = vst [vmem:[#allocation3 + $0x148] sm:$0xff] %v9213
  %9262 = vst [vmem:[#allocation3 + $0x150] sm:$0xff] %v9214
  %9263 = vst [vmem:[#allocation3 + $0x158] sm:$0xff] %v9215
  %9264 = vst [vmem:[#allocation3 + $0x160] sm:$0xff] %v9216
  %9265 = vst [vmem:[#allocation3 + $0x168] sm:$0xff] %v9217
  %9266 = vst [vmem:[#allocation3 + $0x170] sm:$0xff] %v9218
  %9267 = vst [vmem:[#allocation3 + $0x178] sm:$0xff] %v9219
  %v9268 = vld [vmem:[%s7] sm:$0xff]
  %v9269 = vld [vmem:[%s7 + $0x8] sm:$0xff]
  %v9270 = vld [vmem:[%s7 + $0x10] sm:$0xff]
  %v9271 = vld [vmem:[%s7 + $0x18] sm:$0xff]
  %v9272 = vld [vmem:[%s7 + $0x20] sm:$0xff]
  %v9273 = vld [vmem:[%s7 + $0x28] sm:$0xff]
  %v9274 = vld [vmem:[%s7 + $0x30] sm:$0xff]
  %v9275 = vld [vmem:[%s7 + $0x38] sm:$0xff]
  %v9276 = vld [vmem:[%s7 + $0x40] sm:$0xff]
  %v9277 = vld [vmem:[%s7 + $0x48] sm:$0xff]
  %v9278 = vld [vmem:[%s7 + $0x50] sm:$0xff]
  %v9279 = vld [vmem:[%s7 + $0x58] sm:$0xff]
  %v9280 = vld [vmem:[%s7 + $0x60] sm:$0xff]
  %v9281 = vld [vmem:[%s7 + $0x68] sm:$0xff]
  %v9282 = vld [vmem:[%s7 + $0x70] sm:$0xff]
  %v9283 = vld [vmem:[%s7 + $0x78] sm:$0xff]
  %v9284 = vld [vmem:[%s7 + $0x80] sm:$0xff]
  %v9285 = vld [vmem:[%s7 + $0x88] sm:$0xff]
  %v9286 = vld [vmem:[%s7 + $0x90] sm:$0xff]
  %v9287 = vld [vmem:[%s7 + $0x98] sm:$0xff]
  %v9288 = vld [vmem:[%s7 + $0xa0] sm:$0xff]
  %v9289 = vld [vmem:[%s7 + $0xa8] sm:$0xff]
  %v9290 = vld [vmem:[%s7 + $0xb0] sm:$0xff]
  %v9291 = vld [vmem:[%s7 + $0xb8] sm:$0xff]
  %v9292 = vld [vmem:[%s7 + $0xc0] sm:$0xff]
  %v9293 = vld [vmem:[%s7 + $0xc8] sm:$0xff]
  %v9294 = vld [vmem:[%s7 + $0xd0] sm:$0xff]
  %v9295 = vld [vmem:[%s7 + $0xd8] sm:$0xff]
  %v9296 = vld [vmem:[%s7 + $0xe0] sm:$0xff]
  %v9297 = vld [vmem:[%s7 + $0xe8] sm:$0xff]
  %v9298 = vld [vmem:[%s7 + $0xf0] sm:$0xff]
  %v9299 = vld [vmem:[%s7 + $0xf8] sm:$0xff]
  %v9300 = vld [vmem:[%s7 + $0x100] sm:$0xff]
  %v9301 = vld [vmem:[%s7 + $0x108] sm:$0xff]
  %v9302 = vld [vmem:[%s7 + $0x110] sm:$0xff]
  %v9303 = vld [vmem:[%s7 + $0x118] sm:$0xff]
  %v9304 = vld [vmem:[%s7 + $0x120] sm:$0xff]
  %v9305 = vld [vmem:[%s7 + $0x128] sm:$0xff]
  %v9306 = vld [vmem:[%s7 + $0x130] sm:$0xff]
  %v9307 = vld [vmem:[%s7 + $0x138] sm:$0xff]
  %v9308 = vld [vmem:[%s7 + $0x140] sm:$0xff]
  %v9309 = vld [vmem:[%s7 + $0x148] sm:$0xff]
  %v9310 = vld [vmem:[%s7 + $0x150] sm:$0xff]
  %v9311 = vld [vmem:[%s7 + $0x158] sm:$0xff]
  %v9312 = vld [vmem:[%s7 + $0x160] sm:$0xff]
  %v9313 = vld [vmem:[%s7 + $0x168] sm:$0xff]
  %v9314 = vld [vmem:[%s7 + $0x170] sm:$0xff]
  %v9315 = vld [vmem:[%s7 + $0x178] sm:$0xff]
  %v9316 = vld [vmem:[#allocation3] sm:$0xff]
  %v9317 = vld [vmem:[#allocation3 + $0x8] sm:$0xff]
  %v9318 = vld [vmem:[#allocation3 + $0x10] sm:$0xff]
  %v9319 = vld [vmem:[#allocation3 + $0x18] sm:$0xff]
  %v9320 = vld [vmem:[#allocation3 + $0x20] sm:$0xff]
  %v9321 = vld [vmem:[#allocation3 + $0x28] sm:$0xff]
  %v9322 = vld [vmem:[#allocation3 + $0x30] sm:$0xff]
  %v9323 = vld [vmem:[#allocation3 + $0x38] sm:$0xff]
  %v9324 = vld [vmem:[#allocation3 + $0x40] sm:$0xff]
  %v9325 = vld [vmem:[#allocation3 + $0x48] sm:$0xff]
  %v9326 = vld [vmem:[#allocation3 + $0x50] sm:$0xff]
  %v9327 = vld [vmem:[#allocation3 + $0x58] sm:$0xff]
  %v9328 = vld [vmem:[#allocation3 + $0x60] sm:$0xff]
  %v9329 = vld [vmem:[#allocation3 + $0x68] sm:$0xff]
  %v9330 = vld [vmem:[#allocation3 + $0x70] sm:$0xff]
  %v9331 = vld [vmem:[#allocation3 + $0x78] sm:$0xff]
  %v9332 = vld [vmem:[#allocation3 + $0x80] sm:$0xff]
  %v9333 = vld [vmem:[#allocation3 + $0x88] sm:$0xff]
  %v9334 = vld [vmem:[#allocation3 + $0x90] sm:$0xff]
  %v9335 = vld [vmem:[#allocation3 + $0x98] sm:$0xff]
  %v9336 = vld [vmem:[#allocation3 + $0xa0] sm:$0xff]
  %v9337 = vld [vmem:[#allocation3 + $0xa8] sm:$0xff]
  %v9338 = vld [vmem:[#allocation3 + $0xb0] sm:$0xff]
  %v9339 = vld [vmem:[#allocation3 + $0xb8] sm:$0xff]
  %v9340 = vld [vmem:[#allocation3 + $0xc0] sm:$0xff]
  %v9341 = vld [vmem:[#allocation3 + $0xc8] sm:$0xff]
  %v9342 = vld [vmem:[#allocation3 + $0xd0] sm:$0xff]
  %v9343 = vld [vmem:[#allocation3 + $0xd8] sm:$0xff]
  %v9344 = vld [vmem:[#allocation3 + $0xe0] sm:$0xff]
  %v9345 = vld [vmem:[#allocation3 + $0xe8] sm:$0xff]
  %v9346 = vld [vmem:[#allocation3 + $0xf0] sm:$0xff]
  %v9347 = vld [vmem:[#allocation3 + $0xf8] sm:$0xff]
  %v9348 = vld [vmem:[#allocation3 + $0x100] sm:$0xff]
  %v9349 = vld [vmem:[#allocation3 + $0x108] sm:$0xff]
  %v9350 = vld [vmem:[#allocation3 + $0x110] sm:$0xff]
  %v9351 = vld [vmem:[#allocation3 + $0x118] sm:$0xff]
  %v9352 = vld [vmem:[#allocation3 + $0x120] sm:$0xff]
  %v9353 = vld [vmem:[#allocation3 + $0x128] sm:$0xff]
  %v9354 = vld [vmem:[#allocation3 + $0x130] sm:$0xff]
  %v9355 = vld [vmem:[#allocation3 + $0x138] sm:$0xff]
  %v9356 = vld [vmem:[#allocation3 + $0x140] sm:$0xff]
  %v9357 = vld [vmem:[#allocation3 + $0x148] sm:$0xff]
  %v9358 = vld [vmem:[#allocation3 + $0x150] sm:$0xff]
  %v9359 = vld [vmem:[#allocation3 + $0x158] sm:$0xff]
  %v9360 = vld [vmem:[#allocation3 + $0x160] sm:$0xff]
  %v9361 = vld [vmem:[#allocation3 + $0x168] sm:$0xff]
  %v9362 = vld [vmem:[#allocation3 + $0x170] sm:$0xff]
  %v9363 = vld [vmem:[#allocation3 + $0x178] sm:$0xff]
  %v9364 = vld [vmem:[%s8] sm:$0xff]
  %v9365 = vld [vmem:[%s8 + $0x8] sm:$0xff]
  %v9366 = vld [vmem:[%s8 + $0x10] sm:$0xff]
  %v9367 = vld [vmem:[%s8 + $0x18] sm:$0xff]
  %v9368 = vld [vmem:[%s8 + $0x20] sm:$0xff]
  %v9369 = vld [vmem:[%s8 + $0x28] sm:$0xff]
  %v9370 = vld [vmem:[%s8 + $0x30] sm:$0xff]
  %v9371 = vld [vmem:[%s8 + $0x38] sm:$0xff]
  %v9372 = vld [vmem:[%s8 + $0x40] sm:$0xff]
  %v9373 = vld [vmem:[%s8 + $0x48] sm:$0xff]
  %v9374 = vld [vmem:[%s8 + $0x50] sm:$0xff]
  %v9375 = vld [vmem:[%s8 + $0x58] sm:$0xff]
  %v9376 = vld [vmem:[%s8 + $0x60] sm:$0xff]
  %v9377 = vld [vmem:[%s8 + $0x68] sm:$0xff]
  %v9378 = vld [vmem:[%s8 + $0x70] sm:$0xff]
  %v9379 = vld [vmem:[%s8 + $0x78] sm:$0xff]
  %9381 = vset.pattern.permute.xlu0 0
  %9382 = vperm.xlu0 %9381, %v9364
  %v9383 = vpop.permute.xlu0 %9382
  %9386 = vset.pattern.permute.xlu0 0
  %9387 = vperm.xlu0 %9386, %v9365
  %v9388 = vpop.permute.xlu0 %9387
  %9391 = vset.pattern.permute.xlu0 0
  %9392 = vperm.xlu0 %9391, %v9366
  %v9393 = vpop.permute.xlu0 %9392
  %9396 = vset.pattern.permute.xlu0 0
  %9397 = vperm.xlu0 %9396, %v9367
  %v9398 = vpop.permute.xlu0 %9397
  %9401 = vset.pattern.permute.xlu0 0
  %9402 = vperm.xlu0 %9401, %v9368
  %v9403 = vpop.permute.xlu0 %9402
  %9406 = vset.pattern.permute.xlu0 0
  %9407 = vperm.xlu0 %9406, %v9369
  %v9408 = vpop.permute.xlu0 %9407
  %9411 = vset.pattern.permute.xlu0 0
  %9412 = vperm.xlu0 %9411, %v9370
  %v9413 = vpop.permute.xlu0 %9412
  %9416 = vset.pattern.permute.xlu0 0
  %9417 = vperm.xlu0 %9416, %v9371
  %v9418 = vpop.permute.xlu0 %9417
  %9421 = vset.pattern.permute.xlu0 0
  %9422 = vperm.xlu0 %9421, %v9372
  %v9423 = vpop.permute.xlu0 %9422
  %9426 = vset.pattern.permute.xlu0 0
  %9427 = vperm.xlu0 %9426, %v9373
  %v9428 = vpop.permute.xlu0 %9427
  %9431 = vset.pattern.permute.xlu0 0
  %9432 = vperm.xlu0 %9431, %v9374
  %v9433 = vpop.permute.xlu0 %9432
  %9436 = vset.pattern.permute.xlu0 0
  %9437 = vperm.xlu0 %9436, %v9375
  %v9438 = vpop.permute.xlu0 %9437
  %9441 = vset.pattern.permute.xlu0 0
  %9442 = vperm.xlu0 %9441, %v9376
  %v9443 = vpop.permute.xlu0 %9442
  %9446 = vset.pattern.permute.xlu0 0
  %9447 = vperm.xlu0 %9446, %v9377
  %v9448 = vpop.permute.xlu0 %9447
  %9451 = vset.pattern.permute.xlu0 0
  %9452 = vperm.xlu0 %9451, %v9378
  %v9453 = vpop.permute.xlu0 %9452
  %9456 = vset.pattern.permute.xlu0 0
  %9457 = vperm.xlu0 %9456, %v9379
  %v9458 = vpop.permute.xlu0 %9457
  %v9508 = vunpack.c.l.b16 %v9268
  %v9509 = vunpack.c.h.b16 %v9268
  %v9510 = vunpack.c.l.b16 %v9269
  %v9511 = vunpack.c.h.b16 %v9269
  %v9512 = vunpack.c.l.b16 %v9270
  %v9513 = vunpack.c.h.b16 %v9270
  %v9514 = vunpack.c.l.b16 %v9271
  %v9515 = vunpack.c.h.b16 %v9271
  %v9516 = vunpack.c.l.b16 %v9272
  %v9517 = vunpack.c.h.b16 %v9272
  %v9518 = vunpack.c.l.b16 %v9273
  %v9519 = vunpack.c.h.b16 %v9273
  %v9520 = vunpack.c.l.b16 %v9274
  %v9521 = vunpack.c.h.b16 %v9274
  %v9522 = vunpack.c.l.b16 %v9275
  %v9523 = vunpack.c.h.b16 %v9275
  %v9524 = vunpack.c.l.b16 %v9276
  %v9525 = vunpack.c.h.b16 %v9276
  %v9526 = vunpack.c.l.b16 %v9277
  %v9527 = vunpack.c.h.b16 %v9277
  %v9528 = vunpack.c.l.b16 %v9278
  %v9529 = vunpack.c.h.b16 %v9278
  %v9530 = vunpack.c.l.b16 %v9279
  %v9531 = vunpack.c.h.b16 %v9279
  %v9532 = vunpack.c.l.b16 %v9280
  %v9533 = vunpack.c.h.b16 %v9280
  %v9534 = vunpack.c.l.b16 %v9281
  %v9535 = vunpack.c.h.b16 %v9281
  %v9536 = vunpack.c.l.b16 %v9282
  %v9537 = vunpack.c.h.b16 %v9282
  %v9538 = vunpack.c.l.b16 %v9283
  %v9539 = vunpack.c.h.b16 %v9283
  %v9540 = vunpack.c.l.b16 %v9284
  %v9541 = vunpack.c.h.b16 %v9284
  %v9542 = vunpack.c.l.b16 %v9285
  %v9543 = vunpack.c.h.b16 %v9285
  %v9544 = vunpack.c.l.b16 %v9286
  %v9545 = vunpack.c.h.b16 %v9286
  %v9546 = vunpack.c.l.b16 %v9287
  %v9547 = vunpack.c.h.b16 %v9287
  %v9548 = vunpack.c.l.b16 %v9288
  %v9549 = vunpack.c.h.b16 %v9288
  %v9550 = vunpack.c.l.b16 %v9289
  %v9551 = vunpack.c.h.b16 %v9289
  %v9552 = vunpack.c.l.b16 %v9290
  %v9553 = vunpack.c.h.b16 %v9290
  %v9554 = vunpack.c.l.b16 %v9291
  %v9555 = vunpack.c.h.b16 %v9291
  %v9556 = vunpack.c.l.b16 %v9292
  %v9557 = vunpack.c.h.b16 %v9292
  %v9558 = vunpack.c.l.b16 %v9293
  %v9559 = vunpack.c.h.b16 %v9293
  %v9560 = vunpack.c.l.b16 %v9294
  %v9561 = vunpack.c.h.b16 %v9294
  %v9562 = vunpack.c.l.b16 %v9295
  %v9563 = vunpack.c.h.b16 %v9295
  %v9564 = vunpack.c.l.b16 %v9296
  %v9565 = vunpack.c.h.b16 %v9296
  %v9566 = vunpack.c.l.b16 %v9297
  %v9567 = vunpack.c.h.b16 %v9297
  %v9568 = vunpack.c.l.b16 %v9298
  %v9569 = vunpack.c.h.b16 %v9298
  %v9570 = vunpack.c.l.b16 %v9299
  %v9571 = vunpack.c.h.b16 %v9299
  %v9572 = vunpack.c.l.b16 %v9300
  %v9573 = vunpack.c.h.b16 %v9300
  %v9574 = vunpack.c.l.b16 %v9301
  %v9575 = vunpack.c.h.b16 %v9301
  %v9576 = vunpack.c.l.b16 %v9302
  %v9577 = vunpack.c.h.b16 %v9302
  %v9578 = vunpack.c.l.b16 %v9303
  %v9579 = vunpack.c.h.b16 %v9303
  %v9580 = vunpack.c.l.b16 %v9304
  %v9581 = vunpack.c.h.b16 %v9304
  %v9582 = vunpack.c.l.b16 %v9305
  %v9583 = vunpack.c.h.b16 %v9305
  %v9584 = vunpack.c.l.b16 %v9306
  %v9585 = vunpack.c.h.b16 %v9306
  %v9586 = vunpack.c.l.b16 %v9307
  %v9587 = vunpack.c.h.b16 %v9307
  %v9588 = vunpack.c.l.b16 %v9308
  %v9589 = vunpack.c.h.b16 %v9308
  %v9590 = vunpack.c.l.b16 %v9309
  %v9591 = vunpack.c.h.b16 %v9309
  %v9592 = vunpack.c.l.b16 %v9310
  %v9593 = vunpack.c.h.b16 %v9310
  %v9594 = vunpack.c.l.b16 %v9311
  %v9595 = vunpack.c.h.b16 %v9311
  %v9596 = vunpack.c.l.b16 %v9312
  %v9597 = vunpack.c.h.b16 %v9312
  %v9598 = vunpack.c.l.b16 %v9313
  %v9599 = vunpack.c.h.b16 %v9313
  %v9600 = vunpack.c.l.b16 %v9314
  %v9601 = vunpack.c.h.b16 %v9314
  %v9602 = vunpack.c.l.b16 %v9315
  %v9603 = vunpack.c.h.b16 %v9315
  %v9604 = vpack.c.b16 %v9514, %v9508
  %v9605 = vpack.c.b16 %v9515, %v9509
  %v9606 = vpack.c.b16 %v9516, %v9510
  %v9607 = vpack.c.b16 %v9517, %v9511
  %v9608 = vpack.c.b16 %v9518, %v9512
  %v9609 = vpack.c.b16 %v9519, %v9513
  %v9610 = vpack.c.b16 %v9526, %v9520
  %v9611 = vpack.c.b16 %v9527, %v9521
  %v9612 = vpack.c.b16 %v9528, %v9522
  %v9613 = vpack.c.b16 %v9529, %v9523
  %v9614 = vpack.c.b16 %v9530, %v9524
  %v9615 = vpack.c.b16 %v9531, %v9525
  %v9616 = vpack.c.b16 %v9538, %v9532
  %v9617 = vpack.c.b16 %v9539, %v9533
  %v9618 = vpack.c.b16 %v9540, %v9534
  %v9619 = vpack.c.b16 %v9541, %v9535
  %v9620 = vpack.c.b16 %v9542, %v9536
  %v9621 = vpack.c.b16 %v9543, %v9537
  %v9622 = vpack.c.b16 %v9550, %v9544
  %v9623 = vpack.c.b16 %v9551, %v9545
  %v9624 = vpack.c.b16 %v9552, %v9546
  %v9625 = vpack.c.b16 %v9553, %v9547
  %v9626 = vpack.c.b16 %v9554, %v9548
  %v9627 = vpack.c.b16 %v9555, %v9549
  %v9628 = vpack.c.b16 %v9562, %v9556
  %v9629 = vpack.c.b16 %v9563, %v9557
  %v9630 = vpack.c.b16 %v9564, %v9558
  %v9631 = vpack.c.b16 %v9565, %v9559
  %v9632 = vpack.c.b16 %v9566, %v9560
  %v9633 = vpack.c.b16 %v9567, %v9561
  %v9634 = vpack.c.b16 %v9574, %v9568
  %v9635 = vpack.c.b16 %v9575, %v9569
  %v9636 = vpack.c.b16 %v9576, %v9570
  %v9637 = vpack.c.b16 %v9577, %v9571
  %v9638 = vpack.c.b16 %v9578, %v9572
  %v9639 = vpack.c.b16 %v9579, %v9573
  %v9640 = vpack.c.b16 %v9586, %v9580
  %v9641 = vpack.c.b16 %v9587, %v9581
  %v9642 = vpack.c.b16 %v9588, %v9582
  %v9643 = vpack.c.b16 %v9589, %v9583
  %v9644 = vpack.c.b16 %v9590, %v9584
  %v9645 = vpack.c.b16 %v9591, %v9585
  %v9646 = vpack.c.b16 %v9598, %v9592
  %v9647 = vpack.c.b16 %v9599, %v9593
  %v9648 = vpack.c.b16 %v9600, %v9594
  %v9649 = vpack.c.b16 %v9601, %v9595
  %v9650 = vpack.c.b16 %v9602, %v9596
  %v9651 = vpack.c.b16 %v9603, %v9597
  %9700 = vmatprep.subr.bf16.mxu0 0
  %9701 = vmatpush1.bf16.msra.mxu0 %v9316
  %9702 = vmatprep.subr.bf16.mxu0 0
  %9703 = vmatpush1.bf16.msra.mxu0 %v9317
  %9704 = vmatprep.subr.bf16.mxu0 0
  %9705 = vmatpush1.bf16.msra.mxu0 %v9318
  %9706 = vmatprep.subr.bf16.mxu0 0
  %9707 = vmatpush1.bf16.msra.mxu0 %v9319
  %9708 = vmatprep.subr.bf16.mxu0 0
  %9709 = vmatpush1.bf16.msra.mxu0 %v9320
  %9710 = vmatprep.subr.bf16.mxu0 0
  %9711 = vmatpush1.bf16.msra.mxu0 %v9321
  %9712 = vmatprep.subr.bf16.mxu0 0
  %9713 = vmatpush1.bf16.msra.mxu0 %v9322
  %9714 = vmatprep.subr.bf16.mxu0 0
  %9715 = vmatpush1.bf16.msra.mxu0 %v9323
  %9716 = vmatprep.subr.bf16.mxu0 0
  %9717 = vmatpush1.bf16.msra.mxu0 %v9324
  %9718 = vmatprep.subr.bf16.mxu0 0
  %9719 = vmatpush1.bf16.msra.mxu0 %v9325
  %9720 = vmatprep.subr.bf16.mxu0 0
  %9721 = vmatpush1.bf16.msra.mxu0 %v9326
  %9722 = vmatprep.subr.bf16.mxu0 0
  %9723 = vmatpush1.bf16.msra.mxu0 %v9327
  %9724 = vmatprep.subr.bf16.mxu0 0
  %9725 = vmatpush1.bf16.msra.mxu0 %v9328
  %9726 = vmatprep.subr.bf16.mxu0 0
  %9727 = vmatpush1.bf16.msra.mxu0 %v9329
  %9728 = vmatprep.subr.bf16.mxu0 0
  %9729 = vmatpush1.bf16.msra.mxu0 %v9330
  %9730 = vmatprep.subr.bf16.mxu0 0
  %9731 = vmatpush1.bf16.msra.mxu0 %v9331
  %9732 = vmatprep.mubr.bf16.mxu0 %v9605
  %9733 = vmatmul.mubr.bf16.gmra.mrb[0].mxu0 %v9604
  %v9734 = vpop.f32.mrb[0].mxu0
  %v9735 = vadd.f32 %v9383, %v9734
  %v9736 = vpop.f32.mrb[0].mxu0
  %v9737 = vpop.f32.mrb[0].mxu0
  %v9738 = vadd.f32 %v9388, %v9737
  %v9739 = vpop.f32.mrb[0].mxu0
  %9740 = vmatprep.mubr.bf16.mxu0 %v9611
  %9741 = vmatmul.mubr.bf16.gmra.mrb[0].mxu0 %v9610
  %v9742 = vpop.f32.mrb[0].mxu0
  %v9743 = vadd.f32 %v9393, %v9742
  %v9744 = vpop.f32.mrb[0].mxu0
  %v9745 = vpop.f32.mrb[0].mxu0
  %v9746 = vadd.f32 %v9398, %v9745
  %v9747 = vpop.f32.mrb[0].mxu0
  %9748 = vmatprep.mubr.bf16.mxu0 %v9617
  %9749 = vmatmul.mubr.bf16.gmra.mrb[0].mxu0 %v9616
  %v9750 = vpop.f32.mrb[0].mxu0
  %v9751 = vadd.f32 %v9403, %v9750
  %v9752 = vpop.f32.mrb[0].mxu0
  %v9753 = vpop.f32.mrb[0].mxu0
  %v9754 = vadd.f32 %v9408, %v9753
  %v9755 = vpop.f32.mrb[0].mxu0
  %9756 = vmatprep.mubr.bf16.mxu0 %v9623
  %9757 = vmatmul.mubr.bf16.gmra.mrb[0].mxu0 %v9622
  %v9758 = vpop.f32.mrb[0].mxu0
  %v9759 = vadd.f32 %v9413, %v9758
  %v9760 = vpop.f32.mrb[0].mxu0
  %v9761 = vpop.f32.mrb[0].mxu0
  %v9762 = vadd.f32 %v9418, %v9761
  %v9763 = vpop.f32.mrb[0].mxu0
  %9764 = vmatprep.mubr.bf16.mxu0 %v9629
  %9765 = vmatmul.mubr.bf16.gmra.mrb[0].mxu0 %v9628
  %v9766 = vpop.f32.mrb[0].mxu0
  %v9767 = vadd.f32 %v9423, %v9766
  %v9768 = vpop.f32.mrb[0].mxu0
  %v9769 = vpop.f32.mrb[0].mxu0
  %v9770 = vadd.f32 %v9428, %v9769
  %v9771 = vpop.f32.mrb[0].mxu0
  %9772 = vmatprep.mubr.bf16.mxu0 %v9635
  %9773 = vmatmul.mubr.bf16.gmra.mrb[0].mxu0 %v9634
  %v9774 = vpop.f32.mrb[0].mxu0
  %v9775 = vadd.f32 %v9433, %v9774
  %v9776 = vpop.f32.mrb[0].mxu0
  %v9777 = vpop.f32.mrb[0].mxu0
  %v9778 = vadd.f32 %v9438, %v9777
  %v9779 = vpop.f32.mrb[0].mxu0
  %9780 = vmatprep.mubr.bf16.mxu0 %v9641
  %9781 = vmatmul.mubr.bf16.gmra.mrb[0].mxu0 %v9640
  %v9782 = vpop.f32.mrb[0].mxu0
  %v9783 = vadd.f32 %v9443, %v9782
  %v9784 = vpop.f32.mrb[0].mxu0
  %v9785 = vpop.f32.mrb[0].mxu0
  %v9786 = vadd.f32 %v9448, %v9785
  %v9787 = vpop.f32.mrb[0].mxu0
  %9788 = vmatprep.mubr.bf16.mxu0 %v9647
  %9789 = vmatmul.mubr.bf16.gmra.mrb[0].mxu0 %v9646
  %v9790 = vpop.f32.mrb[0].mxu0
  %v9791 = vadd.f32 %v9453, %v9790
  %v9792 = vpop.f32.mrb[0].mxu0
  %v9793 = vpop.f32.mrb[0].mxu0
  %v9794 = vadd.f32 %v9458, %v9793
  %v9795 = vpop.f32.mrb[0].mxu0
  %9796 = vdwg.mxu0
  %9797 = vmatprep.subr.bf16.mxu0 0
  %9798 = vmatpush1.bf16.msra.mxu0 %v9332
  %9799 = vmatprep.subr.bf16.mxu0 0
  %9800 = vmatpush1.bf16.msra.mxu0 %v9333
  %9801 = vmatprep.subr.bf16.mxu0 0
  %9802 = vmatpush1.bf16.msra.mxu0 %v9334
  %9803 = vmatprep.subr.bf16.mxu0 0
  %9804 = vmatpush1.bf16.msra.mxu0 %v9335
  %9805 = vmatprep.subr.bf16.mxu0 0
  %9806 = vmatpush1.bf16.msra.mxu0 %v9336
  %9807 = vmatprep.subr.bf16.mxu0 0
  %9808 = vmatpush1.bf16.msra.mxu0 %v9337
  %9809 = vmatprep.subr.bf16.mxu0 0
  %9810 = vmatpush1.bf16.msra.mxu0 %v9338
  %9811 = vmatprep.subr.bf16.mxu0 0
  %9812 = vmatpush1.bf16.msra.mxu0 %v9339
  %9813 = vmatprep.subr.bf16.mxu0 0
  %9814 = vmatpush1.bf16.msra.mxu0 %v9340
  %9815 = vmatprep.subr.bf16.mxu0 0
  %9816 = vmatpush1.bf16.msra.mxu0 %v9341
  %9817 = vmatprep.subr.bf16.mxu0 0
  %9818 = vmatpush1.bf16.msra.mxu0 %v9342
  %9819 = vmatprep.subr.bf16.mxu0 0
  %9820 = vmatpush1.bf16.msra.mxu0 %v9343
  %9821 = vmatprep.subr.bf16.mxu0 0
  %9822 = vmatpush1.bf16.msra.mxu0 %v9344
  %9823 = vmatprep.subr.bf16.mxu0 0
  %9824 = vmatpush1.bf16.msra.mxu0 %v9345
  %9825 = vmatprep.subr.bf16.mxu0 0
  %9826 = vmatpush1.bf16.msra.mxu0 %v9346
  %9827 = vmatprep.subr.bf16.mxu0 0
  %9828 = vmatpush1.bf16.msra.mxu0 %v9347
  %9829 = vmatprep.mubr.bf16.mxu0 %v9607
  %9830 = vmatmul.mubr.bf16.gmra.mrb[0].mxu0 %v9606
  %v9831 = vpop.f32.mrb[0].mxu0
  %v9832 = vadd.f32 %v9735, %v9831
  %v9833 = vpop.f32.mrb[0].mxu0
  %v9834 = vpop.f32.mrb[0].mxu0
  %v9835 = vadd.f32 %v9738, %v9834
  %v9836 = vpop.f32.mrb[0].mxu0
  %9837 = vmatprep.mubr.bf16.mxu0 %v9613
  %9838 = vmatmul.mubr.bf16.gmra.mrb[0].mxu0 %v9612
  %v9839 = vpop.f32.mrb[0].mxu0
  %v9840 = vadd.f32 %v9743, %v9839
  %v9841 = vpop.f32.mrb[0].mxu0
  %v9842 = vpop.f32.mrb[0].mxu0
  %v9843 = vadd.f32 %v9746, %v9842
  %v9844 = vpop.f32.mrb[0].mxu0
  %9845 = vmatprep.mubr.bf16.mxu0 %v9619
  %9846 = vmatmul.mubr.bf16.gmra.mrb[0].mxu0 %v9618
  %v9847 = vpop.f32.mrb[0].mxu0
  %v9848 = vadd.f32 %v9751, %v9847
  %v9849 = vpop.f32.mrb[0].mxu0
  %v9850 = vpop.f32.mrb[0].mxu0
  %v9851 = vadd.f32 %v9754, %v9850
  %v9852 = vpop.f32.mrb[0].mxu0
  %9853 = vmatprep.mubr.bf16.mxu0 %v9625
  %9854 = vmatmul.mubr.bf16.gmra.mrb[0].mxu0 %v9624
  %v9855 = vpop.f32.mrb[0].mxu0
  %v9856 = vadd.f32 %v9759, %v9855
  %v9857 = vpop.f32.mrb[0].mxu0
  %v9858 = vpop.f32.mrb[0].mxu0
  %v9859 = vadd.f32 %v9762, %v9858
  %v9860 = vpop.f32.mrb[0].mxu0
  %9861 = vmatprep.mubr.bf16.mxu0 %v9631
  %9862 = vmatmul.mubr.bf16.gmra.mrb[0].mxu0 %v9630
  %v9863 = vpop.f32.mrb[0].mxu0
  %v9864 = vadd.f32 %v9767, %v9863
  %v9865 = vpop.f32.mrb[0].mxu0
  %v9866 = vpop.f32.mrb[0].mxu0
  %v9867 = vadd.f32 %v9770, %v9866
  %v9868 = vpop.f32.mrb[0].mxu0
  %9869 = vmatprep.mubr.bf16.mxu0 %v9637
  %9870 = vmatmul.mubr.bf16.gmra.mrb[0].mxu0 %v9636
  %v9871 = vpop.f32.mrb[0].mxu0
  %v9872 = vadd.f32 %v9775, %v9871
  %v9873 = vpop.f32.mrb[0].mxu0
  %v9874 = vpop.f32.mrb[0].mxu0
  %v9875 = vadd.f32 %v9778, %v9874
  %v9876 = vpop.f32.mrb[0].mxu0
  %9877 = vmatprep.mubr.bf16.mxu0 %v9643
  %9878 = vmatmul.mubr.bf16.gmra.mrb[0].mxu0 %v9642
  %v9879 = vpop.f32.mrb[0].mxu0
  %v9880 = vadd.f32 %v9783, %v9879
  %v9881 = vpop.f32.mrb[0].mxu0
  %v9882 = vpop.f32.mrb[0].mxu0
  %v9883 = vadd.f32 %v9786, %v9882
  %v9884 = vpop.f32.mrb[0].mxu0
  %9885 = vmatprep.mubr.bf16.mxu0 %v9649
  %9886 = vmatmul.mubr.bf16.gmra.mrb[0].mxu0 %v9648
  %v9887 = vpop.f32.mrb[0].mxu0
  %v9888 = vadd.f32 %v9791, %v9887
  %v9889 = vpop.f32.mrb[0].mxu0
  %v9890 = vpop.f32.mrb[0].mxu0
  %v9891 = vadd.f32 %v9794, %v9890
  %v9892 = vpop.f32.mrb[0].mxu0
  %9893 = vdwg.mxu0
  %9894 = vmatprep.subr.bf16.mxu0 0
  %9895 = vmatpush1.bf16.msra.mxu0 %v9348
  %9896 = vmatprep.subr.bf16.mxu0 0
  %9897 = vmatpush1.bf16.msra.mxu0 %v9349
  %9898 = vmatprep.subr.bf16.mxu0 0
  %9899 = vmatpush1.bf16.msra.mxu0 %v9350
  %9900 = vmatprep.subr.bf16.mxu0 0
  %9901 = vmatpush1.bf16.msra.mxu0 %v9351
  %9902 = vmatprep.subr.bf16.mxu0 0
  %9903 = vmatpush1.bf16.msra.mxu0 %v9352
  %9904 = vmatprep.subr.bf16.mxu0 0
  %9905 = vmatpush1.bf16.msra.mxu0 %v9353
  %9906 = vmatprep.subr.bf16.mxu0 0
  %9907 = vmatpush1.bf16.msra.mxu0 %v9354
  %9908 = vmatprep.subr.bf16.mxu0 0
  %9909 = vmatpush1.bf16.msra.mxu0 %v9355
  %9910 = vmatprep.subr.bf16.mxu0 0
  %9911 = vmatpush1.bf16.msra.mxu0 %v9356
  %9912 = vmatprep.subr.bf16.mxu0 0
  %9913 = vmatpush1.bf16.msra.mxu0 %v9357
  %9914 = vmatprep.subr.bf16.mxu0 0
  %9915 = vmatpush1.bf16.msra.mxu0 %v9358
  %9916 = vmatprep.subr.bf16.mxu0 0
  %9917 = vmatpush1.bf16.msra.mxu0 %v9359
  %9918 = vmatprep.subr.bf16.mxu0 0
  %9919 = vmatpush1.bf16.msra.mxu0 %v9360
  %9920 = vmatprep.subr.bf16.mxu0 0
  %9921 = vmatpush1.bf16.msra.mxu0 %v9361
  %9922 = vmatprep.subr.bf16.mxu0 0
  %9923 = vmatpush1.bf16.msra.mxu0 %v9362
  %9924 = vmatprep.subr.bf16.mxu0 0
  %9925 = vmatpush1.bf16.msra.mxu0 %v9363
  %9926 = vmatprep.mubr.bf16.mxu0 %v9609
  %9927 = vmatmul.mubr.bf16.gmra.mrb[0].mxu0 %v9608
  %v9928 = vpop.f32.mrb[0].mxu0
  %v9929 = vadd.f32 %v9832, %v9928
  %v9930 = vpop.f32.mrb[0].mxu0
  %v9931 = vpop.f32.mrb[0].mxu0
  %v9932 = vadd.f32 %v9835, %v9931
  %v9933 = vpop.f32.mrb[0].mxu0
  %9934 = vmatprep.mubr.bf16.mxu0 %v9615
  %9935 = vmatmul.mubr.bf16.gmra.mrb[0].mxu0 %v9614
  %v9936 = vpop.f32.mrb[0].mxu0
  %v9937 = vadd.f32 %v9840, %v9936
  %v9938 = vpop.f32.mrb[0].mxu0
  %v9939 = vpop.f32.mrb[0].mxu0
  %v9940 = vadd.f32 %v9843, %v9939
  %v9941 = vpop.f32.mrb[0].mxu0
  %9942 = vmatprep.mubr.bf16.mxu0 %v9621
  %9943 = vmatmul.mubr.bf16.gmra.mrb[0].mxu0 %v9620
  %v9944 = vpop.f32.mrb[0].mxu0
  %v9945 = vadd.f32 %v9848, %v9944
  %v9946 = vpop.f32.mrb[0].mxu0
  %v9947 = vpop.f32.mrb[0].mxu0
  %v9948 = vadd.f32 %v9851, %v9947
  %v9949 = vpop.f32.mrb[0].mxu0
  %9950 = vmatprep.mubr.bf16.mxu0 %v9627
  %9951 = vmatmul.mubr.bf16.gmra.mrb[0].mxu0 %v9626
  %v9952 = vpop.f32.mrb[0].mxu0
  %v9953 = vadd.f32 %v9856, %v9952
  %v9954 = vpop.f32.mrb[0].mxu0
  %v9955 = vpop.f32.mrb[0].mxu0
  %v9956 = vadd.f32 %v9859, %v9955
  %v9957 = vpop.f32.mrb[0].mxu0
  %9958 = vmatprep.mubr.bf16.mxu0 %v9633
  %9959 = vmatmul.mubr.bf16.gmra.mrb[0].mxu0 %v9632
  %v9960 = vpop.f32.mrb[0].mxu0
  %v9961 = vadd.f32 %v9864, %v9960
  %v9962 = vpop.f32.mrb[0].mxu0
  %v9963 = vpop.f32.mrb[0].mxu0
  %v9964 = vadd.f32 %v9867, %v9963
  %v9965 = vpop.f32.mrb[0].mxu0
  %9966 = vmatprep.mubr.bf16.mxu0 %v9639
  %9967 = vmatmul.mubr.bf16.gmra.mrb[0].mxu0 %v9638
  %v9968 = vpop.f32.mrb[0].mxu0
  %v9969 = vadd.f32 %v9872, %v9968
  %v9970 = vpop.f32.mrb[0].mxu0
  %v9971 = vpop.f32.mrb[0].mxu0
  %v9972 = vadd.f32 %v9875, %v9971
  %v9973 = vpop.f32.mrb[0].mxu0
  %9974 = vmatprep.mubr.bf16.mxu0 %v9645
  %9975 = vmatmul.mubr.bf16.gmra.mrb[0].mxu0 %v9644
  %v9976 = vpop.f32.mrb[0].mxu0
  %v9977 = vadd.f32 %v9880, %v9976
  %v9978 = vpop.f32.mrb[0].mxu0
  %v9979 = vpop.f32.mrb[0].mxu0
  %v9980 = vadd.f32 %v9883, %v9979
  %v9981 = vpop.f32.mrb[0].mxu0
  %9982 = vmatprep.mubr.bf16.mxu0 %v9651
  %9983 = vmatmul.mubr.bf16.gmra.mrb[0].mxu0 %v9650
  %v9984 = vpop.f32.mrb[0].mxu0
  %v9985 = vadd.f32 %v9888, %v9984
  %v9986 = vpop.f32.mrb[0].mxu0
  %v9987 = vpop.f32.mrb[0].mxu0
  %v9988 = vadd.f32 %v9891, %v9987
  %v9989 = vpop.f32.mrb[0].mxu0
  %9990 = vdwg.mxu0
  %v9991 = vmax.f32 %v9929, 0.0
  %v9992 = vmax.f32 %v9932, 0.0
  %v9993 = vmax.f32 %v9937, 0.0
  %v9994 = vmax.f32 %v9940, 0.0
  %v9995 = vmax.f32 %v9945, 0.0
  %v9996 = vmax.f32 %v9948, 0.0
  %v9997 = vmax.f32 %v9953, 0.0
  %v9998 = vmax.f32 %v9956, 0.0
  %v9999 = vmax.f32 %v9961, 0.0
  %v10000 = vmax.f32 %v9964, 0.0
  %v10001 = vmax.f32 %v9969, 0.0
  %v10002 = vmax.f32 %v9972, 0.0
  %v10003 = vmax.f32 %v9977, 0.0
  %v10004 = vmax.f32 %v9980, 0.0
  %v10005 = vmax.f32 %v9985, 0.0
  %v10006 = vmax.f32 %v9988, 0.0
  %v10007 = vld [vmem:[%s9] sm:$0xff]
  %v10008 = vld [vmem:[%s10] sm:$0xff]
  %10010 = vset.pattern.permute.xlu0 0
  %10011 = vperm.xlu0 %10010, %v10008
  %v10012 = vpop.permute.xlu0 %10011
  %10014 = vmatprep.subr.mxu0 0.0
  %10015 = vmatpush1.msra.mxu0 %v9991
  %10016 = vmatprep.subr.mxu0 0.0
  %10017 = vmatpush1.msra.mxu0 %v9992
  %10018 = vmatprep.subr.mxu0 0.0
  %10019 = vmatpush1.msra.mxu0 %v9993
  %10020 = vmatprep.subr.mxu0 0.0
  %10021 = vmatpush1.msra.mxu0 %v9994
  %10022 = vmatprep.subr.mxu0 0.0
  %10023 = vmatpush1.msra.mxu0 %v9995
  %10024 = vmatprep.subr.mxu0 0.0
  %10025 = vmatpush1.msra.mxu0 %v9996
  %10026 = vmatprep.subr.mxu0 0.0
  %10027 = vmatpush1.msra.mxu0 %v9997
  %10028 = vmatprep.subr.mxu0 0.0
  %10029 = vmatpush1.msra.mxu0 %v9998
  %10030 = vmatprep.subr.mxu0 0.0
  %10031 = vmatpush1.msra.mxu0 %v9999
  %10032 = vmatprep.subr.mxu0 0.0
  %10033 = vmatpush1.msra.mxu0 %v10000
  %10034 = vmatprep.subr.mxu0 0.0
  %10035 = vmatpush1.msra.mxu0 %v10001
  %10036 = vmatprep.subr.mxu0 0.0
  %10037 = vmatpush1.msra.mxu0 %v10002
  %10038 = vmatprep.subr.mxu0 0.0
  %10039 = vmatpush1.msra.mxu0 %v10003
  %10040 = vmatprep.subr.mxu0 0.0
  %10041 = vmatpush1.msra.mxu0 %v10004
  %10042 = vmatprep.subr.mxu0 0.0
  %10043 = vmatpush1.msra.mxu0 %v10005
  %10044 = vmatprep.subr.mxu0 0.0
  %10045 = vmatpush1.msra.mxu0 %v10006
  %10046 = vmatprep.subr.mxu0 0.0
  %10047 = vmatpush1.msra.mxu0 0.0
  %10048 = vmatprep.subr.mxu0 0.0
  %10049 = vmatpush1.msra.mxu0 0.0
  %10050 = vmatprep.subr.mxu0 0.0
  %10051 = vmatpush1.msra.mxu0 0.0
  %10052 = vmatprep.subr.mxu0 0.0
  %10053 = vmatpush1.msra.mxu0 0.0
  %10054 = vmatprep.subr.mxu0 0.0
  %10055 = vmatpush1.msra.mxu0 0.0
  %10056 = vmatprep.subr.mxu0 0.0
  %10057 = vmatpush1.msra.mxu0 0.0
  %10058 = vmatprep.subr.mxu0 0.0
  %10059 = vmatpush1.msra.mxu0 0.0
  %10060 = vmatprep.subr.mxu0 0.0
  %10061 = vmatpush1.msra.mxu0 0.0
  %10062 = vmatprep.subr.mxu0 0.0
  %10063 = vmatpush1.msra.mxu0 0.0
  %10064 = vmatprep.subr.mxu0 0.0
  %10065 = vmatpush1.msra.mxu0 0.0
  %10066 = vmatprep.subr.mxu0 0.0
  %10067 = vmatpush1.msra.mxu0 0.0
  %10068 = vmatprep.subr.mxu0 0.0
  %10069 = vmatpush1.msra.mxu0 0.0
  %10070 = vmatprep.subr.mxu0 0.0
  %10071 = vmatpush1.msra.mxu0 0.0
  %10072 = vmatprep.subr.mxu0 0.0
  %10073 = vmatpush1.msra.mxu0 0.0
  %10074 = vmatprep.subr.mxu0 0.0
  %10075 = vmatpush1.msra.mxu0 0.0
  %10076 = vmatprep.subr.mxu0 0.0
  %10077 = vmatpush1.msra.mxu0 0.0
  %10078 = vmatprep.mubr.f32.mxu0 0.0
  %10079 = vmatmul.mubr.f32.gmra.mrb[0].mxu0 %v10007
  %v10080 = vpop.f32.mrb[0].mxu0
  %v10081 = vadd.f32 %v10012, %v10080
  %v10082 = vpop.f32.mrb[0].mxu0
  %10083 = vdwg.mxu0
  %10084 = vst [vmem:[%s11] sm:$0xff] %v10081
  // Predicated region
  $region46: #{mycnn_forward.1} parent=0 // pred_check
    _
  $region47: #{mycnn_forward.1} parent=0 // pred_check_branch
    %10086 = sbr.rel (0) target = $region49
  $region48: #{mycnn_forward.1} parent=0 // pred_region
    _
  $region49: #{mycnn_forward.1} parent=0 // pred_fallthru
    _
  // Predicated region
  $region50: #{mycnn_forward.1} parent=0 // pred_check
    _
  $region51: #{mycnn_forward.1} parent=0 // pred_check_branch
    %10088 = sbr.rel (0) target = $region53
  $region52: #{mycnn_forward.1} parent=0 // pred_region
    _
  $region53: #{mycnn_forward.1} parent=0 // pred_fallthru
    _

</llo_original>
